<compile_context>
chip_gen: v7x
topology: tpu7x:2x2x1
jax: 0.10.0
libtpu: 0.0.40
codegen_flags: <defaults>
</compile_context>

<pallas_src>
import functools
import math

import jax
import jax.numpy as jnp
from jax import lax
from jax.experimental import pallas as pl
from jax.experimental.pallas import tpu as pltpu


# ----------------------------- in-kernel helpers -----------------------------

def _layernorm(y, g, b, eps):
    mean = jnp.mean(y, axis=-1, keepdims=True)
    var = jnp.mean(jnp.square(y - mean), axis=-1, keepdims=True)
    return (y - mean) * lax.rsqrt(var + eps) * g + b


def _softmax_rows(s):
    m = jnp.max(s, axis=-1, keepdims=True)
    p = jnp.exp(s - m)
    denom = jnp.sum(p, axis=-1, keepdims=True)
    # divide on the EUP slot (effectively free under the surrounding MXU work)
    return p * pl.reciprocal(denom, approx=True)


def _mha(q_in, k_in, v_in, w_in, b_in, w_out, b_out, *, D, H, fuse_qk):
    """Single-batch multi-head attention on (L, D) activations.

    q_in: (Lq, D), k_in / v_in: (Lk, D)
    w_in: (D, 3D) packed [Wq | Wk | Wv], b_in: (1, 3D)
    w_out: (D, D), b_out: (1, D)
    """
    Dh = D // H
    scale = 1.0 / math.sqrt(Dh)

    if fuse_qk:
        # fused q/k projection when query and key are the same tensor (v2v)
        qk = jnp.dot(q_in, w_in[:, : 2 * D],
                     preferred_element_type=jnp.float32) + b_in[:, : 2 * D]
        q = qk[:, :D]
        k = qk[:, D:]
    else:
        q = jnp.dot(q_in, w_in[:, :D],
                    preferred_element_type=jnp.float32) + b_in[:, :D]
        k = jnp.dot(k_in, w_in[:, D: 2 * D],
                    preferred_element_type=jnp.float32) + b_in[:, D: 2 * D]
    v = jnp.dot(v_in, w_in[:, 2 * D:],
                preferred_element_type=jnp.float32) + b_in[:, 2 * D:]

    out = None
    for h in range(H):                       # static unroll over heads
        sl = slice(h * Dh, (h + 1) * Dh)
        qh = q[:, sl] * scale                # scale q (cheaper than scaling scores)
        kh = k[:, sl]
        vh = v[:, sl]
        # scores: contract last dims — no explicit K transpose
        s = lax.dot_general(qh, kh, (((1,), (1,)), ((), ())),
                            preferred_element_type=jnp.float32)
        p = _softmax_rows(s)
        oh = jnp.dot(p, vh, preferred_element_type=jnp.float32)          # (Lq, Dh)
        # fold output projection into the head loop:
        #   concat_h(O_h) @ Wo == sum_h O_h @ Wo[h*Dh:(h+1)*Dh, :]
        contrib = jnp.dot(oh, w_out[sl, :], preferred_element_type=jnp.float32)
        out = contrib if out is None else out + contrib
    return out + b_out


# ----------------------------- fused block kernel -----------------------------

def _dual_block_kernel(
    # per-batch activations (L, D)
    tgt_ref, mem_ref, qpos_ref, pos_ref,
    # v2v / l2v / v2l attention params: packed in-proj (D,3D),(1,3D); out-proj (D,D),(1,D)
    v2v_w_ref, v2v_b_ref, v2v_wo_ref, v2v_bo_ref,
    l2v_w_ref, l2v_b_ref, l2v_wo_ref, l2v_bo_ref,
    v2l_w_ref, v2l_b_ref, v2l_wo_ref, v2l_bo_ref,
    # language-query / vision-kv projections
    plq_w_ref, plq_b_ref, pvkv_w_ref, pvkv_b_ref,
    # tgt FFN
    lin1_w_ref, lin1_b_ref, lin2_w_ref, lin2_b_ref,
    # memory FFN
    lv1_w_ref, lv1_b_ref, lv2_w_ref, lv2_b_ref,
    # layer norms, packed rows: 0=norm1 1=norm2 2=norm3 3=norm_v2l_1 4=norm_v2l_2
    ln_g_ref, ln_b_ref,
    # outputs (L, D)
    tgt_out_ref, mem_out_ref,
    *, D, H, eps,
):
    f32 = jnp.float32
    tgt = tgt_ref[...].astype(f32)
    mem = mem_ref[...].astype(f32)
    qpos = qpos_ref[...].astype(f32)
    pos = pos_ref[...].astype(f32)

    def ln(idx, y):
        return _layernorm(y, ln_g_ref[idx:idx + 1, :], ln_b_ref[idx:idx + 1, :], eps)

    # ---- v2v self-attention on tgt, residual + norm1 (fused epilogue) ----
    qk_in = tgt + qpos
    tgt2 = _mha(qk_in, qk_in, tgt,
                v2v_w_ref[...], v2v_b_ref[...], v2v_wo_ref[...], v2v_bo_ref[...],
                D=D, H=H, fuse_qk=True)
    tgt = ln(0, tgt + tgt2)

    # ---- l2v cross-attention (vision query, language key/value) ----
    tgt2 = _mha(tgt + qpos, mem + pos, mem,
                l2v_w_ref[...], l2v_b_ref[...], l2v_wo_ref[...], l2v_bo_ref[...],
                D=D, H=H, fuse_qk=False)

    # ---- v2l cross-attention (uses tgt AFTER norm1, BEFORE norm2 — as in reference) ----
    l_q = jnp.dot(mem, plq_w_ref[...], preferred_element_type=f32) + plq_b_ref[...]
    v_kv = jnp.dot(tgt, pvkv_w_ref[...], preferred_element_type=f32) + pvkv_b_ref[...]
    mem2 = _mha(l_q + pos, v_kv[:, :D] + qpos, v_kv[:, D:],
                v2l_w_ref[...], v2l_b_ref[...], v2l_wo_ref[...], v2l_bo_ref[...],
                D=D, H=H, fuse_qk=False)

    # ---- tgt: residual + norm2, FFN (relu), residual + norm3 ----
    tgt = ln(1, tgt + tgt2)
    h1 = jnp.maximum(
        jnp.dot(tgt, lin1_w_ref[...], preferred_element_type=f32) + lin1_b_ref[...], 0.0)
    tgt2 = jnp.dot(h1, lin2_w_ref[...], preferred_element_type=f32) + lin2_b_ref[...]
    tgt = ln(2, tgt + tgt2)
    tgt_out_ref[...] = tgt.astype(tgt_out_ref.dtype)

    # ---- memory: residual + norm_v2l_1, FFN (relu), residual + norm_v2l_2 ----
    mem = ln(3, mem + mem2)
    h2 = jnp.maximum(
        jnp.dot(mem, lv1_w_ref[...], preferred_element_type=f32) + lv1_b_ref[...], 0.0)
    mem2 = jnp.dot(h2, lv2_w_ref[...], preferred_element_type=f32) + lv2_b_ref[...]
    mem = ln(4, mem + mem2)
    mem_out_ref[...] = mem.astype(mem_out_ref.dtype)


# ----------------------------- module forward -----------------------------

def dual_block_forward(tgt, memory, params, pos=None, query_pos=None, *, nhead, eps=1e-5):
    """forward_post of DualVisionLanguageBlock (dropouts = identity, no masks)."""
    Lt, B, D = tgt.shape
    Lm = memory.shape[0]

    if query_pos is None:
        query_pos = jnp.zeros_like(tgt)
    if pos is None:
        pos = jnp.zeros_like(memory)

    # (L, B, D) -> batch-major (B, L, D): one XLA relayout so every in-kernel
    # slice is a 2-D, sublane/lane-aligned slice of a per-batch tile.
    tgt_b = tgt.transpose(1, 0, 2)
    mem_b = memory.transpose(1, 0, 2)
    qpos_b = query_pos.transpose(1, 0, 2)
    pos_b = pos.transpose(1, 0, 2)

    weights = (
        params["v2v_w"], params["v2v_b"], params["v2v_wo"], params["v2v_bo"],
        params["l2v_w"], params["l2v_b"], params["l2v_wo"], params["l2v_bo"],
        params["v2l_w"], params["v2l_b"], params["v2l_wo"], params["v2l_bo"],
        params["proj_l_q_w"], params["proj_l_q_b"],
        params["proj_v_kv_w"], params["proj_v_kv_b"],
        params["linear1_w"], params["linear1_b"],
        params["linear2_w"], params["linear2_b"],
        params["linear_v2l_1_w"], params["linear_v2l_1_b"],
        params["linear_v2l_2_w"], params["linear_v2l_2_b"],
        params["ln_g"], params["ln_b"],
    )

    def wspec(w):
        # Whole weight resident in VMEM; constant block index across the batch
        # grid, so Pallas fetches it once (no per-step re-DMA).
        n = w.ndim

        def imap(b):
            return (0,) * n

        return pl.BlockSpec(w.shape, imap)

    in_specs = [
        pl.BlockSpec((None, Lt, D), lambda b: (b, 0, 0)),
        pl.BlockSpec((None, Lm, D), lambda b: (b, 0, 0)),
        pl.BlockSpec((None, Lt, D), lambda b: (b, 0, 0)),
        pl.BlockSpec((None, Lm, D), lambda b: (b, 0, 0)),
    ] + [wspec(w) for w in weights]

    out_specs = (
        pl.BlockSpec((None, Lt, D), lambda b: (b, 0, 0)),
        pl.BlockSpec((None, Lm, D), lambda b: (b, 0, 0)),
    )

    kernel = functools.partial(_dual_block_kernel, D=D, H=nhead, eps=eps)

    tgt_o, mem_o = pl.pallas_call(
        kernel,
        grid=(B,),
        out_shape=(jax.ShapeDtypeStruct((B, Lt, D), tgt.dtype),
                   jax.ShapeDtypeStruct((B, Lm, D), memory.dtype)),
        in_specs=in_specs,
        out_specs=out_specs,
        compiler_params=pltpu.CompilerParams(
            dimension_semantics=("parallel",)),   # batches shard across TCs on v7x
    )(tgt_b, mem_b, qpos_b, pos_b, *weights)

    return tgt_o.transpose(1, 0, 2), mem_o.transpose(1, 0, 2)


# ----------------------------- params -----------------------------

def init_params(key, d_model, dim_feedforward):
    keys = iter(jax.random.split(key, 64))

    def w(shape, scale=0.02):
        return jax.random.normal(next(keys), shape, jnp.float32) * scale

    params = {}
    # NOTE: when loading PyTorch nn.MultiheadAttention weights, transpose
    # in_proj_weight (3D, D) -> (D, 3D) and out_proj.weight (D, D) -> its transpose.
    for prefix in ("v2v", "l2v", "v2l"):
        params[f"{prefix}_w"] = w((d_model, 3 * d_model))   # [Wq | Wk | Wv]
        params[f"{prefix}_b"] = w((1, 3 * d_model))
        params[f"{prefix}_wo"] = w((d_model, d_model))
        params[f"{prefix}_bo"] = w((1, d_model))

    params.update(
        proj_l_q_w=w((d_model, d_model)), proj_l_q_b=w((1, d_model)),
        proj_v_kv_w=w((d_model, 2 * d_model)), proj_v_kv_b=w((1, 2 * d_model)),
        linear1_w=w((d_model, dim_feedforward)), linear1_b=w((1, dim_feedforward)),
        linear2_w=w((dim_feedforward, d_model)), linear2_b=w((1, d_model)),
        linear_v2l_1_w=w((d_model, dim_feedforward)), linear_v2l_1_b=w((1, dim_feedforward)),
        linear_v2l_2_w=w((dim_feedforward, d_model)), linear_v2l_2_b=w((1, d_model)),
        # packed LayerNorm params, rows: norm1, norm2, norm3, norm_v2l_1, norm_v2l_2
        ln_g=jnp.ones((5, d_model), jnp.float32),
        ln_b=jnp.zeros((5, d_model), jnp.float32),
    )
    return params


# ----------------------------- pure-JAX reference -----------------------------

def _reference_forward(tgt, memory, params, pos, query_pos, *, nhead, eps=1e-5):
    D = tgt.shape[-1]
    H = nhead
    Dh = D // H

    def ln(idx, y):
        g = params["ln_g"][idx]
        b = params["ln_b"][idx]
        mean = jnp.mean(y, axis=-1, keepdims=True)
        var = jnp.mean(jnp.square(y - mean), axis=-1, keepdims=True)
        return (y - mean) / jnp.sqrt(var + eps) * g + b

    def mha(q, k, v, w, bias, wo, bo):
        qp = q @ w[:, :D] + bias[0, :D]
        kp = k @ w[:, D:2 * D] + bias[0, D:2 * D]
        vp = v @ w[:, 2 * D:] + bias[0, 2 * D:]
        Lq, Bsz, _ = qp.shape
        Lk = kp.shape[0]

        def split_heads(x, L):
            return x.reshape(L, Bsz, H, Dh).transpose(1, 2, 0, 3)   # (B,H,L,Dh)

        qh = split_heads(qp, Lq) / math.sqrt(Dh)
        kh = split_heads(kp, Lk)
        vh = split_heads(vp, Lk)
        s = jnp.einsum('bhqd,bhkd->bhqk', qh, kh)
        p = jax.nn.softmax(s, axis=-1)
        o = jnp.einsum('bhqk,bhkd->bhqd', p, vh)
        o = o.transpose(2, 0, 1, 3).reshape(Lq, Bsz, D)
        return o @ wo + bo[0]

    qk = tgt + query_pos
    tgt2 = mha(qk, qk, tgt, params["v2v_w"], params["v2v_b"],
               params["v2v_wo"], params["v2v_bo"])
    t = ln(0, tgt + tgt2)
    tgt2 = mha(t + query_pos, memory + pos, memory, params["l2v_w"], params["l2v_b"],
               params["l2v_wo"], params["l2v_bo"])
    l_q = memory @ params["proj_l_q_w"] + params["proj_l_q_b"][0]
    v_kv = t @ params["proj_v_kv_w"] + params["proj_v_kv_b"][0]
    v_k, v_v = v_kv[..., :D], v_kv[..., D:]
    mem2 = mha(l_q + pos, v_k + query_pos, v_v, params["v2l_w"], params["v2l_b"],
               params["v2l_wo"], params["v2l_bo"])
    t = ln(1, t + tgt2)
    h1 = jax.nn.relu(t @ params["linear1_w"] + params["linear1_b"][0])
    tgt2 = h1 @ params["linear2_w"] + params["linear2_b"][0]
    t = ln(2, t + tgt2)
    m = ln(3, memory + mem2)
    h2 = jax.nn.relu(m @ params["linear_v2l_1_w"] + params["linear_v2l_1_b"][0])
    mem2 = h2 @ params["linear_v2l_2_w"] + params["linear_v2l_2_b"][0]
    m = ln(4, m + mem2)
    return t, m


# ----------------------------- main -----------------------------

if __name__ == "__main__":
    d_model, nhead, dim_ff = 32, 4, 64
    t, hh, ww = 1, 4, 4
    Lt = t * hh * ww          # 16 visual tokens  (sequence length of tgt)
    Lm = 8                    # 8 language tokens (sequence length of memory)
    B = 2                     # batch

    key = jax.random.PRNGKey(0)
    k_tgt, k_mem, k_pos, k_qpos, k_par = jax.random.split(key, 5)
    tgt = jax.random.normal(k_tgt, (Lt, B, d_model), jnp.float32)
    memory = jax.random.normal(k_mem, (Lm, B, d_model), jnp.float32)
    pos = jax.random.normal(k_pos, (Lm, B, d_model), jnp.float32)
    query_pos = jax.random.normal(k_qpos, (Lt, B, d_model), jnp.float32)

    params = init_params(k_par, d_model, dim_ff)

    # TODO(synk): key_padding_mask support (forward is called with None here).
    fwd = jax.jit(functools.partial(dual_block_forward, nhead=nhead))
    tgt_out, mem_out = fwd(tgt, memory, params, pos=pos, query_pos=query_pos)
    jax.block_until_ready((tgt_out, mem_out))

    assert tgt_out.shape == (Lt, B, d_model)
    assert mem_out.shape == (Lm, B, d_model)
    assert bool(jnp.all(jnp.isfinite(tgt_out)))
    assert bool(jnp.all(jnp.isfinite(mem_out)))

    # Correctness vs pure-JAX reference (loose tolerance: approx softmax reciprocal).
    with jax.default_matmul_precision("highest"):
        ref_tgt, ref_mem = _reference_forward(tgt, memory, params,
                                              pos=pos, query_pos=query_pos, nhead=nhead)
    err_t = float(jnp.max(jnp.abs(tgt_out - ref_tgt)))
    err_m = float(jnp.max(jnp.abs(mem_out - ref_mem)))
    assert err_t < 5e-2 and err_m < 5e-2, (err_t, err_m)

    print("KERNEL_OK")
</pallas_src>

<mosaic_0001>
module attributes {stable_mosaic.version = 11 : i64} {
  func.func @_dual_block_kernel(%arg0: i32, %arg1: memref<1x16x32xf32, #tpu.memory_space<vmem>>, %arg2: memref<1x8x32xf32, #tpu.memory_space<vmem>>, %arg3: memref<1x16x32xf32, #tpu.memory_space<vmem>>, %arg4: memref<1x8x32xf32, #tpu.memory_space<vmem>>, %arg5: memref<32x96xf32, #tpu.memory_space<vmem>>, %arg6: memref<1x96xf32, #tpu.memory_space<vmem>>, %arg7: memref<32x32xf32, #tpu.memory_space<vmem>>, %arg8: memref<1x32xf32, #tpu.memory_space<vmem>>, %arg9: memref<32x96xf32, #tpu.memory_space<vmem>>, %arg10: memref<1x96xf32, #tpu.memory_space<vmem>>, %arg11: memref<32x32xf32, #tpu.memory_space<vmem>>, %arg12: memref<1x32xf32, #tpu.memory_space<vmem>>, %arg13: memref<32x96xf32, #tpu.memory_space<vmem>>, %arg14: memref<1x96xf32, #tpu.memory_space<vmem>>, %arg15: memref<32x32xf32, #tpu.memory_space<vmem>>, %arg16: memref<1x32xf32, #tpu.memory_space<vmem>>, %arg17: memref<32x32xf32, #tpu.memory_space<vmem>>, %arg18: memref<1x32xf32, #tpu.memory_space<vmem>>, %arg19: memref<32x64xf32, #tpu.memory_space<vmem>>, %arg20: memref<1x64xf32, #tpu.memory_space<vmem>>, %arg21: memref<32x64xf32, #tpu.memory_space<vmem>>, %arg22: memref<1x64xf32, #tpu.memory_space<vmem>>, %arg23: memref<64x32xf32, #tpu.memory_space<vmem>>, %arg24: memref<1x32xf32, #tpu.memory_space<vmem>>, %arg25: memref<32x64xf32, #tpu.memory_space<vmem>>, %arg26: memref<1x64xf32, #tpu.memory_space<vmem>>, %arg27: memref<64x32xf32, #tpu.memory_space<vmem>>, %arg28: memref<1x32xf32, #tpu.memory_space<vmem>>, %arg29: memref<5x32xf32, #tpu.memory_space<vmem>>, %arg30: memref<5x32xf32, #tpu.memory_space<vmem>>, %arg31: memref<1x16x32xf32, #tpu.memory_space<vmem>>, %arg32: memref<1x8x32xf32, #tpu.memory_space<vmem>>) attributes {dimension_semantics = [#tpu.dimension_semantics<parallel>], iteration_bounds = array<i64: 2>, scalar_prefetch = 0 : i64, scratch_operands = 0 : i64, tpu.core_type = #tpu.core_type<tc>, window_params = [{transform_indices = @transform_0, window_bounds = array<i64: 1, 16, 32>}, {transform_indices = @transform_1, window_bounds = array<i64: 1, 8, 32>}, {transform_indices = @transform_2, window_bounds = array<i64: 1, 16, 32>}, {transform_indices = @transform_3, window_bounds = array<i64: 1, 8, 32>}, {pipeline_mode = #tpu.pipeline_mode<synchronous>, transform_indices = @transform_4, window_bounds = array<i64: 32, 96>}, {pipeline_mode = #tpu.pipeline_mode<synchronous>, transform_indices = @transform_5, window_bounds = array<i64: 1, 96>}, {pipeline_mode = #tpu.pipeline_mode<synchronous>, transform_indices = @transform_6, window_bounds = array<i64: 32, 32>}, {pipeline_mode = #tpu.pipeline_mode<synchronous>, transform_indices = @transform_7, window_bounds = array<i64: 1, 32>}, {pipeline_mode = #tpu.pipeline_mode<synchronous>, transform_indices = @transform_8, window_bounds = array<i64: 32, 96>}, {pipeline_mode = #tpu.pipeline_mode<synchronous>, transform_indices = @transform_9, window_bounds = array<i64: 1, 96>}, {pipeline_mode = #tpu.pipeline_mode<synchronous>, transform_indices = @transform_10, window_bounds = array<i64: 32, 32>}, {pipeline_mode = #tpu.pipeline_mode<synchronous>, transform_indices = @transform_11, window_bounds = array<i64: 1, 32>}, {pipeline_mode = #tpu.pipeline_mode<synchronous>, transform_indices = @transform_12, window_bounds = array<i64: 32, 96>}, {pipeline_mode = #tpu.pipeline_mode<synchronous>, transform_indices = @transform_13, window_bounds = array<i64: 1, 96>}, {pipeline_mode = #tpu.pipeline_mode<synchronous>, transform_indices = @transform_14, window_bounds = array<i64: 32, 32>}, {pipeline_mode = #tpu.pipeline_mode<synchronous>, transform_indices = @transform_15, window_bounds = array<i64: 1, 32>}, {pipeline_mode = #tpu.pipeline_mode<synchronous>, transform_indices = @transform_16, window_bounds = array<i64: 32, 32>}, {pipeline_mode = #tpu.pipeline_mode<synchronous>, transform_indices = @transform_17, window_bounds = array<i64: 1, 32>}, {pipeline_mode = #tpu.pipeline_mode<synchronous>, transform_indices = @transform_18, window_bounds = array<i64: 32, 64>}, {pipeline_mode = #tpu.pipeline_mode<synchronous>, transform_indices = @transform_19, window_bounds = array<i64: 1, 64>}, {pipeline_mode = #tpu.pipeline_mode<synchronous>, transform_indices = @transform_20, window_bounds = array<i64: 32, 64>}, {pipeline_mode = #tpu.pipeline_mode<synchronous>, transform_indices = @transform_21, window_bounds = array<i64: 1, 64>}, {pipeline_mode = #tpu.pipeline_mode<synchronous>, transform_indices = @transform_22, window_bounds = array<i64: 64, 32>}, {pipeline_mode = #tpu.pipeline_mode<synchronous>, transform_indices = @transform_23, window_bounds = array<i64: 1, 32>}, {pipeline_mode = #tpu.pipeline_mode<synchronous>, transform_indices = @transform_24, window_bounds = array<i64: 32, 64>}, {pipeline_mode = #tpu.pipeline_mode<synchronous>, transform_indices = @transform_25, window_bounds = array<i64: 1, 64>}, {pipeline_mode = #tpu.pipeline_mode<synchronous>, transform_indices = @transform_26, window_bounds = array<i64: 64, 32>}, {pipeline_mode = #tpu.pipeline_mode<synchronous>, transform_indices = @transform_27, window_bounds = array<i64: 1, 32>}, {pipeline_mode = #tpu.pipeline_mode<synchronous>, transform_indices = @transform_28, window_bounds = array<i64: 5, 32>}, {pipeline_mode = #tpu.pipeline_mode<synchronous>, transform_indices = @transform_29, window_bounds = array<i64: 5, 32>}, {transform_indices = @transform_30, window_bounds = array<i64: 1, 16, 32>}, {transform_indices = @transform_31, window_bounds = array<i64: 1, 8, 32>}]} {
    %c0 = arith.constant 0 : index
    %c0_0 = arith.constant 0 : index
    %c0_1 = arith.constant 0 : index
    %0 = vector.load %arg1[%c0, %c0_0, %c0_1] : memref<1x16x32xf32, #tpu.memory_space<vmem>>, vector<1x16x32xf32>
    %1 = vector.shape_cast %0 : vector<1x16x32xf32> to vector<16x32xf32>
    %c0_2 = arith.constant 0 : index
    %c0_3 = arith.constant 0 : index
    %c0_4 = arith.constant 0 : index
    %2 = vector.load %arg2[%c0_2, %c0_3, %c0_4] : memref<1x8x32xf32, #tpu.memory_space<vmem>>, vector<1x8x32xf32>
    %3 = vector.shape_cast %2 : vector<1x8x32xf32> to vector<8x32xf32>
    %c0_5 = arith.constant 0 : index
    %c0_6 = arith.constant 0 : index
    %c0_7 = arith.constant 0 : index
    %4 = vector.load %arg3[%c0_5, %c0_6, %c0_7] : memref<1x16x32xf32, #tpu.memory_space<vmem>>, vector<1x16x32xf32>
    %5 = vector.shape_cast %4 : vector<1x16x32xf32> to vector<16x32xf32>
    %c0_8 = arith.constant 0 : index
    %c0_9 = arith.constant 0 : index
    %c0_10 = arith.constant 0 : index
    %6 = vector.load %arg4[%c0_8, %c0_9, %c0_10] : memref<1x8x32xf32, #tpu.memory_space<vmem>>, vector<1x8x32xf32>
    %7 = vector.shape_cast %6 : vector<1x8x32xf32> to vector<8x32xf32>
    %8 = arith.addf %1, %5 : vector<16x32xf32>
    %c0_11 = arith.constant 0 : index
    %c0_12 = arith.constant 0 : index
    %9 = vector.load %arg5[%c0_11, %c0_12] : memref<32x96xf32, #tpu.memory_space<vmem>>, vector<32x96xf32>
    %c0_13 = arith.constant 0 : index
    %c0_14 = arith.constant 0 : index
    %10 = vector.load %arg6[%c0_13, %c0_14] : memref<1x96xf32, #tpu.memory_space<vmem>>, vector<1x96xf32>
    %c0_15 = arith.constant 0 : index
    %c0_16 = arith.constant 0 : index
    %11 = vector.load %arg7[%c0_15, %c0_16] : memref<32x32xf32, #tpu.memory_space<vmem>>, vector<32x32xf32>
    %c0_17 = arith.constant 0 : index
    %c0_18 = arith.constant 0 : index
    %12 = vector.load %arg8[%c0_17, %c0_18] : memref<1x32xf32, #tpu.memory_space<vmem>>, vector<1x32xf32>
    %13 = vector.extract_strided_slice %9 {offsets = [0, 0], sizes = [32, 64], strides = [1, 1]} : vector<32x96xf32> to vector<32x64xf32>
    %cst = arith.constant dense<0.000000e+00> : vector<16x64xf32>
    %14 = tpu.matmul %8, %13, %cst {dimension_numbers = #tpu.dot_dimension_numbers<[1], [0], [0], [1], [0, 0, 1, 1], [], []>} : vector<16x32xf32>, vector<32x64xf32>, vector<16x64xf32> -> vector<16x64xf32>
    %15 = vector.extract_strided_slice %10 {offsets = [0, 0], sizes = [1, 64], strides = [1, 1]} : vector<1x96xf32> to vector<1x64xf32>
    %16 = vector.broadcast %15 : vector<1x64xf32> to vector<16x64xf32>
    %17 = arith.addf %14, %16 : vector<16x64xf32>
    %18 = vector.extract_strided_slice %17 {offsets = [0, 0], sizes = [16, 32], strides = [1, 1]} : vector<16x64xf32> to vector<16x32xf32>
    %19 = vector.extract_strided_slice %17 {offsets = [0, 32], sizes = [16, 32], strides = [1, 1]} : vector<16x64xf32> to vector<16x32xf32>
    %20 = vector.extract_strided_slice %9 {offsets = [0, 64], sizes = [32, 32], strides = [1, 1]} : vector<32x96xf32> to vector<32x32xf32>
    %cst_19 = arith.constant dense<0.000000e+00> : vector<16x32xf32>
    %21 = tpu.matmul %1, %20, %cst_19 {dimension_numbers = #tpu.dot_dimension_numbers<[1], [0], [0], [1], [0, 0, 1, 1], [], []>} : vector<16x32xf32>, vector<32x32xf32>, vector<16x32xf32> -> vector<16x32xf32>
    %22 = vector.extract_strided_slice %10 {offsets = [0, 64], sizes = [1, 32], strides = [1, 1]} : vector<1x96xf32> to vector<1x32xf32>
    %23 = vector.broadcast %22 : vector<1x32xf32> to vector<16x32xf32>
    %24 = arith.addf %21, %23 : vector<16x32xf32>
    %25 = vector.extract_strided_slice %18 {offsets = [0, 0], sizes = [16, 8], strides = [1, 1]} : vector<16x32xf32> to vector<16x8xf32>
    %cst_20 = arith.constant 0.353553385 : f32
    %26 = vector.broadcast %cst_20 : f32 to vector<16x8xf32>
    %27 = arith.mulf %25, %26 : vector<16x8xf32>
    %28 = vector.extract_strided_slice %19 {offsets = [0, 0], sizes = [16, 8], strides = [1, 1]} : vector<16x32xf32> to vector<16x8xf32>
    %29 = vector.extract_strided_slice %24 {offsets = [0, 0], sizes = [16, 8], strides = [1, 1]} : vector<16x32xf32> to vector<16x8xf32>
    %cst_21 = arith.constant dense<0.000000e+00> : vector<16x16xf32>
    %30 = tpu.matmul %27, %28, %cst_21 {dimension_numbers = #tpu.dot_dimension_numbers<[1], [1], [0], [0], [0, 0, 1, 0], [], []>} : vector<16x8xf32>, vector<16x8xf32>, vector<16x16xf32> -> vector<16x16xf32>
    %cst_22 = arith.constant dense<0xFF800000> : vector<16xf32>
    %31 = vector.multi_reduction <maximumf>, %30, %cst_22 [1] : vector<16x16xf32> to vector<16xf32>
    %32 = vector.shape_cast %31 : vector<16xf32> to vector<16x1xf32>
    %33 = vector.broadcast %32 : vector<16x1xf32> to vector<16x16xf32>
    %34 = arith.subf %30, %33 : vector<16x16xf32>
    %35 = math.exp %34 : vector<16x16xf32>
    %cst_23 = arith.constant dense<0.000000e+00> : vector<16xf32>
    %36 = vector.multi_reduction <add>, %35, %cst_23 [1] : vector<16x16xf32> to vector<16xf32>
    %37 = vector.shape_cast %36 : vector<16xf32> to vector<16x1xf32>
    %38 = tpu.reciprocal %37 {approx = true} : vector<16x1xf32> -> vector<16x1xf32>
    %39 = vector.broadcast %38 : vector<16x1xf32> to vector<16x16xf32>
    %40 = arith.mulf %35, %39 : vector<16x16xf32>
    %cst_24 = arith.constant dense<0.000000e+00> : vector<16x8xf32>
    %41 = tpu.matmul %40, %29, %cst_24 {dimension_numbers = #tpu.dot_dimension_numbers<[1], [0], [0], [1], [0, 0, 1, 1], [], []>} : vector<16x16xf32>, vector<16x8xf32>, vector<16x8xf32> -> vector<16x8xf32>
    %42 = vector.extract_strided_slice %11 {offsets = [0, 0], sizes = [8, 32], strides = [1, 1]} : vector<32x32xf32> to vector<8x32xf32>
    %cst_25 = arith.constant dense<0.000000e+00> : vector<16x32xf32>
    %43 = tpu.matmul %41, %42, %cst_25 {dimension_numbers = #tpu.dot_dimension_numbers<[1], [0], [0], [1], [0, 0, 1, 1], [], []>} : vector<16x8xf32>, vector<8x32xf32>, vector<16x32xf32> -> vector<16x32xf32>
    %44 = vector.extract_strided_slice %18 {offsets = [0, 8], sizes = [16, 8], strides = [1, 1]} : vector<16x32xf32> to vector<16x8xf32>
    %cst_26 = arith.constant 0.353553385 : f32
    %45 = vector.broadcast %cst_26 : f32 to vector<16x8xf32>
    %46 = arith.mulf %44, %45 : vector<16x8xf32>
    %47 = vector.extract_strided_slice %19 {offsets = [0, 8], sizes = [16, 8], strides = [1, 1]} : vector<16x32xf32> to vector<16x8xf32>
    %48 = vector.extract_strided_slice %24 {offsets = [0, 8], sizes = [16, 8], strides = [1, 1]} : vector<16x32xf32> to vector<16x8xf32>
    %cst_27 = arith.constant dense<0.000000e+00> : vector<16x16xf32>
    %49 = tpu.matmul %46, %47, %cst_27 {dimension_numbers = #tpu.dot_dimension_numbers<[1], [1], [0], [0], [0, 0, 1, 0], [], []>} : vector<16x8xf32>, vector<16x8xf32>, vector<16x16xf32> -> vector<16x16xf32>
    %cst_28 = arith.constant dense<0xFF800000> : vector<16xf32>
    %50 = vector.multi_reduction <maximumf>, %49, %cst_28 [1] : vector<16x16xf32> to vector<16xf32>
    %51 = vector.shape_cast %50 : vector<16xf32> to vector<16x1xf32>
    %52 = vector.broadcast %51 : vector<16x1xf32> to vector<16x16xf32>
    %53 = arith.subf %49, %52 : vector<16x16xf32>
    %54 = math.exp %53 : vector<16x16xf32>
    %cst_29 = arith.constant dense<0.000000e+00> : vector<16xf32>
    %55 = vector.multi_reduction <add>, %54, %cst_29 [1] : vector<16x16xf32> to vector<16xf32>
    %56 = vector.shape_cast %55 : vector<16xf32> to vector<16x1xf32>
    %57 = tpu.reciprocal %56 {approx = true} : vector<16x1xf32> -> vector<16x1xf32>
    %58 = vector.broadcast %57 : vector<16x1xf32> to vector<16x16xf32>
    %59 = arith.mulf %54, %58 : vector<16x16xf32>
    %cst_30 = arith.constant dense<0.000000e+00> : vector<16x8xf32>
    %60 = tpu.matmul %59, %48, %cst_30 {dimension_numbers = #tpu.dot_dimension_numbers<[1], [0], [0], [1], [0, 0, 1, 1], [], []>} : vector<16x16xf32>, vector<16x8xf32>, vector<16x8xf32> -> vector<16x8xf32>
    %61 = vector.extract_strided_slice %11 {offsets = [8, 0], sizes = [8, 32], strides = [1, 1]} : vector<32x32xf32> to vector<8x32xf32>
    %cst_31 = arith.constant dense<0.000000e+00> : vector<16x32xf32>
    %62 = tpu.matmul %60, %61, %cst_31 {dimension_numbers = #tpu.dot_dimension_numbers<[1], [0], [0], [1], [0, 0, 1, 1], [], []>} : vector<16x8xf32>, vector<8x32xf32>, vector<16x32xf32> -> vector<16x32xf32>
    %63 = arith.addf %43, %62 : vector<16x32xf32>
    %64 = vector.extract_strided_slice %18 {offsets = [0, 16], sizes = [16, 8], strides = [1, 1]} : vector<16x32xf32> to vector<16x8xf32>
    %cst_32 = arith.constant 0.353553385 : f32
    %65 = vector.broadcast %cst_32 : f32 to vector<16x8xf32>
    %66 = arith.mulf %64, %65 : vector<16x8xf32>
    %67 = vector.extract_strided_slice %19 {offsets = [0, 16], sizes = [16, 8], strides = [1, 1]} : vector<16x32xf32> to vector<16x8xf32>
    %68 = vector.extract_strided_slice %24 {offsets = [0, 16], sizes = [16, 8], strides = [1, 1]} : vector<16x32xf32> to vector<16x8xf32>
    %cst_33 = arith.constant dense<0.000000e+00> : vector<16x16xf32>
    %69 = tpu.matmul %66, %67, %cst_33 {dimension_numbers = #tpu.dot_dimension_numbers<[1], [1], [0], [0], [0, 0, 1, 0], [], []>} : vector<16x8xf32>, vector<16x8xf32>, vector<16x16xf32> -> vector<16x16xf32>
    %cst_34 = arith.constant dense<0xFF800000> : vector<16xf32>
    %70 = vector.multi_reduction <maximumf>, %69, %cst_34 [1] : vector<16x16xf32> to vector<16xf32>
    %71 = vector.shape_cast %70 : vector<16xf32> to vector<16x1xf32>
    %72 = vector.broadcast %71 : vector<16x1xf32> to vector<16x16xf32>
    %73 = arith.subf %69, %72 : vector<16x16xf32>
    %74 = math.exp %73 : vector<16x16xf32>
    %cst_35 = arith.constant dense<0.000000e+00> : vector<16xf32>
    %75 = vector.multi_reduction <add>, %74, %cst_35 [1] : vector<16x16xf32> to vector<16xf32>
    %76 = vector.shape_cast %75 : vector<16xf32> to vector<16x1xf32>
    %77 = tpu.reciprocal %76 {approx = true} : vector<16x1xf32> -> vector<16x1xf32>
    %78 = vector.broadcast %77 : vector<16x1xf32> to vector<16x16xf32>
    %79 = arith.mulf %74, %78 : vector<16x16xf32>
    %cst_36 = arith.constant dense<0.000000e+00> : vector<16x8xf32>
    %80 = tpu.matmul %79, %68, %cst_36 {dimension_numbers = #tpu.dot_dimension_numbers<[1], [0], [0], [1], [0, 0, 1, 1], [], []>} : vector<16x16xf32>, vector<16x8xf32>, vector<16x8xf32> -> vector<16x8xf32>
    %81 = vector.extract_strided_slice %11 {offsets = [16, 0], sizes = [8, 32], strides = [1, 1]} : vector<32x32xf32> to vector<8x32xf32>
    %cst_37 = arith.constant dense<0.000000e+00> : vector<16x32xf32>
    %82 = tpu.matmul %80, %81, %cst_37 {dimension_numbers = #tpu.dot_dimension_numbers<[1], [0], [0], [1], [0, 0, 1, 1], [], []>} : vector<16x8xf32>, vector<8x32xf32>, vector<16x32xf32> -> vector<16x32xf32>
    %83 = arith.addf %63, %82 : vector<16x32xf32>
    %84 = vector.extract_strided_slice %18 {offsets = [0, 24], sizes = [16, 8], strides = [1, 1]} : vector<16x32xf32> to vector<16x8xf32>
    %cst_38 = arith.constant 0.353553385 : f32
    %85 = vector.broadcast %cst_38 : f32 to vector<16x8xf32>
    %86 = arith.mulf %84, %85 : vector<16x8xf32>
    %87 = vector.extract_strided_slice %19 {offsets = [0, 24], sizes = [16, 8], strides = [1, 1]} : vector<16x32xf32> to vector<16x8xf32>
    %88 = vector.extract_strided_slice %24 {offsets = [0, 24], sizes = [16, 8], strides = [1, 1]} : vector<16x32xf32> to vector<16x8xf32>
    %cst_39 = arith.constant dense<0.000000e+00> : vector<16x16xf32>
    %89 = tpu.matmul %86, %87, %cst_39 {dimension_numbers = #tpu.dot_dimension_numbers<[1], [1], [0], [0], [0, 0, 1, 0], [], []>} : vector<16x8xf32>, vector<16x8xf32>, vector<16x16xf32> -> vector<16x16xf32>
    %cst_40 = arith.constant dense<0xFF800000> : vector<16xf32>
    %90 = vector.multi_reduction <maximumf>, %89, %cst_40 [1] : vector<16x16xf32> to vector<16xf32>
    %91 = vector.shape_cast %90 : vector<16xf32> to vector<16x1xf32>
    %92 = vector.broadcast %91 : vector<16x1xf32> to vector<16x16xf32>
    %93 = arith.subf %89, %92 : vector<16x16xf32>
    %94 = math.exp %93 : vector<16x16xf32>
    %cst_41 = arith.constant dense<0.000000e+00> : vector<16xf32>
    %95 = vector.multi_reduction <add>, %94, %cst_41 [1] : vector<16x16xf32> to vector<16xf32>
    %96 = vector.shape_cast %95 : vector<16xf32> to vector<16x1xf32>
    %97 = tpu.reciprocal %96 {approx = true} : vector<16x1xf32> -> vector<16x1xf32>
    %98 = vector.broadcast %97 : vector<16x1xf32> to vector<16x16xf32>
    %99 = arith.mulf %94, %98 : vector<16x16xf32>
    %cst_42 = arith.constant dense<0.000000e+00> : vector<16x8xf32>
    %100 = tpu.matmul %99, %88, %cst_42 {dimension_numbers = #tpu.dot_dimension_numbers<[1], [0], [0], [1], [0, 0, 1, 1], [], []>} : vector<16x16xf32>, vector<16x8xf32>, vector<16x8xf32> -> vector<16x8xf32>
    %101 = vector.extract_strided_slice %11 {offsets = [24, 0], sizes = [8, 32], strides = [1, 1]} : vector<32x32xf32> to vector<8x32xf32>
    %cst_43 = arith.constant dense<0.000000e+00> : vector<16x32xf32>
    %102 = tpu.matmul %100, %101, %cst_43 {dimension_numbers = #tpu.dot_dimension_numbers<[1], [0], [0], [1], [0, 0, 1, 1], [], []>} : vector<16x8xf32>, vector<8x32xf32>, vector<16x32xf32> -> vector<16x32xf32>
    %103 = arith.addf %83, %102 : vector<16x32xf32>
    %104 = vector.broadcast %12 : vector<1x32xf32> to vector<16x32xf32>
    %105 = arith.addf %103, %104 : vector<16x32xf32>
    %106 = arith.addf %1, %105 : vector<16x32xf32>
    %c0_44 = arith.constant 0 : index
    %c0_45 = arith.constant 0 : index
    %107 = vector.load %arg29[%c0_44, %c0_45] : memref<5x32xf32, #tpu.memory_space<vmem>>, vector<1x32xf32>
    %c0_46 = arith.constant 0 : index
    %c0_47 = arith.constant 0 : index
    %108 = vector.load %arg30[%c0_46, %c0_47] : memref<5x32xf32, #tpu.memory_space<vmem>>, vector<1x32xf32>
    %cst_48 = arith.constant dense<0.000000e+00> : vector<16xf32>
    %109 = vector.multi_reduction <add>, %106, %cst_48 [1] : vector<16x32xf32> to vector<16xf32>
    %110 = vector.shape_cast %109 : vector<16xf32> to vector<16x1xf32>
    %cst_49 = arith.constant 3.200000e+01 : f32
    %111 = vector.broadcast %cst_49 : f32 to vector<16x1xf32>
    %112 = arith.divf %110, %111 : vector<16x1xf32>
    %113 = vector.broadcast %112 : vector<16x1xf32> to vector<16x32xf32>
    %114 = arith.subf %106, %113 : vector<16x32xf32>
    %115 = arith.mulf %114, %114 : vector<16x32xf32>
    %cst_50 = arith.constant dense<0.000000e+00> : vector<16xf32>
    %116 = vector.multi_reduction <add>, %115, %cst_50 [1] : vector<16x32xf32> to vector<16xf32>
    %117 = vector.shape_cast %116 : vector<16xf32> to vector<16x1xf32>
    %cst_51 = arith.constant 3.200000e+01 : f32
    %118 = vector.broadcast %cst_51 : f32 to vector<16x1xf32>
    %119 = arith.divf %117, %118 : vector<16x1xf32>
    %120 = vector.broadcast %112 : vector<16x1xf32> to vector<16x32xf32>
    %121 = arith.subf %106, %120 : vector<16x32xf32>
    %cst_52 = arith.constant 9.99999974E-6 : f32
    %122 = vector.broadcast %cst_52 : f32 to vector<16x1xf32>
    %123 = arith.addf %119, %122 : vector<16x1xf32>
    %124 = math.rsqrt %123 : vector<16x1xf32>
    %125 = vector.broadcast %124 : vector<16x1xf32> to vector<16x32xf32>
    %126 = arith.mulf %121, %125 : vector<16x32xf32>
    %127 = vector.broadcast %107 : vector<1x32xf32> to vector<16x32xf32>
    %128 = arith.mulf %126, %127 : vector<16x32xf32>
    %129 = vector.broadcast %108 : vector<1x32xf32> to vector<16x32xf32>
    %130 = arith.addf %128, %129 : vector<16x32xf32>
    %131 = arith.addf %130, %5 : vector<16x32xf32>
    %132 = arith.addf %3, %7 : vector<8x32xf32>
    %c0_53 = arith.constant 0 : index
    %c0_54 = arith.constant 0 : index
    %133 = vector.load %arg9[%c0_53, %c0_54] : memref<32x96xf32, #tpu.memory_space<vmem>>, vector<32x96xf32>
    %c0_55 = arith.constant 0 : index
    %c0_56 = arith.constant 0 : index
    %134 = vector.load %arg10[%c0_55, %c0_56] : memref<1x96xf32, #tpu.memory_space<vmem>>, vector<1x96xf32>
    %c0_57 = arith.constant 0 : index
    %c0_58 = arith.constant 0 : index
    %135 = vector.load %arg11[%c0_57, %c0_58] : memref<32x32xf32, #tpu.memory_space<vmem>>, vector<32x32xf32>
    %c0_59 = arith.constant 0 : index
    %c0_60 = arith.constant 0 : index
    %136 = vector.load %arg12[%c0_59, %c0_60] : memref<1x32xf32, #tpu.memory_space<vmem>>, vector<1x32xf32>
    %137 = vector.extract_strided_slice %133 {offsets = [0, 0], sizes = [32, 32], strides = [1, 1]} : vector<32x96xf32> to vector<32x32xf32>
    %cst_61 = arith.constant dense<0.000000e+00> : vector<16x32xf32>
    %138 = tpu.matmul %131, %137, %cst_61 {dimension_numbers = #tpu.dot_dimension_numbers<[1], [0], [0], [1], [0, 0, 1, 1], [], []>} : vector<16x32xf32>, vector<32x32xf32>, vector<16x32xf32> -> vector<16x32xf32>
    %139 = vector.extract_strided_slice %134 {offsets = [0, 0], sizes = [1, 32], strides = [1, 1]} : vector<1x96xf32> to vector<1x32xf32>
    %140 = vector.broadcast %139 : vector<1x32xf32> to vector<16x32xf32>
    %141 = arith.addf %138, %140 : vector<16x32xf32>
    %142 = vector.extract_strided_slice %133 {offsets = [0, 32], sizes = [32, 32], strides = [1, 1]} : vector<32x96xf32> to vector<32x32xf32>
    %cst_62 = arith.constant dense<0.000000e+00> : vector<8x32xf32>
    %143 = tpu.matmul %132, %142, %cst_62 {dimension_numbers = #tpu.dot_dimension_numbers<[1], [0], [0], [1], [0, 0, 1, 1], [], []>} : vector<8x32xf32>, vector<32x32xf32>, vector<8x32xf32> -> vector<8x32xf32>
    %144 = vector.extract_strided_slice %134 {offsets = [0, 32], sizes = [1, 32], strides = [1, 1]} : vector<1x96xf32> to vector<1x32xf32>
    %145 = vector.broadcast %144 : vector<1x32xf32> to vector<8x32xf32>
    %146 = arith.addf %143, %145 : vector<8x32xf32>
    %147 = vector.extract_strided_slice %133 {offsets = [0, 64], sizes = [32, 32], strides = [1, 1]} : vector<32x96xf32> to vector<32x32xf32>
    %cst_63 = arith.constant dense<0.000000e+00> : vector<8x32xf32>
    %148 = tpu.matmul %3, %147, %cst_63 {dimension_numbers = #tpu.dot_dimension_numbers<[1], [0], [0], [1], [0, 0, 1, 1], [], []>} : vector<8x32xf32>, vector<32x32xf32>, vector<8x32xf32> -> vector<8x32xf32>
    %149 = vector.extract_strided_slice %134 {offsets = [0, 64], sizes = [1, 32], strides = [1, 1]} : vector<1x96xf32> to vector<1x32xf32>
    %150 = vector.broadcast %149 : vector<1x32xf32> to vector<8x32xf32>
    %151 = arith.addf %148, %150 : vector<8x32xf32>
    %152 = vector.extract_strided_slice %141 {offsets = [0, 0], sizes = [16, 8], strides = [1, 1]} : vector<16x32xf32> to vector<16x8xf32>
    %cst_64 = arith.constant 0.353553385 : f32
    %153 = vector.broadcast %cst_64 : f32 to vector<16x8xf32>
    %154 = arith.mulf %152, %153 : vector<16x8xf32>
    %155 = vector.extract_strided_slice %146 {offsets = [0, 0], sizes = [8, 8], strides = [1, 1]} : vector<8x32xf32> to vector<8x8xf32>
    %156 = vector.extract_strided_slice %151 {offsets = [0, 0], sizes = [8, 8], strides = [1, 1]} : vector<8x32xf32> to vector<8x8xf32>
    %cst_65 = arith.constant dense<0.000000e+00> : vector<16x8xf32>
    %157 = tpu.matmul %154, %155, %cst_65 {dimension_numbers = #tpu.dot_dimension_numbers<[1], [1], [0], [0], [0, 0, 1, 0], [], []>} : vector<16x8xf32>, vector<8x8xf32>, vector<16x8xf32> -> vector<16x8xf32>
    %cst_66 = arith.constant dense<0xFF800000> : vector<16xf32>
    %158 = vector.multi_reduction <maximumf>, %157, %cst_66 [1] : vector<16x8xf32> to vector<16xf32>
    %159 = vector.shape_cast %158 : vector<16xf32> to vector<16x1xf32>
    %160 = vector.broadcast %159 : vector<16x1xf32> to vector<16x8xf32>
    %161 = arith.subf %157, %160 : vector<16x8xf32>
    %162 = math.exp %161 : vector<16x8xf32>
    %cst_67 = arith.constant dense<0.000000e+00> : vector<16xf32>
    %163 = vector.multi_reduction <add>, %162, %cst_67 [1] : vector<16x8xf32> to vector<16xf32>
    %164 = vector.shape_cast %163 : vector<16xf32> to vector<16x1xf32>
    %165 = tpu.reciprocal %164 {approx = true} : vector<16x1xf32> -> vector<16x1xf32>
    %166 = vector.broadcast %165 : vector<16x1xf32> to vector<16x8xf32>
    %167 = arith.mulf %162, %166 : vector<16x8xf32>
    %cst_68 = arith.constant dense<0.000000e+00> : vector<16x8xf32>
    %168 = tpu.matmul %167, %156, %cst_68 {dimension_numbers = #tpu.dot_dimension_numbers<[1], [0], [0], [1], [0, 0, 1, 1], [], []>} : vector<16x8xf32>, vector<8x8xf32>, vector<16x8xf32> -> vector<16x8xf32>
    %169 = vector.extract_strided_slice %135 {offsets = [0, 0], sizes = [8, 32], strides = [1, 1]} : vector<32x32xf32> to vector<8x32xf32>
    %cst_69 = arith.constant dense<0.000000e+00> : vector<16x32xf32>
    %170 = tpu.matmul %168, %169, %cst_69 {dimension_numbers = #tpu.dot_dimension_numbers<[1], [0], [0], [1], [0, 0, 1, 1], [], []>} : vector<16x8xf32>, vector<8x32xf32>, vector<16x32xf32> -> vector<16x32xf32>
    %171 = vector.extract_strided_slice %141 {offsets = [0, 8], sizes = [16, 8], strides = [1, 1]} : vector<16x32xf32> to vector<16x8xf32>
    %cst_70 = arith.constant 0.353553385 : f32
    %172 = vector.broadcast %cst_70 : f32 to vector<16x8xf32>
    %173 = arith.mulf %171, %172 : vector<16x8xf32>
    %174 = vector.extract_strided_slice %146 {offsets = [0, 8], sizes = [8, 8], strides = [1, 1]} : vector<8x32xf32> to vector<8x8xf32>
    %175 = vector.extract_strided_slice %151 {offsets = [0, 8], sizes = [8, 8], strides = [1, 1]} : vector<8x32xf32> to vector<8x8xf32>
    %cst_71 = arith.constant dense<0.000000e+00> : vector<16x8xf32>
    %176 = tpu.matmul %173, %174, %cst_71 {dimension_numbers = #tpu.dot_dimension_numbers<[1], [1], [0], [0], [0, 0, 1, 0], [], []>} : vector<16x8xf32>, vector<8x8xf32>, vector<16x8xf32> -> vector<16x8xf32>
    %cst_72 = arith.constant dense<0xFF800000> : vector<16xf32>
    %177 = vector.multi_reduction <maximumf>, %176, %cst_72 [1] : vector<16x8xf32> to vector<16xf32>
    %178 = vector.shape_cast %177 : vector<16xf32> to vector<16x1xf32>
    %179 = vector.broadcast %178 : vector<16x1xf32> to vector<16x8xf32>
    %180 = arith.subf %176, %179 : vector<16x8xf32>
    %181 = math.exp %180 : vector<16x8xf32>
    %cst_73 = arith.constant dense<0.000000e+00> : vector<16xf32>
    %182 = vector.multi_reduction <add>, %181, %cst_73 [1] : vector<16x8xf32> to vector<16xf32>
    %183 = vector.shape_cast %182 : vector<16xf32> to vector<16x1xf32>
    %184 = tpu.reciprocal %183 {approx = true} : vector<16x1xf32> -> vector<16x1xf32>
    %185 = vector.broadcast %184 : vector<16x1xf32> to vector<16x8xf32>
    %186 = arith.mulf %181, %185 : vector<16x8xf32>
    %cst_74 = arith.constant dense<0.000000e+00> : vector<16x8xf32>
    %187 = tpu.matmul %186, %175, %cst_74 {dimension_numbers = #tpu.dot_dimension_numbers<[1], [0], [0], [1], [0, 0, 1, 1], [], []>} : vector<16x8xf32>, vector<8x8xf32>, vector<16x8xf32> -> vector<16x8xf32>
    %188 = vector.extract_strided_slice %135 {offsets = [8, 0], sizes = [8, 32], strides = [1, 1]} : vector<32x32xf32> to vector<8x32xf32>
    %cst_75 = arith.constant dense<0.000000e+00> : vector<16x32xf32>
    %189 = tpu.matmul %187, %188, %cst_75 {dimension_numbers = #tpu.dot_dimension_numbers<[1], [0], [0], [1], [0, 0, 1, 1], [], []>} : vector<16x8xf32>, vector<8x32xf32>, vector<16x32xf32> -> vector<16x32xf32>
    %190 = arith.addf %170, %189 : vector<16x32xf32>
    %191 = vector.extract_strided_slice %141 {offsets = [0, 16], sizes = [16, 8], strides = [1, 1]} : vector<16x32xf32> to vector<16x8xf32>
    %cst_76 = arith.constant 0.353553385 : f32
    %192 = vector.broadcast %cst_76 : f32 to vector<16x8xf32>
    %193 = arith.mulf %191, %192 : vector<16x8xf32>
    %194 = vector.extract_strided_slice %146 {offsets = [0, 16], sizes = [8, 8], strides = [1, 1]} : vector<8x32xf32> to vector<8x8xf32>
    %195 = vector.extract_strided_slice %151 {offsets = [0, 16], sizes = [8, 8], strides = [1, 1]} : vector<8x32xf32> to vector<8x8xf32>
    %cst_77 = arith.constant dense<0.000000e+00> : vector<16x8xf32>
    %196 = tpu.matmul %193, %194, %cst_77 {dimension_numbers = #tpu.dot_dimension_numbers<[1], [1], [0], [0], [0, 0, 1, 0], [], []>} : vector<16x8xf32>, vector<8x8xf32>, vector<16x8xf32> -> vector<16x8xf32>
    %cst_78 = arith.constant dense<0xFF800000> : vector<16xf32>
    %197 = vector.multi_reduction <maximumf>, %196, %cst_78 [1] : vector<16x8xf32> to vector<16xf32>
    %198 = vector.shape_cast %197 : vector<16xf32> to vector<16x1xf32>
    %199 = vector.broadcast %198 : vector<16x1xf32> to vector<16x8xf32>
    %200 = arith.subf %196, %199 : vector<16x8xf32>
    %201 = math.exp %200 : vector<16x8xf32>
    %cst_79 = arith.constant dense<0.000000e+00> : vector<16xf32>
    %202 = vector.multi_reduction <add>, %201, %cst_79 [1] : vector<16x8xf32> to vector<16xf32>
    %203 = vector.shape_cast %202 : vector<16xf32> to vector<16x1xf32>
    %204 = tpu.reciprocal %203 {approx = true} : vector<16x1xf32> -> vector<16x1xf32>
    %205 = vector.broadcast %204 : vector<16x1xf32> to vector<16x8xf32>
    %206 = arith.mulf %201, %205 : vector<16x8xf32>
    %cst_80 = arith.constant dense<0.000000e+00> : vector<16x8xf32>
    %207 = tpu.matmul %206, %195, %cst_80 {dimension_numbers = #tpu.dot_dimension_numbers<[1], [0], [0], [1], [0, 0, 1, 1], [], []>} : vector<16x8xf32>, vector<8x8xf32>, vector<16x8xf32> -> vector<16x8xf32>
    %208 = vector.extract_strided_slice %135 {offsets = [16, 0], sizes = [8, 32], strides = [1, 1]} : vector<32x32xf32> to vector<8x32xf32>
    %cst_81 = arith.constant dense<0.000000e+00> : vector<16x32xf32>
    %209 = tpu.matmul %207, %208, %cst_81 {dimension_numbers = #tpu.dot_dimension_numbers<[1], [0], [0], [1], [0, 0, 1, 1], [], []>} : vector<16x8xf32>, vector<8x32xf32>, vector<16x32xf32> -> vector<16x32xf32>
    %210 = arith.addf %190, %209 : vector<16x32xf32>
    %211 = vector.extract_strided_slice %141 {offsets = [0, 24], sizes = [16, 8], strides = [1, 1]} : vector<16x32xf32> to vector<16x8xf32>
    %cst_82 = arith.constant 0.353553385 : f32
    %212 = vector.broadcast %cst_82 : f32 to vector<16x8xf32>
    %213 = arith.mulf %211, %212 : vector<16x8xf32>
    %214 = vector.extract_strided_slice %146 {offsets = [0, 24], sizes = [8, 8], strides = [1, 1]} : vector<8x32xf32> to vector<8x8xf32>
    %215 = vector.extract_strided_slice %151 {offsets = [0, 24], sizes = [8, 8], strides = [1, 1]} : vector<8x32xf32> to vector<8x8xf32>
    %cst_83 = arith.constant dense<0.000000e+00> : vector<16x8xf32>
    %216 = tpu.matmul %213, %214, %cst_83 {dimension_numbers = #tpu.dot_dimension_numbers<[1], [1], [0], [0], [0, 0, 1, 0], [], []>} : vector<16x8xf32>, vector<8x8xf32>, vector<16x8xf32> -> vector<16x8xf32>
    %cst_84 = arith.constant dense<0xFF800000> : vector<16xf32>
    %217 = vector.multi_reduction <maximumf>, %216, %cst_84 [1] : vector<16x8xf32> to vector<16xf32>
    %218 = vector.shape_cast %217 : vector<16xf32> to vector<16x1xf32>
    %219 = vector.broadcast %218 : vector<16x1xf32> to vector<16x8xf32>
    %220 = arith.subf %216, %219 : vector<16x8xf32>
    %221 = math.exp %220 : vector<16x8xf32>
    %cst_85 = arith.constant dense<0.000000e+00> : vector<16xf32>
    %222 = vector.multi_reduction <add>, %221, %cst_85 [1] : vector<16x8xf32> to vector<16xf32>
    %223 = vector.shape_cast %222 : vector<16xf32> to vector<16x1xf32>
    %224 = tpu.reciprocal %223 {approx = true} : vector<16x1xf32> -> vector<16x1xf32>
    %225 = vector.broadcast %224 : vector<16x1xf32> to vector<16x8xf32>
    %226 = arith.mulf %221, %225 : vector<16x8xf32>
    %cst_86 = arith.constant dense<0.000000e+00> : vector<16x8xf32>
    %227 = tpu.matmul %226, %215, %cst_86 {dimension_numbers = #tpu.dot_dimension_numbers<[1], [0], [0], [1], [0, 0, 1, 1], [], []>} : vector<16x8xf32>, vector<8x8xf32>, vector<16x8xf32> -> vector<16x8xf32>
    %228 = vector.extract_strided_slice %135 {offsets = [24, 0], sizes = [8, 32], strides = [1, 1]} : vector<32x32xf32> to vector<8x32xf32>
    %cst_87 = arith.constant dense<0.000000e+00> : vector<16x32xf32>
    %229 = tpu.matmul %227, %228, %cst_87 {dimension_numbers = #tpu.dot_dimension_numbers<[1], [0], [0], [1], [0, 0, 1, 1], [], []>} : vector<16x8xf32>, vector<8x32xf32>, vector<16x32xf32> -> vector<16x32xf32>
    %230 = arith.addf %210, %229 : vector<16x32xf32>
    %231 = vector.broadcast %136 : vector<1x32xf32> to vector<16x32xf32>
    %232 = arith.addf %230, %231 : vector<16x32xf32>
    %c0_88 = arith.constant 0 : index
    %c0_89 = arith.constant 0 : index
    %233 = vector.load %arg17[%c0_88, %c0_89] : memref<32x32xf32, #tpu.memory_space<vmem>>, vector<32x32xf32>
    %cst_90 = arith.constant dense<0.000000e+00> : vector<8x32xf32>
    %234 = tpu.matmul %3, %233, %cst_90 {dimension_numbers = #tpu.dot_dimension_numbers<[1], [0], [0], [1], [0, 0, 1, 1], [], []>} : vector<8x32xf32>, vector<32x32xf32>, vector<8x32xf32> -> vector<8x32xf32>
    %c0_91 = arith.constant 0 : index
    %c0_92 = arith.constant 0 : index
    %235 = vector.load %arg18[%c0_91, %c0_92] : memref<1x32xf32, #tpu.memory_space<vmem>>, vector<1x32xf32>
    %236 = vector.broadcast %235 : vector<1x32xf32> to vector<8x32xf32>
    %237 = arith.addf %234, %236 : vector<8x32xf32>
    %c0_93 = arith.constant 0 : index
    %c0_94 = arith.constant 0 : index
    %238 = vector.load %arg19[%c0_93, %c0_94] : memref<32x64xf32, #tpu.memory_space<vmem>>, vector<32x64xf32>
    %cst_95 = arith.constant dense<0.000000e+00> : vector<16x64xf32>
    %239 = tpu.matmul %130, %238, %cst_95 {dimension_numbers = #tpu.dot_dimension_numbers<[1], [0], [0], [1], [0, 0, 1, 1], [], []>} : vector<16x32xf32>, vector<32x64xf32>, vector<16x64xf32> -> vector<16x64xf32>
    %c0_96 = arith.constant 0 : index
    %c0_97 = arith.constant 0 : index
    %240 = vector.load %arg20[%c0_96, %c0_97] : memref<1x64xf32, #tpu.memory_space<vmem>>, vector<1x64xf32>
    %241 = vector.broadcast %240 : vector<1x64xf32> to vector<16x64xf32>
    %242 = arith.addf %239, %241 : vector<16x64xf32>
    %243 = arith.addf %237, %7 : vector<8x32xf32>
    %244 = vector.extract_strided_slice %242 {offsets = [0, 0], sizes = [16, 32], strides = [1, 1]} : vector<16x64xf32> to vector<16x32xf32>
    %245 = arith.addf %244, %5 : vector<16x32xf32>
    %246 = vector.extract_strided_slice %242 {offsets = [0, 32], sizes = [16, 32], strides = [1, 1]} : vector<16x64xf32> to vector<16x32xf32>
    %c0_98 = arith.constant 0 : index
    %c0_99 = arith.constant 0 : index
    %247 = vector.load %arg13[%c0_98, %c0_99] : memref<32x96xf32, #tpu.memory_space<vmem>>, vector<32x96xf32>
    %c0_100 = arith.constant 0 : index
    %c0_101 = arith.constant 0 : index
    %248 = vector.load %arg14[%c0_100, %c0_101] : memref<1x96xf32, #tpu.memory_space<vmem>>, vector<1x96xf32>
    %c0_102 = arith.constant 0 : index
    %c0_103 = arith.constant 0 : index
    %249 = vector.load %arg15[%c0_102, %c0_103] : memref<32x32xf32, #tpu.memory_space<vmem>>, vector<32x32xf32>
    %c0_104 = arith.constant 0 : index
    %c0_105 = arith.constant 0 : index
    %250 = vector.load %arg16[%c0_104, %c0_105] : memref<1x32xf32, #tpu.memory_space<vmem>>, vector<1x32xf32>
    %251 = vector.extract_strided_slice %247 {offsets = [0, 0], sizes = [32, 32], strides = [1, 1]} : vector<32x96xf32> to vector<32x32xf32>
    %cst_106 = arith.constant dense<0.000000e+00> : vector<8x32xf32>
    %252 = tpu.matmul %243, %251, %cst_106 {dimension_numbers = #tpu.dot_dimension_numbers<[1], [0], [0], [1], [0, 0, 1, 1], [], []>} : vector<8x32xf32>, vector<32x32xf32>, vector<8x32xf32> -> vector<8x32xf32>
    %253 = vector.extract_strided_slice %248 {offsets = [0, 0], sizes = [1, 32], strides = [1, 1]} : vector<1x96xf32> to vector<1x32xf32>
    %254 = vector.broadcast %253 : vector<1x32xf32> to vector<8x32xf32>
    %255 = arith.addf %252, %254 : vector<8x32xf32>
    %256 = vector.extract_strided_slice %247 {offsets = [0, 32], sizes = [32, 32], strides = [1, 1]} : vector<32x96xf32> to vector<32x32xf32>
    %cst_107 = arith.constant dense<0.000000e+00> : vector<16x32xf32>
    %257 = tpu.matmul %245, %256, %cst_107 {dimension_numbers = #tpu.dot_dimension_numbers<[1], [0], [0], [1], [0, 0, 1, 1], [], []>} : vector<16x32xf32>, vector<32x32xf32>, vector<16x32xf32> -> vector<16x32xf32>
    %258 = vector.extract_strided_slice %248 {offsets = [0, 32], sizes = [1, 32], strides = [1, 1]} : vector<1x96xf32> to vector<1x32xf32>
    %259 = vector.broadcast %258 : vector<1x32xf32> to vector<16x32xf32>
    %260 = arith.addf %257, %259 : vector<16x32xf32>
    %261 = vector.extract_strided_slice %247 {offsets = [0, 64], sizes = [32, 32], strides = [1, 1]} : vector<32x96xf32> to vector<32x32xf32>
    %cst_108 = arith.constant dense<0.000000e+00> : vector<16x32xf32>
    %262 = tpu.matmul %246, %261, %cst_108 {dimension_numbers = #tpu.dot_dimension_numbers<[1], [0], [0], [1], [0, 0, 1, 1], [], []>} : vector<16x32xf32>, vector<32x32xf32>, vector<16x32xf32> -> vector<16x32xf32>
    %263 = vector.extract_strided_slice %248 {offsets = [0, 64], sizes = [1, 32], strides = [1, 1]} : vector<1x96xf32> to vector<1x32xf32>
    %264 = vector.broadcast %263 : vector<1x32xf32> to vector<16x32xf32>
    %265 = arith.addf %262, %264 : vector<16x32xf32>
    %266 = vector.extract_strided_slice %255 {offsets = [0, 0], sizes = [8, 8], strides = [1, 1]} : vector<8x32xf32> to vector<8x8xf32>
    %cst_109 = arith.constant 0.353553385 : f32
    %267 = vector.broadcast %cst_109 : f32 to vector<8x8xf32>
    %268 = arith.mulf %266, %267 : vector<8x8xf32>
    %269 = vector.extract_strided_slice %260 {offsets = [0, 0], sizes = [16, 8], strides = [1, 1]} : vector<16x32xf32> to vector<16x8xf32>
    %270 = vector.extract_strided_slice %265 {offsets = [0, 0], sizes = [16, 8], strides = [1, 1]} : vector<16x32xf32> to vector<16x8xf32>
    %cst_110 = arith.constant dense<0.000000e+00> : vector<8x16xf32>
    %271 = tpu.matmul %268, %269, %cst_110 {dimension_numbers = #tpu.dot_dimension_numbers<[1], [1], [0], [0], [0, 0, 1, 0], [], []>} : vector<8x8xf32>, vector<16x8xf32>, vector<8x16xf32> -> vector<8x16xf32>
    %cst_111 = arith.constant dense<0xFF800000> : vector<8xf32>
    %272 = vector.multi_reduction <maximumf>, %271, %cst_111 [1] : vector<8x16xf32> to vector<8xf32>
    %273 = vector.shape_cast %272 : vector<8xf32> to vector<8x1xf32>
    %274 = vector.broadcast %273 : vector<8x1xf32> to vector<8x16xf32>
    %275 = arith.subf %271, %274 : vector<8x16xf32>
    %276 = math.exp %275 : vector<8x16xf32>
    %cst_112 = arith.constant dense<0.000000e+00> : vector<8xf32>
    %277 = vector.multi_reduction <add>, %276, %cst_112 [1] : vector<8x16xf32> to vector<8xf32>
    %278 = vector.shape_cast %277 : vector<8xf32> to vector<8x1xf32>
    %279 = tpu.reciprocal %278 {approx = true} : vector<8x1xf32> -> vector<8x1xf32>
    %280 = vector.broadcast %279 : vector<8x1xf32> to vector<8x16xf32>
    %281 = arith.mulf %276, %280 : vector<8x16xf32>
    %cst_113 = arith.constant dense<0.000000e+00> : vector<8x8xf32>
    %282 = tpu.matmul %281, %270, %cst_113 {dimension_numbers = #tpu.dot_dimension_numbers<[1], [0], [0], [1], [0, 0, 1, 1], [], []>} : vector<8x16xf32>, vector<16x8xf32>, vector<8x8xf32> -> vector<8x8xf32>
    %283 = vector.extract_strided_slice %249 {offsets = [0, 0], sizes = [8, 32], strides = [1, 1]} : vector<32x32xf32> to vector<8x32xf32>
    %cst_114 = arith.constant dense<0.000000e+00> : vector<8x32xf32>
    %284 = tpu.matmul %282, %283, %cst_114 {dimension_numbers = #tpu.dot_dimension_numbers<[1], [0], [0], [1], [0, 0, 1, 1], [], []>} : vector<8x8xf32>, vector<8x32xf32>, vector<8x32xf32> -> vector<8x32xf32>
    %285 = vector.extract_strided_slice %255 {offsets = [0, 8], sizes = [8, 8], strides = [1, 1]} : vector<8x32xf32> to vector<8x8xf32>
    %cst_115 = arith.constant 0.353553385 : f32
    %286 = vector.broadcast %cst_115 : f32 to vector<8x8xf32>
    %287 = arith.mulf %285, %286 : vector<8x8xf32>
    %288 = vector.extract_strided_slice %260 {offsets = [0, 8], sizes = [16, 8], strides = [1, 1]} : vector<16x32xf32> to vector<16x8xf32>
    %289 = vector.extract_strided_slice %265 {offsets = [0, 8], sizes = [16, 8], strides = [1, 1]} : vector<16x32xf32> to vector<16x8xf32>
    %cst_116 = arith.constant dense<0.000000e+00> : vector<8x16xf32>
    %290 = tpu.matmul %287, %288, %cst_116 {dimension_numbers = #tpu.dot_dimension_numbers<[1], [1], [0], [0], [0, 0, 1, 0], [], []>} : vector<8x8xf32>, vector<16x8xf32>, vector<8x16xf32> -> vector<8x16xf32>
    %cst_117 = arith.constant dense<0xFF800000> : vector<8xf32>
    %291 = vector.multi_reduction <maximumf>, %290, %cst_117 [1] : vector<8x16xf32> to vector<8xf32>
    %292 = vector.shape_cast %291 : vector<8xf32> to vector<8x1xf32>
    %293 = vector.broadcast %292 : vector<8x1xf32> to vector<8x16xf32>
    %294 = arith.subf %290, %293 : vector<8x16xf32>
    %295 = math.exp %294 : vector<8x16xf32>
    %cst_118 = arith.constant dense<0.000000e+00> : vector<8xf32>
    %296 = vector.multi_reduction <add>, %295, %cst_118 [1] : vector<8x16xf32> to vector<8xf32>
    %297 = vector.shape_cast %296 : vector<8xf32> to vector<8x1xf32>
    %298 = tpu.reciprocal %297 {approx = true} : vector<8x1xf32> -> vector<8x1xf32>
    %299 = vector.broadcast %298 : vector<8x1xf32> to vector<8x16xf32>
    %300 = arith.mulf %295, %299 : vector<8x16xf32>
    %cst_119 = arith.constant dense<0.000000e+00> : vector<8x8xf32>
    %301 = tpu.matmul %300, %289, %cst_119 {dimension_numbers = #tpu.dot_dimension_numbers<[1], [0], [0], [1], [0, 0, 1, 1], [], []>} : vector<8x16xf32>, vector<16x8xf32>, vector<8x8xf32> -> vector<8x8xf32>
    %302 = vector.extract_strided_slice %249 {offsets = [8, 0], sizes = [8, 32], strides = [1, 1]} : vector<32x32xf32> to vector<8x32xf32>
    %cst_120 = arith.constant dense<0.000000e+00> : vector<8x32xf32>
    %303 = tpu.matmul %301, %302, %cst_120 {dimension_numbers = #tpu.dot_dimension_numbers<[1], [0], [0], [1], [0, 0, 1, 1], [], []>} : vector<8x8xf32>, vector<8x32xf32>, vector<8x32xf32> -> vector<8x32xf32>
    %304 = arith.addf %284, %303 : vector<8x32xf32>
    %305 = vector.extract_strided_slice %255 {offsets = [0, 16], sizes = [8, 8], strides = [1, 1]} : vector<8x32xf32> to vector<8x8xf32>
    %cst_121 = arith.constant 0.353553385 : f32
    %306 = vector.broadcast %cst_121 : f32 to vector<8x8xf32>
    %307 = arith.mulf %305, %306 : vector<8x8xf32>
    %308 = vector.extract_strided_slice %260 {offsets = [0, 16], sizes = [16, 8], strides = [1, 1]} : vector<16x32xf32> to vector<16x8xf32>
    %309 = vector.extract_strided_slice %265 {offsets = [0, 16], sizes = [16, 8], strides = [1, 1]} : vector<16x32xf32> to vector<16x8xf32>
    %cst_122 = arith.constant dense<0.000000e+00> : vector<8x16xf32>
    %310 = tpu.matmul %307, %308, %cst_122 {dimension_numbers = #tpu.dot_dimension_numbers<[1], [1], [0], [0], [0, 0, 1, 0], [], []>} : vector<8x8xf32>, vector<16x8xf32>, vector<8x16xf32> -> vector<8x16xf32>
    %cst_123 = arith.constant dense<0xFF800000> : vector<8xf32>
    %311 = vector.multi_reduction <maximumf>, %310, %cst_123 [1] : vector<8x16xf32> to vector<8xf32>
    %312 = vector.shape_cast %311 : vector<8xf32> to vector<8x1xf32>
    %313 = vector.broadcast %312 : vector<8x1xf32> to vector<8x16xf32>
    %314 = arith.subf %310, %313 : vector<8x16xf32>
    %315 = math.exp %314 : vector<8x16xf32>
    %cst_124 = arith.constant dense<0.000000e+00> : vector<8xf32>
    %316 = vector.multi_reduction <add>, %315, %cst_124 [1] : vector<8x16xf32> to vector<8xf32>
    %317 = vector.shape_cast %316 : vector<8xf32> to vector<8x1xf32>
    %318 = tpu.reciprocal %317 {approx = true} : vector<8x1xf32> -> vector<8x1xf32>
    %319 = vector.broadcast %318 : vector<8x1xf32> to vector<8x16xf32>
    %320 = arith.mulf %315, %319 : vector<8x16xf32>
    %cst_125 = arith.constant dense<0.000000e+00> : vector<8x8xf32>
    %321 = tpu.matmul %320, %309, %cst_125 {dimension_numbers = #tpu.dot_dimension_numbers<[1], [0], [0], [1], [0, 0, 1, 1], [], []>} : vector<8x16xf32>, vector<16x8xf32>, vector<8x8xf32> -> vector<8x8xf32>
    %322 = vector.extract_strided_slice %249 {offsets = [16, 0], sizes = [8, 32], strides = [1, 1]} : vector<32x32xf32> to vector<8x32xf32>
    %cst_126 = arith.constant dense<0.000000e+00> : vector<8x32xf32>
    %323 = tpu.matmul %321, %322, %cst_126 {dimension_numbers = #tpu.dot_dimension_numbers<[1], [0], [0], [1], [0, 0, 1, 1], [], []>} : vector<8x8xf32>, vector<8x32xf32>, vector<8x32xf32> -> vector<8x32xf32>
    %324 = arith.addf %304, %323 : vector<8x32xf32>
    %325 = vector.extract_strided_slice %255 {offsets = [0, 24], sizes = [8, 8], strides = [1, 1]} : vector<8x32xf32> to vector<8x8xf32>
    %cst_127 = arith.constant 0.353553385 : f32
    %326 = vector.broadcast %cst_127 : f32 to vector<8x8xf32>
    %327 = arith.mulf %325, %326 : vector<8x8xf32>
    %328 = vector.extract_strided_slice %260 {offsets = [0, 24], sizes = [16, 8], strides = [1, 1]} : vector<16x32xf32> to vector<16x8xf32>
    %329 = vector.extract_strided_slice %265 {offsets = [0, 24], sizes = [16, 8], strides = [1, 1]} : vector<16x32xf32> to vector<16x8xf32>
    %cst_128 = arith.constant dense<0.000000e+00> : vector<8x16xf32>
    %330 = tpu.matmul %327, %328, %cst_128 {dimension_numbers = #tpu.dot_dimension_numbers<[1], [1], [0], [0], [0, 0, 1, 0], [], []>} : vector<8x8xf32>, vector<16x8xf32>, vector<8x16xf32> -> vector<8x16xf32>
    %cst_129 = arith.constant dense<0xFF800000> : vector<8xf32>
    %331 = vector.multi_reduction <maximumf>, %330, %cst_129 [1] : vector<8x16xf32> to vector<8xf32>
    %332 = vector.shape_cast %331 : vector<8xf32> to vector<8x1xf32>
    %333 = vector.broadcast %332 : vector<8x1xf32> to vector<8x16xf32>
    %334 = arith.subf %330, %333 : vector<8x16xf32>
    %335 = math.exp %334 : vector<8x16xf32>
    %cst_130 = arith.constant dense<0.000000e+00> : vector<8xf32>
    %336 = vector.multi_reduction <add>, %335, %cst_130 [1] : vector<8x16xf32> to vector<8xf32>
    %337 = vector.shape_cast %336 : vector<8xf32> to vector<8x1xf32>
    %338 = tpu.reciprocal %337 {approx = true} : vector<8x1xf32> -> vector<8x1xf32>
    %339 = vector.broadcast %338 : vector<8x1xf32> to vector<8x16xf32>
    %340 = arith.mulf %335, %339 : vector<8x16xf32>
    %cst_131 = arith.constant dense<0.000000e+00> : vector<8x8xf32>
    %341 = tpu.matmul %340, %329, %cst_131 {dimension_numbers = #tpu.dot_dimension_numbers<[1], [0], [0], [1], [0, 0, 1, 1], [], []>} : vector<8x16xf32>, vector<16x8xf32>, vector<8x8xf32> -> vector<8x8xf32>
    %342 = vector.extract_strided_slice %249 {offsets = [24, 0], sizes = [8, 32], strides = [1, 1]} : vector<32x32xf32> to vector<8x32xf32>
    %cst_132 = arith.constant dense<0.000000e+00> : vector<8x32xf32>
    %343 = tpu.matmul %341, %342, %cst_132 {dimension_numbers = #tpu.dot_dimension_numbers<[1], [0], [0], [1], [0, 0, 1, 1], [], []>} : vector<8x8xf32>, vector<8x32xf32>, vector<8x32xf32> -> vector<8x32xf32>
    %344 = arith.addf %324, %343 : vector<8x32xf32>
    %345 = vector.broadcast %250 : vector<1x32xf32> to vector<8x32xf32>
    %346 = arith.addf %344, %345 : vector<8x32xf32>
    %347 = arith.addf %130, %232 : vector<16x32xf32>
    %c1 = arith.constant 1 : index
    %c0_133 = arith.constant 0 : index
    %348 = vector.load %arg29[%c1, %c0_133] : memref<5x32xf32, #tpu.memory_space<vmem>>, vector<1x32xf32>
    %c1_134 = arith.constant 1 : index
    %c0_135 = arith.constant 0 : index
    %349 = vector.load %arg30[%c1_134, %c0_135] : memref<5x32xf32, #tpu.memory_space<vmem>>, vector<1x32xf32>
    %cst_136 = arith.constant dense<0.000000e+00> : vector<16xf32>
    %350 = vector.multi_reduction <add>, %347, %cst_136 [1] : vector<16x32xf32> to vector<16xf32>
    %351 = vector.shape_cast %350 : vector<16xf32> to vector<16x1xf32>
    %cst_137 = arith.constant 3.200000e+01 : f32
    %352 = vector.broadcast %cst_137 : f32 to vector<16x1xf32>
    %353 = arith.divf %351, %352 : vector<16x1xf32>
    %354 = vector.broadcast %353 : vector<16x1xf32> to vector<16x32xf32>
    %355 = arith.subf %347, %354 : vector<16x32xf32>
    %356 = arith.mulf %355, %355 : vector<16x32xf32>
    %cst_138 = arith.constant dense<0.000000e+00> : vector<16xf32>
    %357 = vector.multi_reduction <add>, %356, %cst_138 [1] : vector<16x32xf32> to vector<16xf32>
    %358 = vector.shape_cast %357 : vector<16xf32> to vector<16x1xf32>
    %cst_139 = arith.constant 3.200000e+01 : f32
    %359 = vector.broadcast %cst_139 : f32 to vector<16x1xf32>
    %360 = arith.divf %358, %359 : vector<16x1xf32>
    %361 = vector.broadcast %353 : vector<16x1xf32> to vector<16x32xf32>
    %362 = arith.subf %347, %361 : vector<16x32xf32>
    %cst_140 = arith.constant 9.99999974E-6 : f32
    %363 = vector.broadcast %cst_140 : f32 to vector<16x1xf32>
    %364 = arith.addf %360, %363 : vector<16x1xf32>
    %365 = math.rsqrt %364 : vector<16x1xf32>
    %366 = vector.broadcast %365 : vector<16x1xf32> to vector<16x32xf32>
    %367 = arith.mulf %362, %366 : vector<16x32xf32>
    %368 = vector.broadcast %348 : vector<1x32xf32> to vector<16x32xf32>
    %369 = arith.mulf %367, %368 : vector<16x32xf32>
    %370 = vector.broadcast %349 : vector<1x32xf32> to vector<16x32xf32>
    %371 = arith.addf %369, %370 : vector<16x32xf32>
    %c0_141 = arith.constant 0 : index
    %c0_142 = arith.constant 0 : index
    %372 = vector.load %arg21[%c0_141, %c0_142] : memref<32x64xf32, #tpu.memory_space<vmem>>, vector<32x64xf32>
    %cst_143 = arith.constant dense<0.000000e+00> : vector<16x64xf32>
    %373 = tpu.matmul %371, %372, %cst_143 {dimension_numbers = #tpu.dot_dimension_numbers<[1], [0], [0], [1], [0, 0, 1, 1], [], []>} : vector<16x32xf32>, vector<32x64xf32>, vector<16x64xf32> -> vector<16x64xf32>
    %c0_144 = arith.constant 0 : index
    %c0_145 = arith.constant 0 : index
    %374 = vector.load %arg22[%c0_144, %c0_145] : memref<1x64xf32, #tpu.memory_space<vmem>>, vector<1x64xf32>
    %375 = vector.broadcast %374 : vector<1x64xf32> to vector<16x64xf32>
    %376 = arith.addf %373, %375 : vector<16x64xf32>
    %cst_146 = arith.constant 0.000000e+00 : f32
    %377 = vector.broadcast %cst_146 : f32 to vector<16x64xf32>
    %378 = arith.maximumf %376, %377 : vector<16x64xf32>
    %c0_147 = arith.constant 0 : index
    %c0_148 = arith.constant 0 : index
    %379 = vector.load %arg23[%c0_147, %c0_148] : memref<64x32xf32, #tpu.memory_space<vmem>>, vector<64x32xf32>
    %cst_149 = arith.constant dense<0.000000e+00> : vector<16x32xf32>
    %380 = tpu.matmul %378, %379, %cst_149 {dimension_numbers = #tpu.dot_dimension_numbers<[1], [0], [0], [1], [0, 0, 1, 1], [], []>} : vector<16x64xf32>, vector<64x32xf32>, vector<16x32xf32> -> vector<16x32xf32>
    %c0_150 = arith.constant 0 : index
    %c0_151 = arith.constant 0 : index
    %381 = vector.load %arg24[%c0_150, %c0_151] : memref<1x32xf32, #tpu.memory_space<vmem>>, vector<1x32xf32>
    %382 = vector.broadcast %381 : vector<1x32xf32> to vector<16x32xf32>
    %383 = arith.addf %380, %382 : vector<16x32xf32>
    %384 = arith.addf %371, %383 : vector<16x32xf32>
    %c2 = arith.constant 2 : index
    %c0_152 = arith.constant 0 : index
    %385 = vector.load %arg29[%c2, %c0_152] : memref<5x32xf32, #tpu.memory_space<vmem>>, vector<1x32xf32>
    %c2_153 = arith.constant 2 : index
    %c0_154 = arith.constant 0 : index
    %386 = vector.load %arg30[%c2_153, %c0_154] : memref<5x32xf32, #tpu.memory_space<vmem>>, vector<1x32xf32>
    %cst_155 = arith.constant dense<0.000000e+00> : vector<16xf32>
    %387 = vector.multi_reduction <add>, %384, %cst_155 [1] : vector<16x32xf32> to vector<16xf32>
    %388 = vector.shape_cast %387 : vector<16xf32> to vector<16x1xf32>
    %cst_156 = arith.constant 3.200000e+01 : f32
    %389 = vector.broadcast %cst_156 : f32 to vector<16x1xf32>
    %390 = arith.divf %388, %389 : vector<16x1xf32>
    %391 = vector.broadcast %390 : vector<16x1xf32> to vector<16x32xf32>
    %392 = arith.subf %384, %391 : vector<16x32xf32>
    %393 = arith.mulf %392, %392 : vector<16x32xf32>
    %cst_157 = arith.constant dense<0.000000e+00> : vector<16xf32>
    %394 = vector.multi_reduction <add>, %393, %cst_157 [1] : vector<16x32xf32> to vector<16xf32>
    %395 = vector.shape_cast %394 : vector<16xf32> to vector<16x1xf32>
    %cst_158 = arith.constant 3.200000e+01 : f32
    %396 = vector.broadcast %cst_158 : f32 to vector<16x1xf32>
    %397 = arith.divf %395, %396 : vector<16x1xf32>
    %398 = vector.broadcast %390 : vector<16x1xf32> to vector<16x32xf32>
    %399 = arith.subf %384, %398 : vector<16x32xf32>
    %cst_159 = arith.constant 9.99999974E-6 : f32
    %400 = vector.broadcast %cst_159 : f32 to vector<16x1xf32>
    %401 = arith.addf %397, %400 : vector<16x1xf32>
    %402 = math.rsqrt %401 : vector<16x1xf32>
    %403 = vector.broadcast %402 : vector<16x1xf32> to vector<16x32xf32>
    %404 = arith.mulf %399, %403 : vector<16x32xf32>
    %405 = vector.broadcast %385 : vector<1x32xf32> to vector<16x32xf32>
    %406 = arith.mulf %404, %405 : vector<16x32xf32>
    %407 = vector.broadcast %386 : vector<1x32xf32> to vector<16x32xf32>
    %408 = arith.addf %406, %407 : vector<16x32xf32>
    %c0_160 = arith.constant 0 : index
    %c0_161 = arith.constant 0 : index
    %c0_162 = arith.constant 0 : index
    %409 = vector.load %arg31[%c0_160, %c0_161, %c0_162] : memref<1x16x32xf32, #tpu.memory_space<vmem>>, vector<1x16x32xf32>
    %410 = vector.shape_cast %409 : vector<1x16x32xf32> to vector<16x32xf32>
    %411 = vector.shape_cast %408 : vector<16x32xf32> to vector<1x16x32xf32>
    tpu.vector_store %arg31[%c0_160, %c0_161, %c0_162], %411 {strides = array<i32>} : memref<1x16x32xf32, #tpu.memory_space<vmem>>, vector<1x16x32xf32>,
    %412 = arith.addf %3, %346 : vector<8x32xf32>
    %c3 = arith.constant 3 : index
    %c0_163 = arith.constant 0 : index
    %413 = vector.load %arg29[%c3, %c0_163] : memref<5x32xf32, #tpu.memory_space<vmem>>, vector<1x32xf32>
    %c3_164 = arith.constant 3 : index
    %c0_165 = arith.constant 0 : index
    %414 = vector.load %arg30[%c3_164, %c0_165] : memref<5x32xf32, #tpu.memory_space<vmem>>, vector<1x32xf32>
    %cst_166 = arith.constant dense<0.000000e+00> : vector<8xf32>
    %415 = vector.multi_reduction <add>, %412, %cst_166 [1] : vector<8x32xf32> to vector<8xf32>
    %416 = vector.shape_cast %415 : vector<8xf32> to vector<8x1xf32>
    %cst_167 = arith.constant 3.200000e+01 : f32
    %417 = vector.broadcast %cst_167 : f32 to vector<8x1xf32>
    %418 = arith.divf %416, %417 : vector<8x1xf32>
    %419 = vector.broadcast %418 : vector<8x1xf32> to vector<8x32xf32>
    %420 = arith.subf %412, %419 : vector<8x32xf32>
    %421 = arith.mulf %420, %420 : vector<8x32xf32>
    %cst_168 = arith.constant dense<0.000000e+00> : vector<8xf32>
    %422 = vector.multi_reduction <add>, %421, %cst_168 [1] : vector<8x32xf32> to vector<8xf32>
    %423 = vector.shape_cast %422 : vector<8xf32> to vector<8x1xf32>
    %cst_169 = arith.constant 3.200000e+01 : f32
    %424 = vector.broadcast %cst_169 : f32 to vector<8x1xf32>
    %425 = arith.divf %423, %424 : vector<8x1xf32>
    %426 = vector.broadcast %418 : vector<8x1xf32> to vector<8x32xf32>
    %427 = arith.subf %412, %426 : vector<8x32xf32>
    %cst_170 = arith.constant 9.99999974E-6 : f32
    %428 = vector.broadcast %cst_170 : f32 to vector<8x1xf32>
    %429 = arith.addf %425, %428 : vector<8x1xf32>
    %430 = math.rsqrt %429 : vector<8x1xf32>
    %431 = vector.broadcast %430 : vector<8x1xf32> to vector<8x32xf32>
    %432 = arith.mulf %427, %431 : vector<8x32xf32>
    %433 = vector.broadcast %413 : vector<1x32xf32> to vector<8x32xf32>
    %434 = arith.mulf %432, %433 : vector<8x32xf32>
    %435 = vector.broadcast %414 : vector<1x32xf32> to vector<8x32xf32>
    %436 = arith.addf %434, %435 : vector<8x32xf32>
    %c0_171 = arith.constant 0 : index
    %c0_172 = arith.constant 0 : index
    %437 = vector.load %arg25[%c0_171, %c0_172] : memref<32x64xf32, #tpu.memory_space<vmem>>, vector<32x64xf32>
    %cst_173 = arith.constant dense<0.000000e+00> : vector<8x64xf32>
    %438 = tpu.matmul %436, %437, %cst_173 {dimension_numbers = #tpu.dot_dimension_numbers<[1], [0], [0], [1], [0, 0, 1, 1], [], []>} : vector<8x32xf32>, vector<32x64xf32>, vector<8x64xf32> -> vector<8x64xf32>
    %c0_174 = arith.constant 0 : index
    %c0_175 = arith.constant 0 : index
    %439 = vector.load %arg26[%c0_174, %c0_175] : memref<1x64xf32, #tpu.memory_space<vmem>>, vector<1x64xf32>
    %440 = vector.broadcast %439 : vector<1x64xf32> to vector<8x64xf32>
    %441 = arith.addf %438, %440 : vector<8x64xf32>
    %cst_176 = arith.constant 0.000000e+00 : f32
    %442 = vector.broadcast %cst_176 : f32 to vector<8x64xf32>
    %443 = arith.maximumf %441, %442 : vector<8x64xf32>
    %c0_177 = arith.constant 0 : index
    %c0_178 = arith.constant 0 : index
    %444 = vector.load %arg27[%c0_177, %c0_178] : memref<64x32xf32, #tpu.memory_space<vmem>>, vector<64x32xf32>
    %cst_179 = arith.constant dense<0.000000e+00> : vector<8x32xf32>
    %445 = tpu.matmul %443, %444, %cst_179 {dimension_numbers = #tpu.dot_dimension_numbers<[1], [0], [0], [1], [0, 0, 1, 1], [], []>} : vector<8x64xf32>, vector<64x32xf32>, vector<8x32xf32> -> vector<8x32xf32>
    %c0_180 = arith.constant 0 : index
    %c0_181 = arith.constant 0 : index
    %446 = vector.load %arg28[%c0_180, %c0_181] : memref<1x32xf32, #tpu.memory_space<vmem>>, vector<1x32xf32>
    %447 = vector.broadcast %446 : vector<1x32xf32> to vector<8x32xf32>
    %448 = arith.addf %445, %447 : vector<8x32xf32>
    %449 = arith.addf %436, %448 : vector<8x32xf32>
    %c4 = arith.constant 4 : index
    %c0_182 = arith.constant 0 : index
    %450 = vector.load %arg29[%c4, %c0_182] : memref<5x32xf32, #tpu.memory_space<vmem>>, vector<1x32xf32>
    %c4_183 = arith.constant 4 : index
    %c0_184 = arith.constant 0 : index
    %451 = vector.load %arg30[%c4_183, %c0_184] : memref<5x32xf32, #tpu.memory_space<vmem>>, vector<1x32xf32>
    %cst_185 = arith.constant dense<0.000000e+00> : vector<8xf32>
    %452 = vector.multi_reduction <add>, %449, %cst_185 [1] : vector<8x32xf32> to vector<8xf32>
    %453 = vector.shape_cast %452 : vector<8xf32> to vector<8x1xf32>
    %cst_186 = arith.constant 3.200000e+01 : f32
    %454 = vector.broadcast %cst_186 : f32 to vector<8x1xf32>
    %455 = arith.divf %453, %454 : vector<8x1xf32>
    %456 = vector.broadcast %455 : vector<8x1xf32> to vector<8x32xf32>
    %457 = arith.subf %449, %456 : vector<8x32xf32>
    %458 = arith.mulf %457, %457 : vector<8x32xf32>
    %cst_187 = arith.constant dense<0.000000e+00> : vector<8xf32>
    %459 = vector.multi_reduction <add>, %458, %cst_187 [1] : vector<8x32xf32> to vector<8xf32>
    %460 = vector.shape_cast %459 : vector<8xf32> to vector<8x1xf32>
    %cst_188 = arith.constant 3.200000e+01 : f32
    %461 = vector.broadcast %cst_188 : f32 to vector<8x1xf32>
    %462 = arith.divf %460, %461 : vector<8x1xf32>
    %463 = vector.broadcast %455 : vector<8x1xf32> to vector<8x32xf32>
    %464 = arith.subf %449, %463 : vector<8x32xf32>
    %cst_189 = arith.constant 9.99999974E-6 : f32
    %465 = vector.broadcast %cst_189 : f32 to vector<8x1xf32>
    %466 = arith.addf %462, %465 : vector<8x1xf32>
    %467 = math.rsqrt %466 : vector<8x1xf32>
    %468 = vector.broadcast %467 : vector<8x1xf32> to vector<8x32xf32>
    %469 = arith.mulf %464, %468 : vector<8x32xf32>
    %470 = vector.broadcast %450 : vector<1x32xf32> to vector<8x32xf32>
    %471 = arith.mulf %469, %470 : vector<8x32xf32>
    %472 = vector.broadcast %451 : vector<1x32xf32> to vector<8x32xf32>
    %473 = arith.addf %471, %472 : vector<8x32xf32>
    %c0_190 = arith.constant 0 : index
    %c0_191 = arith.constant 0 : index
    %c0_192 = arith.constant 0 : index
    %474 = vector.load %arg32[%c0_190, %c0_191, %c0_192] : memref<1x8x32xf32, #tpu.memory_space<vmem>>, vector<1x8x32xf32>
    %475 = vector.shape_cast %474 : vector<1x8x32xf32> to vector<8x32xf32>
    %476 = vector.shape_cast %473 : vector<8x32xf32> to vector<1x8x32xf32>
    tpu.vector_store %arg32[%c0_190, %c0_191, %c0_192], %476 {strides = array<i32>} : memref<1x8x32xf32, #tpu.memory_space<vmem>>, vector<1x8x32xf32>,
    return
  }
  func.func @transform_0(%arg0: i32) -> (i32, i32, i32) {
    %c0_i32 = arith.constant 0 : i32
    %c0_i32_0 = arith.constant 0 : i32
    %c0_i32_1 = arith.constant 0 : i32
    return %arg0, %c0_i32, %c0_i32_0 : i32, i32, i32
  }
  func.func @transform_1(%arg0: i32) -> (i32, i32, i32) {
    %c0_i32 = arith.constant 0 : i32
    %c0_i32_0 = arith.constant 0 : i32
    %c0_i32_1 = arith.constant 0 : i32
    return %arg0, %c0_i32, %c0_i32_0 : i32, i32, i32
  }
  func.func @transform_2(%arg0: i32) -> (i32, i32, i32) {
    %c0_i32 = arith.constant 0 : i32
    %c0_i32_0 = arith.constant 0 : i32
    %c0_i32_1 = arith.constant 0 : i32
    return %arg0, %c0_i32, %c0_i32_0 : i32, i32, i32
  }
  func.func @transform_3(%arg0: i32) -> (i32, i32, i32) {
    %c0_i32 = arith.constant 0 : i32
    %c0_i32_0 = arith.constant 0 : i32
    %c0_i32_1 = arith.constant 0 : i32
    return %arg0, %c0_i32, %c0_i32_0 : i32, i32, i32
  }
  func.func @transform_4(%arg0: i32) -> (i32, i32) {
    %c0_i32 = arith.constant 0 : i32
    %c0_i32_0 = arith.constant 0 : i32
    %c0_i32_1 = arith.constant 0 : i32
    return %c0_i32, %c0_i32_0 : i32, i32
  }
  func.func @transform_5(%arg0: i32) -> (i32, i32) {
    %c0_i32 = arith.constant 0 : i32
    %c0_i32_0 = arith.constant 0 : i32
    %c0_i32_1 = arith.constant 0 : i32
    return %c0_i32, %c0_i32_0 : i32, i32
  }
  func.func @transform_6(%arg0: i32) -> (i32, i32) {
    %c0_i32 = arith.constant 0 : i32
    %c0_i32_0 = arith.constant 0 : i32
    %c0_i32_1 = arith.constant 0 : i32
    return %c0_i32, %c0_i32_0 : i32, i32
  }
  func.func @transform_7(%arg0: i32) -> (i32, i32) {
    %c0_i32 = arith.constant 0 : i32
    %c0_i32_0 = arith.constant 0 : i32
    %c0_i32_1 = arith.constant 0 : i32
    return %c0_i32, %c0_i32_0 : i32, i32
  }
  func.func @transform_8(%arg0: i32) -> (i32, i32) {
    %c0_i32 = arith.constant 0 : i32
    %c0_i32_0 = arith.constant 0 : i32
    %c0_i32_1 = arith.constant 0 : i32
    return %c0_i32, %c0_i32_0 : i32, i32
  }
  func.func @transform_9(%arg0: i32) -> (i32, i32) {
    %c0_i32 = arith.constant 0 : i32
    %c0_i32_0 = arith.constant 0 : i32
    %c0_i32_1 = arith.constant 0 : i32
    return %c0_i32, %c0_i32_0 : i32, i32
  }
  func.func @transform_10(%arg0: i32) -> (i32, i32) {
    %c0_i32 = arith.constant 0 : i32
    %c0_i32_0 = arith.constant 0 : i32
    %c0_i32_1 = arith.constant 0 : i32
    return %c0_i32, %c0_i32_0 : i32, i32
  }
  func.func @transform_11(%arg0: i32) -> (i32, i32) {
    %c0_i32 = arith.constant 0 : i32
    %c0_i32_0 = arith.constant 0 : i32
    %c0_i32_1 = arith.constant 0 : i32
    return %c0_i32, %c0_i32_0 : i32, i32
  }
  func.func @transform_12(%arg0: i32) -> (i32, i32) {
    %c0_i32 = arith.constant 0 : i32
    %c0_i32_0 = arith.constant 0 : i32
    %c0_i32_1 = arith.constant 0 : i32
    return %c0_i32, %c0_i32_0 : i32, i32
  }
  func.func @transform_13(%arg0: i32) -> (i32, i32) {
    %c0_i32 = arith.constant 0 : i32
    %c0_i32_0 = arith.constant 0 : i32
    %c0_i32_1 = arith.constant 0 : i32
    return %c0_i32, %c0_i32_0 : i32, i32
  }
  func.func @transform_14(%arg0: i32) -> (i32, i32) {
    %c0_i32 = arith.constant 0 : i32
    %c0_i32_0 = arith.constant 0 : i32
    %c0_i32_1 = arith.constant 0 : i32
    return %c0_i32, %c0_i32_0 : i32, i32
  }
  func.func @transform_15(%arg0: i32) -> (i32, i32) {
    %c0_i32 = arith.constant 0 : i32
    %c0_i32_0 = arith.constant 0 : i32
    %c0_i32_1 = arith.constant 0 : i32
    return %c0_i32, %c0_i32_0 : i32, i32
  }
  func.func @transform_16(%arg0: i32) -> (i32, i32) {
    %c0_i32 = arith.constant 0 : i32
    %c0_i32_0 = arith.constant 0 : i32
    %c0_i32_1 = arith.constant 0 : i32
    return %c0_i32, %c0_i32_0 : i32, i32
  }
  func.func @transform_17(%arg0: i32) -> (i32, i32) {
    %c0_i32 = arith.constant 0 : i32
    %c0_i32_0 = arith.constant 0 : i32
    %c0_i32_1 = arith.constant 0 : i32
    return %c0_i32, %c0_i32_0 : i32, i32
  }
  func.func @transform_18(%arg0: i32) -> (i32, i32) {
    %c0_i32 = arith.constant 0 : i32
    %c0_i32_0 = arith.constant 0 : i32
    %c0_i32_1 = arith.constant 0 : i32
    return %c0_i32, %c0_i32_0 : i32, i32
  }
  func.func @transform_19(%arg0: i32) -> (i32, i32) {
    %c0_i32 = arith.constant 0 : i32
    %c0_i32_0 = arith.constant 0 : i32
    %c0_i32_1 = arith.constant 0 : i32
    return %c0_i32, %c0_i32_0 : i32, i32
  }
  func.func @transform_20(%arg0: i32) -> (i32, i32) {
    %c0_i32 = arith.constant 0 : i32
    %c0_i32_0 = arith.constant 0 : i32
    %c0_i32_1 = arith.constant 0 : i32
    return %c0_i32, %c0_i32_0 : i32, i32
  }
  func.func @transform_21(%arg0: i32) -> (i32, i32) {
    %c0_i32 = arith.constant 0 : i32
    %c0_i32_0 = arith.constant 0 : i32
    %c0_i32_1 = arith.constant 0 : i32
    return %c0_i32, %c0_i32_0 : i32, i32
  }
  func.func @transform_22(%arg0: i32) -> (i32, i32) {
    %c0_i32 = arith.constant 0 : i32
    %c0_i32_0 = arith.constant 0 : i32
    %c0_i32_1 = arith.constant 0 : i32
    return %c0_i32, %c0_i32_0 : i32, i32
  }
  func.func @transform_23(%arg0: i32) -> (i32, i32) {
    %c0_i32 = arith.constant 0 : i32
    %c0_i32_0 = arith.constant 0 : i32
    %c0_i32_1 = arith.constant 0 : i32
    return %c0_i32, %c0_i32_0 : i32, i32
  }
  func.func @transform_24(%arg0: i32) -> (i32, i32) {
    %c0_i32 = arith.constant 0 : i32
    %c0_i32_0 = arith.constant 0 : i32
    %c0_i32_1 = arith.constant 0 : i32
    return %c0_i32, %c0_i32_0 : i32, i32
  }
  func.func @transform_25(%arg0: i32) -> (i32, i32) {
    %c0_i32 = arith.constant 0 : i32
    %c0_i32_0 = arith.constant 0 : i32
    %c0_i32_1 = arith.constant 0 : i32
    return %c0_i32, %c0_i32_0 : i32, i32
  }
  func.func @transform_26(%arg0: i32) -> (i32, i32) {
    %c0_i32 = arith.constant 0 : i32
    %c0_i32_0 = arith.constant 0 : i32
    %c0_i32_1 = arith.constant 0 : i32
    return %c0_i32, %c0_i32_0 : i32, i32
  }
  func.func @transform_27(%arg0: i32) -> (i32, i32) {
    %c0_i32 = arith.constant 0 : i32
    %c0_i32_0 = arith.constant 0 : i32
    %c0_i32_1 = arith.constant 0 : i32
    return %c0_i32, %c0_i32_0 : i32, i32
  }
  func.func @transform_28(%arg0: i32) -> (i32, i32) {
    %c0_i32 = arith.constant 0 : i32
    %c0_i32_0 = arith.constant 0 : i32
    %c0_i32_1 = arith.constant 0 : i32
    return %c0_i32, %c0_i32_0 : i32, i32
  }
  func.func @transform_29(%arg0: i32) -> (i32, i32) {
    %c0_i32 = arith.constant 0 : i32
    %c0_i32_0 = arith.constant 0 : i32
    %c0_i32_1 = arith.constant 0 : i32
    return %c0_i32, %c0_i32_0 : i32, i32
  }
  func.func @transform_30(%arg0: i32) -> (i32, i32, i32) {
    %c0_i32 = arith.constant 0 : i32
    %c0_i32_0 = arith.constant 0 : i32
    %c0_i32_1 = arith.constant 0 : i32
    return %arg0, %c0_i32, %c0_i32_0 : i32, i32, i32
  }
  func.func @transform_31(%arg0: i32) -> (i32, i32, i32) {
    %c0_i32 = arith.constant 0 : i32
    %c0_i32_0 = arith.constant 0 : i32
    %c0_i32_1 = arith.constant 0 : i32
    return %arg0, %c0_i32, %c0_i32_0 : i32, i32, i32
  }
}

</mosaic_0001>

<llo_original>
// kernel: dual_block_forward.1
$region0: #{dual_block_forward.1}
  #allocation0 [shape = 'u32[]', space=smem, size = 0x4, offset = 0x4, fixed_abs, tag = 'smem constant byte address 0x4 - core index']
  #allocation1 [shape = 'u32[144,128]{1,0:T(1,128)}', space=vmem, size = 0x12000, scoped, tag = 'internal scratch']
  %s0 = inlined_call_operand.smem [shape: u32[32], index: -1, kind: input, shape index: {}]
  %s1 = sld [smem:[%s0]]
  %s2 = scalar_lea.smem %s0, 1
  %s3 = sld [smem:[%s2]]
  %s4 = scalar_lea.smem %s0, 2
  %s5 = sld [smem:[%s4]]
  %s6 = scalar_lea.smem %s0, 3
  %s7 = sld [smem:[%s6]]
  %s8 = scalar_lea.smem %s0, 4
  %s9 = sld [smem:[%s8]]
  %s10 = scalar_lea.smem %s0, 5
  %s11 = sld [smem:[%s10]]
  %s12 = scalar_lea.smem %s0, 6
  %s13 = sld [smem:[%s12]]
  %s14 = scalar_lea.smem %s0, 7
  %s15 = sld [smem:[%s14]]
  %s16 = scalar_lea.smem %s0, 8
  %s17 = sld [smem:[%s16]]
  %s18 = scalar_lea.smem %s0, 9
  %s19 = sld [smem:[%s18]]
  %s20 = scalar_lea.smem %s0, 10
  %s21 = sld [smem:[%s20]]
  %s22 = scalar_lea.smem %s0, 11
  %s23 = sld [smem:[%s22]]
  %s24 = scalar_lea.smem %s0, 12
  %s25 = sld [smem:[%s24]]
  %s26 = scalar_lea.smem %s0, 13
  %s27 = sld [smem:[%s26]]
  %s28 = scalar_lea.smem %s0, 14
  %s29 = sld [smem:[%s28]]
  %s30 = scalar_lea.smem %s0, 15
  %s31 = sld [smem:[%s30]]
  %s32 = scalar_lea.smem %s0, 16
  %s33 = sld [smem:[%s32]]
  %s34 = scalar_lea.smem %s0, 17
  %s35 = sld [smem:[%s34]]
  %s36 = scalar_lea.smem %s0, 18
  %s37 = sld [smem:[%s36]]
  %s38 = scalar_lea.smem %s0, 19
  %s39 = sld [smem:[%s38]]
  %s40 = scalar_lea.smem %s0, 20
  %s41 = sld [smem:[%s40]]
  %s42 = scalar_lea.smem %s0, 21
  %s43 = sld [smem:[%s42]]
  %s44 = scalar_lea.smem %s0, 22
  %s45 = sld [smem:[%s44]]
  %s46 = scalar_lea.smem %s0, 23
  %s47 = sld [smem:[%s46]]
  %s48 = scalar_lea.smem %s0, 24
  %s49 = sld [smem:[%s48]]
  %s50 = scalar_lea.smem %s0, 25
  %s51 = sld [smem:[%s50]]
  %s52 = scalar_lea.smem %s0, 26
  %s53 = sld [smem:[%s52]]
  %s54 = scalar_lea.smem %s0, 27
  %s55 = sld [smem:[%s54]]
  %s56 = scalar_lea.smem %s0, 28
  %s57 = sld [smem:[%s56]]
  %s58 = scalar_lea.smem %s0, 29
  %s59 = sld [smem:[%s58]]
  %s60 = scalar_lea.smem %s0, 30
  %s61 = sld [smem:[%s60]]
  %s62 = scalar_lea.smem %s0, 31
  %s63 = sld [smem:[%s62]]
  %64 = xla_tuple %s61, %s63
  %s65 = sld [smem:[#allocation0]]
  $region185: #{dual_block_forward.1} parent=0
    _
  %s67 = ssub.s32 1, %s65
  %s68 = scalar_select 0, %s67, %s65
  $region1: #{dual_block_forward.1} parent=0
    #allocation2 [shape = 'u8[512]{0}', space=vmem, size = 0x400, scoped, tag = 'input window, operand 9, single buffered']
    #allocation3 [shape = 's32[2]{0}', space=sflag, size = 0x8, scoped, tag = 'scoped memory for dual_block_forward.1']
    #allocation4 [shape = 'u8[512]{0}', space=vmem, size = 0x400, scoped, tag = 'input window, operand 11, single buffered']
    #allocation5 [shape = 's32[1]{0}', space=sflag, size = 0x4, scoped, tag = 'scoped memory for dual_block_forward.1']
    #allocation6 [shape = 'u8[512]{0}', space=vmem, size = 0x400, scoped, tag = 'input window, operand 21, single buffered']
    #allocation7 [shape = 'u8[512]{0}', space=vmem, size = 0x400, scoped, tag = 'input window, operand 23, single buffered']
    #allocation8 [shape = 's32[1]{0}', space=sflag, size = 0x4, scoped, tag = 'scoped memory for dual_block_forward.1']
    #allocation9 [shape = 'u8[512]{0}', space=vmem, size = 0x400, scoped, tag = 'input window, operand 25, single buffered']
    #allocation10 [shape = 'u8[512]{0}', space=vmem, size = 0x400, scoped, tag = 'input window, operand 27, single buffered']
    #allocation11 [shape = 's32[1]{0}', space=sflag, size = 0x4, scoped, tag = 'scoped memory for dual_block_forward.1']
    %69 = vsyncpa [#allocation3], 0
    %70 = vsyncpa [#allocation5], 0
    %71 = vsyncpa [#allocation8], 0
    %72 = vsyncpa [#allocation11], 0
    loop: start=0, step=1, limit=4
    $region2: #{dual_block_forward.1} parent=1 // loop_pre_header
      _
    $region3: #{dual_block_forward.1} parent=1 // loop_header
      %s74 = sphi 0, %s78
      %p75 = scmp.ge.s32.totalorder %s74, 4
      %s84 = sphi 0, %s86
      %s87 = sphi 0, %s84
      %s88 = sphi 0, %s87
      %s104 = sphi 0, %s88
      %s110 = sphi 0, %s112
      %s113 = sphi 0, %s110
      %s114 = sphi 0, %s113
      %s130 = sphi 0, %s114
      %s136 = sphi 0, %s138
      %s139 = sphi 0, %s136
      %s140 = sphi 0, %s139
      %s156 = sphi 0, %s140
      %s162 = sphi 0, %s164
      %s165 = sphi 0, %s162
      %s166 = sphi 0, %s165
      %s182 = sphi 0, %s166
      %s186 = sphi 0, %s186
      %s188 = sphi 0, %s186
      %s189 = sphi 0, %s188
      %s203 = sphi 0, %s189
      %s207 = sphi 0, %s207
      %s209 = sphi 0, %s207
      %s210 = sphi 0, %s209
      %s224 = sphi 0, %s210
      %s228 = sphi 0, %s228
      %s230 = sphi 0, %s228
      %s231 = sphi 0, %s230
      %s245 = sphi 0, %s231
      %s249 = sphi 0, %s249
      %s251 = sphi 0, %s249
      %s252 = sphi 0, %s251
      %s266 = sphi 0, %s252
      %s270 = sphi 0, %s270
      %s272 = sphi 0, %s270
      %s273 = sphi 0, %s272
      %s287 = sphi 0, %s273
      %s291 = sphi 0, %s291
      %s293 = sphi 0, %s291
      %s294 = sphi 0, %s293
      %s308 = sphi 0, %s294
      %s312 = sphi 0, %s312
      %s314 = sphi 0, %s312
      %s315 = sphi 0, %s314
      %s329 = sphi 0, %s315
      %s333 = sphi 0, %s333
      %s335 = sphi 0, %s333
      %s336 = sphi 0, %s335
      %s350 = sphi 0, %s336
      %s354 = sphi 0, %s354
      %s356 = sphi 0, %s354
      %s357 = sphi 0, %s356
      %s371 = sphi 0, %s357
      %s375 = sphi 0, %s375
      %s377 = sphi 0, %s375
      %s378 = sphi 0, %s377
      %s392 = sphi 0, %s378
      %s396 = sphi 0, %s396
      %s398 = sphi 0, %s396
      %s399 = sphi 0, %s398
      %s413 = sphi 0, %s399
      %s417 = sphi 0, %s417
      %s419 = sphi 0, %s417
      %s420 = sphi 0, %s419
      %s434 = sphi 0, %s420
      %s438 = sphi 0, %s438
      %s440 = sphi 0, %s438
      %s441 = sphi 0, %s440
      %s455 = sphi 0, %s441
      %s459 = sphi 0, %s459
      %s461 = sphi 0, %s459
      %s462 = sphi 0, %s461
      %s476 = sphi 0, %s462
      %s480 = sphi 0, %s480
      %s482 = sphi 0, %s480
      %s483 = sphi 0, %s482
      %s497 = sphi 0, %s483
      %s501 = sphi 0, %s501
      %s503 = sphi 0, %s501
      %s504 = sphi 0, %s503
      %s518 = sphi 0, %s504
      %s522 = sphi 0, %s522
      %s524 = sphi 0, %s522
      %s525 = sphi 0, %s524
      %s539 = sphi 0, %s525
      %s543 = sphi 0, %s543
      %s545 = sphi 0, %s543
      %s546 = sphi 0, %s545
      %s560 = sphi 0, %s546
      %s564 = sphi 0, %s564
      %s566 = sphi 0, %s564
      %s567 = sphi 0, %s566
      %s581 = sphi 0, %s567
      %s585 = sphi 0, %s585
      %s587 = sphi 0, %s585
      %s588 = sphi 0, %s587
      %s602 = sphi 0, %s588
      %s606 = sphi 0, %s606
      %s608 = sphi 0, %s606
      %s609 = sphi 0, %s608
      %s623 = sphi 0, %s609
      %s627 = sphi 0, %s627
      %s629 = sphi 0, %s627
      %s630 = sphi 0, %s629
      %s644 = sphi 0, %s630
      %s648 = sphi 0, %s648
      %s650 = sphi 0, %s648
      %s651 = sphi 0, %s650
      %s665 = sphi 0, %s651
      %s669 = sphi 0, %s669
      %s671 = sphi 0, %s669
      %s672 = sphi 0, %s671
      %s686 = sphi 0, %s672
      %s690 = sphi 0, %s690
      %s692 = sphi 0, %s690
      %s693 = sphi 0, %s692
      %s707 = sphi 0, %s693
      %s711 = sphi 0, %s711
      %s713 = sphi 0, %s711
      %s714 = sphi 0, %s713
      %s728 = sphi 0, %s714
      %s734 = sphi 0, %s736
      %s737 = sphi 0, %s734
      %s738 = sphi 0, %s737
      %s754 = sphi 0, %s738
      %s760 = sphi 0, %s762
      %s763 = sphi 0, %s760
      %s764 = sphi 0, %s763
      %s780 = sphi 0, %s764
    $region4: #{dual_block_forward.1} parent=1 // loop_header_branch
      %77 = sbr.rel (%p75) target = $region8
    $region5: #{dual_block_forward.1} parent=1 // loop_body
      %s79 = ssub.s32 %s74, 1
      %s80 = ssub.s32 %s74, 2
      %s81 = sadd.s32 %s74, 1
      %s82 = ssub.s32 %s74, %s81
      %p83 = scmp.eq.s32.totalorder %s82, 0
      %s85 = sadd.s32 %s84, 1
      %s86 = scalar_select %p83, %s84, %s85
      %p89 = pneg %p83
      %p90 = scmp.eq.s32.totalorder %s74, 1
      %p91 = por %p89, %p90
      %p92 = scmp.ne.s32.totalorder %s84, %s87
      %p93 = scmp.eq.s32.totalorder %s74, 0
      %p94 = por %p92, %p93
      %p95 = scmp.ne.s32.totalorder %s84, %s87
      %p96 = scmp.eq.s32.totalorder %s79, 1
      %p97 = por %p95, %p96
      %p98 = scmp.ne.s32.totalorder %s87, %s88
      %p99 = scmp.eq.s32.totalorder %s79, 0
      %p100 = por %p98, %p99
      %p101 = scmp.ne.s32.totalorder %s87, %s88
      %p102 = scmp.eq.s32.totalorder %s80, 1
      %p103 = por %p101, %p102
      %p105 = scmp.ne.s32.totalorder %s88, %s104
      %p106 = scmp.eq.s32.totalorder %s80, 0
      %p107 = por %p105, %p106
      %s108 = ssub.s32 %s74, %s81
      %p109 = scmp.eq.s32.totalorder %s108, 0
      %s111 = sadd.s32 %s110, 1
      %s112 = scalar_select %p109, %s110, %s111
      %p115 = pneg %p109
      %p116 = scmp.eq.s32.totalorder %s74, 1
      %p117 = por %p115, %p116
      %p118 = scmp.ne.s32.totalorder %s110, %s113
      %p119 = scmp.eq.s32.totalorder %s74, 0
      %p120 = por %p118, %p119
      %p121 = scmp.ne.s32.totalorder %s110, %s113
      %p122 = scmp.eq.s32.totalorder %s79, 1
      %p123 = por %p121, %p122
      %p124 = scmp.ne.s32.totalorder %s113, %s114
      %p125 = scmp.eq.s32.totalorder %s79, 0
      %p126 = por %p124, %p125
      %p127 = scmp.ne.s32.totalorder %s113, %s114
      %p128 = scmp.eq.s32.totalorder %s80, 1
      %p129 = por %p127, %p128
      %p131 = scmp.ne.s32.totalorder %s114, %s130
      %p132 = scmp.eq.s32.totalorder %s80, 0
      %p133 = por %p131, %p132
      %s134 = ssub.s32 %s74, %s81
      %p135 = scmp.eq.s32.totalorder %s134, 0
      %s137 = sadd.s32 %s136, 1
      %s138 = scalar_select %p135, %s136, %s137
      %p141 = pneg %p135
      %p142 = scmp.eq.s32.totalorder %s74, 1
      %p143 = por %p141, %p142
      %p144 = scmp.ne.s32.totalorder %s136, %s139
      %p145 = scmp.eq.s32.totalorder %s74, 0
      %p146 = por %p144, %p145
      %p147 = scmp.ne.s32.totalorder %s136, %s139
      %p148 = scmp.eq.s32.totalorder %s79, 1
      %p149 = por %p147, %p148
      %p150 = scmp.ne.s32.totalorder %s139, %s140
      %p151 = scmp.eq.s32.totalorder %s79, 0
      %p152 = por %p150, %p151
      %p153 = scmp.ne.s32.totalorder %s139, %s140
      %p154 = scmp.eq.s32.totalorder %s80, 1
      %p155 = por %p153, %p154
      %p157 = scmp.ne.s32.totalorder %s140, %s156
      %p158 = scmp.eq.s32.totalorder %s80, 0
      %p159 = por %p157, %p158
      %s160 = ssub.s32 %s74, %s81
      %p161 = scmp.eq.s32.totalorder %s160, 0
      %s163 = sadd.s32 %s162, 1
      %s164 = scalar_select %p161, %s162, %s163
      %p167 = pneg %p161
      %p168 = scmp.eq.s32.totalorder %s74, 1
      %p169 = por %p167, %p168
      %p170 = scmp.ne.s32.totalorder %s162, %s165
      %p171 = scmp.eq.s32.totalorder %s74, 0
      %p172 = por %p170, %p171
      %p173 = scmp.ne.s32.totalorder %s162, %s165
      %p174 = scmp.eq.s32.totalorder %s79, 1
      %p175 = por %p173, %p174
      %p176 = scmp.ne.s32.totalorder %s165, %s166
      %p177 = scmp.eq.s32.totalorder %s79, 0
      %p178 = por %p176, %p177
      %p179 = scmp.ne.s32.totalorder %s165, %s166
      %p180 = scmp.eq.s32.totalorder %s80, 1
      %p181 = por %p179, %p180
      %p183 = scmp.ne.s32.totalorder %s166, %s182
      %p184 = scmp.eq.s32.totalorder %s80, 0
      %p185 = por %p183, %p184
      %s187 = sadd.s32 %s186, 1
      %p190 = scmp.eq.s32.totalorder %s74, 1
      %p191 = scmp.ne.s32.totalorder %s186, %s188
      %p192 = scmp.eq.s32.totalorder %s74, 0
      %p193 = por %p191, %p192
      %p194 = scmp.ne.s32.totalorder %s186, %s188
      %p195 = scmp.eq.s32.totalorder %s79, 1
      %p196 = por %p194, %p195
      %p197 = scmp.ne.s32.totalorder %s188, %s189
      %p198 = scmp.eq.s32.totalorder %s79, 0
      %p199 = por %p197, %p198
      %p200 = scmp.ne.s32.totalorder %s188, %s189
      %p201 = scmp.eq.s32.totalorder %s80, 1
      %p202 = por %p200, %p201
      %p204 = scmp.ne.s32.totalorder %s189, %s203
      %p205 = scmp.eq.s32.totalorder %s80, 0
      %p206 = por %p204, %p205
      %s208 = sadd.s32 %s207, 1
      %p211 = scmp.eq.s32.totalorder %s74, 1
      %p212 = scmp.ne.s32.totalorder %s207, %s209
      %p213 = scmp.eq.s32.totalorder %s74, 0
      %p214 = por %p212, %p213
      %p215 = scmp.ne.s32.totalorder %s207, %s209
      %p216 = scmp.eq.s32.totalorder %s79, 1
      %p217 = por %p215, %p216
      %p218 = scmp.ne.s32.totalorder %s209, %s210
      %p219 = scmp.eq.s32.totalorder %s79, 0
      %p220 = por %p218, %p219
      %p221 = scmp.ne.s32.totalorder %s209, %s210
      %p222 = scmp.eq.s32.totalorder %s80, 1
      %p223 = por %p221, %p222
      %p225 = scmp.ne.s32.totalorder %s210, %s224
      %p226 = scmp.eq.s32.totalorder %s80, 0
      %p227 = por %p225, %p226
      %s229 = sadd.s32 %s228, 1
      %p232 = scmp.eq.s32.totalorder %s74, 1
      %p233 = scmp.ne.s32.totalorder %s228, %s230
      %p234 = scmp.eq.s32.totalorder %s74, 0
      %p235 = por %p233, %p234
      %p236 = scmp.ne.s32.totalorder %s228, %s230
      %p237 = scmp.eq.s32.totalorder %s79, 1
      %p238 = por %p236, %p237
      %p239 = scmp.ne.s32.totalorder %s230, %s231
      %p240 = scmp.eq.s32.totalorder %s79, 0
      %p241 = por %p239, %p240
      %p242 = scmp.ne.s32.totalorder %s230, %s231
      %p243 = scmp.eq.s32.totalorder %s80, 1
      %p244 = por %p242, %p243
      %p246 = scmp.ne.s32.totalorder %s231, %s245
      %p247 = scmp.eq.s32.totalorder %s80, 0
      %p248 = por %p246, %p247
      %s250 = sadd.s32 %s249, 1
      %p253 = scmp.eq.s32.totalorder %s74, 1
      %p254 = scmp.ne.s32.totalorder %s249, %s251
      %p255 = scmp.eq.s32.totalorder %s74, 0
      %p256 = por %p254, %p255
      %p257 = scmp.ne.s32.totalorder %s249, %s251
      %p258 = scmp.eq.s32.totalorder %s79, 1
      %p259 = por %p257, %p258
      %p260 = scmp.ne.s32.totalorder %s251, %s252
      %p261 = scmp.eq.s32.totalorder %s79, 0
      %p262 = por %p260, %p261
      %p263 = scmp.ne.s32.totalorder %s251, %s252
      %p264 = scmp.eq.s32.totalorder %s80, 1
      %p265 = por %p263, %p264
      %p267 = scmp.ne.s32.totalorder %s252, %s266
      %p268 = scmp.eq.s32.totalorder %s80, 0
      %p269 = por %p267, %p268
      %s271 = sadd.s32 %s270, 1
      %p274 = scmp.eq.s32.totalorder %s74, 1
      %p275 = scmp.ne.s32.totalorder %s270, %s272
      %p276 = scmp.eq.s32.totalorder %s74, 0
      %p277 = por %p275, %p276
      %p278 = scmp.ne.s32.totalorder %s270, %s272
      %p279 = scmp.eq.s32.totalorder %s79, 1
      %p280 = por %p278, %p279
      %p281 = scmp.ne.s32.totalorder %s272, %s273
      %p282 = scmp.eq.s32.totalorder %s79, 0
      %p283 = por %p281, %p282
      %p284 = scmp.ne.s32.totalorder %s272, %s273
      %p285 = scmp.eq.s32.totalorder %s80, 1
      %p286 = por %p284, %p285
      %p288 = scmp.ne.s32.totalorder %s273, %s287
      %p289 = scmp.eq.s32.totalorder %s80, 0
      %p290 = por %p288, %p289
      %s292 = sadd.s32 %s291, 1
      %p295 = scmp.eq.s32.totalorder %s74, 1
      %p296 = scmp.ne.s32.totalorder %s291, %s293
      %p297 = scmp.eq.s32.totalorder %s74, 0
      %p298 = por %p296, %p297
      %p299 = scmp.ne.s32.totalorder %s291, %s293
      %p300 = scmp.eq.s32.totalorder %s79, 1
      %p301 = por %p299, %p300
      %p302 = scmp.ne.s32.totalorder %s293, %s294
      %p303 = scmp.eq.s32.totalorder %s79, 0
      %p304 = por %p302, %p303
      %p305 = scmp.ne.s32.totalorder %s293, %s294
      %p306 = scmp.eq.s32.totalorder %s80, 1
      %p307 = por %p305, %p306
      %p309 = scmp.ne.s32.totalorder %s294, %s308
      %p310 = scmp.eq.s32.totalorder %s80, 0
      %p311 = por %p309, %p310
      %s313 = sadd.s32 %s312, 1
      %p316 = scmp.eq.s32.totalorder %s74, 1
      %p317 = scmp.ne.s32.totalorder %s312, %s314
      %p318 = scmp.eq.s32.totalorder %s74, 0
      %p319 = por %p317, %p318
      %p320 = scmp.ne.s32.totalorder %s312, %s314
      %p321 = scmp.eq.s32.totalorder %s79, 1
      %p322 = por %p320, %p321
      %p323 = scmp.ne.s32.totalorder %s314, %s315
      %p324 = scmp.eq.s32.totalorder %s79, 0
      %p325 = por %p323, %p324
      %p326 = scmp.ne.s32.totalorder %s314, %s315
      %p327 = scmp.eq.s32.totalorder %s80, 1
      %p328 = por %p326, %p327
      %p330 = scmp.ne.s32.totalorder %s315, %s329
      %p331 = scmp.eq.s32.totalorder %s80, 0
      %p332 = por %p330, %p331
      %s334 = sadd.s32 %s333, 1
      %p337 = scmp.eq.s32.totalorder %s74, 1
      %p338 = scmp.ne.s32.totalorder %s333, %s335
      %p339 = scmp.eq.s32.totalorder %s74, 0
      %p340 = por %p338, %p339
      %p341 = scmp.ne.s32.totalorder %s333, %s335
      %p342 = scmp.eq.s32.totalorder %s79, 1
      %p343 = por %p341, %p342
      %p344 = scmp.ne.s32.totalorder %s335, %s336
      %p345 = scmp.eq.s32.totalorder %s79, 0
      %p346 = por %p344, %p345
      %p347 = scmp.ne.s32.totalorder %s335, %s336
      %p348 = scmp.eq.s32.totalorder %s80, 1
      %p349 = por %p347, %p348
      %p351 = scmp.ne.s32.totalorder %s336, %s350
      %p352 = scmp.eq.s32.totalorder %s80, 0
      %p353 = por %p351, %p352
      %s355 = sadd.s32 %s354, 1
      %p358 = scmp.eq.s32.totalorder %s74, 1
      %p359 = scmp.ne.s32.totalorder %s354, %s356
      %p360 = scmp.eq.s32.totalorder %s74, 0
      %p361 = por %p359, %p360
      %p362 = scmp.ne.s32.totalorder %s354, %s356
      %p363 = scmp.eq.s32.totalorder %s79, 1
      %p364 = por %p362, %p363
      %p365 = scmp.ne.s32.totalorder %s356, %s357
      %p366 = scmp.eq.s32.totalorder %s79, 0
      %p367 = por %p365, %p366
      %p368 = scmp.ne.s32.totalorder %s356, %s357
      %p369 = scmp.eq.s32.totalorder %s80, 1
      %p370 = por %p368, %p369
      %p372 = scmp.ne.s32.totalorder %s357, %s371
      %p373 = scmp.eq.s32.totalorder %s80, 0
      %p374 = por %p372, %p373
      %s376 = sadd.s32 %s375, 1
      %p379 = scmp.eq.s32.totalorder %s74, 1
      %p380 = scmp.ne.s32.totalorder %s375, %s377
      %p381 = scmp.eq.s32.totalorder %s74, 0
      %p382 = por %p380, %p381
      %p383 = scmp.ne.s32.totalorder %s375, %s377
      %p384 = scmp.eq.s32.totalorder %s79, 1
      %p385 = por %p383, %p384
      %p386 = scmp.ne.s32.totalorder %s377, %s378
      %p387 = scmp.eq.s32.totalorder %s79, 0
      %p388 = por %p386, %p387
      %p389 = scmp.ne.s32.totalorder %s377, %s378
      %p390 = scmp.eq.s32.totalorder %s80, 1
      %p391 = por %p389, %p390
      %p393 = scmp.ne.s32.totalorder %s378, %s392
      %p394 = scmp.eq.s32.totalorder %s80, 0
      %p395 = por %p393, %p394
      %s397 = sadd.s32 %s396, 1
      %p400 = scmp.eq.s32.totalorder %s74, 1
      %p401 = scmp.ne.s32.totalorder %s396, %s398
      %p402 = scmp.eq.s32.totalorder %s74, 0
      %p403 = por %p401, %p402
      %p404 = scmp.ne.s32.totalorder %s396, %s398
      %p405 = scmp.eq.s32.totalorder %s79, 1
      %p406 = por %p404, %p405
      %p407 = scmp.ne.s32.totalorder %s398, %s399
      %p408 = scmp.eq.s32.totalorder %s79, 0
      %p409 = por %p407, %p408
      %p410 = scmp.ne.s32.totalorder %s398, %s399
      %p411 = scmp.eq.s32.totalorder %s80, 1
      %p412 = por %p410, %p411
      %p414 = scmp.ne.s32.totalorder %s399, %s413
      %p415 = scmp.eq.s32.totalorder %s80, 0
      %p416 = por %p414, %p415
      %s418 = sadd.s32 %s417, 1
      %p421 = scmp.eq.s32.totalorder %s74, 1
      %p422 = scmp.ne.s32.totalorder %s417, %s419
      %p423 = scmp.eq.s32.totalorder %s74, 0
      %p424 = por %p422, %p423
      %p425 = scmp.ne.s32.totalorder %s417, %s419
      %p426 = scmp.eq.s32.totalorder %s79, 1
      %p427 = por %p425, %p426
      %p428 = scmp.ne.s32.totalorder %s419, %s420
      %p429 = scmp.eq.s32.totalorder %s79, 0
      %p430 = por %p428, %p429
      %p431 = scmp.ne.s32.totalorder %s419, %s420
      %p432 = scmp.eq.s32.totalorder %s80, 1
      %p433 = por %p431, %p432
      %p435 = scmp.ne.s32.totalorder %s420, %s434
      %p436 = scmp.eq.s32.totalorder %s80, 0
      %p437 = por %p435, %p436
      %s439 = sadd.s32 %s438, 1
      %p442 = scmp.eq.s32.totalorder %s74, 1
      %p443 = scmp.ne.s32.totalorder %s438, %s440
      %p444 = scmp.eq.s32.totalorder %s74, 0
      %p445 = por %p443, %p444
      %p446 = scmp.ne.s32.totalorder %s438, %s440
      %p447 = scmp.eq.s32.totalorder %s79, 1
      %p448 = por %p446, %p447
      %p449 = scmp.ne.s32.totalorder %s440, %s441
      %p450 = scmp.eq.s32.totalorder %s79, 0
      %p451 = por %p449, %p450
      %p452 = scmp.ne.s32.totalorder %s440, %s441
      %p453 = scmp.eq.s32.totalorder %s80, 1
      %p454 = por %p452, %p453
      %p456 = scmp.ne.s32.totalorder %s441, %s455
      %p457 = scmp.eq.s32.totalorder %s80, 0
      %p458 = por %p456, %p457
      %s460 = sadd.s32 %s459, 1
      %p463 = scmp.eq.s32.totalorder %s74, 1
      %p464 = scmp.ne.s32.totalorder %s459, %s461
      %p465 = scmp.eq.s32.totalorder %s74, 0
      %p466 = por %p464, %p465
      %p467 = scmp.ne.s32.totalorder %s459, %s461
      %p468 = scmp.eq.s32.totalorder %s79, 1
      %p469 = por %p467, %p468
      %p470 = scmp.ne.s32.totalorder %s461, %s462
      %p471 = scmp.eq.s32.totalorder %s79, 0
      %p472 = por %p470, %p471
      %p473 = scmp.ne.s32.totalorder %s461, %s462
      %p474 = scmp.eq.s32.totalorder %s80, 1
      %p475 = por %p473, %p474
      %p477 = scmp.ne.s32.totalorder %s462, %s476
      %p478 = scmp.eq.s32.totalorder %s80, 0
      %p479 = por %p477, %p478
      %s481 = sadd.s32 %s480, 1
      %p484 = scmp.eq.s32.totalorder %s74, 1
      %p485 = scmp.ne.s32.totalorder %s480, %s482
      %p486 = scmp.eq.s32.totalorder %s74, 0
      %p487 = por %p485, %p486
      %p488 = scmp.ne.s32.totalorder %s480, %s482
      %p489 = scmp.eq.s32.totalorder %s79, 1
      %p490 = por %p488, %p489
      %p491 = scmp.ne.s32.totalorder %s482, %s483
      %p492 = scmp.eq.s32.totalorder %s79, 0
      %p493 = por %p491, %p492
      %p494 = scmp.ne.s32.totalorder %s482, %s483
      %p495 = scmp.eq.s32.totalorder %s80, 1
      %p496 = por %p494, %p495
      %p498 = scmp.ne.s32.totalorder %s483, %s497
      %p499 = scmp.eq.s32.totalorder %s80, 0
      %p500 = por %p498, %p499
      %s502 = sadd.s32 %s501, 1
      %p505 = scmp.eq.s32.totalorder %s74, 1
      %p506 = scmp.ne.s32.totalorder %s501, %s503
      %p507 = scmp.eq.s32.totalorder %s74, 0
      %p508 = por %p506, %p507
      %p509 = scmp.ne.s32.totalorder %s501, %s503
      %p510 = scmp.eq.s32.totalorder %s79, 1
      %p511 = por %p509, %p510
      %p512 = scmp.ne.s32.totalorder %s503, %s504
      %p513 = scmp.eq.s32.totalorder %s79, 0
      %p514 = por %p512, %p513
      %p515 = scmp.ne.s32.totalorder %s503, %s504
      %p516 = scmp.eq.s32.totalorder %s80, 1
      %p517 = por %p515, %p516
      %p519 = scmp.ne.s32.totalorder %s504, %s518
      %p520 = scmp.eq.s32.totalorder %s80, 0
      %p521 = por %p519, %p520
      %s523 = sadd.s32 %s522, 1
      %p526 = scmp.eq.s32.totalorder %s74, 1
      %p527 = scmp.ne.s32.totalorder %s522, %s524
      %p528 = scmp.eq.s32.totalorder %s74, 0
      %p529 = por %p527, %p528
      %p530 = scmp.ne.s32.totalorder %s522, %s524
      %p531 = scmp.eq.s32.totalorder %s79, 1
      %p532 = por %p530, %p531
      %p533 = scmp.ne.s32.totalorder %s524, %s525
      %p534 = scmp.eq.s32.totalorder %s79, 0
      %p535 = por %p533, %p534
      %p536 = scmp.ne.s32.totalorder %s524, %s525
      %p537 = scmp.eq.s32.totalorder %s80, 1
      %p538 = por %p536, %p537
      %p540 = scmp.ne.s32.totalorder %s525, %s539
      %p541 = scmp.eq.s32.totalorder %s80, 0
      %p542 = por %p540, %p541
      %s544 = sadd.s32 %s543, 1
      %p547 = scmp.eq.s32.totalorder %s74, 1
      %p548 = scmp.ne.s32.totalorder %s543, %s545
      %p549 = scmp.eq.s32.totalorder %s74, 0
      %p550 = por %p548, %p549
      %p551 = scmp.ne.s32.totalorder %s543, %s545
      %p552 = scmp.eq.s32.totalorder %s79, 1
      %p553 = por %p551, %p552
      %p554 = scmp.ne.s32.totalorder %s545, %s546
      %p555 = scmp.eq.s32.totalorder %s79, 0
      %p556 = por %p554, %p555
      %p557 = scmp.ne.s32.totalorder %s545, %s546
      %p558 = scmp.eq.s32.totalorder %s80, 1
      %p559 = por %p557, %p558
      %p561 = scmp.ne.s32.totalorder %s546, %s560
      %p562 = scmp.eq.s32.totalorder %s80, 0
      %p563 = por %p561, %p562
      %s565 = sadd.s32 %s564, 1
      %p568 = scmp.eq.s32.totalorder %s74, 1
      %p569 = scmp.ne.s32.totalorder %s564, %s566
      %p570 = scmp.eq.s32.totalorder %s74, 0
      %p571 = por %p569, %p570
      %p572 = scmp.ne.s32.totalorder %s564, %s566
      %p573 = scmp.eq.s32.totalorder %s79, 1
      %p574 = por %p572, %p573
      %p575 = scmp.ne.s32.totalorder %s566, %s567
      %p576 = scmp.eq.s32.totalorder %s79, 0
      %p577 = por %p575, %p576
      %p578 = scmp.ne.s32.totalorder %s566, %s567
      %p579 = scmp.eq.s32.totalorder %s80, 1
      %p580 = por %p578, %p579
      %p582 = scmp.ne.s32.totalorder %s567, %s581
      %p583 = scmp.eq.s32.totalorder %s80, 0
      %p584 = por %p582, %p583
      %s586 = sadd.s32 %s585, 1
      %p589 = scmp.eq.s32.totalorder %s74, 1
      %p590 = scmp.ne.s32.totalorder %s585, %s587
      %p591 = scmp.eq.s32.totalorder %s74, 0
      %p592 = por %p590, %p591
      %p593 = scmp.ne.s32.totalorder %s585, %s587
      %p594 = scmp.eq.s32.totalorder %s79, 1
      %p595 = por %p593, %p594
      %p596 = scmp.ne.s32.totalorder %s587, %s588
      %p597 = scmp.eq.s32.totalorder %s79, 0
      %p598 = por %p596, %p597
      %p599 = scmp.ne.s32.totalorder %s587, %s588
      %p600 = scmp.eq.s32.totalorder %s80, 1
      %p601 = por %p599, %p600
      %p603 = scmp.ne.s32.totalorder %s588, %s602
      %p604 = scmp.eq.s32.totalorder %s80, 0
      %p605 = por %p603, %p604
      %s607 = sadd.s32 %s606, 1
      %p610 = scmp.eq.s32.totalorder %s74, 1
      %p611 = scmp.ne.s32.totalorder %s606, %s608
      %p612 = scmp.eq.s32.totalorder %s74, 0
      %p613 = por %p611, %p612
      %p614 = scmp.ne.s32.totalorder %s606, %s608
      %p615 = scmp.eq.s32.totalorder %s79, 1
      %p616 = por %p614, %p615
      %p617 = scmp.ne.s32.totalorder %s608, %s609
      %p618 = scmp.eq.s32.totalorder %s79, 0
      %p619 = por %p617, %p618
      %p620 = scmp.ne.s32.totalorder %s608, %s609
      %p621 = scmp.eq.s32.totalorder %s80, 1
      %p622 = por %p620, %p621
      %p624 = scmp.ne.s32.totalorder %s609, %s623
      %p625 = scmp.eq.s32.totalorder %s80, 0
      %p626 = por %p624, %p625
      %s628 = sadd.s32 %s627, 1
      %p631 = scmp.eq.s32.totalorder %s74, 1
      %p632 = scmp.ne.s32.totalorder %s627, %s629
      %p633 = scmp.eq.s32.totalorder %s74, 0
      %p634 = por %p632, %p633
      %p635 = scmp.ne.s32.totalorder %s627, %s629
      %p636 = scmp.eq.s32.totalorder %s79, 1
      %p637 = por %p635, %p636
      %p638 = scmp.ne.s32.totalorder %s629, %s630
      %p639 = scmp.eq.s32.totalorder %s79, 0
      %p640 = por %p638, %p639
      %p641 = scmp.ne.s32.totalorder %s629, %s630
      %p642 = scmp.eq.s32.totalorder %s80, 1
      %p643 = por %p641, %p642
      %p645 = scmp.ne.s32.totalorder %s630, %s644
      %p646 = scmp.eq.s32.totalorder %s80, 0
      %p647 = por %p645, %p646
      %s649 = sadd.s32 %s648, 1
      %p652 = scmp.eq.s32.totalorder %s74, 1
      %p653 = scmp.ne.s32.totalorder %s648, %s650
      %p654 = scmp.eq.s32.totalorder %s74, 0
      %p655 = por %p653, %p654
      %p656 = scmp.ne.s32.totalorder %s648, %s650
      %p657 = scmp.eq.s32.totalorder %s79, 1
      %p658 = por %p656, %p657
      %p659 = scmp.ne.s32.totalorder %s650, %s651
      %p660 = scmp.eq.s32.totalorder %s79, 0
      %p661 = por %p659, %p660
      %p662 = scmp.ne.s32.totalorder %s650, %s651
      %p663 = scmp.eq.s32.totalorder %s80, 1
      %p664 = por %p662, %p663
      %p666 = scmp.ne.s32.totalorder %s651, %s665
      %p667 = scmp.eq.s32.totalorder %s80, 0
      %p668 = por %p666, %p667
      %s670 = sadd.s32 %s669, 1
      %p673 = scmp.eq.s32.totalorder %s74, 1
      %p674 = scmp.ne.s32.totalorder %s669, %s671
      %p675 = scmp.eq.s32.totalorder %s74, 0
      %p676 = por %p674, %p675
      %p677 = scmp.ne.s32.totalorder %s669, %s671
      %p678 = scmp.eq.s32.totalorder %s79, 1
      %p679 = por %p677, %p678
      %p680 = scmp.ne.s32.totalorder %s671, %s672
      %p681 = scmp.eq.s32.totalorder %s79, 0
      %p682 = por %p680, %p681
      %p683 = scmp.ne.s32.totalorder %s671, %s672
      %p684 = scmp.eq.s32.totalorder %s80, 1
      %p685 = por %p683, %p684
      %p687 = scmp.ne.s32.totalorder %s672, %s686
      %p688 = scmp.eq.s32.totalorder %s80, 0
      %p689 = por %p687, %p688
      %s691 = sadd.s32 %s690, 1
      %p694 = scmp.eq.s32.totalorder %s74, 1
      %p695 = scmp.ne.s32.totalorder %s690, %s692
      %p696 = scmp.eq.s32.totalorder %s74, 0
      %p697 = por %p695, %p696
      %p698 = scmp.ne.s32.totalorder %s690, %s692
      %p699 = scmp.eq.s32.totalorder %s79, 1
      %p700 = por %p698, %p699
      %p701 = scmp.ne.s32.totalorder %s692, %s693
      %p702 = scmp.eq.s32.totalorder %s79, 0
      %p703 = por %p701, %p702
      %p704 = scmp.ne.s32.totalorder %s692, %s693
      %p705 = scmp.eq.s32.totalorder %s80, 1
      %p706 = por %p704, %p705
      %p708 = scmp.ne.s32.totalorder %s693, %s707
      %p709 = scmp.eq.s32.totalorder %s80, 0
      %p710 = por %p708, %p709
      %s712 = sadd.s32 %s711, 1
      %p715 = scmp.eq.s32.totalorder %s74, 1
      %p716 = scmp.ne.s32.totalorder %s711, %s713
      %p717 = scmp.eq.s32.totalorder %s74, 0
      %p718 = por %p716, %p717
      %p719 = scmp.ne.s32.totalorder %s711, %s713
      %p720 = scmp.eq.s32.totalorder %s79, 1
      %p721 = por %p719, %p720
      %p722 = scmp.ne.s32.totalorder %s713, %s714
      %p723 = scmp.eq.s32.totalorder %s79, 0
      %p724 = por %p722, %p723
      %p725 = scmp.ne.s32.totalorder %s713, %s714
      %p726 = scmp.eq.s32.totalorder %s80, 1
      %p727 = por %p725, %p726
      %p729 = scmp.ne.s32.totalorder %s714, %s728
      %p730 = scmp.eq.s32.totalorder %s80, 0
      %p731 = por %p729, %p730
      %s732 = ssub.s32 %s74, %s81
      %p733 = scmp.eq.s32.totalorder %s732, 0
      %s735 = sadd.s32 %s734, 1
      %s736 = scalar_select %p733, %s734, %s735
      %p739 = pneg %p733
      %p740 = scmp.eq.s32.totalorder %s74, 1
      %p741 = por %p739, %p740
      %p742 = scmp.ne.s32.totalorder %s734, %s737
      %p743 = scmp.eq.s32.totalorder %s74, 0
      %p744 = por %p742, %p743
      %p745 = scmp.ne.s32.totalorder %s734, %s737
      %p746 = scmp.eq.s32.totalorder %s79, 1
      %p747 = por %p745, %p746
      %p748 = scmp.ne.s32.totalorder %s737, %s738
      %p749 = scmp.eq.s32.totalorder %s79, 0
      %p750 = por %p748, %p749
      %p751 = scmp.ne.s32.totalorder %s737, %s738
      %p752 = scmp.eq.s32.totalorder %s80, 1
      %p753 = por %p751, %p752
      %p755 = scmp.ne.s32.totalorder %s738, %s754
      %p756 = scmp.eq.s32.totalorder %s80, 0
      %p757 = por %p755, %p756
      %s758 = ssub.s32 %s74, %s81
      %p759 = scmp.eq.s32.totalorder %s758, 0
      %s761 = sadd.s32 %s760, 1
      %s762 = scalar_select %p759, %s760, %s761
      %p765 = pneg %p759
      %p766 = scmp.eq.s32.totalorder %s74, 1
      %p767 = por %p765, %p766
      %p768 = scmp.ne.s32.totalorder %s760, %s763
      %p769 = scmp.eq.s32.totalorder %s74, 0
      %p770 = por %p768, %p769
      %p771 = scmp.ne.s32.totalorder %s760, %s763
      %p772 = scmp.eq.s32.totalorder %s79, 1
      %p773 = por %p771, %p772
      %p774 = scmp.ne.s32.totalorder %s763, %s764
      %p775 = scmp.eq.s32.totalorder %s79, 0
      %p776 = por %p774, %p775
      %p777 = scmp.ne.s32.totalorder %s763, %s764
      %p778 = scmp.eq.s32.totalorder %s80, 1
      %p779 = por %p777, %p778
      %p781 = scmp.ne.s32.totalorder %s764, %s780
      %p782 = scmp.eq.s32.totalorder %s80, 0
      %p783 = por %p781, %p782
      %p784 = scmp.le.s32.totalorder 1, %s74
      %p785 = scmp.lt.s32.totalorder %s74, 3
      %p786 = pnand %p784, %p785
      %p787 = pneg %p786
      // Predicated region
      $region9: #{dual_block_forward.1} parent=5 // pred_check
        _
      $region10: #{dual_block_forward.1} parent=5 // pred_check_branch
        %789 = sbr.rel (%p786) target = $region12
      $region11: #{dual_block_forward.1} parent=5 // pred_region
        %s790 = ssub.s32 %s74, 1
        // Predicated region
        $region13: #{dual_block_forward.1} parent=11 // pred_check
          %p791 = pneg %p199
        $region14: #{dual_block_forward.1} parent=11 // pred_check_branch
          %793 = sbr.rel (%p791) target = $region16
        $region15: #{dual_block_forward.1} parent=11 // pred_region
          _
        $region16: #{dual_block_forward.1} parent=11 // pred_fallthru
          _
        // Predicated region
        $region17: #{dual_block_forward.1} parent=11 // pred_check
          %p794 = pneg %p220
        $region18: #{dual_block_forward.1} parent=11 // pred_check_branch
          %796 = sbr.rel (%p794) target = $region20
        $region19: #{dual_block_forward.1} parent=11 // pred_region
          _
        $region20: #{dual_block_forward.1} parent=11 // pred_fallthru
          _
        // Predicated region
        $region21: #{dual_block_forward.1} parent=11 // pred_check
          %p797 = pneg %p241
        $region22: #{dual_block_forward.1} parent=11 // pred_check_branch
          %799 = sbr.rel (%p797) target = $region24
        $region23: #{dual_block_forward.1} parent=11 // pred_region
          _
        $region24: #{dual_block_forward.1} parent=11 // pred_fallthru
          _
        // Predicated region
        $region25: #{dual_block_forward.1} parent=11 // pred_check
          %p800 = pneg %p262
        $region26: #{dual_block_forward.1} parent=11 // pred_check_branch
          %802 = sbr.rel (%p800) target = $region28
        $region27: #{dual_block_forward.1} parent=11 // pred_region
          _
        $region28: #{dual_block_forward.1} parent=11 // pred_fallthru
          _
        // Predicated region
        $region29: #{dual_block_forward.1} parent=11 // pred_check
          %p803 = pneg %p283
        $region30: #{dual_block_forward.1} parent=11 // pred_check_branch
          %805 = sbr.rel (%p803) target = $region32
        $region31: #{dual_block_forward.1} parent=11 // pred_region
          _
        $region32: #{dual_block_forward.1} parent=11 // pred_fallthru
          _
        // Predicated region
        $region33: #{dual_block_forward.1} parent=11 // pred_check
          %p806 = pneg %p304
        $region34: #{dual_block_forward.1} parent=11 // pred_check_branch
          %808 = sbr.rel (%p806) target = $region36
        $region35: #{dual_block_forward.1} parent=11 // pred_region
          %s810 = ssub.s32 16, 16
          %811 = vsyncadd [#allocation3], %s810
          %s813 = sshll.u32 [#allocation2], 4
          %s814 = int_to_ptr.vmem [resolvable:$true] %s813
          %816 = dma.hbm_to_vmem [thread:$0]  %s19, 16, %s814, [#allocation3]
        $region36: #{dual_block_forward.1} parent=11 // pred_fallthru
          _
        // Predicated region
        $region37: #{dual_block_forward.1} parent=11 // pred_check
          %p817 = pneg %p325
        $region38: #{dual_block_forward.1} parent=11 // pred_check_branch
          %819 = sbr.rel (%p817) target = $region40
        $region39: #{dual_block_forward.1} parent=11 // pred_region
          _
        $region40: #{dual_block_forward.1} parent=11 // pred_fallthru
          _
        // Predicated region
        $region41: #{dual_block_forward.1} parent=11 // pred_check
          %p820 = pneg %p346
        $region42: #{dual_block_forward.1} parent=11 // pred_check_branch
          %822 = sbr.rel (%p820) target = $region44
        $region43: #{dual_block_forward.1} parent=11 // pred_region
          %s824 = ssub.s32 16, 16
          %825 = vsyncadd [#allocation5], %s824
          %s827 = sshll.u32 [#allocation4], 4
          %s828 = int_to_ptr.vmem [resolvable:$true] %s827
          %830 = dma.hbm_to_vmem [thread:$0]  %s23, 16, %s828, [#allocation5]
        $region44: #{dual_block_forward.1} parent=11 // pred_fallthru
          _
        // Predicated region
        $region45: #{dual_block_forward.1} parent=11 // pred_check
          %p831 = pneg %p367
        $region46: #{dual_block_forward.1} parent=11 // pred_check_branch
          %833 = sbr.rel (%p831) target = $region48
        $region47: #{dual_block_forward.1} parent=11 // pred_region
          _
        $region48: #{dual_block_forward.1} parent=11 // pred_fallthru
          _
        // Predicated region
        $region49: #{dual_block_forward.1} parent=11 // pred_check
          %p834 = pneg %p388
        $region50: #{dual_block_forward.1} parent=11 // pred_check_branch
          %836 = sbr.rel (%p834) target = $region52
        $region51: #{dual_block_forward.1} parent=11 // pred_region
          _
        $region52: #{dual_block_forward.1} parent=11 // pred_fallthru
          _
        // Predicated region
        $region53: #{dual_block_forward.1} parent=11 // pred_check
          %p837 = pneg %p409
        $region54: #{dual_block_forward.1} parent=11 // pred_check_branch
          %839 = sbr.rel (%p837) target = $region56
        $region55: #{dual_block_forward.1} parent=11 // pred_region
          _
        $region56: #{dual_block_forward.1} parent=11 // pred_fallthru
          _
        // Predicated region
        $region57: #{dual_block_forward.1} parent=11 // pred_check
          %p840 = pneg %p430
        $region58: #{dual_block_forward.1} parent=11 // pred_check_branch
          %842 = sbr.rel (%p840) target = $region60
        $region59: #{dual_block_forward.1} parent=11 // pred_region
          _
        $region60: #{dual_block_forward.1} parent=11 // pred_fallthru
          _
        // Predicated region
        $region61: #{dual_block_forward.1} parent=11 // pred_check
          %p843 = pneg %p451
        $region62: #{dual_block_forward.1} parent=11 // pred_check_branch
          %845 = sbr.rel (%p843) target = $region64
        $region63: #{dual_block_forward.1} parent=11 // pred_region
          _
        $region64: #{dual_block_forward.1} parent=11 // pred_fallthru
          _
        // Predicated region
        $region65: #{dual_block_forward.1} parent=11 // pred_check
          %p846 = pneg %p472
        $region66: #{dual_block_forward.1} parent=11 // pred_check_branch
          %848 = sbr.rel (%p846) target = $region68
        $region67: #{dual_block_forward.1} parent=11 // pred_region
          _
        $region68: #{dual_block_forward.1} parent=11 // pred_fallthru
          _
        // Predicated region
        $region69: #{dual_block_forward.1} parent=11 // pred_check
          %p849 = pneg %p493
        $region70: #{dual_block_forward.1} parent=11 // pred_check_branch
          %851 = sbr.rel (%p849) target = $region72
        $region71: #{dual_block_forward.1} parent=11 // pred_region
          _
        $region72: #{dual_block_forward.1} parent=11 // pred_fallthru
          _
        // Predicated region
        $region73: #{dual_block_forward.1} parent=11 // pred_check
          %p852 = pneg %p514
        $region74: #{dual_block_forward.1} parent=11 // pred_check_branch
          %854 = sbr.rel (%p852) target = $region76
        $region75: #{dual_block_forward.1} parent=11 // pred_region
          _
        $region76: #{dual_block_forward.1} parent=11 // pred_fallthru
          _
        // Predicated region
        $region77: #{dual_block_forward.1} parent=11 // pred_check
          %p855 = pneg %p535
        $region78: #{dual_block_forward.1} parent=11 // pred_check_branch
          %857 = sbr.rel (%p855) target = $region80
        $region79: #{dual_block_forward.1} parent=11 // pred_region
          _
        $region80: #{dual_block_forward.1} parent=11 // pred_fallthru
          _
        // Predicated region
        $region81: #{dual_block_forward.1} parent=11 // pred_check
          %p858 = pneg %p556
        $region82: #{dual_block_forward.1} parent=11 // pred_check_branch
          %860 = sbr.rel (%p858) target = $region84
        $region83: #{dual_block_forward.1} parent=11 // pred_region
          %s862 = ssub.s32 16, 16
          %863 = vsyncadd [#allocation5], %s862
          %s865 = sshll.u32 [#allocation6], 4
          %s866 = int_to_ptr.vmem [resolvable:$true] %s865
          %868 = dma.hbm_to_vmem [thread:$0]  %s43, 16, %s866, [#allocation5]
        $region84: #{dual_block_forward.1} parent=11 // pred_fallthru
          _
        // Predicated region
        $region85: #{dual_block_forward.1} parent=11 // pred_check
          %p869 = pneg %p577
        $region86: #{dual_block_forward.1} parent=11 // pred_check_branch
          %871 = sbr.rel (%p869) target = $region88
        $region87: #{dual_block_forward.1} parent=11 // pred_region
          _
        $region88: #{dual_block_forward.1} parent=11 // pred_fallthru
          _
        // Predicated region
        $region89: #{dual_block_forward.1} parent=11 // pred_check
          %p872 = pneg %p598
        $region90: #{dual_block_forward.1} parent=11 // pred_check_branch
          %874 = sbr.rel (%p872) target = $region92
        $region91: #{dual_block_forward.1} parent=11 // pred_region
          %s876 = ssub.s32 16, 16
          %877 = vsyncadd [#allocation8], %s876
          %s879 = sshll.u32 [#allocation7], 4
          %s880 = int_to_ptr.vmem [resolvable:$true] %s879
          %882 = dma.hbm_to_vmem [thread:$0]  %s47, 16, %s880, [#allocation8]
        $region92: #{dual_block_forward.1} parent=11 // pred_fallthru
          _
        // Predicated region
        $region93: #{dual_block_forward.1} parent=11 // pred_check
          %p883 = pneg %p619
        $region94: #{dual_block_forward.1} parent=11 // pred_check_branch
          %885 = sbr.rel (%p883) target = $region96
        $region95: #{dual_block_forward.1} parent=11 // pred_region
          _
        $region96: #{dual_block_forward.1} parent=11 // pred_fallthru
          _
        // Predicated region
        $region97: #{dual_block_forward.1} parent=11 // pred_check
          %p886 = pneg %p640
        $region98: #{dual_block_forward.1} parent=11 // pred_check_branch
          %888 = sbr.rel (%p886) target = $region100
        $region99: #{dual_block_forward.1} parent=11 // pred_region
          %s890 = ssub.s32 16, 16
          %891 = vsyncadd [#allocation8], %s890
          %s893 = sshll.u32 [#allocation9], 4
          %s894 = int_to_ptr.vmem [resolvable:$true] %s893
          %896 = dma.hbm_to_vmem [thread:$0]  %s51, 16, %s894, [#allocation8]
        $region100: #{dual_block_forward.1} parent=11 // pred_fallthru
          _
        // Predicated region
        $region101: #{dual_block_forward.1} parent=11 // pred_check
          %p897 = pneg %p661
        $region102: #{dual_block_forward.1} parent=11 // pred_check_branch
          %899 = sbr.rel (%p897) target = $region104
        $region103: #{dual_block_forward.1} parent=11 // pred_region
          _
        $region104: #{dual_block_forward.1} parent=11 // pred_fallthru
          _
        // Predicated region
        $region105: #{dual_block_forward.1} parent=11 // pred_check
          %p900 = pneg %p682
        $region106: #{dual_block_forward.1} parent=11 // pred_check_branch
          %902 = sbr.rel (%p900) target = $region108
        $region107: #{dual_block_forward.1} parent=11 // pred_region
          %s904 = ssub.s32 16, 16
          %905 = vsyncadd [#allocation11], %s904
          %s907 = sshll.u32 [#allocation10], 4
          %s908 = int_to_ptr.vmem [resolvable:$true] %s907
          %910 = dma.hbm_to_vmem [thread:$0]  %s55, 16, %s908, [#allocation11]
        $region108: #{dual_block_forward.1} parent=11 // pred_fallthru
          _
        // Predicated region
        $region109: #{dual_block_forward.1} parent=11 // pred_check
          %p911 = pneg %p703
        $region110: #{dual_block_forward.1} parent=11 // pred_check_branch
          %913 = sbr.rel (%p911) target = $region112
        $region111: #{dual_block_forward.1} parent=11 // pred_region
          _
        $region112: #{dual_block_forward.1} parent=11 // pred_fallthru
          _
        // Predicated region
        $region113: #{dual_block_forward.1} parent=11 // pred_check
          %p914 = pneg %p724
        $region114: #{dual_block_forward.1} parent=11 // pred_check_branch
          %916 = sbr.rel (%p914) target = $region116
        $region115: #{dual_block_forward.1} parent=11 // pred_region
          _
        $region116: #{dual_block_forward.1} parent=11 // pred_fallthru
          _
      $region12: #{dual_block_forward.1} parent=5 // pred_fallthru
        _
      %p917 = scmp.lt.s32.totalorder %s74, 2
      // Predicated region
      $region117: #{dual_block_forward.1} parent=5 // pred_check
        %p918 = pneg %p917
      $region118: #{dual_block_forward.1} parent=5 // pred_check_branch
        %920 = sbr.rel (%p918) target = $region120
      $region119: #{dual_block_forward.1} parent=5 // pred_region
        // Predicated region
        $region121: #{dual_block_forward.1} parent=119 // pred_check
          %p921 = pneg %p94
        $region122: #{dual_block_forward.1} parent=119 // pred_check_branch
          %923 = sbr.rel (%p921) target = $region124
        $region123: #{dual_block_forward.1} parent=119 // pred_region
          %p924 = scmp.lt.s32.totalorder %s74, 1
          %s925 = scalar_select %p924, %s74, 1
          %s926 = smul.addr %s925, 2
          %s927 = smul.addr %s926, 8
          %s928 = scalar_lea.vmem %s1, %s927
        $region124: #{dual_block_forward.1} parent=119 // pred_fallthru
          _
        // Predicated region
        $region125: #{dual_block_forward.1} parent=119 // pred_check
          %p929 = pneg %p120
        $region126: #{dual_block_forward.1} parent=119 // pred_check_branch
          %931 = sbr.rel (%p929) target = $region128
        $region127: #{dual_block_forward.1} parent=119 // pred_region
          %p932 = scmp.lt.s32.totalorder %s74, 1
          %s933 = scalar_select %p932, %s74, 1
          %s934 = smul.addr %s933, 8
          %s935 = scalar_lea.vmem %s3, %s934
        $region128: #{dual_block_forward.1} parent=119 // pred_fallthru
          _
        // Predicated region
        $region129: #{dual_block_forward.1} parent=119 // pred_check
          %p936 = pneg %p146
        $region130: #{dual_block_forward.1} parent=119 // pred_check_branch
          %938 = sbr.rel (%p936) target = $region132
        $region131: #{dual_block_forward.1} parent=119 // pred_region
          %p939 = scmp.lt.s32.totalorder %s74, 1
          %s940 = scalar_select %p939, %s74, 1
          %s941 = smul.addr %s940, 2
          %s942 = smul.addr %s941, 8
          %s943 = scalar_lea.vmem %s5, %s942
        $region132: #{dual_block_forward.1} parent=119 // pred_fallthru
          _
        // Predicated region
        $region133: #{dual_block_forward.1} parent=119 // pred_check
          %p944 = pneg %p172
        $region134: #{dual_block_forward.1} parent=119 // pred_check_branch
          %946 = sbr.rel (%p944) target = $region136
        $region135: #{dual_block_forward.1} parent=119 // pred_region
          %p947 = scmp.lt.s32.totalorder %s74, 1
          %s948 = scalar_select %p947, %s74, 1
          %s949 = smul.addr %s948, 8
          %s950 = scalar_lea.vmem %s7, %s949
        $region136: #{dual_block_forward.1} parent=119 // pred_fallthru
          _
      $region120: #{dual_block_forward.1} parent=5 // pred_fallthru
        _
      %p951 = scmp.le.s32.totalorder 1, %s74
      %p952 = scmp.lt.s32.totalorder %s74, 3
      %p953 = pnand %p951, %p952
      %p954 = pneg %p953
      // Predicated region
      $region137: #{dual_block_forward.1} parent=5 // pred_check
        _
      $region138: #{dual_block_forward.1} parent=5 // pred_check_branch
        %956 = sbr.rel (%p953) target = $region140
      $region139: #{dual_block_forward.1} parent=5 // pred_region
        %s957 = ssub.s32 %s74, 1
        // Predicated region
        $region141: #{dual_block_forward.1} parent=139 // pred_check
          %p958 = pneg %p304
        $region142: #{dual_block_forward.1} parent=139 // pred_check_branch
          %960 = sbr.rel (%p958) target = $region144
        $region143: #{dual_block_forward.1} parent=139 // pred_region
          %961 = dma.done [#allocation3], 16
        $region144: #{dual_block_forward.1} parent=139 // pred_fallthru
          _
        // Predicated region
        $region145: #{dual_block_forward.1} parent=139 // pred_check
          %p962 = pneg %p346
        $region146: #{dual_block_forward.1} parent=139 // pred_check_branch
          %964 = sbr.rel (%p962) target = $region148
        $region147: #{dual_block_forward.1} parent=139 // pred_region
          %965 = dma.done [#allocation5], 16
        $region148: #{dual_block_forward.1} parent=139 // pred_fallthru
          _
        // Predicated region
        $region149: #{dual_block_forward.1} parent=139 // pred_check
          %p966 = pneg %p556
        $region150: #{dual_block_forward.1} parent=139 // pred_check_branch
          %968 = sbr.rel (%p966) target = $region152
        $region151: #{dual_block_forward.1} parent=139 // pred_region
          %969 = dma.done [#allocation5], 16
        $region152: #{dual_block_forward.1} parent=139 // pred_fallthru
          _
        // Predicated region
        $region153: #{dual_block_forward.1} parent=139 // pred_check
          %p970 = pneg %p598
        $region154: #{dual_block_forward.1} parent=139 // pred_check_branch
          %972 = sbr.rel (%p970) target = $region156
        $region155: #{dual_block_forward.1} parent=139 // pred_region
          %973 = dma.done [#allocation8], 16
        $region156: #{dual_block_forward.1} parent=139 // pred_fallthru
          _
        // Predicated region
        $region157: #{dual_block_forward.1} parent=139 // pred_check
          %p974 = pneg %p640
        $region158: #{dual_block_forward.1} parent=139 // pred_check_branch
          %976 = sbr.rel (%p974) target = $region160
        $region159: #{dual_block_forward.1} parent=139 // pred_region
          %977 = dma.done [#allocation8], 16
        $region160: #{dual_block_forward.1} parent=139 // pred_fallthru
          _
        // Predicated region
        $region161: #{dual_block_forward.1} parent=139 // pred_check
          %p978 = pneg %p682
        $region162: #{dual_block_forward.1} parent=139 // pred_check_branch
          %980 = sbr.rel (%p978) target = $region164
        $region163: #{dual_block_forward.1} parent=139 // pred_region
          %981 = dma.done [#allocation11], 16
        $region164: #{dual_block_forward.1} parent=139 // pred_fallthru
          _
        %p982 = scmp.lt.s32.totalorder %s79, 1
        %s983 = scalar_select %p982, %s79, 1
        %s984 = smul.addr %s983, 2
        %s985 = smul.addr %s984, 8
        %s986 = scalar_lea.vmem %s1, %s985
        %p987 = pneg %p100
        %p988 = pneg %p97
        %p989 = scmp.lt.s32.totalorder %s79, 1
        %s990 = scalar_select %p989, %s79, 1
        %s991 = smul.addr %s990, 8
        %s992 = scalar_lea.vmem %s3, %s991
        %p993 = pneg %p126
        %p994 = pneg %p123
        %p995 = scmp.lt.s32.totalorder %s79, 1
        %s996 = scalar_select %p995, %s79, 1
        %s997 = smul.addr %s996, 2
        %s998 = smul.addr %s997, 8
        %s999 = scalar_lea.vmem %s5, %s998
        %p1000 = pneg %p152
        %p1001 = pneg %p149
        %p1002 = scmp.lt.s32.totalorder %s79, 1
        %s1003 = scalar_select %p1002, %s79, 1
        %s1004 = smul.addr %s1003, 8
        %s1005 = scalar_lea.vmem %s7, %s1004
        %p1006 = pneg %p178
        %p1007 = pneg %p175
        %p1008 = pneg %p199
        %p1009 = pneg %p196
        %p1010 = pneg %p220
        %p1011 = pneg %p217
        %p1012 = pneg %p241
        %p1013 = pneg %p238
        %p1014 = pneg %p262
        %p1015 = pneg %p259
        %p1016 = pneg %p283
        %p1017 = pneg %p280
        %p1018 = pneg %p304
        %p1019 = pneg %p301
        %p1020 = pneg %p325
        %p1021 = pneg %p322
        %p1022 = pneg %p346
        %p1023 = pneg %p343
        %p1024 = pneg %p367
        %p1025 = pneg %p364
        %p1026 = pneg %p388
        %p1027 = pneg %p385
        %p1028 = pneg %p409
        %p1029 = pneg %p406
        %p1030 = pneg %p430
        %p1031 = pneg %p427
        %p1032 = pneg %p451
        %p1033 = pneg %p448
        %p1034 = pneg %p472
        %p1035 = pneg %p469
        %p1036 = pneg %p493
        %p1037 = pneg %p490
        %p1038 = pneg %p514
        %p1039 = pneg %p511
        %p1040 = pneg %p535
        %p1041 = pneg %p532
        %p1042 = pneg %p556
        %p1043 = pneg %p553
        %p1044 = pneg %p577
        %p1045 = pneg %p574
        %p1046 = pneg %p598
        %p1047 = pneg %p595
        %p1048 = pneg %p619
        %p1049 = pneg %p616
        %p1050 = pneg %p640
        %p1051 = pneg %p637
        %p1052 = pneg %p661
        %p1053 = pneg %p658
        %p1054 = pneg %p682
        %p1055 = pneg %p679
        %p1056 = pneg %p703
        %p1057 = pneg %p700
        %p1058 = pneg %p724
        %p1059 = pneg %p721
        %p1060 = pneg %p750
        %p1061 = pneg %p747
        %p1062 = scmp.lt.s32.totalorder %s79, 1
        %s1063 = scalar_select %p1062, %s79, 1
        %s1064 = smul.addr %s1063, 2
        %s1065 = smul.addr %s1064, 8
        %s1066 = scalar_lea.vmem %s61, %s1065
        %p1067 = pneg %p776
        %p1068 = pneg %p773
        %p1069 = scmp.lt.s32.totalorder %s79, 1
        %s1070 = scalar_select %p1069, %s79, 1
        %s1071 = smul.addr %s1070, 8
        %s1072 = scalar_lea.vmem %s63, %s1071
        %p1073 = scmp.lt.s32.totalorder %s79, 1
        %s1074 = scalar_select %p1073, %s79, 1
        %s1075 = smul.addr %s1074, 2
        %s1076 = smul.addr %s1075, 8
        %s1077 = scalar_lea.vmem %s1, %s1076
        %p1078 = scmp.lt.s32.totalorder %s79, 1
        %s1079 = scalar_select %p1078, %s79, 1
        %s1080 = smul.addr %s1079, 8
        %s1081 = scalar_lea.vmem %s3, %s1080
        %p1082 = scmp.lt.s32.totalorder %s79, 1
        %s1083 = scalar_select %p1082, %s79, 1
        %s1084 = smul.addr %s1083, 2
        %s1085 = smul.addr %s1084, 8
        %s1086 = scalar_lea.vmem %s5, %s1085
        %p1087 = scmp.lt.s32.totalorder %s79, 1
        %s1088 = scalar_select %p1087, %s79, 1
        %s1089 = smul.addr %s1088, 8
        %s1090 = scalar_lea.vmem %s7, %s1089
        %p1091 = scmp.lt.s32.totalorder %s79, 1
        %s1092 = scalar_select %p1091, %s79, 1
        %s1093 = smul.addr %s1092, 2
        %s1094 = smul.addr %s1093, 8
        %s1095 = scalar_lea.vmem %s61, %s1094
        %p1096 = scmp.lt.s32.totalorder %s79, 1
        %s1097 = scalar_select %p1096, %s79, 1
        %s1098 = smul.addr %s1097, 8
        %s1099 = scalar_lea.vmem %s63, %s1098
        %v1100 = vld [vmem:[%s1077] sm:$0xff]
        %v1101 = vld [vmem:[%s1077 + $0x8] sm:$0xff]
        %v1102 = vld [vmem:[%s1081] sm:$0xff]
        %v1103 = vld [vmem:[%s1086] sm:$0xff]
        %v1104 = vld [vmem:[%s1086 + $0x8] sm:$0xff]
        %v1105 = vld [vmem:[%s1090] sm:$0xff]
        %v1106 = vadd.f32 %v1100, %v1103
        %v1107 = vadd.f32 %v1101, %v1104
        %v1108 = vld [vmem:[%s9] sm:$0xff]
        %v1109 = vld [vmem:[%s9 + $0x8] sm:$0xff]
        %v1110 = vld [vmem:[%s9 + $0x10] sm:$0xff]
        %v1111 = vld [vmem:[%s9 + $0x18] sm:$0xff]
        %v1112 = vld [vmem:[%s11] sm:$0x1]
        %v1113 = vld [vmem:[%s13] sm:$0xff]
        %v1114 = vld [vmem:[%s13 + $0x8] sm:$0xff]
        %v1115 = vld [vmem:[%s13 + $0x10] sm:$0xff]
        %v1116 = vld [vmem:[%s13 + $0x18] sm:$0xff]
        %v1117 = vld [vmem:[%s15] sm:$0x1]
        %v1119 = vlaneseq
        %v1120 = vshrl.u32 %v1119, 7
        %v1121 = vsub.s32 0, %v1120
        %v1122 = vrot.slane %v1112, %v1121
        %vm1124 = vcmask 261120
        %v1126 = vsel %vm1124, %v1106, 0
        %v1129 = vsel %vm1124, %v1107, 0
        %1131 = vmatprep.subr.mxu0 0.0
        %1132 = vmatpush1.msra.mxu0 %v1108
        %1133 = vmatprep.subr.mxu0 0.0
        %1134 = vmatpush1.msra.mxu0 %v1109
        %1135 = vmatprep.subr.mxu0 0.0
        %1136 = vmatpush1.msra.mxu0 %v1110
        %1137 = vmatprep.subr.mxu0 0.0
        %1138 = vmatpush1.msra.mxu0 %v1111
        %1139 = vmatprep.subr.mxu0 0.0
        %1140 = vmatpush1.msra.mxu0 0.0
        %1141 = vmatprep.subr.mxu0 0.0
        %1142 = vmatpush1.msra.mxu0 0.0
        %1143 = vmatprep.subr.mxu0 0.0
        %1144 = vmatpush1.msra.mxu0 0.0
        %1145 = vmatprep.subr.mxu0 0.0
        %1146 = vmatpush1.msra.mxu0 0.0
        %1147 = vmatprep.subr.mxu0 0.0
        %1148 = vmatpush1.msra.mxu0 0.0
        %1149 = vmatprep.subr.mxu0 0.0
        %1150 = vmatpush1.msra.mxu0 0.0
        %1151 = vmatprep.subr.mxu0 0.0
        %1152 = vmatpush1.msra.mxu0 0.0
        %1153 = vmatprep.subr.mxu0 0.0
        %1154 = vmatpush1.msra.mxu0 0.0
        %1155 = vmatprep.subr.mxu0 0.0
        %1156 = vmatpush1.msra.mxu0 0.0
        %1157 = vmatprep.subr.mxu0 0.0
        %1158 = vmatpush1.msra.mxu0 0.0
        %1159 = vmatprep.subr.mxu0 0.0
        %1160 = vmatpush1.msra.mxu0 0.0
        %1161 = vmatprep.subr.mxu0 0.0
        %1162 = vmatpush1.msra.mxu0 0.0
        %1163 = vmatprep.subr.mxu0 0.0
        %1164 = vmatpush1.msra.mxu0 0.0
        %1165 = vmatprep.subr.mxu0 0.0
        %1166 = vmatpush1.msra.mxu0 0.0
        %1167 = vmatprep.subr.mxu0 0.0
        %1168 = vmatpush1.msra.mxu0 0.0
        %1169 = vmatprep.subr.mxu0 0.0
        %1170 = vmatpush1.msra.mxu0 0.0
        %1171 = vmatprep.subr.mxu0 0.0
        %1172 = vmatpush1.msra.mxu0 0.0
        %1173 = vmatprep.subr.mxu0 0.0
        %1174 = vmatpush1.msra.mxu0 0.0
        %1175 = vmatprep.subr.mxu0 0.0
        %1176 = vmatpush1.msra.mxu0 0.0
        %1177 = vmatprep.subr.mxu0 0.0
        %1178 = vmatpush1.msra.mxu0 0.0
        %1179 = vmatprep.subr.mxu0 0.0
        %1180 = vmatpush1.msra.mxu0 0.0
        %1181 = vmatprep.subr.mxu0 0.0
        %1182 = vmatpush1.msra.mxu0 0.0
        %1183 = vmatprep.subr.mxu0 0.0
        %1184 = vmatpush1.msra.mxu0 0.0
        %1185 = vmatprep.subr.mxu0 0.0
        %1186 = vmatpush1.msra.mxu0 0.0
        %1187 = vmatprep.subr.mxu0 0.0
        %1188 = vmatpush1.msra.mxu0 0.0
        %1189 = vmatprep.subr.mxu0 0.0
        %1190 = vmatpush1.msra.mxu0 0.0
        %1191 = vmatprep.subr.mxu0 0.0
        %1192 = vmatpush1.msra.mxu0 0.0
        %1193 = vmatprep.subr.mxu0 0.0
        %1194 = vmatpush1.msra.mxu0 0.0
        %1195 = vmatprep.mubr.f32.mxu0 0.0
        %1196 = vmatmul.mubr.f32.gmra.mrb[0].mxu0 %v1126
        %v1197 = vpop.f32.mrb[0].mxu0
        %v1198 = vadd.f32 %v1122, %v1197
        %v1199 = vpop.f32.mrb[0].mxu0
        %1200 = vmatprep.mubr.f32.mxu0 0.0
        %1201 = vmatmul.mubr.f32.gmra.mrb[0].mxu0 %v1129
        %v1202 = vpop.f32.mrb[0].mxu0
        %v1203 = vadd.f32 %v1122, %v1202
        %v1204 = vpop.f32.mrb[0].mxu0
        %1205 = vdwg.mxu0
        %1210 = vrot.lane.b32.xlu0 %v1108, 64
        %v1211 = vpop.permute.xlu0 %1210
        %1212 = vrot.lane.b32.xlu0 %v1109, 64
        %v1213 = vpop.permute.xlu0 %1212
        %1214 = vrot.lane.b32.xlu0 %v1110, 64
        %v1215 = vpop.permute.xlu0 %1214
        %1216 = vrot.lane.b32.xlu0 %v1111, 64
        %v1217 = vpop.permute.xlu0 %1216
        %1222 = vrot.lane.b32.xlu0 %v1122, 64
        %v1223 = vpop.permute.xlu0 %1222
        %v1226 = vsel %vm1124, %v1100, 0
        %v1229 = vsel %vm1124, %v1101, 0
        %1231 = vmatprep.subr.mxu0 0.0
        %1232 = vmatpush1.msra.mxu0 %v1211
        %1233 = vmatprep.subr.mxu0 0.0
        %1234 = vmatpush1.msra.mxu0 %v1213
        %1235 = vmatprep.subr.mxu0 0.0
        %1236 = vmatpush1.msra.mxu0 %v1215
        %1237 = vmatprep.subr.mxu0 0.0
        %1238 = vmatpush1.msra.mxu0 %v1217
        %1239 = vmatprep.subr.mxu0 0.0
        %1240 = vmatpush1.msra.mxu0 0.0
        %1241 = vmatprep.subr.mxu0 0.0
        %1242 = vmatpush1.msra.mxu0 0.0
        %1243 = vmatprep.subr.mxu0 0.0
        %1244 = vmatpush1.msra.mxu0 0.0
        %1245 = vmatprep.subr.mxu0 0.0
        %1246 = vmatpush1.msra.mxu0 0.0
        %1247 = vmatprep.subr.mxu0 0.0
        %1248 = vmatpush1.msra.mxu0 0.0
        %1249 = vmatprep.subr.mxu0 0.0
        %1250 = vmatpush1.msra.mxu0 0.0
        %1251 = vmatprep.subr.mxu0 0.0
        %1252 = vmatpush1.msra.mxu0 0.0
        %1253 = vmatprep.subr.mxu0 0.0
        %1254 = vmatpush1.msra.mxu0 0.0
        %1255 = vmatprep.subr.mxu0 0.0
        %1256 = vmatpush1.msra.mxu0 0.0
        %1257 = vmatprep.subr.mxu0 0.0
        %1258 = vmatpush1.msra.mxu0 0.0
        %1259 = vmatprep.subr.mxu0 0.0
        %1260 = vmatpush1.msra.mxu0 0.0
        %1261 = vmatprep.subr.mxu0 0.0
        %1262 = vmatpush1.msra.mxu0 0.0
        %1263 = vmatprep.subr.mxu0 0.0
        %1264 = vmatpush1.msra.mxu0 0.0
        %1265 = vmatprep.subr.mxu0 0.0
        %1266 = vmatpush1.msra.mxu0 0.0
        %1267 = vmatprep.subr.mxu0 0.0
        %1268 = vmatpush1.msra.mxu0 0.0
        %1269 = vmatprep.subr.mxu0 0.0
        %1270 = vmatpush1.msra.mxu0 0.0
        %1271 = vmatprep.subr.mxu0 0.0
        %1272 = vmatpush1.msra.mxu0 0.0
        %1273 = vmatprep.subr.mxu0 0.0
        %1274 = vmatpush1.msra.mxu0 0.0
        %1275 = vmatprep.subr.mxu0 0.0
        %1276 = vmatpush1.msra.mxu0 0.0
        %1277 = vmatprep.subr.mxu0 0.0
        %1278 = vmatpush1.msra.mxu0 0.0
        %1279 = vmatprep.subr.mxu0 0.0
        %1280 = vmatpush1.msra.mxu0 0.0
        %1281 = vmatprep.subr.mxu0 0.0
        %1282 = vmatpush1.msra.mxu0 0.0
        %1283 = vmatprep.subr.mxu0 0.0
        %1284 = vmatpush1.msra.mxu0 0.0
        %1285 = vmatprep.subr.mxu0 0.0
        %1286 = vmatpush1.msra.mxu0 0.0
        %1287 = vmatprep.subr.mxu0 0.0
        %1288 = vmatpush1.msra.mxu0 0.0
        %1289 = vmatprep.subr.mxu0 0.0
        %1290 = vmatpush1.msra.mxu0 0.0
        %1291 = vmatprep.subr.mxu0 0.0
        %1292 = vmatpush1.msra.mxu0 0.0
        %1293 = vmatprep.subr.mxu0 0.0
        %1294 = vmatpush1.msra.mxu0 0.0
        %1295 = vmatprep.mubr.f32.mxu0 0.0
        %1296 = vmatmul.mubr.f32.gmra.mrb[0].mxu0 %v1226
        %v1297 = vpop.f32.mrb[0].mxu0
        %v1298 = vadd.f32 %v1223, %v1297
        %v1299 = vpop.f32.mrb[0].mxu0
        %1300 = vmatprep.mubr.f32.mxu0 0.0
        %1301 = vmatmul.mubr.f32.gmra.mrb[0].mxu0 %v1229
        %v1302 = vpop.f32.mrb[0].mxu0
        %v1303 = vadd.f32 %v1223, %v1302
        %v1304 = vpop.f32.mrb[0].mxu0
        %1305 = vdwg.mxu0
        %v1306 = vmul.f32 %v1198, 0.35355338
        %v1307 = vmul.f32 %v1203, 0.35355338
        %1310 = vrot.lane.b32.xlu0 %v1198, 96
        %v1311 = vpop.permute.xlu0 %1310
        %1312 = vrot.lane.b32.xlu0 %v1203, 96
        %v1313 = vpop.permute.xlu0 %1312
        %vm1314 = vcmask 64512
        %v1316 = vsel %vm1314, %v1306, 0
        %v1319 = vsel %vm1314, %v1307, 0
        %v1321 = vsel %vm1314, %v1311, 0
        %v1323 = vsel %vm1314, %v1313, 0
        %1325 = vmatprep.subr.mxu0 0.0
        %1326 = vmatpush1.xpose.msra.mxu0 %v1321
        %1327 = vmatprep.subr.mxu0 0.0
        %1328 = vmatpush1.xpose.msra.mxu0 %v1323
        %1329 = vmatprep.subr.mxu0 0.0
        %1330 = vmatpush1.xpose.msra.mxu0 0.0
        %1331 = vmatprep.subr.mxu0 0.0
        %1332 = vmatpush1.xpose.msra.mxu0 0.0
        %1333 = vmatprep.subr.mxu0 0.0
        %1334 = vmatpush1.xpose.msra.mxu0 0.0
        %1335 = vmatprep.subr.mxu0 0.0
        %1336 = vmatpush1.xpose.msra.mxu0 0.0
        %1337 = vmatprep.subr.mxu0 0.0
        %1338 = vmatpush1.xpose.msra.mxu0 0.0
        %1339 = vmatprep.subr.mxu0 0.0
        %1340 = vmatpush1.xpose.msra.mxu0 0.0
        %1341 = vmatprep.subr.mxu0 0.0
        %1342 = vmatpush1.xpose.msra.mxu0 0.0
        %1343 = vmatprep.subr.mxu0 0.0
        %1344 = vmatpush1.xpose.msra.mxu0 0.0
        %1345 = vmatprep.subr.mxu0 0.0
        %1346 = vmatpush1.xpose.msra.mxu0 0.0
        %1347 = vmatprep.subr.mxu0 0.0
        %1348 = vmatpush1.xpose.msra.mxu0 0.0
        %1349 = vmatprep.subr.mxu0 0.0
        %1350 = vmatpush1.xpose.msra.mxu0 0.0
        %1351 = vmatprep.subr.mxu0 0.0
        %1352 = vmatpush1.xpose.msra.mxu0 0.0
        %1353 = vmatprep.subr.mxu0 0.0
        %1354 = vmatpush1.xpose.msra.mxu0 0.0
        %1355 = vmatprep.subr.mxu0 0.0
        %1356 = vmatpush1.xpose.msra.mxu0 0.0
        %1357 = vmatprep.subr.mxu0 0.0
        %1358 = vmatpush1.xpose.msra.mxu0 0.0
        %1359 = vmatprep.subr.mxu0 0.0
        %1360 = vmatpush1.xpose.msra.mxu0 0.0
        %1361 = vmatprep.subr.mxu0 0.0
        %1362 = vmatpush1.xpose.msra.mxu0 0.0
        %1363 = vmatprep.subr.mxu0 0.0
        %1364 = vmatpush1.xpose.msra.mxu0 0.0
        %1365 = vmatprep.subr.mxu0 0.0
        %1366 = vmatpush1.xpose.msra.mxu0 0.0
        %1367 = vmatprep.subr.mxu0 0.0
        %1368 = vmatpush1.xpose.msra.mxu0 0.0
        %1369 = vmatprep.subr.mxu0 0.0
        %1370 = vmatpush1.xpose.msra.mxu0 0.0
        %1371 = vmatprep.subr.mxu0 0.0
        %1372 = vmatpush1.xpose.msra.mxu0 0.0
        %1373 = vmatprep.subr.mxu0 0.0
        %1374 = vmatpush1.xpose.msra.mxu0 0.0
        %1375 = vmatprep.subr.mxu0 0.0
        %1376 = vmatpush1.xpose.msra.mxu0 0.0
        %1377 = vmatprep.subr.mxu0 0.0
        %1378 = vmatpush1.xpose.msra.mxu0 0.0
        %1379 = vmatprep.subr.mxu0 0.0
        %1380 = vmatpush1.xpose.msra.mxu0 0.0
        %1381 = vmatprep.subr.mxu0 0.0
        %1382 = vmatpush1.xpose.msra.mxu0 0.0
        %1383 = vmatprep.subr.mxu0 0.0
        %1384 = vmatpush1.xpose.msra.mxu0 0.0
        %1385 = vmatprep.subr.mxu0 0.0
        %1386 = vmatpush1.xpose.msra.mxu0 0.0
        %1387 = vmatprep.subr.mxu0 0.0
        %1388 = vmatpush1.xpose.msra.mxu0 0.0
        %1389 = vmatprep.mubr.f32.mxu0 0.0
        %1390 = vmatmul.mubr.f32.gmra.mrb[0].mxu0 %v1316
        %v1391 = vpop.f32.mrb[0].mxu0
        %v1392 = vadd.f32 0.0, %v1391
        %v1393 = vpop.f32.mrb[0].mxu0
        %1394 = vmatprep.mubr.f32.mxu0 0.0
        %1395 = vmatmul.mubr.f32.gmra.mrb[0].mxu0 %v1319
        %v1396 = vpop.f32.mrb[0].mxu0
        %v1397 = vadd.f32 0.0, %v1396
        %v1398 = vpop.f32.mrb[0].mxu0
        %1399 = vdwg.mxu0
        %vm1400 = vcmask 130048
        %v1401 = vsel %vm1400, %v1392, -inf
        %1402 = vmax.xlane.f32.xlu0 %v1401
        %v1403 = vpop.xlane.xlu0 %1402
        %v1404 = vsel %vm1400, %v1397, -inf
        %1405 = vmax.xlane.f32.xlu0 %v1404
        %v1406 = vpop.xlane.xlu0 %1405
        %v1407 = vsub.f32 %v1392, %v1403
        %v1408 = vsub.f32 %v1397, %v1406
        %v1409 = vmul.f32 %v1407, 1.442695
        %v1410 = vpow.pop %v1409
        %v1411 = vmul.f32 %v1408, 1.442695
        %v1412 = vpow.pop %v1411
        %v1413 = vsel %vm1400, %v1410, 0.0
        %1414 = vadd.xlane.f32.xlu0 %v1413
        %v1415 = vpop.xlane.xlu0 %1414
        %v1416 = vsel %vm1400, %v1412, 0.0
        %1417 = vadd.xlane.f32.xlu0 %v1416
        %v1418 = vpop.xlane.xlu0 %1417
        %v1419 = vrcp.pop %v1415
        %v1420 = vrcp.pop %v1418
        %v1421 = vmul.f32 %v1410, %v1419
        %v1422 = vmul.f32 %v1412, %v1420
        %v1424 = vsel %vm1400, %v1421, 0
        %v1427 = vsel %vm1400, %v1422, 0
        %1429 = vmatprep.subr.mxu0 0.0
        %1430 = vmatpush1.msra.mxu0 %v1298
        %1431 = vmatprep.subr.mxu0 0.0
        %1432 = vmatpush1.msra.mxu0 %v1303
        %1433 = vmatprep.subr.mxu0 0.0
        %1434 = vmatpush1.msra.mxu0 0.0
        %1435 = vmatprep.subr.mxu0 0.0
        %1436 = vmatpush1.msra.mxu0 0.0
        %1437 = vmatprep.subr.mxu0 0.0
        %1438 = vmatpush1.msra.mxu0 0.0
        %1439 = vmatprep.subr.mxu0 0.0
        %1440 = vmatpush1.msra.mxu0 0.0
        %1441 = vmatprep.subr.mxu0 0.0
        %1442 = vmatpush1.msra.mxu0 0.0
        %1443 = vmatprep.subr.mxu0 0.0
        %1444 = vmatpush1.msra.mxu0 0.0
        %1445 = vmatprep.subr.mxu0 0.0
        %1446 = vmatpush1.msra.mxu0 0.0
        %1447 = vmatprep.subr.mxu0 0.0
        %1448 = vmatpush1.msra.mxu0 0.0
        %1449 = vmatprep.subr.mxu0 0.0
        %1450 = vmatpush1.msra.mxu0 0.0
        %1451 = vmatprep.subr.mxu0 0.0
        %1452 = vmatpush1.msra.mxu0 0.0
        %1453 = vmatprep.subr.mxu0 0.0
        %1454 = vmatpush1.msra.mxu0 0.0
        %1455 = vmatprep.subr.mxu0 0.0
        %1456 = vmatpush1.msra.mxu0 0.0
        %1457 = vmatprep.subr.mxu0 0.0
        %1458 = vmatpush1.msra.mxu0 0.0
        %1459 = vmatprep.subr.mxu0 0.0
        %1460 = vmatpush1.msra.mxu0 0.0
        %1461 = vmatprep.subr.mxu0 0.0
        %1462 = vmatpush1.msra.mxu0 0.0
        %1463 = vmatprep.subr.mxu0 0.0
        %1464 = vmatpush1.msra.mxu0 0.0
        %1465 = vmatprep.subr.mxu0 0.0
        %1466 = vmatpush1.msra.mxu0 0.0
        %1467 = vmatprep.subr.mxu0 0.0
        %1468 = vmatpush1.msra.mxu0 0.0
        %1469 = vmatprep.subr.mxu0 0.0
        %1470 = vmatpush1.msra.mxu0 0.0
        %1471 = vmatprep.subr.mxu0 0.0
        %1472 = vmatpush1.msra.mxu0 0.0
        %1473 = vmatprep.subr.mxu0 0.0
        %1474 = vmatpush1.msra.mxu0 0.0
        %1475 = vmatprep.subr.mxu0 0.0
        %1476 = vmatpush1.msra.mxu0 0.0
        %1477 = vmatprep.subr.mxu0 0.0
        %1478 = vmatpush1.msra.mxu0 0.0
        %1479 = vmatprep.subr.mxu0 0.0
        %1480 = vmatpush1.msra.mxu0 0.0
        %1481 = vmatprep.subr.mxu0 0.0
        %1482 = vmatpush1.msra.mxu0 0.0
        %1483 = vmatprep.subr.mxu0 0.0
        %1484 = vmatpush1.msra.mxu0 0.0
        %1485 = vmatprep.subr.mxu0 0.0
        %1486 = vmatpush1.msra.mxu0 0.0
        %1487 = vmatprep.subr.mxu0 0.0
        %1488 = vmatpush1.msra.mxu0 0.0
        %1489 = vmatprep.subr.mxu0 0.0
        %1490 = vmatpush1.msra.mxu0 0.0
        %1491 = vmatprep.subr.mxu0 0.0
        %1492 = vmatpush1.msra.mxu0 0.0
        %1493 = vmatprep.mubr.f32.mxu0 0.0
        %1494 = vmatmul.mubr.f32.gmra.mrb[0].mxu0 %v1424
        %v1495 = vpop.f32.mrb[0].mxu0
        %v1496 = vadd.f32 0.0, %v1495
        %v1497 = vpop.f32.mrb[0].mxu0
        %1498 = vmatprep.mubr.f32.mxu0 0.0
        %1499 = vmatmul.mubr.f32.gmra.mrb[0].mxu0 %v1427
        %v1500 = vpop.f32.mrb[0].mxu0
        %v1501 = vadd.f32 0.0, %v1500
        %v1502 = vpop.f32.mrb[0].mxu0
        %1503 = vdwg.mxu0
        %1504 = vrot.lane.b32.xlu0 %v1306, 120
        %v1505 = vpop.permute.xlu0 %1504
        %1506 = vrot.lane.b32.xlu0 %v1307, 120
        %v1507 = vpop.permute.xlu0 %1506
        %1508 = vrot.lane.b32.xlu0 %v1198, 88
        %v1509 = vpop.permute.xlu0 %1508
        %1510 = vrot.lane.b32.xlu0 %v1203, 88
        %v1511 = vpop.permute.xlu0 %1510
        %v1512 = vsel %vm1314, %v1505, 0
        %v1514 = vsel %vm1314, %v1507, 0
        %v1516 = vsel %vm1314, %v1509, 0
        %v1518 = vsel %vm1314, %v1511, 0
        %1520 = vmatprep.subr.mxu0 0.0
        %1521 = vmatpush1.xpose.msra.mxu0 %v1516
        %1522 = vmatprep.subr.mxu0 0.0
        %1523 = vmatpush1.xpose.msra.mxu0 %v1518
        %1524 = vmatprep.subr.mxu0 0.0
        %1525 = vmatpush1.xpose.msra.mxu0 0.0
        %1526 = vmatprep.subr.mxu0 0.0
        %1527 = vmatpush1.xpose.msra.mxu0 0.0
        %1528 = vmatprep.subr.mxu0 0.0
        %1529 = vmatpush1.xpose.msra.mxu0 0.0
        %1530 = vmatprep.subr.mxu0 0.0
        %1531 = vmatpush1.xpose.msra.mxu0 0.0
        %1532 = vmatprep.subr.mxu0 0.0
        %1533 = vmatpush1.xpose.msra.mxu0 0.0
        %1534 = vmatprep.subr.mxu0 0.0
        %1535 = vmatpush1.xpose.msra.mxu0 0.0
        %1536 = vmatprep.subr.mxu0 0.0
        %1537 = vmatpush1.xpose.msra.mxu0 0.0
        %1538 = vmatprep.subr.mxu0 0.0
        %1539 = vmatpush1.xpose.msra.mxu0 0.0
        %1540 = vmatprep.subr.mxu0 0.0
        %1541 = vmatpush1.xpose.msra.mxu0 0.0
        %1542 = vmatprep.subr.mxu0 0.0
        %1543 = vmatpush1.xpose.msra.mxu0 0.0
        %1544 = vmatprep.subr.mxu0 0.0
        %1545 = vmatpush1.xpose.msra.mxu0 0.0
        %1546 = vmatprep.subr.mxu0 0.0
        %1547 = vmatpush1.xpose.msra.mxu0 0.0
        %1548 = vmatprep.subr.mxu0 0.0
        %1549 = vmatpush1.xpose.msra.mxu0 0.0
        %1550 = vmatprep.subr.mxu0 0.0
        %1551 = vmatpush1.xpose.msra.mxu0 0.0
        %1552 = vmatprep.subr.mxu0 0.0
        %1553 = vmatpush1.xpose.msra.mxu0 0.0
        %1554 = vmatprep.subr.mxu0 0.0
        %1555 = vmatpush1.xpose.msra.mxu0 0.0
        %1556 = vmatprep.subr.mxu0 0.0
        %1557 = vmatpush1.xpose.msra.mxu0 0.0
        %1558 = vmatprep.subr.mxu0 0.0
        %1559 = vmatpush1.xpose.msra.mxu0 0.0
        %1560 = vmatprep.subr.mxu0 0.0
        %1561 = vmatpush1.xpose.msra.mxu0 0.0
        %1562 = vmatprep.subr.mxu0 0.0
        %1563 = vmatpush1.xpose.msra.mxu0 0.0
        %1564 = vmatprep.subr.mxu0 0.0
        %1565 = vmatpush1.xpose.msra.mxu0 0.0
        %1566 = vmatprep.subr.mxu0 0.0
        %1567 = vmatpush1.xpose.msra.mxu0 0.0
        %1568 = vmatprep.subr.mxu0 0.0
        %1569 = vmatpush1.xpose.msra.mxu0 0.0
        %1570 = vmatprep.subr.mxu0 0.0
        %1571 = vmatpush1.xpose.msra.mxu0 0.0
        %1572 = vmatprep.subr.mxu0 0.0
        %1573 = vmatpush1.xpose.msra.mxu0 0.0
        %1574 = vmatprep.subr.mxu0 0.0
        %1575 = vmatpush1.xpose.msra.mxu0 0.0
        %1576 = vmatprep.subr.mxu0 0.0
        %1577 = vmatpush1.xpose.msra.mxu0 0.0
        %1578 = vmatprep.subr.mxu0 0.0
        %1579 = vmatpush1.xpose.msra.mxu0 0.0
        %1580 = vmatprep.subr.mxu0 0.0
        %1581 = vmatpush1.xpose.msra.mxu0 0.0
        %1582 = vmatprep.subr.mxu0 0.0
        %1583 = vmatpush1.xpose.msra.mxu0 0.0
        %1584 = vmatprep.mubr.f32.mxu0 0.0
        %1585 = vmatmul.mubr.f32.gmra.mrb[0].mxu0 %v1512
        %v1586 = vpop.f32.mrb[0].mxu0
        %v1587 = vadd.f32 0.0, %v1586
        %v1588 = vpop.f32.mrb[0].mxu0
        %1589 = vmatprep.mubr.f32.mxu0 0.0
        %1590 = vmatmul.mubr.f32.gmra.mrb[0].mxu0 %v1514
        %v1591 = vpop.f32.mrb[0].mxu0
        %v1592 = vadd.f32 0.0, %v1591
        %v1593 = vpop.f32.mrb[0].mxu0
        %1594 = vdwg.mxu0
        %v1595 = vsel %vm1400, %v1587, -inf
        %1596 = vmax.xlane.f32.xlu0 %v1595
        %v1597 = vpop.xlane.xlu0 %1596
        %v1598 = vsel %vm1400, %v1592, -inf
        %1599 = vmax.xlane.f32.xlu0 %v1598
        %v1600 = vpop.xlane.xlu0 %1599
        %v1601 = vsub.f32 %v1587, %v1597
        %v1602 = vsub.f32 %v1592, %v1600
        %v1603 = vmul.f32 %v1601, 1.442695
        %v1604 = vpow.pop %v1603
        %v1605 = vmul.f32 %v1602, 1.442695
        %v1606 = vpow.pop %v1605
        %v1607 = vsel %vm1400, %v1604, 0.0
        %1608 = vadd.xlane.f32.xlu0 %v1607
        %v1609 = vpop.xlane.xlu0 %1608
        %v1610 = vsel %vm1400, %v1606, 0.0
        %1611 = vadd.xlane.f32.xlu0 %v1610
        %v1612 = vpop.xlane.xlu0 %1611
        %v1613 = vrcp.pop %v1609
        %v1614 = vrcp.pop %v1612
        %v1615 = vmul.f32 %v1604, %v1613
        %v1616 = vmul.f32 %v1606, %v1614
        %1619 = vrot.lane.b32.xlu0 %v1298, 120
        %v1620 = vpop.permute.xlu0 %1619
        %1621 = vrot.lane.b32.xlu0 %v1303, 120
        %v1622 = vpop.permute.xlu0 %1621
        %v1626 = vsel %vm1400, %v1615, 0
        %v1629 = vsel %vm1400, %v1616, 0
        %1631 = vmatprep.subr.mxu0 0.0
        %1632 = vmatpush1.msra.mxu0 %v1620
        %1633 = vmatprep.subr.mxu0 0.0
        %1634 = vmatpush1.msra.mxu0 %v1622
        %1635 = vmatprep.subr.mxu0 0.0
        %1636 = vmatpush1.msra.mxu0 0.0
        %1637 = vmatprep.subr.mxu0 0.0
        %1638 = vmatpush1.msra.mxu0 0.0
        %1639 = vmatprep.subr.mxu0 0.0
        %1640 = vmatpush1.msra.mxu0 0.0
        %1641 = vmatprep.subr.mxu0 0.0
        %1642 = vmatpush1.msra.mxu0 0.0
        %1643 = vmatprep.subr.mxu0 0.0
        %1644 = vmatpush1.msra.mxu0 0.0
        %1645 = vmatprep.subr.mxu0 0.0
        %1646 = vmatpush1.msra.mxu0 0.0
        %1647 = vmatprep.subr.mxu0 0.0
        %1648 = vmatpush1.msra.mxu0 0.0
        %1649 = vmatprep.subr.mxu0 0.0
        %1650 = vmatpush1.msra.mxu0 0.0
        %1651 = vmatprep.subr.mxu0 0.0
        %1652 = vmatpush1.msra.mxu0 0.0
        %1653 = vmatprep.subr.mxu0 0.0
        %1654 = vmatpush1.msra.mxu0 0.0
        %1655 = vmatprep.subr.mxu0 0.0
        %1656 = vmatpush1.msra.mxu0 0.0
        %1657 = vmatprep.subr.mxu0 0.0
        %1658 = vmatpush1.msra.mxu0 0.0
        %1659 = vmatprep.subr.mxu0 0.0
        %1660 = vmatpush1.msra.mxu0 0.0
        %1661 = vmatprep.subr.mxu0 0.0
        %1662 = vmatpush1.msra.mxu0 0.0
        %1663 = vmatprep.subr.mxu0 0.0
        %1664 = vmatpush1.msra.mxu0 0.0
        %1665 = vmatprep.subr.mxu0 0.0
        %1666 = vmatpush1.msra.mxu0 0.0
        %1667 = vmatprep.subr.mxu0 0.0
        %1668 = vmatpush1.msra.mxu0 0.0
        %1669 = vmatprep.subr.mxu0 0.0
        %1670 = vmatpush1.msra.mxu0 0.0
        %1671 = vmatprep.subr.mxu0 0.0
        %1672 = vmatpush1.msra.mxu0 0.0
        %1673 = vmatprep.subr.mxu0 0.0
        %1674 = vmatpush1.msra.mxu0 0.0
        %1675 = vmatprep.subr.mxu0 0.0
        %1676 = vmatpush1.msra.mxu0 0.0
        %1677 = vmatprep.subr.mxu0 0.0
        %1678 = vmatpush1.msra.mxu0 0.0
        %1679 = vmatprep.subr.mxu0 0.0
        %1680 = vmatpush1.msra.mxu0 0.0
        %1681 = vmatprep.subr.mxu0 0.0
        %1682 = vmatpush1.msra.mxu0 0.0
        %1683 = vmatprep.subr.mxu0 0.0
        %1684 = vmatpush1.msra.mxu0 0.0
        %1685 = vmatprep.subr.mxu0 0.0
        %1686 = vmatpush1.msra.mxu0 0.0
        %1687 = vmatprep.subr.mxu0 0.0
        %1688 = vmatpush1.msra.mxu0 0.0
        %1689 = vmatprep.subr.mxu0 0.0
        %1690 = vmatpush1.msra.mxu0 0.0
        %1691 = vmatprep.subr.mxu0 0.0
        %1692 = vmatpush1.msra.mxu0 0.0
        %1693 = vmatprep.subr.mxu0 0.0
        %1694 = vmatpush1.msra.mxu0 0.0
        %1695 = vmatprep.mubr.f32.mxu0 0.0
        %1696 = vmatmul.mubr.f32.gmra.mrb[0].mxu0 %v1626
        %v1697 = vpop.f32.mrb[0].mxu0
        %v1698 = vadd.f32 0.0, %v1697
        %v1699 = vpop.f32.mrb[0].mxu0
        %1700 = vmatprep.mubr.f32.mxu0 0.0
        %1701 = vmatmul.mubr.f32.gmra.mrb[0].mxu0 %v1629
        %v1702 = vpop.f32.mrb[0].mxu0
        %v1703 = vadd.f32 0.0, %v1702
        %v1704 = vpop.f32.mrb[0].mxu0
        %1705 = vdwg.mxu0
        %v1707 = vsel %vm1314, %v1698, 0
        %v1710 = vsel %vm1314, %v1703, 0
        %1712 = vmatprep.subr.mxu0 0.0
        %1713 = vmatpush1.msra.mxu0 %v1114
        %1714 = vmatprep.subr.mxu0 0.0
        %1715 = vmatpush1.msra.mxu0 0.0
        %1716 = vmatprep.subr.mxu0 0.0
        %1717 = vmatpush1.msra.mxu0 0.0
        %1718 = vmatprep.subr.mxu0 0.0
        %1719 = vmatpush1.msra.mxu0 0.0
        %1720 = vmatprep.subr.mxu0 0.0
        %1721 = vmatpush1.msra.mxu0 0.0
        %1722 = vmatprep.subr.mxu0 0.0
        %1723 = vmatpush1.msra.mxu0 0.0
        %1724 = vmatprep.subr.mxu0 0.0
        %1725 = vmatpush1.msra.mxu0 0.0
        %1726 = vmatprep.subr.mxu0 0.0
        %1727 = vmatpush1.msra.mxu0 0.0
        %1728 = vmatprep.subr.mxu0 0.0
        %1729 = vmatpush1.msra.mxu0 0.0
        %1730 = vmatprep.subr.mxu0 0.0
        %1731 = vmatpush1.msra.mxu0 0.0
        %1732 = vmatprep.subr.mxu0 0.0
        %1733 = vmatpush1.msra.mxu0 0.0
        %1734 = vmatprep.subr.mxu0 0.0
        %1735 = vmatpush1.msra.mxu0 0.0
        %1736 = vmatprep.subr.mxu0 0.0
        %1737 = vmatpush1.msra.mxu0 0.0
        %1738 = vmatprep.subr.mxu0 0.0
        %1739 = vmatpush1.msra.mxu0 0.0
        %1740 = vmatprep.subr.mxu0 0.0
        %1741 = vmatpush1.msra.mxu0 0.0
        %1742 = vmatprep.subr.mxu0 0.0
        %1743 = vmatpush1.msra.mxu0 0.0
        %1744 = vmatprep.subr.mxu0 0.0
        %1745 = vmatpush1.msra.mxu0 0.0
        %1746 = vmatprep.subr.mxu0 0.0
        %1747 = vmatpush1.msra.mxu0 0.0
        %1748 = vmatprep.subr.mxu0 0.0
        %1749 = vmatpush1.msra.mxu0 0.0
        %1750 = vmatprep.subr.mxu0 0.0
        %1751 = vmatpush1.msra.mxu0 0.0
        %1752 = vmatprep.subr.mxu0 0.0
        %1753 = vmatpush1.msra.mxu0 0.0
        %1754 = vmatprep.subr.mxu0 0.0
        %1755 = vmatpush1.msra.mxu0 0.0
        %1756 = vmatprep.subr.mxu0 0.0
        %1757 = vmatpush1.msra.mxu0 0.0
        %1758 = vmatprep.subr.mxu0 0.0
        %1759 = vmatpush1.msra.mxu0 0.0
        %1760 = vmatprep.subr.mxu0 0.0
        %1761 = vmatpush1.msra.mxu0 0.0
        %1762 = vmatprep.subr.mxu0 0.0
        %1763 = vmatpush1.msra.mxu0 0.0
        %1764 = vmatprep.subr.mxu0 0.0
        %1765 = vmatpush1.msra.mxu0 0.0
        %1766 = vmatprep.subr.mxu0 0.0
        %1767 = vmatpush1.msra.mxu0 0.0
        %1768 = vmatprep.subr.mxu0 0.0
        %1769 = vmatpush1.msra.mxu0 0.0
        %1770 = vmatprep.subr.mxu0 0.0
        %1771 = vmatpush1.msra.mxu0 0.0
        %1772 = vmatprep.subr.mxu0 0.0
        %1773 = vmatpush1.msra.mxu0 0.0
        %1774 = vmatprep.subr.mxu0 0.0
        %1775 = vmatpush1.msra.mxu0 0.0
        %1776 = vmatprep.mubr.f32.mxu0 0.0
        %1777 = vmatmul.mubr.f32.gmra.mrb[0].mxu0 %v1707
        %v1778 = vpop.f32.mrb[0].mxu0
        %v1779 = vadd.f32 0.0, %v1778
        %v1780 = vpop.f32.mrb[0].mxu0
        %1781 = vmatprep.mubr.f32.mxu0 0.0
        %1782 = vmatmul.mubr.f32.gmra.mrb[0].mxu0 %v1710
        %v1783 = vpop.f32.mrb[0].mxu0
        %v1784 = vadd.f32 0.0, %v1783
        %v1785 = vpop.f32.mrb[0].mxu0
        %1786 = vdwg.mxu0
        %v1788 = vsel %vm1314, %v1496, 0
        %v1791 = vsel %vm1314, %v1501, 0
        %1793 = vmatprep.subr.mxu0 0.0
        %1794 = vmatpush1.msra.mxu0 %v1113
        %1795 = vmatprep.subr.mxu0 0.0
        %1796 = vmatpush1.msra.mxu0 0.0
        %1797 = vmatprep.subr.mxu0 0.0
        %1798 = vmatpush1.msra.mxu0 0.0
        %1799 = vmatprep.subr.mxu0 0.0
        %1800 = vmatpush1.msra.mxu0 0.0
        %1801 = vmatprep.subr.mxu0 0.0
        %1802 = vmatpush1.msra.mxu0 0.0
        %1803 = vmatprep.subr.mxu0 0.0
        %1804 = vmatpush1.msra.mxu0 0.0
        %1805 = vmatprep.subr.mxu0 0.0
        %1806 = vmatpush1.msra.mxu0 0.0
        %1807 = vmatprep.subr.mxu0 0.0
        %1808 = vmatpush1.msra.mxu0 0.0
        %1809 = vmatprep.subr.mxu0 0.0
        %1810 = vmatpush1.msra.mxu0 0.0
        %1811 = vmatprep.subr.mxu0 0.0
        %1812 = vmatpush1.msra.mxu0 0.0
        %1813 = vmatprep.subr.mxu0 0.0
        %1814 = vmatpush1.msra.mxu0 0.0
        %1815 = vmatprep.subr.mxu0 0.0
        %1816 = vmatpush1.msra.mxu0 0.0
        %1817 = vmatprep.subr.mxu0 0.0
        %1818 = vmatpush1.msra.mxu0 0.0
        %1819 = vmatprep.subr.mxu0 0.0
        %1820 = vmatpush1.msra.mxu0 0.0
        %1821 = vmatprep.subr.mxu0 0.0
        %1822 = vmatpush1.msra.mxu0 0.0
        %1823 = vmatprep.subr.mxu0 0.0
        %1824 = vmatpush1.msra.mxu0 0.0
        %1825 = vmatprep.subr.mxu0 0.0
        %1826 = vmatpush1.msra.mxu0 0.0
        %1827 = vmatprep.subr.mxu0 0.0
        %1828 = vmatpush1.msra.mxu0 0.0
        %1829 = vmatprep.subr.mxu0 0.0
        %1830 = vmatpush1.msra.mxu0 0.0
        %1831 = vmatprep.subr.mxu0 0.0
        %1832 = vmatpush1.msra.mxu0 0.0
        %1833 = vmatprep.subr.mxu0 0.0
        %1834 = vmatpush1.msra.mxu0 0.0
        %1835 = vmatprep.subr.mxu0 0.0
        %1836 = vmatpush1.msra.mxu0 0.0
        %1837 = vmatprep.subr.mxu0 0.0
        %1838 = vmatpush1.msra.mxu0 0.0
        %1839 = vmatprep.subr.mxu0 0.0
        %1840 = vmatpush1.msra.mxu0 0.0
        %1841 = vmatprep.subr.mxu0 0.0
        %1842 = vmatpush1.msra.mxu0 0.0
        %1843 = vmatprep.subr.mxu0 0.0
        %1844 = vmatpush1.msra.mxu0 0.0
        %1845 = vmatprep.subr.mxu0 0.0
        %1846 = vmatpush1.msra.mxu0 0.0
        %1847 = vmatprep.subr.mxu0 0.0
        %1848 = vmatpush1.msra.mxu0 0.0
        %1849 = vmatprep.subr.mxu0 0.0
        %1850 = vmatpush1.msra.mxu0 0.0
        %1851 = vmatprep.subr.mxu0 0.0
        %1852 = vmatpush1.msra.mxu0 0.0
        %1853 = vmatprep.subr.mxu0 0.0
        %1854 = vmatpush1.msra.mxu0 0.0
        %1855 = vmatprep.subr.mxu0 0.0
        %1856 = vmatpush1.msra.mxu0 0.0
        %1857 = vmatprep.mubr.f32.mxu0 0.0
        %1858 = vmatmul.mubr.f32.gmra.mrb[0].mxu0 %v1788
        %v1859 = vpop.f32.mrb[0].mxu0
        %v1860 = vadd.f32 %v1779, %v1859
        %v1861 = vpop.f32.mrb[0].mxu0
        %1862 = vmatprep.mubr.f32.mxu0 0.0
        %1863 = vmatmul.mubr.f32.gmra.mrb[0].mxu0 %v1791
        %v1864 = vpop.f32.mrb[0].mxu0
        %v1865 = vadd.f32 %v1784, %v1864
        %v1866 = vpop.f32.mrb[0].mxu0
        %1867 = vdwg.mxu0
        %1868 = vrot.lane.b32.xlu0 %v1306, 112
        %v1869 = vpop.permute.xlu0 %1868
        %1870 = vrot.lane.b32.xlu0 %v1307, 112
        %v1871 = vpop.permute.xlu0 %1870
        %1872 = vrot.lane.b32.xlu0 %v1198, 80
        %v1873 = vpop.permute.xlu0 %1872
        %1874 = vrot.lane.b32.xlu0 %v1203, 80
        %v1875 = vpop.permute.xlu0 %1874
        %v1876 = vsel %vm1314, %v1869, 0
        %v1878 = vsel %vm1314, %v1871, 0
        %v1880 = vsel %vm1314, %v1873, 0
        %v1882 = vsel %vm1314, %v1875, 0
        %1884 = vmatprep.subr.mxu0 0.0
        %1885 = vmatpush1.xpose.msra.mxu0 %v1880
        %1886 = vmatprep.subr.mxu0 0.0
        %1887 = vmatpush1.xpose.msra.mxu0 %v1882
        %1888 = vmatprep.subr.mxu0 0.0
        %1889 = vmatpush1.xpose.msra.mxu0 0.0
        %1890 = vmatprep.subr.mxu0 0.0
        %1891 = vmatpush1.xpose.msra.mxu0 0.0
        %1892 = vmatprep.subr.mxu0 0.0
        %1893 = vmatpush1.xpose.msra.mxu0 0.0
        %1894 = vmatprep.subr.mxu0 0.0
        %1895 = vmatpush1.xpose.msra.mxu0 0.0
        %1896 = vmatprep.subr.mxu0 0.0
        %1897 = vmatpush1.xpose.msra.mxu0 0.0
        %1898 = vmatprep.subr.mxu0 0.0
        %1899 = vmatpush1.xpose.msra.mxu0 0.0
        %1900 = vmatprep.subr.mxu0 0.0
        %1901 = vmatpush1.xpose.msra.mxu0 0.0
        %1902 = vmatprep.subr.mxu0 0.0
        %1903 = vmatpush1.xpose.msra.mxu0 0.0
        %1904 = vmatprep.subr.mxu0 0.0
        %1905 = vmatpush1.xpose.msra.mxu0 0.0
        %1906 = vmatprep.subr.mxu0 0.0
        %1907 = vmatpush1.xpose.msra.mxu0 0.0
        %1908 = vmatprep.subr.mxu0 0.0
        %1909 = vmatpush1.xpose.msra.mxu0 0.0
        %1910 = vmatprep.subr.mxu0 0.0
        %1911 = vmatpush1.xpose.msra.mxu0 0.0
        %1912 = vmatprep.subr.mxu0 0.0
        %1913 = vmatpush1.xpose.msra.mxu0 0.0
        %1914 = vmatprep.subr.mxu0 0.0
        %1915 = vmatpush1.xpose.msra.mxu0 0.0
        %1916 = vmatprep.subr.mxu0 0.0
        %1917 = vmatpush1.xpose.msra.mxu0 0.0
        %1918 = vmatprep.subr.mxu0 0.0
        %1919 = vmatpush1.xpose.msra.mxu0 0.0
        %1920 = vmatprep.subr.mxu0 0.0
        %1921 = vmatpush1.xpose.msra.mxu0 0.0
        %1922 = vmatprep.subr.mxu0 0.0
        %1923 = vmatpush1.xpose.msra.mxu0 0.0
        %1924 = vmatprep.subr.mxu0 0.0
        %1925 = vmatpush1.xpose.msra.mxu0 0.0
        %1926 = vmatprep.subr.mxu0 0.0
        %1927 = vmatpush1.xpose.msra.mxu0 0.0
        %1928 = vmatprep.subr.mxu0 0.0
        %1929 = vmatpush1.xpose.msra.mxu0 0.0
        %1930 = vmatprep.subr.mxu0 0.0
        %1931 = vmatpush1.xpose.msra.mxu0 0.0
        %1932 = vmatprep.subr.mxu0 0.0
        %1933 = vmatpush1.xpose.msra.mxu0 0.0
        %1934 = vmatprep.subr.mxu0 0.0
        %1935 = vmatpush1.xpose.msra.mxu0 0.0
        %1936 = vmatprep.subr.mxu0 0.0
        %1937 = vmatpush1.xpose.msra.mxu0 0.0
        %1938 = vmatprep.subr.mxu0 0.0
        %1939 = vmatpush1.xpose.msra.mxu0 0.0
        %1940 = vmatprep.subr.mxu0 0.0
        %1941 = vmatpush1.xpose.msra.mxu0 0.0
        %1942 = vmatprep.subr.mxu0 0.0
        %1943 = vmatpush1.xpose.msra.mxu0 0.0
        %1944 = vmatprep.subr.mxu0 0.0
        %1945 = vmatpush1.xpose.msra.mxu0 0.0
        %1946 = vmatprep.subr.mxu0 0.0
        %1947 = vmatpush1.xpose.msra.mxu0 0.0
        %1948 = vmatprep.mubr.f32.mxu0 0.0
        %1949 = vmatmul.mubr.f32.gmra.mrb[0].mxu0 %v1876
        %v1950 = vpop.f32.mrb[0].mxu0
        %v1951 = vadd.f32 0.0, %v1950
        %v1952 = vpop.f32.mrb[0].mxu0
        %1953 = vmatprep.mubr.f32.mxu0 0.0
        %1954 = vmatmul.mubr.f32.gmra.mrb[0].mxu0 %v1878
        %v1955 = vpop.f32.mrb[0].mxu0
        %v1956 = vadd.f32 0.0, %v1955
        %v1957 = vpop.f32.mrb[0].mxu0
        %1958 = vdwg.mxu0
        %v1959 = vsel %vm1400, %v1951, -inf
        %1960 = vmax.xlane.f32.xlu0 %v1959
        %v1961 = vpop.xlane.xlu0 %1960
        %v1962 = vsel %vm1400, %v1956, -inf
        %1963 = vmax.xlane.f32.xlu0 %v1962
        %v1964 = vpop.xlane.xlu0 %1963
        %v1965 = vsub.f32 %v1951, %v1961
        %v1966 = vsub.f32 %v1956, %v1964
        %v1967 = vmul.f32 %v1965, 1.442695
        %v1968 = vpow.pop %v1967
        %v1969 = vmul.f32 %v1966, 1.442695
        %v1970 = vpow.pop %v1969
        %v1971 = vsel %vm1400, %v1968, 0.0
        %1972 = vadd.xlane.f32.xlu0 %v1971
        %v1973 = vpop.xlane.xlu0 %1972
        %v1974 = vsel %vm1400, %v1970, 0.0
        %1975 = vadd.xlane.f32.xlu0 %v1974
        %v1976 = vpop.xlane.xlu0 %1975
        %v1977 = vrcp.pop %v1973
        %v1978 = vrcp.pop %v1976
        %v1979 = vmul.f32 %v1968, %v1977
        %v1980 = vmul.f32 %v1970, %v1978
        %1981 = vrot.lane.b32.xlu0 %v1298, 112
        %v1982 = vpop.permute.xlu0 %1981
        %1983 = vrot.lane.b32.xlu0 %v1303, 112
        %v1984 = vpop.permute.xlu0 %1983
        %v1988 = vsel %vm1400, %v1979, 0
        %v1991 = vsel %vm1400, %v1980, 0
        %1993 = vmatprep.subr.mxu0 0.0
        %1994 = vmatpush1.msra.mxu0 %v1982
        %1995 = vmatprep.subr.mxu0 0.0
        %1996 = vmatpush1.msra.mxu0 %v1984
        %1997 = vmatprep.subr.mxu0 0.0
        %1998 = vmatpush1.msra.mxu0 0.0
        %1999 = vmatprep.subr.mxu0 0.0
        %2000 = vmatpush1.msra.mxu0 0.0
        %2001 = vmatprep.subr.mxu0 0.0
        %2002 = vmatpush1.msra.mxu0 0.0
        %2003 = vmatprep.subr.mxu0 0.0
        %2004 = vmatpush1.msra.mxu0 0.0
        %2005 = vmatprep.subr.mxu0 0.0
        %2006 = vmatpush1.msra.mxu0 0.0
        %2007 = vmatprep.subr.mxu0 0.0
        %2008 = vmatpush1.msra.mxu0 0.0
        %2009 = vmatprep.subr.mxu0 0.0
        %2010 = vmatpush1.msra.mxu0 0.0
        %2011 = vmatprep.subr.mxu0 0.0
        %2012 = vmatpush1.msra.mxu0 0.0
        %2013 = vmatprep.subr.mxu0 0.0
        %2014 = vmatpush1.msra.mxu0 0.0
        %2015 = vmatprep.subr.mxu0 0.0
        %2016 = vmatpush1.msra.mxu0 0.0
        %2017 = vmatprep.subr.mxu0 0.0
        %2018 = vmatpush1.msra.mxu0 0.0
        %2019 = vmatprep.subr.mxu0 0.0
        %2020 = vmatpush1.msra.mxu0 0.0
        %2021 = vmatprep.subr.mxu0 0.0
        %2022 = vmatpush1.msra.mxu0 0.0
        %2023 = vmatprep.subr.mxu0 0.0
        %2024 = vmatpush1.msra.mxu0 0.0
        %2025 = vmatprep.subr.mxu0 0.0
        %2026 = vmatpush1.msra.mxu0 0.0
        %2027 = vmatprep.subr.mxu0 0.0
        %2028 = vmatpush1.msra.mxu0 0.0
        %2029 = vmatprep.subr.mxu0 0.0
        %2030 = vmatpush1.msra.mxu0 0.0
        %2031 = vmatprep.subr.mxu0 0.0
        %2032 = vmatpush1.msra.mxu0 0.0
        %2033 = vmatprep.subr.mxu0 0.0
        %2034 = vmatpush1.msra.mxu0 0.0
        %2035 = vmatprep.subr.mxu0 0.0
        %2036 = vmatpush1.msra.mxu0 0.0
        %2037 = vmatprep.subr.mxu0 0.0
        %2038 = vmatpush1.msra.mxu0 0.0
        %2039 = vmatprep.subr.mxu0 0.0
        %2040 = vmatpush1.msra.mxu0 0.0
        %2041 = vmatprep.subr.mxu0 0.0
        %2042 = vmatpush1.msra.mxu0 0.0
        %2043 = vmatprep.subr.mxu0 0.0
        %2044 = vmatpush1.msra.mxu0 0.0
        %2045 = vmatprep.subr.mxu0 0.0
        %2046 = vmatpush1.msra.mxu0 0.0
        %2047 = vmatprep.subr.mxu0 0.0
        %2048 = vmatpush1.msra.mxu0 0.0
        %2049 = vmatprep.subr.mxu0 0.0
        %2050 = vmatpush1.msra.mxu0 0.0
        %2051 = vmatprep.subr.mxu0 0.0
        %2052 = vmatpush1.msra.mxu0 0.0
        %2053 = vmatprep.subr.mxu0 0.0
        %2054 = vmatpush1.msra.mxu0 0.0
        %2055 = vmatprep.subr.mxu0 0.0
        %2056 = vmatpush1.msra.mxu0 0.0
        %2057 = vmatprep.mubr.f32.mxu0 0.0
        %2058 = vmatmul.mubr.f32.gmra.mrb[0].mxu0 %v1988
        %v2059 = vpop.f32.mrb[0].mxu0
        %v2060 = vadd.f32 0.0, %v2059
        %v2061 = vpop.f32.mrb[0].mxu0
        %2062 = vmatprep.mubr.f32.mxu0 0.0
        %2063 = vmatmul.mubr.f32.gmra.mrb[0].mxu0 %v1991
        %v2064 = vpop.f32.mrb[0].mxu0
        %v2065 = vadd.f32 0.0, %v2064
        %v2066 = vpop.f32.mrb[0].mxu0
        %2067 = vdwg.mxu0
        %v2069 = vsel %vm1314, %v2060, 0
        %v2072 = vsel %vm1314, %v2065, 0
        %2074 = vmatprep.subr.mxu0 0.0
        %2075 = vmatpush1.msra.mxu0 %v1115
        %2076 = vmatprep.subr.mxu0 0.0
        %2077 = vmatpush1.msra.mxu0 0.0
        %2078 = vmatprep.subr.mxu0 0.0
        %2079 = vmatpush1.msra.mxu0 0.0
        %2080 = vmatprep.subr.mxu0 0.0
        %2081 = vmatpush1.msra.mxu0 0.0
        %2082 = vmatprep.subr.mxu0 0.0
        %2083 = vmatpush1.msra.mxu0 0.0
        %2084 = vmatprep.subr.mxu0 0.0
        %2085 = vmatpush1.msra.mxu0 0.0
        %2086 = vmatprep.subr.mxu0 0.0
        %2087 = vmatpush1.msra.mxu0 0.0
        %2088 = vmatprep.subr.mxu0 0.0
        %2089 = vmatpush1.msra.mxu0 0.0
        %2090 = vmatprep.subr.mxu0 0.0
        %2091 = vmatpush1.msra.mxu0 0.0
        %2092 = vmatprep.subr.mxu0 0.0
        %2093 = vmatpush1.msra.mxu0 0.0
        %2094 = vmatprep.subr.mxu0 0.0
        %2095 = vmatpush1.msra.mxu0 0.0
        %2096 = vmatprep.subr.mxu0 0.0
        %2097 = vmatpush1.msra.mxu0 0.0
        %2098 = vmatprep.subr.mxu0 0.0
        %2099 = vmatpush1.msra.mxu0 0.0
        %2100 = vmatprep.subr.mxu0 0.0
        %2101 = vmatpush1.msra.mxu0 0.0
        %2102 = vmatprep.subr.mxu0 0.0
        %2103 = vmatpush1.msra.mxu0 0.0
        %2104 = vmatprep.subr.mxu0 0.0
        %2105 = vmatpush1.msra.mxu0 0.0
        %2106 = vmatprep.subr.mxu0 0.0
        %2107 = vmatpush1.msra.mxu0 0.0
        %2108 = vmatprep.subr.mxu0 0.0
        %2109 = vmatpush1.msra.mxu0 0.0
        %2110 = vmatprep.subr.mxu0 0.0
        %2111 = vmatpush1.msra.mxu0 0.0
        %2112 = vmatprep.subr.mxu0 0.0
        %2113 = vmatpush1.msra.mxu0 0.0
        %2114 = vmatprep.subr.mxu0 0.0
        %2115 = vmatpush1.msra.mxu0 0.0
        %2116 = vmatprep.subr.mxu0 0.0
        %2117 = vmatpush1.msra.mxu0 0.0
        %2118 = vmatprep.subr.mxu0 0.0
        %2119 = vmatpush1.msra.mxu0 0.0
        %2120 = vmatprep.subr.mxu0 0.0
        %2121 = vmatpush1.msra.mxu0 0.0
        %2122 = vmatprep.subr.mxu0 0.0
        %2123 = vmatpush1.msra.mxu0 0.0
        %2124 = vmatprep.subr.mxu0 0.0
        %2125 = vmatpush1.msra.mxu0 0.0
        %2126 = vmatprep.subr.mxu0 0.0
        %2127 = vmatpush1.msra.mxu0 0.0
        %2128 = vmatprep.subr.mxu0 0.0
        %2129 = vmatpush1.msra.mxu0 0.0
        %2130 = vmatprep.subr.mxu0 0.0
        %2131 = vmatpush1.msra.mxu0 0.0
        %2132 = vmatprep.subr.mxu0 0.0
        %2133 = vmatpush1.msra.mxu0 0.0
        %2134 = vmatprep.subr.mxu0 0.0
        %2135 = vmatpush1.msra.mxu0 0.0
        %2136 = vmatprep.subr.mxu0 0.0
        %2137 = vmatpush1.msra.mxu0 0.0
        %2138 = vmatprep.mubr.f32.mxu0 0.0
        %2139 = vmatmul.mubr.f32.gmra.mrb[0].mxu0 %v2069
        %v2140 = vpop.f32.mrb[0].mxu0
        %v2141 = vadd.f32 0.0, %v2140
        %v2142 = vpop.f32.mrb[0].mxu0
        %2143 = vmatprep.mubr.f32.mxu0 0.0
        %2144 = vmatmul.mubr.f32.gmra.mrb[0].mxu0 %v2072
        %v2145 = vpop.f32.mrb[0].mxu0
        %v2146 = vadd.f32 0.0, %v2145
        %v2147 = vpop.f32.mrb[0].mxu0
        %2148 = vdwg.mxu0
        %v2149 = vadd.f32 %v1860, %v2141
        %v2150 = vadd.f32 %v1865, %v2146
        %2151 = vrot.lane.b32.xlu0 %v1306, 104
        %v2152 = vpop.permute.xlu0 %2151
        %2153 = vrot.lane.b32.xlu0 %v1307, 104
        %v2154 = vpop.permute.xlu0 %2153
        %2155 = vrot.lane.b32.xlu0 %v1198, 72
        %v2156 = vpop.permute.xlu0 %2155
        %2157 = vrot.lane.b32.xlu0 %v1203, 72
        %v2158 = vpop.permute.xlu0 %2157
        %v2159 = vsel %vm1314, %v2152, 0
        %v2161 = vsel %vm1314, %v2154, 0
        %v2163 = vsel %vm1314, %v2156, 0
        %v2165 = vsel %vm1314, %v2158, 0
        %2167 = vmatprep.subr.mxu0 0.0
        %2168 = vmatpush1.xpose.msra.mxu0 %v2163
        %2169 = vmatprep.subr.mxu0 0.0
        %2170 = vmatpush1.xpose.msra.mxu0 %v2165
        %2171 = vmatprep.subr.mxu0 0.0
        %2172 = vmatpush1.xpose.msra.mxu0 0.0
        %2173 = vmatprep.subr.mxu0 0.0
        %2174 = vmatpush1.xpose.msra.mxu0 0.0
        %2175 = vmatprep.subr.mxu0 0.0
        %2176 = vmatpush1.xpose.msra.mxu0 0.0
        %2177 = vmatprep.subr.mxu0 0.0
        %2178 = vmatpush1.xpose.msra.mxu0 0.0
        %2179 = vmatprep.subr.mxu0 0.0
        %2180 = vmatpush1.xpose.msra.mxu0 0.0
        %2181 = vmatprep.subr.mxu0 0.0
        %2182 = vmatpush1.xpose.msra.mxu0 0.0
        %2183 = vmatprep.subr.mxu0 0.0
        %2184 = vmatpush1.xpose.msra.mxu0 0.0
        %2185 = vmatprep.subr.mxu0 0.0
        %2186 = vmatpush1.xpose.msra.mxu0 0.0
        %2187 = vmatprep.subr.mxu0 0.0
        %2188 = vmatpush1.xpose.msra.mxu0 0.0
        %2189 = vmatprep.subr.mxu0 0.0
        %2190 = vmatpush1.xpose.msra.mxu0 0.0
        %2191 = vmatprep.subr.mxu0 0.0
        %2192 = vmatpush1.xpose.msra.mxu0 0.0
        %2193 = vmatprep.subr.mxu0 0.0
        %2194 = vmatpush1.xpose.msra.mxu0 0.0
        %2195 = vmatprep.subr.mxu0 0.0
        %2196 = vmatpush1.xpose.msra.mxu0 0.0
        %2197 = vmatprep.subr.mxu0 0.0
        %2198 = vmatpush1.xpose.msra.mxu0 0.0
        %2199 = vmatprep.subr.mxu0 0.0
        %2200 = vmatpush1.xpose.msra.mxu0 0.0
        %2201 = vmatprep.subr.mxu0 0.0
        %2202 = vmatpush1.xpose.msra.mxu0 0.0
        %2203 = vmatprep.subr.mxu0 0.0
        %2204 = vmatpush1.xpose.msra.mxu0 0.0
        %2205 = vmatprep.subr.mxu0 0.0
        %2206 = vmatpush1.xpose.msra.mxu0 0.0
        %2207 = vmatprep.subr.mxu0 0.0
        %2208 = vmatpush1.xpose.msra.mxu0 0.0
        %2209 = vmatprep.subr.mxu0 0.0
        %2210 = vmatpush1.xpose.msra.mxu0 0.0
        %2211 = vmatprep.subr.mxu0 0.0
        %2212 = vmatpush1.xpose.msra.mxu0 0.0
        %2213 = vmatprep.subr.mxu0 0.0
        %2214 = vmatpush1.xpose.msra.mxu0 0.0
        %2215 = vmatprep.subr.mxu0 0.0
        %2216 = vmatpush1.xpose.msra.mxu0 0.0
        %2217 = vmatprep.subr.mxu0 0.0
        %2218 = vmatpush1.xpose.msra.mxu0 0.0
        %2219 = vmatprep.subr.mxu0 0.0
        %2220 = vmatpush1.xpose.msra.mxu0 0.0
        %2221 = vmatprep.subr.mxu0 0.0
        %2222 = vmatpush1.xpose.msra.mxu0 0.0
        %2223 = vmatprep.subr.mxu0 0.0
        %2224 = vmatpush1.xpose.msra.mxu0 0.0
        %2225 = vmatprep.subr.mxu0 0.0
        %2226 = vmatpush1.xpose.msra.mxu0 0.0
        %2227 = vmatprep.subr.mxu0 0.0
        %2228 = vmatpush1.xpose.msra.mxu0 0.0
        %2229 = vmatprep.subr.mxu0 0.0
        %2230 = vmatpush1.xpose.msra.mxu0 0.0
        %2231 = vmatprep.mubr.f32.mxu0 0.0
        %2232 = vmatmul.mubr.f32.gmra.mrb[0].mxu0 %v2159
        %v2233 = vpop.f32.mrb[0].mxu0
        %v2234 = vadd.f32 0.0, %v2233
        %v2235 = vpop.f32.mrb[0].mxu0
        %2236 = vmatprep.mubr.f32.mxu0 0.0
        %2237 = vmatmul.mubr.f32.gmra.mrb[0].mxu0 %v2161
        %v2238 = vpop.f32.mrb[0].mxu0
        %v2239 = vadd.f32 0.0, %v2238
        %v2240 = vpop.f32.mrb[0].mxu0
        %2241 = vdwg.mxu0
        %v2242 = vsel %vm1400, %v2234, -inf
        %2243 = vmax.xlane.f32.xlu0 %v2242
        %v2244 = vpop.xlane.xlu0 %2243
        %v2245 = vsel %vm1400, %v2239, -inf
        %2246 = vmax.xlane.f32.xlu0 %v2245
        %v2247 = vpop.xlane.xlu0 %2246
        %v2248 = vsub.f32 %v2234, %v2244
        %v2249 = vsub.f32 %v2239, %v2247
        %v2250 = vmul.f32 %v2248, 1.442695
        %v2251 = vpow.pop %v2250
        %v2252 = vmul.f32 %v2249, 1.442695
        %v2253 = vpow.pop %v2252
        %v2254 = vsel %vm1400, %v2251, 0.0
        %2255 = vadd.xlane.f32.xlu0 %v2254
        %v2256 = vpop.xlane.xlu0 %2255
        %v2257 = vsel %vm1400, %v2253, 0.0
        %2258 = vadd.xlane.f32.xlu0 %v2257
        %v2259 = vpop.xlane.xlu0 %2258
        %v2260 = vrcp.pop %v2256
        %v2261 = vrcp.pop %v2259
        %v2262 = vmul.f32 %v2251, %v2260
        %v2263 = vmul.f32 %v2253, %v2261
        %2264 = vrot.lane.b32.xlu0 %v1298, 104
        %v2265 = vpop.permute.xlu0 %2264
        %2266 = vrot.lane.b32.xlu0 %v1303, 104
        %v2267 = vpop.permute.xlu0 %2266
        %v2271 = vsel %vm1400, %v2262, 0
        %v2274 = vsel %vm1400, %v2263, 0
        %2276 = vmatprep.subr.mxu0 0.0
        %2277 = vmatpush1.msra.mxu0 %v2265
        %2278 = vmatprep.subr.mxu0 0.0
        %2279 = vmatpush1.msra.mxu0 %v2267
        %2280 = vmatprep.subr.mxu0 0.0
        %2281 = vmatpush1.msra.mxu0 0.0
        %2282 = vmatprep.subr.mxu0 0.0
        %2283 = vmatpush1.msra.mxu0 0.0
        %2284 = vmatprep.subr.mxu0 0.0
        %2285 = vmatpush1.msra.mxu0 0.0
        %2286 = vmatprep.subr.mxu0 0.0
        %2287 = vmatpush1.msra.mxu0 0.0
        %2288 = vmatprep.subr.mxu0 0.0
        %2289 = vmatpush1.msra.mxu0 0.0
        %2290 = vmatprep.subr.mxu0 0.0
        %2291 = vmatpush1.msra.mxu0 0.0
        %2292 = vmatprep.subr.mxu0 0.0
        %2293 = vmatpush1.msra.mxu0 0.0
        %2294 = vmatprep.subr.mxu0 0.0
        %2295 = vmatpush1.msra.mxu0 0.0
        %2296 = vmatprep.subr.mxu0 0.0
        %2297 = vmatpush1.msra.mxu0 0.0
        %2298 = vmatprep.subr.mxu0 0.0
        %2299 = vmatpush1.msra.mxu0 0.0
        %2300 = vmatprep.subr.mxu0 0.0
        %2301 = vmatpush1.msra.mxu0 0.0
        %2302 = vmatprep.subr.mxu0 0.0
        %2303 = vmatpush1.msra.mxu0 0.0
        %2304 = vmatprep.subr.mxu0 0.0
        %2305 = vmatpush1.msra.mxu0 0.0
        %2306 = vmatprep.subr.mxu0 0.0
        %2307 = vmatpush1.msra.mxu0 0.0
        %2308 = vmatprep.subr.mxu0 0.0
        %2309 = vmatpush1.msra.mxu0 0.0
        %2310 = vmatprep.subr.mxu0 0.0
        %2311 = vmatpush1.msra.mxu0 0.0
        %2312 = vmatprep.subr.mxu0 0.0
        %2313 = vmatpush1.msra.mxu0 0.0
        %2314 = vmatprep.subr.mxu0 0.0
        %2315 = vmatpush1.msra.mxu0 0.0
        %2316 = vmatprep.subr.mxu0 0.0
        %2317 = vmatpush1.msra.mxu0 0.0
        %2318 = vmatprep.subr.mxu0 0.0
        %2319 = vmatpush1.msra.mxu0 0.0
        %2320 = vmatprep.subr.mxu0 0.0
        %2321 = vmatpush1.msra.mxu0 0.0
        %2322 = vmatprep.subr.mxu0 0.0
        %2323 = vmatpush1.msra.mxu0 0.0
        %2324 = vmatprep.subr.mxu0 0.0
        %2325 = vmatpush1.msra.mxu0 0.0
        %2326 = vmatprep.subr.mxu0 0.0
        %2327 = vmatpush1.msra.mxu0 0.0
        %2328 = vmatprep.subr.mxu0 0.0
        %2329 = vmatpush1.msra.mxu0 0.0
        %2330 = vmatprep.subr.mxu0 0.0
        %2331 = vmatpush1.msra.mxu0 0.0
        %2332 = vmatprep.subr.mxu0 0.0
        %2333 = vmatpush1.msra.mxu0 0.0
        %2334 = vmatprep.subr.mxu0 0.0
        %2335 = vmatpush1.msra.mxu0 0.0
        %2336 = vmatprep.subr.mxu0 0.0
        %2337 = vmatpush1.msra.mxu0 0.0
        %2338 = vmatprep.subr.mxu0 0.0
        %2339 = vmatpush1.msra.mxu0 0.0
        %2340 = vmatprep.mubr.f32.mxu0 0.0
        %2341 = vmatmul.mubr.f32.gmra.mrb[0].mxu0 %v2271
        %v2342 = vpop.f32.mrb[0].mxu0
        %v2343 = vadd.f32 0.0, %v2342
        %v2344 = vpop.f32.mrb[0].mxu0
        %2345 = vmatprep.mubr.f32.mxu0 0.0
        %2346 = vmatmul.mubr.f32.gmra.mrb[0].mxu0 %v2274
        %v2347 = vpop.f32.mrb[0].mxu0
        %v2348 = vadd.f32 0.0, %v2347
        %v2349 = vpop.f32.mrb[0].mxu0
        %2350 = vdwg.mxu0
        %v2352 = vsel %vm1314, %v2343, 0
        %v2355 = vsel %vm1314, %v2348, 0
        %2357 = vmatprep.subr.mxu0 0.0
        %2358 = vmatpush1.msra.mxu0 %v1116
        %2359 = vmatprep.subr.mxu0 0.0
        %2360 = vmatpush1.msra.mxu0 0.0
        %2361 = vmatprep.subr.mxu0 0.0
        %2362 = vmatpush1.msra.mxu0 0.0
        %2363 = vmatprep.subr.mxu0 0.0
        %2364 = vmatpush1.msra.mxu0 0.0
        %2365 = vmatprep.subr.mxu0 0.0
        %2366 = vmatpush1.msra.mxu0 0.0
        %2367 = vmatprep.subr.mxu0 0.0
        %2368 = vmatpush1.msra.mxu0 0.0
        %2369 = vmatprep.subr.mxu0 0.0
        %2370 = vmatpush1.msra.mxu0 0.0
        %2371 = vmatprep.subr.mxu0 0.0
        %2372 = vmatpush1.msra.mxu0 0.0
        %2373 = vmatprep.subr.mxu0 0.0
        %2374 = vmatpush1.msra.mxu0 0.0
        %2375 = vmatprep.subr.mxu0 0.0
        %2376 = vmatpush1.msra.mxu0 0.0
        %2377 = vmatprep.subr.mxu0 0.0
        %2378 = vmatpush1.msra.mxu0 0.0
        %2379 = vmatprep.subr.mxu0 0.0
        %2380 = vmatpush1.msra.mxu0 0.0
        %2381 = vmatprep.subr.mxu0 0.0
        %2382 = vmatpush1.msra.mxu0 0.0
        %2383 = vmatprep.subr.mxu0 0.0
        %2384 = vmatpush1.msra.mxu0 0.0
        %2385 = vmatprep.subr.mxu0 0.0
        %2386 = vmatpush1.msra.mxu0 0.0
        %2387 = vmatprep.subr.mxu0 0.0
        %2388 = vmatpush1.msra.mxu0 0.0
        %2389 = vmatprep.subr.mxu0 0.0
        %2390 = vmatpush1.msra.mxu0 0.0
        %2391 = vmatprep.subr.mxu0 0.0
        %2392 = vmatpush1.msra.mxu0 0.0
        %2393 = vmatprep.subr.mxu0 0.0
        %2394 = vmatpush1.msra.mxu0 0.0
        %2395 = vmatprep.subr.mxu0 0.0
        %2396 = vmatpush1.msra.mxu0 0.0
        %2397 = vmatprep.subr.mxu0 0.0
        %2398 = vmatpush1.msra.mxu0 0.0
        %2399 = vmatprep.subr.mxu0 0.0
        %2400 = vmatpush1.msra.mxu0 0.0
        %2401 = vmatprep.subr.mxu0 0.0
        %2402 = vmatpush1.msra.mxu0 0.0
        %2403 = vmatprep.subr.mxu0 0.0
        %2404 = vmatpush1.msra.mxu0 0.0
        %2405 = vmatprep.subr.mxu0 0.0
        %2406 = vmatpush1.msra.mxu0 0.0
        %2407 = vmatprep.subr.mxu0 0.0
        %2408 = vmatpush1.msra.mxu0 0.0
        %2409 = vmatprep.subr.mxu0 0.0
        %2410 = vmatpush1.msra.mxu0 0.0
        %2411 = vmatprep.subr.mxu0 0.0
        %2412 = vmatpush1.msra.mxu0 0.0
        %2413 = vmatprep.subr.mxu0 0.0
        %2414 = vmatpush1.msra.mxu0 0.0
        %2415 = vmatprep.subr.mxu0 0.0
        %2416 = vmatpush1.msra.mxu0 0.0
        %2417 = vmatprep.subr.mxu0 0.0
        %2418 = vmatpush1.msra.mxu0 0.0
        %2419 = vmatprep.subr.mxu0 0.0
        %2420 = vmatpush1.msra.mxu0 0.0
        %2421 = vmatprep.mubr.f32.mxu0 0.0
        %2422 = vmatmul.mubr.f32.gmra.mrb[0].mxu0 %v2352
        %v2423 = vpop.f32.mrb[0].mxu0
        %v2424 = vadd.f32 0.0, %v2423
        %v2425 = vpop.f32.mrb[0].mxu0
        %2426 = vmatprep.mubr.f32.mxu0 0.0
        %2427 = vmatmul.mubr.f32.gmra.mrb[0].mxu0 %v2355
        %v2428 = vpop.f32.mrb[0].mxu0
        %v2429 = vadd.f32 0.0, %v2428
        %v2430 = vpop.f32.mrb[0].mxu0
        %2431 = vdwg.mxu0
        %v2432 = vadd.f32 %v2149, %v2424
        %v2433 = vadd.f32 %v2150, %v2429
        %v2435 = vlaneseq
        %v2436 = vshrl.u32 %v2435, 7
        %v2437 = vsub.s32 0, %v2436
        %v2438 = vrot.slane %v1117, %v2437
        %v2440 = vadd.f32 %v2432, %v2438
        %v2441 = vadd.f32 %v2433, %v2438
        %v2442 = vadd.f32 %v1100, %v2440
        %v2443 = vadd.f32 %v1101, %v2441
        %v2444 = vld [vmem:[%s57] sm:$0x1]
        %v2445 = vld [vmem:[%s59] sm:$0x1]
        %v2446 = vsel %vm1124, %v2442, 0.0
        %2447 = vadd.xlane.f32.xlu0 %v2446
        %v2448 = vpop.xlane.xlu0 %2447
        %v2449 = vsel %vm1124, %v2443, 0.0
        %2450 = vadd.xlane.f32.xlu0 %v2449
        %v2451 = vpop.xlane.xlu0 %2450
        %v2452 = vrcp.pop 32.0
        %v2453 = vmul.f32 %v2448, %v2452
        %v2454 = vmul.f32 %v2451, %v2452
        %v2455 = vsub.f32 %v2442, %v2453
        %v2456 = vsub.f32 %v2443, %v2454
        %v2457 = vmul.f32 %v2455, %v2455
        %v2458 = vmul.f32 %v2456, %v2456
        %v2459 = vsel %vm1124, %v2457, 0.0
        %2460 = vadd.xlane.f32.xlu0 %v2459
        %v2461 = vpop.xlane.xlu0 %2460
        %v2462 = vsel %vm1124, %v2458, 0.0
        %2463 = vadd.xlane.f32.xlu0 %v2462
        %v2464 = vpop.xlane.xlu0 %2463
        %v2465 = vmul.f32 %v2461, %v2452
        %v2466 = vmul.f32 %v2464, %v2452
        %v2467 = vadd.f32 %v2465, 1e-05
        %v2468 = vadd.f32 %v2466, 1e-05
        %v2469 = vrsqrt.pop %v2467
        %v2470 = vrsqrt.pop %v2468
        %v2471 = vmul.f32 %v2455, %v2469
        %v2472 = vmul.f32 %v2456, %v2470
        %v2473 = vlaneseq
        %v2474 = vshrl.u32 %v2473, 7
        %v2475 = vsub.s32 0, %v2474
        %v2476 = vrot.slane %v2444, %v2475
        %v2477 = vmul.f32 %v2471, %v2476
        %v2478 = vmul.f32 %v2472, %v2476
        %v2479 = vlaneseq
        %v2480 = vshrl.u32 %v2479, 7
        %v2481 = vsub.s32 0, %v2480
        %v2482 = vrot.slane %v2445, %v2481
        %v2483 = vadd.f32 %v2477, %v2482
        %v2484 = vadd.f32 %v2478, %v2482
        %v2485 = vadd.f32 %v2483, %v1103
        %v2486 = vadd.f32 %v2484, %v1104
        %v2487 = vadd.f32 %v1102, %v1105
        %v2488 = vld [vmem:[%s17] sm:$0xff]
        %v2489 = vld [vmem:[%s17 + $0x8] sm:$0xff]
        %v2490 = vld [vmem:[%s17 + $0x10] sm:$0xff]
        %v2491 = vld [vmem:[%s17 + $0x18] sm:$0xff]
        %v2492 = vld [vmem:[#allocation2] sm:$0x1]
        %v2493 = vld [vmem:[%s21] sm:$0xff]
        %v2494 = vld [vmem:[%s21 + $0x8] sm:$0xff]
        %v2495 = vld [vmem:[%s21 + $0x10] sm:$0xff]
        %v2496 = vld [vmem:[%s21 + $0x18] sm:$0xff]
        %v2497 = vld [vmem:[#allocation4] sm:$0x1]
        %v2499 = vlaneseq
        %v2500 = vshrl.u32 %v2499, 7
        %v2501 = vsub.s32 0, %v2500
        %v2502 = vrot.slane %v2492, %v2501
        %v2505 = vsel %vm1124, %v2485, 0
        %v2508 = vsel %vm1124, %v2486, 0
        %2510 = vmatprep.subr.mxu0 0.0
        %2511 = vmatpush1.msra.mxu0 %v2488
        %2512 = vmatprep.subr.mxu0 0.0
        %2513 = vmatpush1.msra.mxu0 %v2489
        %2514 = vmatprep.subr.mxu0 0.0
        %2515 = vmatpush1.msra.mxu0 %v2490
        %2516 = vmatprep.subr.mxu0 0.0
        %2517 = vmatpush1.msra.mxu0 %v2491
        %2518 = vmatprep.subr.mxu0 0.0
        %2519 = vmatpush1.msra.mxu0 0.0
        %2520 = vmatprep.subr.mxu0 0.0
        %2521 = vmatpush1.msra.mxu0 0.0
        %2522 = vmatprep.subr.mxu0 0.0
        %2523 = vmatpush1.msra.mxu0 0.0
        %2524 = vmatprep.subr.mxu0 0.0
        %2525 = vmatpush1.msra.mxu0 0.0
        %2526 = vmatprep.subr.mxu0 0.0
        %2527 = vmatpush1.msra.mxu0 0.0
        %2528 = vmatprep.subr.mxu0 0.0
        %2529 = vmatpush1.msra.mxu0 0.0
        %2530 = vmatprep.subr.mxu0 0.0
        %2531 = vmatpush1.msra.mxu0 0.0
        %2532 = vmatprep.subr.mxu0 0.0
        %2533 = vmatpush1.msra.mxu0 0.0
        %2534 = vmatprep.subr.mxu0 0.0
        %2535 = vmatpush1.msra.mxu0 0.0
        %2536 = vmatprep.subr.mxu0 0.0
        %2537 = vmatpush1.msra.mxu0 0.0
        %2538 = vmatprep.subr.mxu0 0.0
        %2539 = vmatpush1.msra.mxu0 0.0
        %2540 = vmatprep.subr.mxu0 0.0
        %2541 = vmatpush1.msra.mxu0 0.0
        %2542 = vmatprep.subr.mxu0 0.0
        %2543 = vmatpush1.msra.mxu0 0.0
        %2544 = vmatprep.subr.mxu0 0.0
        %2545 = vmatpush1.msra.mxu0 0.0
        %2546 = vmatprep.subr.mxu0 0.0
        %2547 = vmatpush1.msra.mxu0 0.0
        %2548 = vmatprep.subr.mxu0 0.0
        %2549 = vmatpush1.msra.mxu0 0.0
        %2550 = vmatprep.subr.mxu0 0.0
        %2551 = vmatpush1.msra.mxu0 0.0
        %2552 = vmatprep.subr.mxu0 0.0
        %2553 = vmatpush1.msra.mxu0 0.0
        %2554 = vmatprep.subr.mxu0 0.0
        %2555 = vmatpush1.msra.mxu0 0.0
        %2556 = vmatprep.subr.mxu0 0.0
        %2557 = vmatpush1.msra.mxu0 0.0
        %2558 = vmatprep.subr.mxu0 0.0
        %2559 = vmatpush1.msra.mxu0 0.0
        %2560 = vmatprep.subr.mxu0 0.0
        %2561 = vmatpush1.msra.mxu0 0.0
        %2562 = vmatprep.subr.mxu0 0.0
        %2563 = vmatpush1.msra.mxu0 0.0
        %2564 = vmatprep.subr.mxu0 0.0
        %2565 = vmatpush1.msra.mxu0 0.0
        %2566 = vmatprep.subr.mxu0 0.0
        %2567 = vmatpush1.msra.mxu0 0.0
        %2568 = vmatprep.subr.mxu0 0.0
        %2569 = vmatpush1.msra.mxu0 0.0
        %2570 = vmatprep.subr.mxu0 0.0
        %2571 = vmatpush1.msra.mxu0 0.0
        %2572 = vmatprep.subr.mxu0 0.0
        %2573 = vmatpush1.msra.mxu0 0.0
        %2574 = vmatprep.mubr.f32.mxu0 0.0
        %2575 = vmatmul.mubr.f32.gmra.mrb[0].mxu0 %v2505
        %v2576 = vpop.f32.mrb[0].mxu0
        %v2577 = vadd.f32 %v2502, %v2576
        %v2578 = vpop.f32.mrb[0].mxu0
        %2579 = vmatprep.mubr.f32.mxu0 0.0
        %2580 = vmatmul.mubr.f32.gmra.mrb[0].mxu0 %v2508
        %v2581 = vpop.f32.mrb[0].mxu0
        %v2582 = vadd.f32 %v2502, %v2581
        %v2583 = vpop.f32.mrb[0].mxu0
        %2584 = vdwg.mxu0
        %2589 = vrot.lane.b32.xlu0 %v2488, 96
        %v2590 = vpop.permute.xlu0 %2589
        %2591 = vrot.lane.b32.xlu0 %v2489, 96
        %v2592 = vpop.permute.xlu0 %2591
        %2593 = vrot.lane.b32.xlu0 %v2490, 96
        %v2594 = vpop.permute.xlu0 %2593
        %2595 = vrot.lane.b32.xlu0 %v2491, 96
        %v2596 = vpop.permute.xlu0 %2595
        %2601 = vrot.lane.b32.xlu0 %v2502, 96
        %v2602 = vpop.permute.xlu0 %2601
        %v2605 = vsel %vm1124, %v2487, 0
        %2607 = vmatprep.subr.mxu0 0.0
        %2608 = vmatpush1.msra.mxu0 %v2590
        %2609 = vmatprep.subr.mxu0 0.0
        %2610 = vmatpush1.msra.mxu0 %v2592
        %2611 = vmatprep.subr.mxu0 0.0
        %2612 = vmatpush1.msra.mxu0 %v2594
        %2613 = vmatprep.subr.mxu0 0.0
        %2614 = vmatpush1.msra.mxu0 %v2596
        %2615 = vmatprep.subr.mxu0 0.0
        %2616 = vmatpush1.msra.mxu0 0.0
        %2617 = vmatprep.subr.mxu0 0.0
        %2618 = vmatpush1.msra.mxu0 0.0
        %2619 = vmatprep.subr.mxu0 0.0
        %2620 = vmatpush1.msra.mxu0 0.0
        %2621 = vmatprep.subr.mxu0 0.0
        %2622 = vmatpush1.msra.mxu0 0.0
        %2623 = vmatprep.subr.mxu0 0.0
        %2624 = vmatpush1.msra.mxu0 0.0
        %2625 = vmatprep.subr.mxu0 0.0
        %2626 = vmatpush1.msra.mxu0 0.0
        %2627 = vmatprep.subr.mxu0 0.0
        %2628 = vmatpush1.msra.mxu0 0.0
        %2629 = vmatprep.subr.mxu0 0.0
        %2630 = vmatpush1.msra.mxu0 0.0
        %2631 = vmatprep.subr.mxu0 0.0
        %2632 = vmatpush1.msra.mxu0 0.0
        %2633 = vmatprep.subr.mxu0 0.0
        %2634 = vmatpush1.msra.mxu0 0.0
        %2635 = vmatprep.subr.mxu0 0.0
        %2636 = vmatpush1.msra.mxu0 0.0
        %2637 = vmatprep.subr.mxu0 0.0
        %2638 = vmatpush1.msra.mxu0 0.0
        %2639 = vmatprep.subr.mxu0 0.0
        %2640 = vmatpush1.msra.mxu0 0.0
        %2641 = vmatprep.subr.mxu0 0.0
        %2642 = vmatpush1.msra.mxu0 0.0
        %2643 = vmatprep.subr.mxu0 0.0
        %2644 = vmatpush1.msra.mxu0 0.0
        %2645 = vmatprep.subr.mxu0 0.0
        %2646 = vmatpush1.msra.mxu0 0.0
        %2647 = vmatprep.subr.mxu0 0.0
        %2648 = vmatpush1.msra.mxu0 0.0
        %2649 = vmatprep.subr.mxu0 0.0
        %2650 = vmatpush1.msra.mxu0 0.0
        %2651 = vmatprep.subr.mxu0 0.0
        %2652 = vmatpush1.msra.mxu0 0.0
        %2653 = vmatprep.subr.mxu0 0.0
        %2654 = vmatpush1.msra.mxu0 0.0
        %2655 = vmatprep.subr.mxu0 0.0
        %2656 = vmatpush1.msra.mxu0 0.0
        %2657 = vmatprep.subr.mxu0 0.0
        %2658 = vmatpush1.msra.mxu0 0.0
        %2659 = vmatprep.subr.mxu0 0.0
        %2660 = vmatpush1.msra.mxu0 0.0
        %2661 = vmatprep.subr.mxu0 0.0
        %2662 = vmatpush1.msra.mxu0 0.0
        %2663 = vmatprep.subr.mxu0 0.0
        %2664 = vmatpush1.msra.mxu0 0.0
        %2665 = vmatprep.subr.mxu0 0.0
        %2666 = vmatpush1.msra.mxu0 0.0
        %2667 = vmatprep.subr.mxu0 0.0
        %2668 = vmatpush1.msra.mxu0 0.0
        %2669 = vmatprep.subr.mxu0 0.0
        %2670 = vmatpush1.msra.mxu0 0.0
        %2671 = vmatprep.mubr.f32.mxu0 0.0
        %2672 = vmatmul.mubr.f32.gmra.mrb[0].mxu0 %v2605
        %v2673 = vpop.f32.mrb[0].mxu0
        %v2674 = vadd.f32 %v2602, %v2673
        %v2675 = vpop.f32.mrb[0].mxu0
        %2676 = vdwg.mxu0
        %2677 = vrot.lane.b32.xlu0 %v2488, 64
        %v2678 = vpop.permute.xlu0 %2677
        %2679 = vrot.lane.b32.xlu0 %v2489, 64
        %v2680 = vpop.permute.xlu0 %2679
        %2681 = vrot.lane.b32.xlu0 %v2490, 64
        %v2682 = vpop.permute.xlu0 %2681
        %2683 = vrot.lane.b32.xlu0 %v2491, 64
        %v2684 = vpop.permute.xlu0 %2683
        %2689 = vrot.lane.b32.xlu0 %v2502, 64
        %v2690 = vpop.permute.xlu0 %2689
        %v2693 = vsel %vm1124, %v1102, 0
        %2695 = vmatprep.subr.mxu0 0.0
        %2696 = vmatpush1.msra.mxu0 %v2678
        %2697 = vmatprep.subr.mxu0 0.0
        %2698 = vmatpush1.msra.mxu0 %v2680
        %2699 = vmatprep.subr.mxu0 0.0
        %2700 = vmatpush1.msra.mxu0 %v2682
        %2701 = vmatprep.subr.mxu0 0.0
        %2702 = vmatpush1.msra.mxu0 %v2684
        %2703 = vmatprep.subr.mxu0 0.0
        %2704 = vmatpush1.msra.mxu0 0.0
        %2705 = vmatprep.subr.mxu0 0.0
        %2706 = vmatpush1.msra.mxu0 0.0
        %2707 = vmatprep.subr.mxu0 0.0
        %2708 = vmatpush1.msra.mxu0 0.0
        %2709 = vmatprep.subr.mxu0 0.0
        %2710 = vmatpush1.msra.mxu0 0.0
        %2711 = vmatprep.subr.mxu0 0.0
        %2712 = vmatpush1.msra.mxu0 0.0
        %2713 = vmatprep.subr.mxu0 0.0
        %2714 = vmatpush1.msra.mxu0 0.0
        %2715 = vmatprep.subr.mxu0 0.0
        %2716 = vmatpush1.msra.mxu0 0.0
        %2717 = vmatprep.subr.mxu0 0.0
        %2718 = vmatpush1.msra.mxu0 0.0
        %2719 = vmatprep.subr.mxu0 0.0
        %2720 = vmatpush1.msra.mxu0 0.0
        %2721 = vmatprep.subr.mxu0 0.0
        %2722 = vmatpush1.msra.mxu0 0.0
        %2723 = vmatprep.subr.mxu0 0.0
        %2724 = vmatpush1.msra.mxu0 0.0
        %2725 = vmatprep.subr.mxu0 0.0
        %2726 = vmatpush1.msra.mxu0 0.0
        %2727 = vmatprep.subr.mxu0 0.0
        %2728 = vmatpush1.msra.mxu0 0.0
        %2729 = vmatprep.subr.mxu0 0.0
        %2730 = vmatpush1.msra.mxu0 0.0
        %2731 = vmatprep.subr.mxu0 0.0
        %2732 = vmatpush1.msra.mxu0 0.0
        %2733 = vmatprep.subr.mxu0 0.0
        %2734 = vmatpush1.msra.mxu0 0.0
        %2735 = vmatprep.subr.mxu0 0.0
        %2736 = vmatpush1.msra.mxu0 0.0
        %2737 = vmatprep.subr.mxu0 0.0
        %2738 = vmatpush1.msra.mxu0 0.0
        %2739 = vmatprep.subr.mxu0 0.0
        %2740 = vmatpush1.msra.mxu0 0.0
        %2741 = vmatprep.subr.mxu0 0.0
        %2742 = vmatpush1.msra.mxu0 0.0
        %2743 = vmatprep.subr.mxu0 0.0
        %2744 = vmatpush1.msra.mxu0 0.0
        %2745 = vmatprep.subr.mxu0 0.0
        %2746 = vmatpush1.msra.mxu0 0.0
        %2747 = vmatprep.subr.mxu0 0.0
        %2748 = vmatpush1.msra.mxu0 0.0
        %2749 = vmatprep.subr.mxu0 0.0
        %2750 = vmatpush1.msra.mxu0 0.0
        %2751 = vmatprep.subr.mxu0 0.0
        %2752 = vmatpush1.msra.mxu0 0.0
        %2753 = vmatprep.subr.mxu0 0.0
        %2754 = vmatpush1.msra.mxu0 0.0
        %2755 = vmatprep.subr.mxu0 0.0
        %2756 = vmatpush1.msra.mxu0 0.0
        %2757 = vmatprep.subr.mxu0 0.0
        %2758 = vmatpush1.msra.mxu0 0.0
        %2759 = vmatprep.mubr.f32.mxu0 0.0
        %2760 = vmatmul.mubr.f32.gmra.mrb[0].mxu0 %v2693
        %v2761 = vpop.f32.mrb[0].mxu0
        %v2762 = vadd.f32 %v2690, %v2761
        %v2763 = vpop.f32.mrb[0].mxu0
        %2764 = vdwg.mxu0
        %v2765 = vmul.f32 %v2577, 0.35355338
        %v2766 = vmul.f32 %v2582, 0.35355338
        %v2768 = vsel %vm1314, %v2765, 0
        %v2771 = vsel %vm1314, %v2766, 0
        %v2774 = vsel %vm1314, %v2674, 0
        %2776 = vmatprep.subr.mxu0 0.0
        %2777 = vmatpush1.xpose.msra.mxu0 %v2774
        %2778 = vmatprep.subr.mxu0 0.0
        %2779 = vmatpush1.xpose.msra.mxu0 0.0
        %2780 = vmatprep.subr.mxu0 0.0
        %2781 = vmatpush1.xpose.msra.mxu0 0.0
        %2782 = vmatprep.subr.mxu0 0.0
        %2783 = vmatpush1.xpose.msra.mxu0 0.0
        %2784 = vmatprep.subr.mxu0 0.0
        %2785 = vmatpush1.xpose.msra.mxu0 0.0
        %2786 = vmatprep.subr.mxu0 0.0
        %2787 = vmatpush1.xpose.msra.mxu0 0.0
        %2788 = vmatprep.subr.mxu0 0.0
        %2789 = vmatpush1.xpose.msra.mxu0 0.0
        %2790 = vmatprep.subr.mxu0 0.0
        %2791 = vmatpush1.xpose.msra.mxu0 0.0
        %2792 = vmatprep.subr.mxu0 0.0
        %2793 = vmatpush1.xpose.msra.mxu0 0.0
        %2794 = vmatprep.subr.mxu0 0.0
        %2795 = vmatpush1.xpose.msra.mxu0 0.0
        %2796 = vmatprep.subr.mxu0 0.0
        %2797 = vmatpush1.xpose.msra.mxu0 0.0
        %2798 = vmatprep.subr.mxu0 0.0
        %2799 = vmatpush1.xpose.msra.mxu0 0.0
        %2800 = vmatprep.subr.mxu0 0.0
        %2801 = vmatpush1.xpose.msra.mxu0 0.0
        %2802 = vmatprep.subr.mxu0 0.0
        %2803 = vmatpush1.xpose.msra.mxu0 0.0
        %2804 = vmatprep.subr.mxu0 0.0
        %2805 = vmatpush1.xpose.msra.mxu0 0.0
        %2806 = vmatprep.subr.mxu0 0.0
        %2807 = vmatpush1.xpose.msra.mxu0 0.0
        %2808 = vmatprep.subr.mxu0 0.0
        %2809 = vmatpush1.xpose.msra.mxu0 0.0
        %2810 = vmatprep.subr.mxu0 0.0
        %2811 = vmatpush1.xpose.msra.mxu0 0.0
        %2812 = vmatprep.subr.mxu0 0.0
        %2813 = vmatpush1.xpose.msra.mxu0 0.0
        %2814 = vmatprep.subr.mxu0 0.0
        %2815 = vmatpush1.xpose.msra.mxu0 0.0
        %2816 = vmatprep.subr.mxu0 0.0
        %2817 = vmatpush1.xpose.msra.mxu0 0.0
        %2818 = vmatprep.subr.mxu0 0.0
        %2819 = vmatpush1.xpose.msra.mxu0 0.0
        %2820 = vmatprep.subr.mxu0 0.0
        %2821 = vmatpush1.xpose.msra.mxu0 0.0
        %2822 = vmatprep.subr.mxu0 0.0
        %2823 = vmatpush1.xpose.msra.mxu0 0.0
        %2824 = vmatprep.subr.mxu0 0.0
        %2825 = vmatpush1.xpose.msra.mxu0 0.0
        %2826 = vmatprep.subr.mxu0 0.0
        %2827 = vmatpush1.xpose.msra.mxu0 0.0
        %2828 = vmatprep.subr.mxu0 0.0
        %2829 = vmatpush1.xpose.msra.mxu0 0.0
        %2830 = vmatprep.subr.mxu0 0.0
        %2831 = vmatpush1.xpose.msra.mxu0 0.0
        %2832 = vmatprep.subr.mxu0 0.0
        %2833 = vmatpush1.xpose.msra.mxu0 0.0
        %2834 = vmatprep.subr.mxu0 0.0
        %2835 = vmatpush1.xpose.msra.mxu0 0.0
        %2836 = vmatprep.subr.mxu0 0.0
        %2837 = vmatpush1.xpose.msra.mxu0 0.0
        %2838 = vmatprep.subr.mxu0 0.0
        %2839 = vmatpush1.xpose.msra.mxu0 0.0
        %2840 = vmatprep.mubr.f32.mxu0 0.0
        %2841 = vmatmul.mubr.f32.gmra.mrb[0].mxu0 %v2768
        %v2842 = vpop.f32.mrb[0].mxu0
        %v2843 = vadd.f32 0.0, %v2842
        %v2844 = vpop.f32.mrb[0].mxu0
        %2845 = vmatprep.mubr.f32.mxu0 0.0
        %2846 = vmatmul.mubr.f32.gmra.mrb[0].mxu0 %v2771
        %v2847 = vpop.f32.mrb[0].mxu0
        %v2848 = vadd.f32 0.0, %v2847
        %v2849 = vpop.f32.mrb[0].mxu0
        %2850 = vdwg.mxu0
        %v2851 = vsel %vm1314, %v2843, -inf
        %2852 = vmax.xlane.f32.xlu0 %v2851
        %v2853 = vpop.xlane.xlu0 %2852
        %v2854 = vsel %vm1314, %v2848, -inf
        %2855 = vmax.xlane.f32.xlu0 %v2854
        %v2856 = vpop.xlane.xlu0 %2855
        %v2857 = vsub.f32 %v2843, %v2853
        %v2858 = vsub.f32 %v2848, %v2856
        %v2859 = vmul.f32 %v2857, 1.442695
        %v2860 = vpow.pop %v2859
        %v2861 = vmul.f32 %v2858, 1.442695
        %v2862 = vpow.pop %v2861
        %v2863 = vsel %vm1314, %v2860, 0.0
        %2864 = vadd.xlane.f32.xlu0 %v2863
        %v2865 = vpop.xlane.xlu0 %2864
        %v2866 = vsel %vm1314, %v2862, 0.0
        %2867 = vadd.xlane.f32.xlu0 %v2866
        %v2868 = vpop.xlane.xlu0 %2867
        %v2869 = vrcp.pop %v2865
        %v2870 = vrcp.pop %v2868
        %v2871 = vmul.f32 %v2860, %v2869
        %v2872 = vmul.f32 %v2862, %v2870
        %v2874 = vsel %vm1314, %v2871, 0
        %v2877 = vsel %vm1314, %v2872, 0
        %2879 = vmatprep.subr.mxu0 0.0
        %2880 = vmatpush1.msra.mxu0 %v2762
        %2881 = vmatprep.subr.mxu0 0.0
        %2882 = vmatpush1.msra.mxu0 0.0
        %2883 = vmatprep.subr.mxu0 0.0
        %2884 = vmatpush1.msra.mxu0 0.0
        %2885 = vmatprep.subr.mxu0 0.0
        %2886 = vmatpush1.msra.mxu0 0.0
        %2887 = vmatprep.subr.mxu0 0.0
        %2888 = vmatpush1.msra.mxu0 0.0
        %2889 = vmatprep.subr.mxu0 0.0
        %2890 = vmatpush1.msra.mxu0 0.0
        %2891 = vmatprep.subr.mxu0 0.0
        %2892 = vmatpush1.msra.mxu0 0.0
        %2893 = vmatprep.subr.mxu0 0.0
        %2894 = vmatpush1.msra.mxu0 0.0
        %2895 = vmatprep.subr.mxu0 0.0
        %2896 = vmatpush1.msra.mxu0 0.0
        %2897 = vmatprep.subr.mxu0 0.0
        %2898 = vmatpush1.msra.mxu0 0.0
        %2899 = vmatprep.subr.mxu0 0.0
        %2900 = vmatpush1.msra.mxu0 0.0
        %2901 = vmatprep.subr.mxu0 0.0
        %2902 = vmatpush1.msra.mxu0 0.0
        %2903 = vmatprep.subr.mxu0 0.0
        %2904 = vmatpush1.msra.mxu0 0.0
        %2905 = vmatprep.subr.mxu0 0.0
        %2906 = vmatpush1.msra.mxu0 0.0
        %2907 = vmatprep.subr.mxu0 0.0
        %2908 = vmatpush1.msra.mxu0 0.0
        %2909 = vmatprep.subr.mxu0 0.0
        %2910 = vmatpush1.msra.mxu0 0.0
        %2911 = vmatprep.subr.mxu0 0.0
        %2912 = vmatpush1.msra.mxu0 0.0
        %2913 = vmatprep.subr.mxu0 0.0
        %2914 = vmatpush1.msra.mxu0 0.0
        %2915 = vmatprep.subr.mxu0 0.0
        %2916 = vmatpush1.msra.mxu0 0.0
        %2917 = vmatprep.subr.mxu0 0.0
        %2918 = vmatpush1.msra.mxu0 0.0
        %2919 = vmatprep.subr.mxu0 0.0
        %2920 = vmatpush1.msra.mxu0 0.0
        %2921 = vmatprep.subr.mxu0 0.0
        %2922 = vmatpush1.msra.mxu0 0.0
        %2923 = vmatprep.subr.mxu0 0.0
        %2924 = vmatpush1.msra.mxu0 0.0
        %2925 = vmatprep.subr.mxu0 0.0
        %2926 = vmatpush1.msra.mxu0 0.0
        %2927 = vmatprep.subr.mxu0 0.0
        %2928 = vmatpush1.msra.mxu0 0.0
        %2929 = vmatprep.subr.mxu0 0.0
        %2930 = vmatpush1.msra.mxu0 0.0
        %2931 = vmatprep.subr.mxu0 0.0
        %2932 = vmatpush1.msra.mxu0 0.0
        %2933 = vmatprep.subr.mxu0 0.0
        %2934 = vmatpush1.msra.mxu0 0.0
        %2935 = vmatprep.subr.mxu0 0.0
        %2936 = vmatpush1.msra.mxu0 0.0
        %2937 = vmatprep.subr.mxu0 0.0
        %2938 = vmatpush1.msra.mxu0 0.0
        %2939 = vmatprep.subr.mxu0 0.0
        %2940 = vmatpush1.msra.mxu0 0.0
        %2941 = vmatprep.subr.mxu0 0.0
        %2942 = vmatpush1.msra.mxu0 0.0
        %2943 = vmatprep.mubr.f32.mxu0 0.0
        %2944 = vmatmul.mubr.f32.gmra.mrb[0].mxu0 %v2874
        %v2945 = vpop.f32.mrb[0].mxu0
        %v2946 = vadd.f32 0.0, %v2945
        %v2947 = vpop.f32.mrb[0].mxu0
        %2948 = vmatprep.mubr.f32.mxu0 0.0
        %2949 = vmatmul.mubr.f32.gmra.mrb[0].mxu0 %v2877
        %v2950 = vpop.f32.mrb[0].mxu0
        %v2951 = vadd.f32 0.0, %v2950
        %v2952 = vpop.f32.mrb[0].mxu0
        %2953 = vdwg.mxu0
        %2954 = vrot.lane.b32.xlu0 %v2765, 120
        %v2955 = vpop.permute.xlu0 %2954
        %2956 = vrot.lane.b32.xlu0 %v2766, 120
        %v2957 = vpop.permute.xlu0 %2956
        %2958 = vrot.lane.b32.xlu0 %v2674, 120
        %v2959 = vpop.permute.xlu0 %2958
        %v2960 = vsel %vm1314, %v2955, 0
        %v2962 = vsel %vm1314, %v2957, 0
        %v2964 = vsel %vm1314, %v2959, 0
        %2966 = vmatprep.subr.mxu0 0.0
        %2967 = vmatpush1.xpose.msra.mxu0 %v2964
        %2968 = vmatprep.subr.mxu0 0.0
        %2969 = vmatpush1.xpose.msra.mxu0 0.0
        %2970 = vmatprep.subr.mxu0 0.0
        %2971 = vmatpush1.xpose.msra.mxu0 0.0
        %2972 = vmatprep.subr.mxu0 0.0
        %2973 = vmatpush1.xpose.msra.mxu0 0.0
        %2974 = vmatprep.subr.mxu0 0.0
        %2975 = vmatpush1.xpose.msra.mxu0 0.0
        %2976 = vmatprep.subr.mxu0 0.0
        %2977 = vmatpush1.xpose.msra.mxu0 0.0
        %2978 = vmatprep.subr.mxu0 0.0
        %2979 = vmatpush1.xpose.msra.mxu0 0.0
        %2980 = vmatprep.subr.mxu0 0.0
        %2981 = vmatpush1.xpose.msra.mxu0 0.0
        %2982 = vmatprep.subr.mxu0 0.0
        %2983 = vmatpush1.xpose.msra.mxu0 0.0
        %2984 = vmatprep.subr.mxu0 0.0
        %2985 = vmatpush1.xpose.msra.mxu0 0.0
        %2986 = vmatprep.subr.mxu0 0.0
        %2987 = vmatpush1.xpose.msra.mxu0 0.0
        %2988 = vmatprep.subr.mxu0 0.0
        %2989 = vmatpush1.xpose.msra.mxu0 0.0
        %2990 = vmatprep.subr.mxu0 0.0
        %2991 = vmatpush1.xpose.msra.mxu0 0.0
        %2992 = vmatprep.subr.mxu0 0.0
        %2993 = vmatpush1.xpose.msra.mxu0 0.0
        %2994 = vmatprep.subr.mxu0 0.0
        %2995 = vmatpush1.xpose.msra.mxu0 0.0
        %2996 = vmatprep.subr.mxu0 0.0
        %2997 = vmatpush1.xpose.msra.mxu0 0.0
        %2998 = vmatprep.subr.mxu0 0.0
        %2999 = vmatpush1.xpose.msra.mxu0 0.0
        %3000 = vmatprep.subr.mxu0 0.0
        %3001 = vmatpush1.xpose.msra.mxu0 0.0
        %3002 = vmatprep.subr.mxu0 0.0
        %3003 = vmatpush1.xpose.msra.mxu0 0.0
        %3004 = vmatprep.subr.mxu0 0.0
        %3005 = vmatpush1.xpose.msra.mxu0 0.0
        %3006 = vmatprep.subr.mxu0 0.0
        %3007 = vmatpush1.xpose.msra.mxu0 0.0
        %3008 = vmatprep.subr.mxu0 0.0
        %3009 = vmatpush1.xpose.msra.mxu0 0.0
        %3010 = vmatprep.subr.mxu0 0.0
        %3011 = vmatpush1.xpose.msra.mxu0 0.0
        %3012 = vmatprep.subr.mxu0 0.0
        %3013 = vmatpush1.xpose.msra.mxu0 0.0
        %3014 = vmatprep.subr.mxu0 0.0
        %3015 = vmatpush1.xpose.msra.mxu0 0.0
        %3016 = vmatprep.subr.mxu0 0.0
        %3017 = vmatpush1.xpose.msra.mxu0 0.0
        %3018 = vmatprep.subr.mxu0 0.0
        %3019 = vmatpush1.xpose.msra.mxu0 0.0
        %3020 = vmatprep.subr.mxu0 0.0
        %3021 = vmatpush1.xpose.msra.mxu0 0.0
        %3022 = vmatprep.subr.mxu0 0.0
        %3023 = vmatpush1.xpose.msra.mxu0 0.0
        %3024 = vmatprep.subr.mxu0 0.0
        %3025 = vmatpush1.xpose.msra.mxu0 0.0
        %3026 = vmatprep.subr.mxu0 0.0
        %3027 = vmatpush1.xpose.msra.mxu0 0.0
        %3028 = vmatprep.subr.mxu0 0.0
        %3029 = vmatpush1.xpose.msra.mxu0 0.0
        %3030 = vmatprep.mubr.f32.mxu0 0.0
        %3031 = vmatmul.mubr.f32.gmra.mrb[0].mxu0 %v2960
        %v3032 = vpop.f32.mrb[0].mxu0
        %v3033 = vadd.f32 0.0, %v3032
        %v3034 = vpop.f32.mrb[0].mxu0
        %3035 = vmatprep.mubr.f32.mxu0 0.0
        %3036 = vmatmul.mubr.f32.gmra.mrb[0].mxu0 %v2962
        %v3037 = vpop.f32.mrb[0].mxu0
        %v3038 = vadd.f32 0.0, %v3037
        %v3039 = vpop.f32.mrb[0].mxu0
        %3040 = vdwg.mxu0
        %v3041 = vsel %vm1314, %v3033, -inf
        %3042 = vmax.xlane.f32.xlu0 %v3041
        %v3043 = vpop.xlane.xlu0 %3042
        %v3044 = vsel %vm1314, %v3038, -inf
        %3045 = vmax.xlane.f32.xlu0 %v3044
        %v3046 = vpop.xlane.xlu0 %3045
        %v3047 = vsub.f32 %v3033, %v3043
        %v3048 = vsub.f32 %v3038, %v3046
        %v3049 = vmul.f32 %v3047, 1.442695
        %v3050 = vpow.pop %v3049
        %v3051 = vmul.f32 %v3048, 1.442695
        %v3052 = vpow.pop %v3051
        %v3053 = vsel %vm1314, %v3050, 0.0
        %3054 = vadd.xlane.f32.xlu0 %v3053
        %v3055 = vpop.xlane.xlu0 %3054
        %v3056 = vsel %vm1314, %v3052, 0.0
        %3057 = vadd.xlane.f32.xlu0 %v3056
        %v3058 = vpop.xlane.xlu0 %3057
        %v3059 = vrcp.pop %v3055
        %v3060 = vrcp.pop %v3058
        %v3061 = vmul.f32 %v3050, %v3059
        %v3062 = vmul.f32 %v3052, %v3060
        %3064 = vrot.lane.b32.xlu0 %v2762, 120
        %v3065 = vpop.permute.xlu0 %3064
        %v3068 = vsel %vm1314, %v3061, 0
        %v3071 = vsel %vm1314, %v3062, 0
        %3073 = vmatprep.subr.mxu0 0.0
        %3074 = vmatpush1.msra.mxu0 %v3065
        %3075 = vmatprep.subr.mxu0 0.0
        %3076 = vmatpush1.msra.mxu0 0.0
        %3077 = vmatprep.subr.mxu0 0.0
        %3078 = vmatpush1.msra.mxu0 0.0
        %3079 = vmatprep.subr.mxu0 0.0
        %3080 = vmatpush1.msra.mxu0 0.0
        %3081 = vmatprep.subr.mxu0 0.0
        %3082 = vmatpush1.msra.mxu0 0.0
        %3083 = vmatprep.subr.mxu0 0.0
        %3084 = vmatpush1.msra.mxu0 0.0
        %3085 = vmatprep.subr.mxu0 0.0
        %3086 = vmatpush1.msra.mxu0 0.0
        %3087 = vmatprep.subr.mxu0 0.0
        %3088 = vmatpush1.msra.mxu0 0.0
        %3089 = vmatprep.subr.mxu0 0.0
        %3090 = vmatpush1.msra.mxu0 0.0
        %3091 = vmatprep.subr.mxu0 0.0
        %3092 = vmatpush1.msra.mxu0 0.0
        %3093 = vmatprep.subr.mxu0 0.0
        %3094 = vmatpush1.msra.mxu0 0.0
        %3095 = vmatprep.subr.mxu0 0.0
        %3096 = vmatpush1.msra.mxu0 0.0
        %3097 = vmatprep.subr.mxu0 0.0
        %3098 = vmatpush1.msra.mxu0 0.0
        %3099 = vmatprep.subr.mxu0 0.0
        %3100 = vmatpush1.msra.mxu0 0.0
        %3101 = vmatprep.subr.mxu0 0.0
        %3102 = vmatpush1.msra.mxu0 0.0
        %3103 = vmatprep.subr.mxu0 0.0
        %3104 = vmatpush1.msra.mxu0 0.0
        %3105 = vmatprep.subr.mxu0 0.0
        %3106 = vmatpush1.msra.mxu0 0.0
        %3107 = vmatprep.subr.mxu0 0.0
        %3108 = vmatpush1.msra.mxu0 0.0
        %3109 = vmatprep.subr.mxu0 0.0
        %3110 = vmatpush1.msra.mxu0 0.0
        %3111 = vmatprep.subr.mxu0 0.0
        %3112 = vmatpush1.msra.mxu0 0.0
        %3113 = vmatprep.subr.mxu0 0.0
        %3114 = vmatpush1.msra.mxu0 0.0
        %3115 = vmatprep.subr.mxu0 0.0
        %3116 = vmatpush1.msra.mxu0 0.0
        %3117 = vmatprep.subr.mxu0 0.0
        %3118 = vmatpush1.msra.mxu0 0.0
        %3119 = vmatprep.subr.mxu0 0.0
        %3120 = vmatpush1.msra.mxu0 0.0
        %3121 = vmatprep.subr.mxu0 0.0
        %3122 = vmatpush1.msra.mxu0 0.0
        %3123 = vmatprep.subr.mxu0 0.0
        %3124 = vmatpush1.msra.mxu0 0.0
        %3125 = vmatprep.subr.mxu0 0.0
        %3126 = vmatpush1.msra.mxu0 0.0
        %3127 = vmatprep.subr.mxu0 0.0
        %3128 = vmatpush1.msra.mxu0 0.0
        %3129 = vmatprep.subr.mxu0 0.0
        %3130 = vmatpush1.msra.mxu0 0.0
        %3131 = vmatprep.subr.mxu0 0.0
        %3132 = vmatpush1.msra.mxu0 0.0
        %3133 = vmatprep.subr.mxu0 0.0
        %3134 = vmatpush1.msra.mxu0 0.0
        %3135 = vmatprep.subr.mxu0 0.0
        %3136 = vmatpush1.msra.mxu0 0.0
        %3137 = vmatprep.mubr.f32.mxu0 0.0
        %3138 = vmatmul.mubr.f32.gmra.mrb[0].mxu0 %v3068
        %v3139 = vpop.f32.mrb[0].mxu0
        %v3140 = vadd.f32 0.0, %v3139
        %v3141 = vpop.f32.mrb[0].mxu0
        %3142 = vmatprep.mubr.f32.mxu0 0.0
        %3143 = vmatmul.mubr.f32.gmra.mrb[0].mxu0 %v3071
        %v3144 = vpop.f32.mrb[0].mxu0
        %v3145 = vadd.f32 0.0, %v3144
        %v3146 = vpop.f32.mrb[0].mxu0
        %3147 = vdwg.mxu0
        %v3149 = vsel %vm1314, %v3140, 0
        %v3152 = vsel %vm1314, %v3145, 0
        %3154 = vmatprep.subr.mxu0 0.0
        %3155 = vmatpush1.msra.mxu0 %v2494
        %3156 = vmatprep.subr.mxu0 0.0
        %3157 = vmatpush1.msra.mxu0 0.0
        %3158 = vmatprep.subr.mxu0 0.0
        %3159 = vmatpush1.msra.mxu0 0.0
        %3160 = vmatprep.subr.mxu0 0.0
        %3161 = vmatpush1.msra.mxu0 0.0
        %3162 = vmatprep.subr.mxu0 0.0
        %3163 = vmatpush1.msra.mxu0 0.0
        %3164 = vmatprep.subr.mxu0 0.0
        %3165 = vmatpush1.msra.mxu0 0.0
        %3166 = vmatprep.subr.mxu0 0.0
        %3167 = vmatpush1.msra.mxu0 0.0
        %3168 = vmatprep.subr.mxu0 0.0
        %3169 = vmatpush1.msra.mxu0 0.0
        %3170 = vmatprep.subr.mxu0 0.0
        %3171 = vmatpush1.msra.mxu0 0.0
        %3172 = vmatprep.subr.mxu0 0.0
        %3173 = vmatpush1.msra.mxu0 0.0
        %3174 = vmatprep.subr.mxu0 0.0
        %3175 = vmatpush1.msra.mxu0 0.0
        %3176 = vmatprep.subr.mxu0 0.0
        %3177 = vmatpush1.msra.mxu0 0.0
        %3178 = vmatprep.subr.mxu0 0.0
        %3179 = vmatpush1.msra.mxu0 0.0
        %3180 = vmatprep.subr.mxu0 0.0
        %3181 = vmatpush1.msra.mxu0 0.0
        %3182 = vmatprep.subr.mxu0 0.0
        %3183 = vmatpush1.msra.mxu0 0.0
        %3184 = vmatprep.subr.mxu0 0.0
        %3185 = vmatpush1.msra.mxu0 0.0
        %3186 = vmatprep.subr.mxu0 0.0
        %3187 = vmatpush1.msra.mxu0 0.0
        %3188 = vmatprep.subr.mxu0 0.0
        %3189 = vmatpush1.msra.mxu0 0.0
        %3190 = vmatprep.subr.mxu0 0.0
        %3191 = vmatpush1.msra.mxu0 0.0
        %3192 = vmatprep.subr.mxu0 0.0
        %3193 = vmatpush1.msra.mxu0 0.0
        %3194 = vmatprep.subr.mxu0 0.0
        %3195 = vmatpush1.msra.mxu0 0.0
        %3196 = vmatprep.subr.mxu0 0.0
        %3197 = vmatpush1.msra.mxu0 0.0
        %3198 = vmatprep.subr.mxu0 0.0
        %3199 = vmatpush1.msra.mxu0 0.0
        %3200 = vmatprep.subr.mxu0 0.0
        %3201 = vmatpush1.msra.mxu0 0.0
        %3202 = vmatprep.subr.mxu0 0.0
        %3203 = vmatpush1.msra.mxu0 0.0
        %3204 = vmatprep.subr.mxu0 0.0
        %3205 = vmatpush1.msra.mxu0 0.0
        %3206 = vmatprep.subr.mxu0 0.0
        %3207 = vmatpush1.msra.mxu0 0.0
        %3208 = vmatprep.subr.mxu0 0.0
        %3209 = vmatpush1.msra.mxu0 0.0
        %3210 = vmatprep.subr.mxu0 0.0
        %3211 = vmatpush1.msra.mxu0 0.0
        %3212 = vmatprep.subr.mxu0 0.0
        %3213 = vmatpush1.msra.mxu0 0.0
        %3214 = vmatprep.subr.mxu0 0.0
        %3215 = vmatpush1.msra.mxu0 0.0
        %3216 = vmatprep.subr.mxu0 0.0
        %3217 = vmatpush1.msra.mxu0 0.0
        %3218 = vmatprep.mubr.f32.mxu0 0.0
        %3219 = vmatmul.mubr.f32.gmra.mrb[0].mxu0 %v3149
        %v3220 = vpop.f32.mrb[0].mxu0
        %v3221 = vadd.f32 0.0, %v3220
        %v3222 = vpop.f32.mrb[0].mxu0
        %3223 = vmatprep.mubr.f32.mxu0 0.0
        %3224 = vmatmul.mubr.f32.gmra.mrb[0].mxu0 %v3152
        %v3225 = vpop.f32.mrb[0].mxu0
        %v3226 = vadd.f32 0.0, %v3225
        %v3227 = vpop.f32.mrb[0].mxu0
        %3228 = vdwg.mxu0
        %v3230 = vsel %vm1314, %v2946, 0
        %v3233 = vsel %vm1314, %v2951, 0
        %3235 = vmatprep.subr.mxu0 0.0
        %3236 = vmatpush1.msra.mxu0 %v2493
        %3237 = vmatprep.subr.mxu0 0.0
        %3238 = vmatpush1.msra.mxu0 0.0
        %3239 = vmatprep.subr.mxu0 0.0
        %3240 = vmatpush1.msra.mxu0 0.0
        %3241 = vmatprep.subr.mxu0 0.0
        %3242 = vmatpush1.msra.mxu0 0.0
        %3243 = vmatprep.subr.mxu0 0.0
        %3244 = vmatpush1.msra.mxu0 0.0
        %3245 = vmatprep.subr.mxu0 0.0
        %3246 = vmatpush1.msra.mxu0 0.0
        %3247 = vmatprep.subr.mxu0 0.0
        %3248 = vmatpush1.msra.mxu0 0.0
        %3249 = vmatprep.subr.mxu0 0.0
        %3250 = vmatpush1.msra.mxu0 0.0
        %3251 = vmatprep.subr.mxu0 0.0
        %3252 = vmatpush1.msra.mxu0 0.0
        %3253 = vmatprep.subr.mxu0 0.0
        %3254 = vmatpush1.msra.mxu0 0.0
        %3255 = vmatprep.subr.mxu0 0.0
        %3256 = vmatpush1.msra.mxu0 0.0
        %3257 = vmatprep.subr.mxu0 0.0
        %3258 = vmatpush1.msra.mxu0 0.0
        %3259 = vmatprep.subr.mxu0 0.0
        %3260 = vmatpush1.msra.mxu0 0.0
        %3261 = vmatprep.subr.mxu0 0.0
        %3262 = vmatpush1.msra.mxu0 0.0
        %3263 = vmatprep.subr.mxu0 0.0
        %3264 = vmatpush1.msra.mxu0 0.0
        %3265 = vmatprep.subr.mxu0 0.0
        %3266 = vmatpush1.msra.mxu0 0.0
        %3267 = vmatprep.subr.mxu0 0.0
        %3268 = vmatpush1.msra.mxu0 0.0
        %3269 = vmatprep.subr.mxu0 0.0
        %3270 = vmatpush1.msra.mxu0 0.0
        %3271 = vmatprep.subr.mxu0 0.0
        %3272 = vmatpush1.msra.mxu0 0.0
        %3273 = vmatprep.subr.mxu0 0.0
        %3274 = vmatpush1.msra.mxu0 0.0
        %3275 = vmatprep.subr.mxu0 0.0
        %3276 = vmatpush1.msra.mxu0 0.0
        %3277 = vmatprep.subr.mxu0 0.0
        %3278 = vmatpush1.msra.mxu0 0.0
        %3279 = vmatprep.subr.mxu0 0.0
        %3280 = vmatpush1.msra.mxu0 0.0
        %3281 = vmatprep.subr.mxu0 0.0
        %3282 = vmatpush1.msra.mxu0 0.0
        %3283 = vmatprep.subr.mxu0 0.0
        %3284 = vmatpush1.msra.mxu0 0.0
        %3285 = vmatprep.subr.mxu0 0.0
        %3286 = vmatpush1.msra.mxu0 0.0
        %3287 = vmatprep.subr.mxu0 0.0
        %3288 = vmatpush1.msra.mxu0 0.0
        %3289 = vmatprep.subr.mxu0 0.0
        %3290 = vmatpush1.msra.mxu0 0.0
        %3291 = vmatprep.subr.mxu0 0.0
        %3292 = vmatpush1.msra.mxu0 0.0
        %3293 = vmatprep.subr.mxu0 0.0
        %3294 = vmatpush1.msra.mxu0 0.0
        %3295 = vmatprep.subr.mxu0 0.0
        %3296 = vmatpush1.msra.mxu0 0.0
        %3297 = vmatprep.subr.mxu0 0.0
        %3298 = vmatpush1.msra.mxu0 0.0
        %3299 = vmatprep.mubr.f32.mxu0 0.0
        %3300 = vmatmul.mubr.f32.gmra.mrb[0].mxu0 %v3230
        %v3301 = vpop.f32.mrb[0].mxu0
        %v3302 = vadd.f32 %v3221, %v3301
        %v3303 = vpop.f32.mrb[0].mxu0
        %3304 = vmatprep.mubr.f32.mxu0 0.0
        %3305 = vmatmul.mubr.f32.gmra.mrb[0].mxu0 %v3233
        %v3306 = vpop.f32.mrb[0].mxu0
        %v3307 = vadd.f32 %v3226, %v3306
        %v3308 = vpop.f32.mrb[0].mxu0
        %3309 = vdwg.mxu0
        %3310 = vrot.lane.b32.xlu0 %v2765, 112
        %v3311 = vpop.permute.xlu0 %3310
        %3312 = vrot.lane.b32.xlu0 %v2766, 112
        %v3313 = vpop.permute.xlu0 %3312
        %3314 = vrot.lane.b32.xlu0 %v2674, 112
        %v3315 = vpop.permute.xlu0 %3314
        %v3316 = vsel %vm1314, %v3311, 0
        %v3318 = vsel %vm1314, %v3313, 0
        %v3320 = vsel %vm1314, %v3315, 0
        %3322 = vmatprep.subr.mxu0 0.0
        %3323 = vmatpush1.xpose.msra.mxu0 %v3320
        %3324 = vmatprep.subr.mxu0 0.0
        %3325 = vmatpush1.xpose.msra.mxu0 0.0
        %3326 = vmatprep.subr.mxu0 0.0
        %3327 = vmatpush1.xpose.msra.mxu0 0.0
        %3328 = vmatprep.subr.mxu0 0.0
        %3329 = vmatpush1.xpose.msra.mxu0 0.0
        %3330 = vmatprep.subr.mxu0 0.0
        %3331 = vmatpush1.xpose.msra.mxu0 0.0
        %3332 = vmatprep.subr.mxu0 0.0
        %3333 = vmatpush1.xpose.msra.mxu0 0.0
        %3334 = vmatprep.subr.mxu0 0.0
        %3335 = vmatpush1.xpose.msra.mxu0 0.0
        %3336 = vmatprep.subr.mxu0 0.0
        %3337 = vmatpush1.xpose.msra.mxu0 0.0
        %3338 = vmatprep.subr.mxu0 0.0
        %3339 = vmatpush1.xpose.msra.mxu0 0.0
        %3340 = vmatprep.subr.mxu0 0.0
        %3341 = vmatpush1.xpose.msra.mxu0 0.0
        %3342 = vmatprep.subr.mxu0 0.0
        %3343 = vmatpush1.xpose.msra.mxu0 0.0
        %3344 = vmatprep.subr.mxu0 0.0
        %3345 = vmatpush1.xpose.msra.mxu0 0.0
        %3346 = vmatprep.subr.mxu0 0.0
        %3347 = vmatpush1.xpose.msra.mxu0 0.0
        %3348 = vmatprep.subr.mxu0 0.0
        %3349 = vmatpush1.xpose.msra.mxu0 0.0
        %3350 = vmatprep.subr.mxu0 0.0
        %3351 = vmatpush1.xpose.msra.mxu0 0.0
        %3352 = vmatprep.subr.mxu0 0.0
        %3353 = vmatpush1.xpose.msra.mxu0 0.0
        %3354 = vmatprep.subr.mxu0 0.0
        %3355 = vmatpush1.xpose.msra.mxu0 0.0
        %3356 = vmatprep.subr.mxu0 0.0
        %3357 = vmatpush1.xpose.msra.mxu0 0.0
        %3358 = vmatprep.subr.mxu0 0.0
        %3359 = vmatpush1.xpose.msra.mxu0 0.0
        %3360 = vmatprep.subr.mxu0 0.0
        %3361 = vmatpush1.xpose.msra.mxu0 0.0
        %3362 = vmatprep.subr.mxu0 0.0
        %3363 = vmatpush1.xpose.msra.mxu0 0.0
        %3364 = vmatprep.subr.mxu0 0.0
        %3365 = vmatpush1.xpose.msra.mxu0 0.0
        %3366 = vmatprep.subr.mxu0 0.0
        %3367 = vmatpush1.xpose.msra.mxu0 0.0
        %3368 = vmatprep.subr.mxu0 0.0
        %3369 = vmatpush1.xpose.msra.mxu0 0.0
        %3370 = vmatprep.subr.mxu0 0.0
        %3371 = vmatpush1.xpose.msra.mxu0 0.0
        %3372 = vmatprep.subr.mxu0 0.0
        %3373 = vmatpush1.xpose.msra.mxu0 0.0
        %3374 = vmatprep.subr.mxu0 0.0
        %3375 = vmatpush1.xpose.msra.mxu0 0.0
        %3376 = vmatprep.subr.mxu0 0.0
        %3377 = vmatpush1.xpose.msra.mxu0 0.0
        %3378 = vmatprep.subr.mxu0 0.0
        %3379 = vmatpush1.xpose.msra.mxu0 0.0
        %3380 = vmatprep.subr.mxu0 0.0
        %3381 = vmatpush1.xpose.msra.mxu0 0.0
        %3382 = vmatprep.subr.mxu0 0.0
        %3383 = vmatpush1.xpose.msra.mxu0 0.0
        %3384 = vmatprep.subr.mxu0 0.0
        %3385 = vmatpush1.xpose.msra.mxu0 0.0
        %3386 = vmatprep.mubr.f32.mxu0 0.0
        %3387 = vmatmul.mubr.f32.gmra.mrb[0].mxu0 %v3316
        %v3388 = vpop.f32.mrb[0].mxu0
        %v3389 = vadd.f32 0.0, %v3388
        %v3390 = vpop.f32.mrb[0].mxu0
        %3391 = vmatprep.mubr.f32.mxu0 0.0
        %3392 = vmatmul.mubr.f32.gmra.mrb[0].mxu0 %v3318
        %v3393 = vpop.f32.mrb[0].mxu0
        %v3394 = vadd.f32 0.0, %v3393
        %v3395 = vpop.f32.mrb[0].mxu0
        %3396 = vdwg.mxu0
        %v3397 = vsel %vm1314, %v3389, -inf
        %3398 = vmax.xlane.f32.xlu0 %v3397
        %v3399 = vpop.xlane.xlu0 %3398
        %v3400 = vsel %vm1314, %v3394, -inf
        %3401 = vmax.xlane.f32.xlu0 %v3400
        %v3402 = vpop.xlane.xlu0 %3401
        %v3403 = vsub.f32 %v3389, %v3399
        %v3404 = vsub.f32 %v3394, %v3402
        %v3405 = vmul.f32 %v3403, 1.442695
        %v3406 = vpow.pop %v3405
        %v3407 = vmul.f32 %v3404, 1.442695
        %v3408 = vpow.pop %v3407
        %v3409 = vsel %vm1314, %v3406, 0.0
        %3410 = vadd.xlane.f32.xlu0 %v3409
        %v3411 = vpop.xlane.xlu0 %3410
        %v3412 = vsel %vm1314, %v3408, 0.0
        %3413 = vadd.xlane.f32.xlu0 %v3412
        %v3414 = vpop.xlane.xlu0 %3413
        %v3415 = vrcp.pop %v3411
        %v3416 = vrcp.pop %v3414
        %v3417 = vmul.f32 %v3406, %v3415
        %v3418 = vmul.f32 %v3408, %v3416
        %3419 = vrot.lane.b32.xlu0 %v2762, 112
        %v3420 = vpop.permute.xlu0 %3419
        %v3423 = vsel %vm1314, %v3417, 0
        %v3426 = vsel %vm1314, %v3418, 0
        %3428 = vmatprep.subr.mxu0 0.0
        %3429 = vmatpush1.msra.mxu0 %v3420
        %3430 = vmatprep.subr.mxu0 0.0
        %3431 = vmatpush1.msra.mxu0 0.0
        %3432 = vmatprep.subr.mxu0 0.0
        %3433 = vmatpush1.msra.mxu0 0.0
        %3434 = vmatprep.subr.mxu0 0.0
        %3435 = vmatpush1.msra.mxu0 0.0
        %3436 = vmatprep.subr.mxu0 0.0
        %3437 = vmatpush1.msra.mxu0 0.0
        %3438 = vmatprep.subr.mxu0 0.0
        %3439 = vmatpush1.msra.mxu0 0.0
        %3440 = vmatprep.subr.mxu0 0.0
        %3441 = vmatpush1.msra.mxu0 0.0
        %3442 = vmatprep.subr.mxu0 0.0
        %3443 = vmatpush1.msra.mxu0 0.0
        %3444 = vmatprep.subr.mxu0 0.0
        %3445 = vmatpush1.msra.mxu0 0.0
        %3446 = vmatprep.subr.mxu0 0.0
        %3447 = vmatpush1.msra.mxu0 0.0
        %3448 = vmatprep.subr.mxu0 0.0
        %3449 = vmatpush1.msra.mxu0 0.0
        %3450 = vmatprep.subr.mxu0 0.0
        %3451 = vmatpush1.msra.mxu0 0.0
        %3452 = vmatprep.subr.mxu0 0.0
        %3453 = vmatpush1.msra.mxu0 0.0
        %3454 = vmatprep.subr.mxu0 0.0
        %3455 = vmatpush1.msra.mxu0 0.0
        %3456 = vmatprep.subr.mxu0 0.0
        %3457 = vmatpush1.msra.mxu0 0.0
        %3458 = vmatprep.subr.mxu0 0.0
        %3459 = vmatpush1.msra.mxu0 0.0
        %3460 = vmatprep.subr.mxu0 0.0
        %3461 = vmatpush1.msra.mxu0 0.0
        %3462 = vmatprep.subr.mxu0 0.0
        %3463 = vmatpush1.msra.mxu0 0.0
        %3464 = vmatprep.subr.mxu0 0.0
        %3465 = vmatpush1.msra.mxu0 0.0
        %3466 = vmatprep.subr.mxu0 0.0
        %3467 = vmatpush1.msra.mxu0 0.0
        %3468 = vmatprep.subr.mxu0 0.0
        %3469 = vmatpush1.msra.mxu0 0.0
        %3470 = vmatprep.subr.mxu0 0.0
        %3471 = vmatpush1.msra.mxu0 0.0
        %3472 = vmatprep.subr.mxu0 0.0
        %3473 = vmatpush1.msra.mxu0 0.0
        %3474 = vmatprep.subr.mxu0 0.0
        %3475 = vmatpush1.msra.mxu0 0.0
        %3476 = vmatprep.subr.mxu0 0.0
        %3477 = vmatpush1.msra.mxu0 0.0
        %3478 = vmatprep.subr.mxu0 0.0
        %3479 = vmatpush1.msra.mxu0 0.0
        %3480 = vmatprep.subr.mxu0 0.0
        %3481 = vmatpush1.msra.mxu0 0.0
        %3482 = vmatprep.subr.mxu0 0.0
        %3483 = vmatpush1.msra.mxu0 0.0
        %3484 = vmatprep.subr.mxu0 0.0
        %3485 = vmatpush1.msra.mxu0 0.0
        %3486 = vmatprep.subr.mxu0 0.0
        %3487 = vmatpush1.msra.mxu0 0.0
        %3488 = vmatprep.subr.mxu0 0.0
        %3489 = vmatpush1.msra.mxu0 0.0
        %3490 = vmatprep.subr.mxu0 0.0
        %3491 = vmatpush1.msra.mxu0 0.0
        %3492 = vmatprep.mubr.f32.mxu0 0.0
        %3493 = vmatmul.mubr.f32.gmra.mrb[0].mxu0 %v3423
        %v3494 = vpop.f32.mrb[0].mxu0
        %v3495 = vadd.f32 0.0, %v3494
        %v3496 = vpop.f32.mrb[0].mxu0
        %3497 = vmatprep.mubr.f32.mxu0 0.0
        %3498 = vmatmul.mubr.f32.gmra.mrb[0].mxu0 %v3426
        %v3499 = vpop.f32.mrb[0].mxu0
        %v3500 = vadd.f32 0.0, %v3499
        %v3501 = vpop.f32.mrb[0].mxu0
        %3502 = vdwg.mxu0
        %v3504 = vsel %vm1314, %v3495, 0
        %v3507 = vsel %vm1314, %v3500, 0
        %3509 = vmatprep.subr.mxu0 0.0
        %3510 = vmatpush1.msra.mxu0 %v2495
        %3511 = vmatprep.subr.mxu0 0.0
        %3512 = vmatpush1.msra.mxu0 0.0
        %3513 = vmatprep.subr.mxu0 0.0
        %3514 = vmatpush1.msra.mxu0 0.0
        %3515 = vmatprep.subr.mxu0 0.0
        %3516 = vmatpush1.msra.mxu0 0.0
        %3517 = vmatprep.subr.mxu0 0.0
        %3518 = vmatpush1.msra.mxu0 0.0
        %3519 = vmatprep.subr.mxu0 0.0
        %3520 = vmatpush1.msra.mxu0 0.0
        %3521 = vmatprep.subr.mxu0 0.0
        %3522 = vmatpush1.msra.mxu0 0.0
        %3523 = vmatprep.subr.mxu0 0.0
        %3524 = vmatpush1.msra.mxu0 0.0
        %3525 = vmatprep.subr.mxu0 0.0
        %3526 = vmatpush1.msra.mxu0 0.0
        %3527 = vmatprep.subr.mxu0 0.0
        %3528 = vmatpush1.msra.mxu0 0.0
        %3529 = vmatprep.subr.mxu0 0.0
        %3530 = vmatpush1.msra.mxu0 0.0
        %3531 = vmatprep.subr.mxu0 0.0
        %3532 = vmatpush1.msra.mxu0 0.0
        %3533 = vmatprep.subr.mxu0 0.0
        %3534 = vmatpush1.msra.mxu0 0.0
        %3535 = vmatprep.subr.mxu0 0.0
        %3536 = vmatpush1.msra.mxu0 0.0
        %3537 = vmatprep.subr.mxu0 0.0
        %3538 = vmatpush1.msra.mxu0 0.0
        %3539 = vmatprep.subr.mxu0 0.0
        %3540 = vmatpush1.msra.mxu0 0.0
        %3541 = vmatprep.subr.mxu0 0.0
        %3542 = vmatpush1.msra.mxu0 0.0
        %3543 = vmatprep.subr.mxu0 0.0
        %3544 = vmatpush1.msra.mxu0 0.0
        %3545 = vmatprep.subr.mxu0 0.0
        %3546 = vmatpush1.msra.mxu0 0.0
        %3547 = vmatprep.subr.mxu0 0.0
        %3548 = vmatpush1.msra.mxu0 0.0
        %3549 = vmatprep.subr.mxu0 0.0
        %3550 = vmatpush1.msra.mxu0 0.0
        %3551 = vmatprep.subr.mxu0 0.0
        %3552 = vmatpush1.msra.mxu0 0.0
        %3553 = vmatprep.subr.mxu0 0.0
        %3554 = vmatpush1.msra.mxu0 0.0
        %3555 = vmatprep.subr.mxu0 0.0
        %3556 = vmatpush1.msra.mxu0 0.0
        %3557 = vmatprep.subr.mxu0 0.0
        %3558 = vmatpush1.msra.mxu0 0.0
        %3559 = vmatprep.subr.mxu0 0.0
        %3560 = vmatpush1.msra.mxu0 0.0
        %3561 = vmatprep.subr.mxu0 0.0
        %3562 = vmatpush1.msra.mxu0 0.0
        %3563 = vmatprep.subr.mxu0 0.0
        %3564 = vmatpush1.msra.mxu0 0.0
        %3565 = vmatprep.subr.mxu0 0.0
        %3566 = vmatpush1.msra.mxu0 0.0
        %3567 = vmatprep.subr.mxu0 0.0
        %3568 = vmatpush1.msra.mxu0 0.0
        %3569 = vmatprep.subr.mxu0 0.0
        %3570 = vmatpush1.msra.mxu0 0.0
        %3571 = vmatprep.subr.mxu0 0.0
        %3572 = vmatpush1.msra.mxu0 0.0
        %3573 = vmatprep.mubr.f32.mxu0 0.0
        %3574 = vmatmul.mubr.f32.gmra.mrb[0].mxu0 %v3504
        %v3575 = vpop.f32.mrb[0].mxu0
        %v3576 = vadd.f32 0.0, %v3575
        %v3577 = vpop.f32.mrb[0].mxu0
        %3578 = vmatprep.mubr.f32.mxu0 0.0
        %3579 = vmatmul.mubr.f32.gmra.mrb[0].mxu0 %v3507
        %v3580 = vpop.f32.mrb[0].mxu0
        %v3581 = vadd.f32 0.0, %v3580
        %v3582 = vpop.f32.mrb[0].mxu0
        %3583 = vdwg.mxu0
        %v3584 = vadd.f32 %v3302, %v3576
        %v3585 = vadd.f32 %v3307, %v3581
        %3586 = vrot.lane.b32.xlu0 %v2765, 104
        %v3587 = vpop.permute.xlu0 %3586
        %3588 = vrot.lane.b32.xlu0 %v2766, 104
        %v3589 = vpop.permute.xlu0 %3588
        %3590 = vrot.lane.b32.xlu0 %v2674, 104
        %v3591 = vpop.permute.xlu0 %3590
        %v3592 = vsel %vm1314, %v3587, 0
        %v3594 = vsel %vm1314, %v3589, 0
        %v3596 = vsel %vm1314, %v3591, 0
        %3598 = vmatprep.subr.mxu0 0.0
        %3599 = vmatpush1.xpose.msra.mxu0 %v3596
        %3600 = vmatprep.subr.mxu0 0.0
        %3601 = vmatpush1.xpose.msra.mxu0 0.0
        %3602 = vmatprep.subr.mxu0 0.0
        %3603 = vmatpush1.xpose.msra.mxu0 0.0
        %3604 = vmatprep.subr.mxu0 0.0
        %3605 = vmatpush1.xpose.msra.mxu0 0.0
        %3606 = vmatprep.subr.mxu0 0.0
        %3607 = vmatpush1.xpose.msra.mxu0 0.0
        %3608 = vmatprep.subr.mxu0 0.0
        %3609 = vmatpush1.xpose.msra.mxu0 0.0
        %3610 = vmatprep.subr.mxu0 0.0
        %3611 = vmatpush1.xpose.msra.mxu0 0.0
        %3612 = vmatprep.subr.mxu0 0.0
        %3613 = vmatpush1.xpose.msra.mxu0 0.0
        %3614 = vmatprep.subr.mxu0 0.0
        %3615 = vmatpush1.xpose.msra.mxu0 0.0
        %3616 = vmatprep.subr.mxu0 0.0
        %3617 = vmatpush1.xpose.msra.mxu0 0.0
        %3618 = vmatprep.subr.mxu0 0.0
        %3619 = vmatpush1.xpose.msra.mxu0 0.0
        %3620 = vmatprep.subr.mxu0 0.0
        %3621 = vmatpush1.xpose.msra.mxu0 0.0
        %3622 = vmatprep.subr.mxu0 0.0
        %3623 = vmatpush1.xpose.msra.mxu0 0.0
        %3624 = vmatprep.subr.mxu0 0.0
        %3625 = vmatpush1.xpose.msra.mxu0 0.0
        %3626 = vmatprep.subr.mxu0 0.0
        %3627 = vmatpush1.xpose.msra.mxu0 0.0
        %3628 = vmatprep.subr.mxu0 0.0
        %3629 = vmatpush1.xpose.msra.mxu0 0.0
        %3630 = vmatprep.subr.mxu0 0.0
        %3631 = vmatpush1.xpose.msra.mxu0 0.0
        %3632 = vmatprep.subr.mxu0 0.0
        %3633 = vmatpush1.xpose.msra.mxu0 0.0
        %3634 = vmatprep.subr.mxu0 0.0
        %3635 = vmatpush1.xpose.msra.mxu0 0.0
        %3636 = vmatprep.subr.mxu0 0.0
        %3637 = vmatpush1.xpose.msra.mxu0 0.0
        %3638 = vmatprep.subr.mxu0 0.0
        %3639 = vmatpush1.xpose.msra.mxu0 0.0
        %3640 = vmatprep.subr.mxu0 0.0
        %3641 = vmatpush1.xpose.msra.mxu0 0.0
        %3642 = vmatprep.subr.mxu0 0.0
        %3643 = vmatpush1.xpose.msra.mxu0 0.0
        %3644 = vmatprep.subr.mxu0 0.0
        %3645 = vmatpush1.xpose.msra.mxu0 0.0
        %3646 = vmatprep.subr.mxu0 0.0
        %3647 = vmatpush1.xpose.msra.mxu0 0.0
        %3648 = vmatprep.subr.mxu0 0.0
        %3649 = vmatpush1.xpose.msra.mxu0 0.0
        %3650 = vmatprep.subr.mxu0 0.0
        %3651 = vmatpush1.xpose.msra.mxu0 0.0
        %3652 = vmatprep.subr.mxu0 0.0
        %3653 = vmatpush1.xpose.msra.mxu0 0.0
        %3654 = vmatprep.subr.mxu0 0.0
        %3655 = vmatpush1.xpose.msra.mxu0 0.0
        %3656 = vmatprep.subr.mxu0 0.0
        %3657 = vmatpush1.xpose.msra.mxu0 0.0
        %3658 = vmatprep.subr.mxu0 0.0
        %3659 = vmatpush1.xpose.msra.mxu0 0.0
        %3660 = vmatprep.subr.mxu0 0.0
        %3661 = vmatpush1.xpose.msra.mxu0 0.0
        %3662 = vmatprep.mubr.f32.mxu0 0.0
        %3663 = vmatmul.mubr.f32.gmra.mrb[0].mxu0 %v3592
        %v3664 = vpop.f32.mrb[0].mxu0
        %v3665 = vadd.f32 0.0, %v3664
        %v3666 = vpop.f32.mrb[0].mxu0
        %3667 = vmatprep.mubr.f32.mxu0 0.0
        %3668 = vmatmul.mubr.f32.gmra.mrb[0].mxu0 %v3594
        %v3669 = vpop.f32.mrb[0].mxu0
        %v3670 = vadd.f32 0.0, %v3669
        %v3671 = vpop.f32.mrb[0].mxu0
        %3672 = vdwg.mxu0
        %v3673 = vsel %vm1314, %v3665, -inf
        %3674 = vmax.xlane.f32.xlu0 %v3673
        %v3675 = vpop.xlane.xlu0 %3674
        %v3676 = vsel %vm1314, %v3670, -inf
        %3677 = vmax.xlane.f32.xlu0 %v3676
        %v3678 = vpop.xlane.xlu0 %3677
        %v3679 = vsub.f32 %v3665, %v3675
        %v3680 = vsub.f32 %v3670, %v3678
        %v3681 = vmul.f32 %v3679, 1.442695
        %v3682 = vpow.pop %v3681
        %v3683 = vmul.f32 %v3680, 1.442695
        %v3684 = vpow.pop %v3683
        %v3685 = vsel %vm1314, %v3682, 0.0
        %3686 = vadd.xlane.f32.xlu0 %v3685
        %v3687 = vpop.xlane.xlu0 %3686
        %v3688 = vsel %vm1314, %v3684, 0.0
        %3689 = vadd.xlane.f32.xlu0 %v3688
        %v3690 = vpop.xlane.xlu0 %3689
        %v3691 = vrcp.pop %v3687
        %v3692 = vrcp.pop %v3690
        %v3693 = vmul.f32 %v3682, %v3691
        %v3694 = vmul.f32 %v3684, %v3692
        %3695 = vrot.lane.b32.xlu0 %v2762, 104
        %v3696 = vpop.permute.xlu0 %3695
        %v3699 = vsel %vm1314, %v3693, 0
        %v3702 = vsel %vm1314, %v3694, 0
        %3704 = vmatprep.subr.mxu0 0.0
        %3705 = vmatpush1.msra.mxu0 %v3696
        %3706 = vmatprep.subr.mxu0 0.0
        %3707 = vmatpush1.msra.mxu0 0.0
        %3708 = vmatprep.subr.mxu0 0.0
        %3709 = vmatpush1.msra.mxu0 0.0
        %3710 = vmatprep.subr.mxu0 0.0
        %3711 = vmatpush1.msra.mxu0 0.0
        %3712 = vmatprep.subr.mxu0 0.0
        %3713 = vmatpush1.msra.mxu0 0.0
        %3714 = vmatprep.subr.mxu0 0.0
        %3715 = vmatpush1.msra.mxu0 0.0
        %3716 = vmatprep.subr.mxu0 0.0
        %3717 = vmatpush1.msra.mxu0 0.0
        %3718 = vmatprep.subr.mxu0 0.0
        %3719 = vmatpush1.msra.mxu0 0.0
        %3720 = vmatprep.subr.mxu0 0.0
        %3721 = vmatpush1.msra.mxu0 0.0
        %3722 = vmatprep.subr.mxu0 0.0
        %3723 = vmatpush1.msra.mxu0 0.0
        %3724 = vmatprep.subr.mxu0 0.0
        %3725 = vmatpush1.msra.mxu0 0.0
        %3726 = vmatprep.subr.mxu0 0.0
        %3727 = vmatpush1.msra.mxu0 0.0
        %3728 = vmatprep.subr.mxu0 0.0
        %3729 = vmatpush1.msra.mxu0 0.0
        %3730 = vmatprep.subr.mxu0 0.0
        %3731 = vmatpush1.msra.mxu0 0.0
        %3732 = vmatprep.subr.mxu0 0.0
        %3733 = vmatpush1.msra.mxu0 0.0
        %3734 = vmatprep.subr.mxu0 0.0
        %3735 = vmatpush1.msra.mxu0 0.0
        %3736 = vmatprep.subr.mxu0 0.0
        %3737 = vmatpush1.msra.mxu0 0.0
        %3738 = vmatprep.subr.mxu0 0.0
        %3739 = vmatpush1.msra.mxu0 0.0
        %3740 = vmatprep.subr.mxu0 0.0
        %3741 = vmatpush1.msra.mxu0 0.0
        %3742 = vmatprep.subr.mxu0 0.0
        %3743 = vmatpush1.msra.mxu0 0.0
        %3744 = vmatprep.subr.mxu0 0.0
        %3745 = vmatpush1.msra.mxu0 0.0
        %3746 = vmatprep.subr.mxu0 0.0
        %3747 = vmatpush1.msra.mxu0 0.0
        %3748 = vmatprep.subr.mxu0 0.0
        %3749 = vmatpush1.msra.mxu0 0.0
        %3750 = vmatprep.subr.mxu0 0.0
        %3751 = vmatpush1.msra.mxu0 0.0
        %3752 = vmatprep.subr.mxu0 0.0
        %3753 = vmatpush1.msra.mxu0 0.0
        %3754 = vmatprep.subr.mxu0 0.0
        %3755 = vmatpush1.msra.mxu0 0.0
        %3756 = vmatprep.subr.mxu0 0.0
        %3757 = vmatpush1.msra.mxu0 0.0
        %3758 = vmatprep.subr.mxu0 0.0
        %3759 = vmatpush1.msra.mxu0 0.0
        %3760 = vmatprep.subr.mxu0 0.0
        %3761 = vmatpush1.msra.mxu0 0.0
        %3762 = vmatprep.subr.mxu0 0.0
        %3763 = vmatpush1.msra.mxu0 0.0
        %3764 = vmatprep.subr.mxu0 0.0
        %3765 = vmatpush1.msra.mxu0 0.0
        %3766 = vmatprep.subr.mxu0 0.0
        %3767 = vmatpush1.msra.mxu0 0.0
        %3768 = vmatprep.mubr.f32.mxu0 0.0
        %3769 = vmatmul.mubr.f32.gmra.mrb[0].mxu0 %v3699
        %v3770 = vpop.f32.mrb[0].mxu0
        %v3771 = vadd.f32 0.0, %v3770
        %v3772 = vpop.f32.mrb[0].mxu0
        %3773 = vmatprep.mubr.f32.mxu0 0.0
        %3774 = vmatmul.mubr.f32.gmra.mrb[0].mxu0 %v3702
        %v3775 = vpop.f32.mrb[0].mxu0
        %v3776 = vadd.f32 0.0, %v3775
        %v3777 = vpop.f32.mrb[0].mxu0
        %3778 = vdwg.mxu0
        %v3780 = vsel %vm1314, %v3771, 0
        %v3783 = vsel %vm1314, %v3776, 0
        %3785 = vmatprep.subr.mxu0 0.0
        %3786 = vmatpush1.msra.mxu0 %v2496
        %3787 = vmatprep.subr.mxu0 0.0
        %3788 = vmatpush1.msra.mxu0 0.0
        %3789 = vmatprep.subr.mxu0 0.0
        %3790 = vmatpush1.msra.mxu0 0.0
        %3791 = vmatprep.subr.mxu0 0.0
        %3792 = vmatpush1.msra.mxu0 0.0
        %3793 = vmatprep.subr.mxu0 0.0
        %3794 = vmatpush1.msra.mxu0 0.0
        %3795 = vmatprep.subr.mxu0 0.0
        %3796 = vmatpush1.msra.mxu0 0.0
        %3797 = vmatprep.subr.mxu0 0.0
        %3798 = vmatpush1.msra.mxu0 0.0
        %3799 = vmatprep.subr.mxu0 0.0
        %3800 = vmatpush1.msra.mxu0 0.0
        %3801 = vmatprep.subr.mxu0 0.0
        %3802 = vmatpush1.msra.mxu0 0.0
        %3803 = vmatprep.subr.mxu0 0.0
        %3804 = vmatpush1.msra.mxu0 0.0
        %3805 = vmatprep.subr.mxu0 0.0
        %3806 = vmatpush1.msra.mxu0 0.0
        %3807 = vmatprep.subr.mxu0 0.0
        %3808 = vmatpush1.msra.mxu0 0.0
        %3809 = vmatprep.subr.mxu0 0.0
        %3810 = vmatpush1.msra.mxu0 0.0
        %3811 = vmatprep.subr.mxu0 0.0
        %3812 = vmatpush1.msra.mxu0 0.0
        %3813 = vmatprep.subr.mxu0 0.0
        %3814 = vmatpush1.msra.mxu0 0.0
        %3815 = vmatprep.subr.mxu0 0.0
        %3816 = vmatpush1.msra.mxu0 0.0
        %3817 = vmatprep.subr.mxu0 0.0
        %3818 = vmatpush1.msra.mxu0 0.0
        %3819 = vmatprep.subr.mxu0 0.0
        %3820 = vmatpush1.msra.mxu0 0.0
        %3821 = vmatprep.subr.mxu0 0.0
        %3822 = vmatpush1.msra.mxu0 0.0
        %3823 = vmatprep.subr.mxu0 0.0
        %3824 = vmatpush1.msra.mxu0 0.0
        %3825 = vmatprep.subr.mxu0 0.0
        %3826 = vmatpush1.msra.mxu0 0.0
        %3827 = vmatprep.subr.mxu0 0.0
        %3828 = vmatpush1.msra.mxu0 0.0
        %3829 = vmatprep.subr.mxu0 0.0
        %3830 = vmatpush1.msra.mxu0 0.0
        %3831 = vmatprep.subr.mxu0 0.0
        %3832 = vmatpush1.msra.mxu0 0.0
        %3833 = vmatprep.subr.mxu0 0.0
        %3834 = vmatpush1.msra.mxu0 0.0
        %3835 = vmatprep.subr.mxu0 0.0
        %3836 = vmatpush1.msra.mxu0 0.0
        %3837 = vmatprep.subr.mxu0 0.0
        %3838 = vmatpush1.msra.mxu0 0.0
        %3839 = vmatprep.subr.mxu0 0.0
        %3840 = vmatpush1.msra.mxu0 0.0
        %3841 = vmatprep.subr.mxu0 0.0
        %3842 = vmatpush1.msra.mxu0 0.0
        %3843 = vmatprep.subr.mxu0 0.0
        %3844 = vmatpush1.msra.mxu0 0.0
        %3845 = vmatprep.subr.mxu0 0.0
        %3846 = vmatpush1.msra.mxu0 0.0
        %3847 = vmatprep.subr.mxu0 0.0
        %3848 = vmatpush1.msra.mxu0 0.0
        %3849 = vmatprep.mubr.f32.mxu0 0.0
        %3850 = vmatmul.mubr.f32.gmra.mrb[0].mxu0 %v3780
        %v3851 = vpop.f32.mrb[0].mxu0
        %v3852 = vadd.f32 0.0, %v3851
        %v3853 = vpop.f32.mrb[0].mxu0
        %3854 = vmatprep.mubr.f32.mxu0 0.0
        %3855 = vmatmul.mubr.f32.gmra.mrb[0].mxu0 %v3783
        %v3856 = vpop.f32.mrb[0].mxu0
        %v3857 = vadd.f32 0.0, %v3856
        %v3858 = vpop.f32.mrb[0].mxu0
        %3859 = vdwg.mxu0
        %v3860 = vadd.f32 %v3584, %v3852
        %v3861 = vadd.f32 %v3585, %v3857
        %v3863 = vlaneseq
        %v3864 = vshrl.u32 %v3863, 7
        %v3865 = vsub.s32 0, %v3864
        %v3866 = vrot.slane %v2497, %v3865
        %v3868 = vadd.f32 %v3860, %v3866
        %v3869 = vadd.f32 %v3861, %v3866
        %v3870 = vld [vmem:[%s33] sm:$0xff]
        %v3871 = vld [vmem:[%s33 + $0x8] sm:$0xff]
        %v3872 = vld [vmem:[%s33 + $0x10] sm:$0xff]
        %v3873 = vld [vmem:[%s33 + $0x18] sm:$0xff]
        %v3874 = vld [vmem:[%s35] sm:$0x1]
        %v3876 = vlaneseq
        %v3877 = vshrl.u32 %v3876, 7
        %v3878 = vsub.s32 0, %v3877
        %v3879 = vrot.slane %v3874, %v3878
        %3881 = vmatprep.subr.mxu0 0.0
        %3882 = vmatpush1.msra.mxu0 %v3870
        %3883 = vmatprep.subr.mxu0 0.0
        %3884 = vmatpush1.msra.mxu0 %v3871
        %3885 = vmatprep.subr.mxu0 0.0
        %3886 = vmatpush1.msra.mxu0 %v3872
        %3887 = vmatprep.subr.mxu0 0.0
        %3888 = vmatpush1.msra.mxu0 %v3873
        %3889 = vmatprep.subr.mxu0 0.0
        %3890 = vmatpush1.msra.mxu0 0.0
        %3891 = vmatprep.subr.mxu0 0.0
        %3892 = vmatpush1.msra.mxu0 0.0
        %3893 = vmatprep.subr.mxu0 0.0
        %3894 = vmatpush1.msra.mxu0 0.0
        %3895 = vmatprep.subr.mxu0 0.0
        %3896 = vmatpush1.msra.mxu0 0.0
        %3897 = vmatprep.subr.mxu0 0.0
        %3898 = vmatpush1.msra.mxu0 0.0
        %3899 = vmatprep.subr.mxu0 0.0
        %3900 = vmatpush1.msra.mxu0 0.0
        %3901 = vmatprep.subr.mxu0 0.0
        %3902 = vmatpush1.msra.mxu0 0.0
        %3903 = vmatprep.subr.mxu0 0.0
        %3904 = vmatpush1.msra.mxu0 0.0
        %3905 = vmatprep.subr.mxu0 0.0
        %3906 = vmatpush1.msra.mxu0 0.0
        %3907 = vmatprep.subr.mxu0 0.0
        %3908 = vmatpush1.msra.mxu0 0.0
        %3909 = vmatprep.subr.mxu0 0.0
        %3910 = vmatpush1.msra.mxu0 0.0
        %3911 = vmatprep.subr.mxu0 0.0
        %3912 = vmatpush1.msra.mxu0 0.0
        %3913 = vmatprep.subr.mxu0 0.0
        %3914 = vmatpush1.msra.mxu0 0.0
        %3915 = vmatprep.subr.mxu0 0.0
        %3916 = vmatpush1.msra.mxu0 0.0
        %3917 = vmatprep.subr.mxu0 0.0
        %3918 = vmatpush1.msra.mxu0 0.0
        %3919 = vmatprep.subr.mxu0 0.0
        %3920 = vmatpush1.msra.mxu0 0.0
        %3921 = vmatprep.subr.mxu0 0.0
        %3922 = vmatpush1.msra.mxu0 0.0
        %3923 = vmatprep.subr.mxu0 0.0
        %3924 = vmatpush1.msra.mxu0 0.0
        %3925 = vmatprep.subr.mxu0 0.0
        %3926 = vmatpush1.msra.mxu0 0.0
        %3927 = vmatprep.subr.mxu0 0.0
        %3928 = vmatpush1.msra.mxu0 0.0
        %3929 = vmatprep.subr.mxu0 0.0
        %3930 = vmatpush1.msra.mxu0 0.0
        %3931 = vmatprep.subr.mxu0 0.0
        %3932 = vmatpush1.msra.mxu0 0.0
        %3933 = vmatprep.subr.mxu0 0.0
        %3934 = vmatpush1.msra.mxu0 0.0
        %3935 = vmatprep.subr.mxu0 0.0
        %3936 = vmatpush1.msra.mxu0 0.0
        %3937 = vmatprep.subr.mxu0 0.0
        %3938 = vmatpush1.msra.mxu0 0.0
        %3939 = vmatprep.subr.mxu0 0.0
        %3940 = vmatpush1.msra.mxu0 0.0
        %3941 = vmatprep.subr.mxu0 0.0
        %3942 = vmatpush1.msra.mxu0 0.0
        %3943 = vmatprep.subr.mxu0 0.0
        %3944 = vmatpush1.msra.mxu0 0.0
        %3945 = vmatprep.mubr.f32.mxu0 0.0
        %3946 = vmatmul.mubr.f32.gmra.mrb[0].mxu0 %v2693
        %v3947 = vpop.f32.mrb[0].mxu0
        %v3948 = vadd.f32 %v3879, %v3947
        %v3949 = vpop.f32.mrb[0].mxu0
        %3950 = vdwg.mxu0
        %v3951 = vld [vmem:[%s37] sm:$0xff]
        %v3952 = vld [vmem:[%s37 + $0x8] sm:$0xff]
        %v3953 = vld [vmem:[%s37 + $0x10] sm:$0xff]
        %v3954 = vld [vmem:[%s37 + $0x18] sm:$0xff]
        %v3955 = vld [vmem:[%s39] sm:$0x1]
        %v3957 = vlaneseq
        %v3958 = vshrl.u32 %v3957, 7
        %v3959 = vsub.s32 0, %v3958
        %v3960 = vrot.slane %v3955, %v3959
        %v3963 = vsel %vm1124, %v2483, 0
        %v3966 = vsel %vm1124, %v2484, 0
        %3968 = vmatprep.subr.mxu0 0.0
        %3969 = vmatpush1.msra.mxu0 %v3951
        %3970 = vmatprep.subr.mxu0 0.0
        %3971 = vmatpush1.msra.mxu0 %v3952
        %3972 = vmatprep.subr.mxu0 0.0
        %3973 = vmatpush1.msra.mxu0 %v3953
        %3974 = vmatprep.subr.mxu0 0.0
        %3975 = vmatpush1.msra.mxu0 %v3954
        %3976 = vmatprep.subr.mxu0 0.0
        %3977 = vmatpush1.msra.mxu0 0.0
        %3978 = vmatprep.subr.mxu0 0.0
        %3979 = vmatpush1.msra.mxu0 0.0
        %3980 = vmatprep.subr.mxu0 0.0
        %3981 = vmatpush1.msra.mxu0 0.0
        %3982 = vmatprep.subr.mxu0 0.0
        %3983 = vmatpush1.msra.mxu0 0.0
        %3984 = vmatprep.subr.mxu0 0.0
        %3985 = vmatpush1.msra.mxu0 0.0
        %3986 = vmatprep.subr.mxu0 0.0
        %3987 = vmatpush1.msra.mxu0 0.0
        %3988 = vmatprep.subr.mxu0 0.0
        %3989 = vmatpush1.msra.mxu0 0.0
        %3990 = vmatprep.subr.mxu0 0.0
        %3991 = vmatpush1.msra.mxu0 0.0
        %3992 = vmatprep.subr.mxu0 0.0
        %3993 = vmatpush1.msra.mxu0 0.0
        %3994 = vmatprep.subr.mxu0 0.0
        %3995 = vmatpush1.msra.mxu0 0.0
        %3996 = vmatprep.subr.mxu0 0.0
        %3997 = vmatpush1.msra.mxu0 0.0
        %3998 = vmatprep.subr.mxu0 0.0
        %3999 = vmatpush1.msra.mxu0 0.0
        %4000 = vmatprep.subr.mxu0 0.0
        %4001 = vmatpush1.msra.mxu0 0.0
        %4002 = vmatprep.subr.mxu0 0.0
        %4003 = vmatpush1.msra.mxu0 0.0
        %4004 = vmatprep.subr.mxu0 0.0
        %4005 = vmatpush1.msra.mxu0 0.0
        %4006 = vmatprep.subr.mxu0 0.0
        %4007 = vmatpush1.msra.mxu0 0.0
        %4008 = vmatprep.subr.mxu0 0.0
        %4009 = vmatpush1.msra.mxu0 0.0
        %4010 = vmatprep.subr.mxu0 0.0
        %4011 = vmatpush1.msra.mxu0 0.0
        %4012 = vmatprep.subr.mxu0 0.0
        %4013 = vmatpush1.msra.mxu0 0.0
        %4014 = vmatprep.subr.mxu0 0.0
        %4015 = vmatpush1.msra.mxu0 0.0
        %4016 = vmatprep.subr.mxu0 0.0
        %4017 = vmatpush1.msra.mxu0 0.0
        %4018 = vmatprep.subr.mxu0 0.0
        %4019 = vmatpush1.msra.mxu0 0.0
        %4020 = vmatprep.subr.mxu0 0.0
        %4021 = vmatpush1.msra.mxu0 0.0
        %4022 = vmatprep.subr.mxu0 0.0
        %4023 = vmatpush1.msra.mxu0 0.0
        %4024 = vmatprep.subr.mxu0 0.0
        %4025 = vmatpush1.msra.mxu0 0.0
        %4026 = vmatprep.subr.mxu0 0.0
        %4027 = vmatpush1.msra.mxu0 0.0
        %4028 = vmatprep.subr.mxu0 0.0
        %4029 = vmatpush1.msra.mxu0 0.0
        %4030 = vmatprep.subr.mxu0 0.0
        %4031 = vmatpush1.msra.mxu0 0.0
        %4032 = vmatprep.mubr.f32.mxu0 0.0
        %4033 = vmatmul.mubr.f32.gmra.mrb[0].mxu0 %v3963
        %v4034 = vpop.f32.mrb[0].mxu0
        %v4035 = vadd.f32 %v3960, %v4034
        %v4036 = vpop.f32.mrb[0].mxu0
        %4037 = vmatprep.mubr.f32.mxu0 0.0
        %4038 = vmatmul.mubr.f32.gmra.mrb[0].mxu0 %v3966
        %v4039 = vpop.f32.mrb[0].mxu0
        %v4040 = vadd.f32 %v3960, %v4039
        %v4041 = vpop.f32.mrb[0].mxu0
        %4042 = vdwg.mxu0
        %v4043 = vadd.f32 %v3948, %v1105
        %v4044 = vadd.f32 %v4035, %v1103
        %v4045 = vadd.f32 %v4040, %v1104
        %v4046 = vld [vmem:[%s25] sm:$0xff]
        %v4047 = vld [vmem:[%s25 + $0x8] sm:$0xff]
        %v4048 = vld [vmem:[%s25 + $0x10] sm:$0xff]
        %v4049 = vld [vmem:[%s25 + $0x18] sm:$0xff]
        %v4050 = vld [vmem:[%s27] sm:$0x1]
        %v4051 = vld [vmem:[%s29] sm:$0xff]
        %v4052 = vld [vmem:[%s29 + $0x8] sm:$0xff]
        %v4053 = vld [vmem:[%s29 + $0x10] sm:$0xff]
        %v4054 = vld [vmem:[%s29 + $0x18] sm:$0xff]
        %v4055 = vld [vmem:[%s31] sm:$0x1]
        %v4057 = vlaneseq
        %v4058 = vshrl.u32 %v4057, 7
        %v4059 = vsub.s32 0, %v4058
        %v4060 = vrot.slane %v4050, %v4059
        %v4063 = vsel %vm1124, %v4043, 0
        %4065 = vmatprep.subr.mxu0 0.0
        %4066 = vmatpush1.msra.mxu0 %v4046
        %4067 = vmatprep.subr.mxu0 0.0
        %4068 = vmatpush1.msra.mxu0 %v4047
        %4069 = vmatprep.subr.mxu0 0.0
        %4070 = vmatpush1.msra.mxu0 %v4048
        %4071 = vmatprep.subr.mxu0 0.0
        %4072 = vmatpush1.msra.mxu0 %v4049
        %4073 = vmatprep.subr.mxu0 0.0
        %4074 = vmatpush1.msra.mxu0 0.0
        %4075 = vmatprep.subr.mxu0 0.0
        %4076 = vmatpush1.msra.mxu0 0.0
        %4077 = vmatprep.subr.mxu0 0.0
        %4078 = vmatpush1.msra.mxu0 0.0
        %4079 = vmatprep.subr.mxu0 0.0
        %4080 = vmatpush1.msra.mxu0 0.0
        %4081 = vmatprep.subr.mxu0 0.0
        %4082 = vmatpush1.msra.mxu0 0.0
        %4083 = vmatprep.subr.mxu0 0.0
        %4084 = vmatpush1.msra.mxu0 0.0
        %4085 = vmatprep.subr.mxu0 0.0
        %4086 = vmatpush1.msra.mxu0 0.0
        %4087 = vmatprep.subr.mxu0 0.0
        %4088 = vmatpush1.msra.mxu0 0.0
        %4089 = vmatprep.subr.mxu0 0.0
        %4090 = vmatpush1.msra.mxu0 0.0
        %4091 = vmatprep.subr.mxu0 0.0
        %4092 = vmatpush1.msra.mxu0 0.0
        %4093 = vmatprep.subr.mxu0 0.0
        %4094 = vmatpush1.msra.mxu0 0.0
        %4095 = vmatprep.subr.mxu0 0.0
        %4096 = vmatpush1.msra.mxu0 0.0
        %4097 = vmatprep.subr.mxu0 0.0
        %4098 = vmatpush1.msra.mxu0 0.0
        %4099 = vmatprep.subr.mxu0 0.0
        %4100 = vmatpush1.msra.mxu0 0.0
        %4101 = vmatprep.subr.mxu0 0.0
        %4102 = vmatpush1.msra.mxu0 0.0
        %4103 = vmatprep.subr.mxu0 0.0
        %4104 = vmatpush1.msra.mxu0 0.0
        %4105 = vmatprep.subr.mxu0 0.0
        %4106 = vmatpush1.msra.mxu0 0.0
        %4107 = vmatprep.subr.mxu0 0.0
        %4108 = vmatpush1.msra.mxu0 0.0
        %4109 = vmatprep.subr.mxu0 0.0
        %4110 = vmatpush1.msra.mxu0 0.0
        %4111 = vmatprep.subr.mxu0 0.0
        %4112 = vmatpush1.msra.mxu0 0.0
        %4113 = vmatprep.subr.mxu0 0.0
        %4114 = vmatpush1.msra.mxu0 0.0
        %4115 = vmatprep.subr.mxu0 0.0
        %4116 = vmatpush1.msra.mxu0 0.0
        %4117 = vmatprep.subr.mxu0 0.0
        %4118 = vmatpush1.msra.mxu0 0.0
        %4119 = vmatprep.subr.mxu0 0.0
        %4120 = vmatpush1.msra.mxu0 0.0
        %4121 = vmatprep.subr.mxu0 0.0
        %4122 = vmatpush1.msra.mxu0 0.0
        %4123 = vmatprep.subr.mxu0 0.0
        %4124 = vmatpush1.msra.mxu0 0.0
        %4125 = vmatprep.subr.mxu0 0.0
        %4126 = vmatpush1.msra.mxu0 0.0
        %4127 = vmatprep.subr.mxu0 0.0
        %4128 = vmatpush1.msra.mxu0 0.0
        %4129 = vmatprep.mubr.f32.mxu0 0.0
        %4130 = vmatmul.mubr.f32.gmra.mrb[0].mxu0 %v4063
        %v4131 = vpop.f32.mrb[0].mxu0
        %v4132 = vadd.f32 %v4060, %v4131
        %v4133 = vpop.f32.mrb[0].mxu0
        %4134 = vdwg.mxu0
        %4139 = vrot.lane.b32.xlu0 %v4046, 96
        %v4140 = vpop.permute.xlu0 %4139
        %4141 = vrot.lane.b32.xlu0 %v4047, 96
        %v4142 = vpop.permute.xlu0 %4141
        %4143 = vrot.lane.b32.xlu0 %v4048, 96
        %v4144 = vpop.permute.xlu0 %4143
        %4145 = vrot.lane.b32.xlu0 %v4049, 96
        %v4146 = vpop.permute.xlu0 %4145
        %4151 = vrot.lane.b32.xlu0 %v4060, 96
        %v4152 = vpop.permute.xlu0 %4151
        %v4155 = vsel %vm1124, %v4044, 0
        %v4158 = vsel %vm1124, %v4045, 0
        %4160 = vmatprep.subr.mxu0 0.0
        %4161 = vmatpush1.msra.mxu0 %v4140
        %4162 = vmatprep.subr.mxu0 0.0
        %4163 = vmatpush1.msra.mxu0 %v4142
        %4164 = vmatprep.subr.mxu0 0.0
        %4165 = vmatpush1.msra.mxu0 %v4144
        %4166 = vmatprep.subr.mxu0 0.0
        %4167 = vmatpush1.msra.mxu0 %v4146
        %4168 = vmatprep.subr.mxu0 0.0
        %4169 = vmatpush1.msra.mxu0 0.0
        %4170 = vmatprep.subr.mxu0 0.0
        %4171 = vmatpush1.msra.mxu0 0.0
        %4172 = vmatprep.subr.mxu0 0.0
        %4173 = vmatpush1.msra.mxu0 0.0
        %4174 = vmatprep.subr.mxu0 0.0
        %4175 = vmatpush1.msra.mxu0 0.0
        %4176 = vmatprep.subr.mxu0 0.0
        %4177 = vmatpush1.msra.mxu0 0.0
        %4178 = vmatprep.subr.mxu0 0.0
        %4179 = vmatpush1.msra.mxu0 0.0
        %4180 = vmatprep.subr.mxu0 0.0
        %4181 = vmatpush1.msra.mxu0 0.0
        %4182 = vmatprep.subr.mxu0 0.0
        %4183 = vmatpush1.msra.mxu0 0.0
        %4184 = vmatprep.subr.mxu0 0.0
        %4185 = vmatpush1.msra.mxu0 0.0
        %4186 = vmatprep.subr.mxu0 0.0
        %4187 = vmatpush1.msra.mxu0 0.0
        %4188 = vmatprep.subr.mxu0 0.0
        %4189 = vmatpush1.msra.mxu0 0.0
        %4190 = vmatprep.subr.mxu0 0.0
        %4191 = vmatpush1.msra.mxu0 0.0
        %4192 = vmatprep.subr.mxu0 0.0
        %4193 = vmatpush1.msra.mxu0 0.0
        %4194 = vmatprep.subr.mxu0 0.0
        %4195 = vmatpush1.msra.mxu0 0.0
        %4196 = vmatprep.subr.mxu0 0.0
        %4197 = vmatpush1.msra.mxu0 0.0
        %4198 = vmatprep.subr.mxu0 0.0
        %4199 = vmatpush1.msra.mxu0 0.0
        %4200 = vmatprep.subr.mxu0 0.0
        %4201 = vmatpush1.msra.mxu0 0.0
        %4202 = vmatprep.subr.mxu0 0.0
        %4203 = vmatpush1.msra.mxu0 0.0
        %4204 = vmatprep.subr.mxu0 0.0
        %4205 = vmatpush1.msra.mxu0 0.0
        %4206 = vmatprep.subr.mxu0 0.0
        %4207 = vmatpush1.msra.mxu0 0.0
        %4208 = vmatprep.subr.mxu0 0.0
        %4209 = vmatpush1.msra.mxu0 0.0
        %4210 = vmatprep.subr.mxu0 0.0
        %4211 = vmatpush1.msra.mxu0 0.0
        %4212 = vmatprep.subr.mxu0 0.0
        %4213 = vmatpush1.msra.mxu0 0.0
        %4214 = vmatprep.subr.mxu0 0.0
        %4215 = vmatpush1.msra.mxu0 0.0
        %4216 = vmatprep.subr.mxu0 0.0
        %4217 = vmatpush1.msra.mxu0 0.0
        %4218 = vmatprep.subr.mxu0 0.0
        %4219 = vmatpush1.msra.mxu0 0.0
        %4220 = vmatprep.subr.mxu0 0.0
        %4221 = vmatpush1.msra.mxu0 0.0
        %4222 = vmatprep.subr.mxu0 0.0
        %4223 = vmatpush1.msra.mxu0 0.0
        %4224 = vmatprep.mubr.f32.mxu0 0.0
        %4225 = vmatmul.mubr.f32.gmra.mrb[0].mxu0 %v4155
        %v4226 = vpop.f32.mrb[0].mxu0
        %v4227 = vadd.f32 %v4152, %v4226
        %v4228 = vpop.f32.mrb[0].mxu0
        %4229 = vmatprep.mubr.f32.mxu0 0.0
        %4230 = vmatmul.mubr.f32.gmra.mrb[0].mxu0 %v4158
        %v4231 = vpop.f32.mrb[0].mxu0
        %v4232 = vadd.f32 %v4152, %v4231
        %v4233 = vpop.f32.mrb[0].mxu0
        %4234 = vdwg.mxu0
        %4237 = vrot.lane.b32.xlu0 %v4035, 96
        %v4238 = vpop.permute.xlu0 %4237
        %4239 = vrot.lane.b32.xlu0 %v4040, 96
        %v4240 = vpop.permute.xlu0 %4239
        %4241 = vrot.lane.b32.xlu0 %v4046, 64
        %v4242 = vpop.permute.xlu0 %4241
        %4243 = vrot.lane.b32.xlu0 %v4047, 64
        %v4244 = vpop.permute.xlu0 %4243
        %4245 = vrot.lane.b32.xlu0 %v4048, 64
        %v4246 = vpop.permute.xlu0 %4245
        %4247 = vrot.lane.b32.xlu0 %v4049, 64
        %v4248 = vpop.permute.xlu0 %4247
        %4253 = vrot.lane.b32.xlu0 %v4060, 64
        %v4254 = vpop.permute.xlu0 %4253
        %v4256 = vsel %vm1124, %v4238, 0
        %v4258 = vsel %vm1124, %v4240, 0
        %4260 = vmatprep.subr.mxu0 0.0
        %4261 = vmatpush1.msra.mxu0 %v4242
        %4262 = vmatprep.subr.mxu0 0.0
        %4263 = vmatpush1.msra.mxu0 %v4244
        %4264 = vmatprep.subr.mxu0 0.0
        %4265 = vmatpush1.msra.mxu0 %v4246
        %4266 = vmatprep.subr.mxu0 0.0
        %4267 = vmatpush1.msra.mxu0 %v4248
        %4268 = vmatprep.subr.mxu0 0.0
        %4269 = vmatpush1.msra.mxu0 0.0
        %4270 = vmatprep.subr.mxu0 0.0
        %4271 = vmatpush1.msra.mxu0 0.0
        %4272 = vmatprep.subr.mxu0 0.0
        %4273 = vmatpush1.msra.mxu0 0.0
        %4274 = vmatprep.subr.mxu0 0.0
        %4275 = vmatpush1.msra.mxu0 0.0
        %4276 = vmatprep.subr.mxu0 0.0
        %4277 = vmatpush1.msra.mxu0 0.0
        %4278 = vmatprep.subr.mxu0 0.0
        %4279 = vmatpush1.msra.mxu0 0.0
        %4280 = vmatprep.subr.mxu0 0.0
        %4281 = vmatpush1.msra.mxu0 0.0
        %4282 = vmatprep.subr.mxu0 0.0
        %4283 = vmatpush1.msra.mxu0 0.0
        %4284 = vmatprep.subr.mxu0 0.0
        %4285 = vmatpush1.msra.mxu0 0.0
        %4286 = vmatprep.subr.mxu0 0.0
        %4287 = vmatpush1.msra.mxu0 0.0
        %4288 = vmatprep.subr.mxu0 0.0
        %4289 = vmatpush1.msra.mxu0 0.0
        %4290 = vmatprep.subr.mxu0 0.0
        %4291 = vmatpush1.msra.mxu0 0.0
        %4292 = vmatprep.subr.mxu0 0.0
        %4293 = vmatpush1.msra.mxu0 0.0
        %4294 = vmatprep.subr.mxu0 0.0
        %4295 = vmatpush1.msra.mxu0 0.0
        %4296 = vmatprep.subr.mxu0 0.0
        %4297 = vmatpush1.msra.mxu0 0.0
        %4298 = vmatprep.subr.mxu0 0.0
        %4299 = vmatpush1.msra.mxu0 0.0
        %4300 = vmatprep.subr.mxu0 0.0
        %4301 = vmatpush1.msra.mxu0 0.0
        %4302 = vmatprep.subr.mxu0 0.0
        %4303 = vmatpush1.msra.mxu0 0.0
        %4304 = vmatprep.subr.mxu0 0.0
        %4305 = vmatpush1.msra.mxu0 0.0
        %4306 = vmatprep.subr.mxu0 0.0
        %4307 = vmatpush1.msra.mxu0 0.0
        %4308 = vmatprep.subr.mxu0 0.0
        %4309 = vmatpush1.msra.mxu0 0.0
        %4310 = vmatprep.subr.mxu0 0.0
        %4311 = vmatpush1.msra.mxu0 0.0
        %4312 = vmatprep.subr.mxu0 0.0
        %4313 = vmatpush1.msra.mxu0 0.0
        %4314 = vmatprep.subr.mxu0 0.0
        %4315 = vmatpush1.msra.mxu0 0.0
        %4316 = vmatprep.subr.mxu0 0.0
        %4317 = vmatpush1.msra.mxu0 0.0
        %4318 = vmatprep.subr.mxu0 0.0
        %4319 = vmatpush1.msra.mxu0 0.0
        %4320 = vmatprep.subr.mxu0 0.0
        %4321 = vmatpush1.msra.mxu0 0.0
        %4322 = vmatprep.subr.mxu0 0.0
        %4323 = vmatpush1.msra.mxu0 0.0
        %4324 = vmatprep.mubr.f32.mxu0 0.0
        %4325 = vmatmul.mubr.f32.gmra.mrb[0].mxu0 %v4256
        %v4326 = vpop.f32.mrb[0].mxu0
        %v4327 = vadd.f32 %v4254, %v4326
        %v4328 = vpop.f32.mrb[0].mxu0
        %4329 = vmatprep.mubr.f32.mxu0 0.0
        %4330 = vmatmul.mubr.f32.gmra.mrb[0].mxu0 %v4258
        %v4331 = vpop.f32.mrb[0].mxu0
        %v4332 = vadd.f32 %v4254, %v4331
        %v4333 = vpop.f32.mrb[0].mxu0
        %4334 = vdwg.mxu0
        %v4335 = vmul.f32 %v4132, 0.35355338
        %v4337 = vsel %vm1314, %v4335, 0
        %v4340 = vsel %vm1314, %v4227, 0
        %v4343 = vsel %vm1314, %v4232, 0
        %4345 = vmatprep.subr.mxu0 0.0
        %4346 = vmatpush1.xpose.msra.mxu0 %v4340
        %4347 = vmatprep.subr.mxu0 0.0
        %4348 = vmatpush1.xpose.msra.mxu0 %v4343
        %4349 = vmatprep.subr.mxu0 0.0
        %4350 = vmatpush1.xpose.msra.mxu0 0.0
        %4351 = vmatprep.subr.mxu0 0.0
        %4352 = vmatpush1.xpose.msra.mxu0 0.0
        %4353 = vmatprep.subr.mxu0 0.0
        %4354 = vmatpush1.xpose.msra.mxu0 0.0
        %4355 = vmatprep.subr.mxu0 0.0
        %4356 = vmatpush1.xpose.msra.mxu0 0.0
        %4357 = vmatprep.subr.mxu0 0.0
        %4358 = vmatpush1.xpose.msra.mxu0 0.0
        %4359 = vmatprep.subr.mxu0 0.0
        %4360 = vmatpush1.xpose.msra.mxu0 0.0
        %4361 = vmatprep.subr.mxu0 0.0
        %4362 = vmatpush1.xpose.msra.mxu0 0.0
        %4363 = vmatprep.subr.mxu0 0.0
        %4364 = vmatpush1.xpose.msra.mxu0 0.0
        %4365 = vmatprep.subr.mxu0 0.0
        %4366 = vmatpush1.xpose.msra.mxu0 0.0
        %4367 = vmatprep.subr.mxu0 0.0
        %4368 = vmatpush1.xpose.msra.mxu0 0.0
        %4369 = vmatprep.subr.mxu0 0.0
        %4370 = vmatpush1.xpose.msra.mxu0 0.0
        %4371 = vmatprep.subr.mxu0 0.0
        %4372 = vmatpush1.xpose.msra.mxu0 0.0
        %4373 = vmatprep.subr.mxu0 0.0
        %4374 = vmatpush1.xpose.msra.mxu0 0.0
        %4375 = vmatprep.subr.mxu0 0.0
        %4376 = vmatpush1.xpose.msra.mxu0 0.0
        %4377 = vmatprep.subr.mxu0 0.0
        %4378 = vmatpush1.xpose.msra.mxu0 0.0
        %4379 = vmatprep.subr.mxu0 0.0
        %4380 = vmatpush1.xpose.msra.mxu0 0.0
        %4381 = vmatprep.subr.mxu0 0.0
        %4382 = vmatpush1.xpose.msra.mxu0 0.0
        %4383 = vmatprep.subr.mxu0 0.0
        %4384 = vmatpush1.xpose.msra.mxu0 0.0
        %4385 = vmatprep.subr.mxu0 0.0
        %4386 = vmatpush1.xpose.msra.mxu0 0.0
        %4387 = vmatprep.subr.mxu0 0.0
        %4388 = vmatpush1.xpose.msra.mxu0 0.0
        %4389 = vmatprep.subr.mxu0 0.0
        %4390 = vmatpush1.xpose.msra.mxu0 0.0
        %4391 = vmatprep.subr.mxu0 0.0
        %4392 = vmatpush1.xpose.msra.mxu0 0.0
        %4393 = vmatprep.subr.mxu0 0.0
        %4394 = vmatpush1.xpose.msra.mxu0 0.0
        %4395 = vmatprep.subr.mxu0 0.0
        %4396 = vmatpush1.xpose.msra.mxu0 0.0
        %4397 = vmatprep.subr.mxu0 0.0
        %4398 = vmatpush1.xpose.msra.mxu0 0.0
        %4399 = vmatprep.subr.mxu0 0.0
        %4400 = vmatpush1.xpose.msra.mxu0 0.0
        %4401 = vmatprep.subr.mxu0 0.0
        %4402 = vmatpush1.xpose.msra.mxu0 0.0
        %4403 = vmatprep.subr.mxu0 0.0
        %4404 = vmatpush1.xpose.msra.mxu0 0.0
        %4405 = vmatprep.subr.mxu0 0.0
        %4406 = vmatpush1.xpose.msra.mxu0 0.0
        %4407 = vmatprep.subr.mxu0 0.0
        %4408 = vmatpush1.xpose.msra.mxu0 0.0
        %4409 = vmatprep.mubr.f32.mxu0 0.0
        %4410 = vmatmul.mubr.f32.gmra.mrb[0].mxu0 %v4337
        %v4411 = vpop.f32.mrb[0].mxu0
        %v4412 = vadd.f32 0.0, %v4411
        %v4413 = vpop.f32.mrb[0].mxu0
        %4414 = vdwg.mxu0
        %v4415 = vsel %vm1400, %v4412, -inf
        %4416 = vmax.xlane.f32.xlu0 %v4415
        %v4417 = vpop.xlane.xlu0 %4416
        %v4418 = vsub.f32 %v4412, %v4417
        %v4419 = vmul.f32 %v4418, 1.442695
        %v4420 = vpow.pop %v4419
        %v4421 = vsel %vm1400, %v4420, 0.0
        %4422 = vadd.xlane.f32.xlu0 %v4421
        %v4423 = vpop.xlane.xlu0 %4422
        %v4424 = vrcp.pop %v4423
        %v4425 = vmul.f32 %v4420, %v4424
        %v4427 = vsel %vm1400, %v4425, 0
        %4429 = vmatprep.subr.mxu0 0.0
        %4430 = vmatpush1.msra.mxu0 %v4327
        %4431 = vmatprep.subr.mxu0 0.0
        %4432 = vmatpush1.msra.mxu0 %v4332
        %4433 = vmatprep.subr.mxu0 0.0
        %4434 = vmatpush1.msra.mxu0 0.0
        %4435 = vmatprep.subr.mxu0 0.0
        %4436 = vmatpush1.msra.mxu0 0.0
        %4437 = vmatprep.subr.mxu0 0.0
        %4438 = vmatpush1.msra.mxu0 0.0
        %4439 = vmatprep.subr.mxu0 0.0
        %4440 = vmatpush1.msra.mxu0 0.0
        %4441 = vmatprep.subr.mxu0 0.0
        %4442 = vmatpush1.msra.mxu0 0.0
        %4443 = vmatprep.subr.mxu0 0.0
        %4444 = vmatpush1.msra.mxu0 0.0
        %4445 = vmatprep.subr.mxu0 0.0
        %4446 = vmatpush1.msra.mxu0 0.0
        %4447 = vmatprep.subr.mxu0 0.0
        %4448 = vmatpush1.msra.mxu0 0.0
        %4449 = vmatprep.subr.mxu0 0.0
        %4450 = vmatpush1.msra.mxu0 0.0
        %4451 = vmatprep.subr.mxu0 0.0
        %4452 = vmatpush1.msra.mxu0 0.0
        %4453 = vmatprep.subr.mxu0 0.0
        %4454 = vmatpush1.msra.mxu0 0.0
        %4455 = vmatprep.subr.mxu0 0.0
        %4456 = vmatpush1.msra.mxu0 0.0
        %4457 = vmatprep.subr.mxu0 0.0
        %4458 = vmatpush1.msra.mxu0 0.0
        %4459 = vmatprep.subr.mxu0 0.0
        %4460 = vmatpush1.msra.mxu0 0.0
        %4461 = vmatprep.subr.mxu0 0.0
        %4462 = vmatpush1.msra.mxu0 0.0
        %4463 = vmatprep.subr.mxu0 0.0
        %4464 = vmatpush1.msra.mxu0 0.0
        %4465 = vmatprep.subr.mxu0 0.0
        %4466 = vmatpush1.msra.mxu0 0.0
        %4467 = vmatprep.subr.mxu0 0.0
        %4468 = vmatpush1.msra.mxu0 0.0
        %4469 = vmatprep.subr.mxu0 0.0
        %4470 = vmatpush1.msra.mxu0 0.0
        %4471 = vmatprep.subr.mxu0 0.0
        %4472 = vmatpush1.msra.mxu0 0.0
        %4473 = vmatprep.subr.mxu0 0.0
        %4474 = vmatpush1.msra.mxu0 0.0
        %4475 = vmatprep.subr.mxu0 0.0
        %4476 = vmatpush1.msra.mxu0 0.0
        %4477 = vmatprep.subr.mxu0 0.0
        %4478 = vmatpush1.msra.mxu0 0.0
        %4479 = vmatprep.subr.mxu0 0.0
        %4480 = vmatpush1.msra.mxu0 0.0
        %4481 = vmatprep.subr.mxu0 0.0
        %4482 = vmatpush1.msra.mxu0 0.0
        %4483 = vmatprep.subr.mxu0 0.0
        %4484 = vmatpush1.msra.mxu0 0.0
        %4485 = vmatprep.subr.mxu0 0.0
        %4486 = vmatpush1.msra.mxu0 0.0
        %4487 = vmatprep.subr.mxu0 0.0
        %4488 = vmatpush1.msra.mxu0 0.0
        %4489 = vmatprep.subr.mxu0 0.0
        %4490 = vmatpush1.msra.mxu0 0.0
        %4491 = vmatprep.subr.mxu0 0.0
        %4492 = vmatpush1.msra.mxu0 0.0
        %4493 = vmatprep.mubr.f32.mxu0 0.0
        %4494 = vmatmul.mubr.f32.gmra.mrb[0].mxu0 %v4427
        %v4495 = vpop.f32.mrb[0].mxu0
        %v4496 = vadd.f32 0.0, %v4495
        %v4497 = vpop.f32.mrb[0].mxu0
        %4498 = vdwg.mxu0
        %4499 = vrot.lane.b32.xlu0 %v4335, 120
        %v4500 = vpop.permute.xlu0 %4499
        %4501 = vrot.lane.b32.xlu0 %v4227, 120
        %v4502 = vpop.permute.xlu0 %4501
        %4503 = vrot.lane.b32.xlu0 %v4232, 120
        %v4504 = vpop.permute.xlu0 %4503
        %v4505 = vsel %vm1314, %v4500, 0
        %v4507 = vsel %vm1314, %v4502, 0
        %v4509 = vsel %vm1314, %v4504, 0
        %4511 = vmatprep.subr.mxu0 0.0
        %4512 = vmatpush1.xpose.msra.mxu0 %v4507
        %4513 = vmatprep.subr.mxu0 0.0
        %4514 = vmatpush1.xpose.msra.mxu0 %v4509
        %4515 = vmatprep.subr.mxu0 0.0
        %4516 = vmatpush1.xpose.msra.mxu0 0.0
        %4517 = vmatprep.subr.mxu0 0.0
        %4518 = vmatpush1.xpose.msra.mxu0 0.0
        %4519 = vmatprep.subr.mxu0 0.0
        %4520 = vmatpush1.xpose.msra.mxu0 0.0
        %4521 = vmatprep.subr.mxu0 0.0
        %4522 = vmatpush1.xpose.msra.mxu0 0.0
        %4523 = vmatprep.subr.mxu0 0.0
        %4524 = vmatpush1.xpose.msra.mxu0 0.0
        %4525 = vmatprep.subr.mxu0 0.0
        %4526 = vmatpush1.xpose.msra.mxu0 0.0
        %4527 = vmatprep.subr.mxu0 0.0
        %4528 = vmatpush1.xpose.msra.mxu0 0.0
        %4529 = vmatprep.subr.mxu0 0.0
        %4530 = vmatpush1.xpose.msra.mxu0 0.0
        %4531 = vmatprep.subr.mxu0 0.0
        %4532 = vmatpush1.xpose.msra.mxu0 0.0
        %4533 = vmatprep.subr.mxu0 0.0
        %4534 = vmatpush1.xpose.msra.mxu0 0.0
        %4535 = vmatprep.subr.mxu0 0.0
        %4536 = vmatpush1.xpose.msra.mxu0 0.0
        %4537 = vmatprep.subr.mxu0 0.0
        %4538 = vmatpush1.xpose.msra.mxu0 0.0
        %4539 = vmatprep.subr.mxu0 0.0
        %4540 = vmatpush1.xpose.msra.mxu0 0.0
        %4541 = vmatprep.subr.mxu0 0.0
        %4542 = vmatpush1.xpose.msra.mxu0 0.0
        %4543 = vmatprep.subr.mxu0 0.0
        %4544 = vmatpush1.xpose.msra.mxu0 0.0
        %4545 = vmatprep.subr.mxu0 0.0
        %4546 = vmatpush1.xpose.msra.mxu0 0.0
        %4547 = vmatprep.subr.mxu0 0.0
        %4548 = vmatpush1.xpose.msra.mxu0 0.0
        %4549 = vmatprep.subr.mxu0 0.0
        %4550 = vmatpush1.xpose.msra.mxu0 0.0
        %4551 = vmatprep.subr.mxu0 0.0
        %4552 = vmatpush1.xpose.msra.mxu0 0.0
        %4553 = vmatprep.subr.mxu0 0.0
        %4554 = vmatpush1.xpose.msra.mxu0 0.0
        %4555 = vmatprep.subr.mxu0 0.0
        %4556 = vmatpush1.xpose.msra.mxu0 0.0
        %4557 = vmatprep.subr.mxu0 0.0
        %4558 = vmatpush1.xpose.msra.mxu0 0.0
        %4559 = vmatprep.subr.mxu0 0.0
        %4560 = vmatpush1.xpose.msra.mxu0 0.0
        %4561 = vmatprep.subr.mxu0 0.0
        %4562 = vmatpush1.xpose.msra.mxu0 0.0
        %4563 = vmatprep.subr.mxu0 0.0
        %4564 = vmatpush1.xpose.msra.mxu0 0.0
        %4565 = vmatprep.subr.mxu0 0.0
        %4566 = vmatpush1.xpose.msra.mxu0 0.0
        %4567 = vmatprep.subr.mxu0 0.0
        %4568 = vmatpush1.xpose.msra.mxu0 0.0
        %4569 = vmatprep.subr.mxu0 0.0
        %4570 = vmatpush1.xpose.msra.mxu0 0.0
        %4571 = vmatprep.subr.mxu0 0.0
        %4572 = vmatpush1.xpose.msra.mxu0 0.0
        %4573 = vmatprep.subr.mxu0 0.0
        %4574 = vmatpush1.xpose.msra.mxu0 0.0
        %4575 = vmatprep.mubr.f32.mxu0 0.0
        %4576 = vmatmul.mubr.f32.gmra.mrb[0].mxu0 %v4505
        %v4577 = vpop.f32.mrb[0].mxu0
        %v4578 = vadd.f32 0.0, %v4577
        %v4579 = vpop.f32.mrb[0].mxu0
        %4580 = vdwg.mxu0
        %v4581 = vsel %vm1400, %v4578, -inf
        %4582 = vmax.xlane.f32.xlu0 %v4581
        %v4583 = vpop.xlane.xlu0 %4582
        %v4584 = vsub.f32 %v4578, %v4583
        %v4585 = vmul.f32 %v4584, 1.442695
        %v4586 = vpow.pop %v4585
        %v4587 = vsel %vm1400, %v4586, 0.0
        %4588 = vadd.xlane.f32.xlu0 %v4587
        %v4589 = vpop.xlane.xlu0 %4588
        %v4590 = vrcp.pop %v4589
        %v4591 = vmul.f32 %v4586, %v4590
        %4594 = vrot.lane.b32.xlu0 %v4327, 120
        %v4595 = vpop.permute.xlu0 %4594
        %4596 = vrot.lane.b32.xlu0 %v4332, 120
        %v4597 = vpop.permute.xlu0 %4596
        %v4601 = vsel %vm1400, %v4591, 0
        %4603 = vmatprep.subr.mxu0 0.0
        %4604 = vmatpush1.msra.mxu0 %v4595
        %4605 = vmatprep.subr.mxu0 0.0
        %4606 = vmatpush1.msra.mxu0 %v4597
        %4607 = vmatprep.subr.mxu0 0.0
        %4608 = vmatpush1.msra.mxu0 0.0
        %4609 = vmatprep.subr.mxu0 0.0
        %4610 = vmatpush1.msra.mxu0 0.0
        %4611 = vmatprep.subr.mxu0 0.0
        %4612 = vmatpush1.msra.mxu0 0.0
        %4613 = vmatprep.subr.mxu0 0.0
        %4614 = vmatpush1.msra.mxu0 0.0
        %4615 = vmatprep.subr.mxu0 0.0
        %4616 = vmatpush1.msra.mxu0 0.0
        %4617 = vmatprep.subr.mxu0 0.0
        %4618 = vmatpush1.msra.mxu0 0.0
        %4619 = vmatprep.subr.mxu0 0.0
        %4620 = vmatpush1.msra.mxu0 0.0
        %4621 = vmatprep.subr.mxu0 0.0
        %4622 = vmatpush1.msra.mxu0 0.0
        %4623 = vmatprep.subr.mxu0 0.0
        %4624 = vmatpush1.msra.mxu0 0.0
        %4625 = vmatprep.subr.mxu0 0.0
        %4626 = vmatpush1.msra.mxu0 0.0
        %4627 = vmatprep.subr.mxu0 0.0
        %4628 = vmatpush1.msra.mxu0 0.0
        %4629 = vmatprep.subr.mxu0 0.0
        %4630 = vmatpush1.msra.mxu0 0.0
        %4631 = vmatprep.subr.mxu0 0.0
        %4632 = vmatpush1.msra.mxu0 0.0
        %4633 = vmatprep.subr.mxu0 0.0
        %4634 = vmatpush1.msra.mxu0 0.0
        %4635 = vmatprep.subr.mxu0 0.0
        %4636 = vmatpush1.msra.mxu0 0.0
        %4637 = vmatprep.subr.mxu0 0.0
        %4638 = vmatpush1.msra.mxu0 0.0
        %4639 = vmatprep.subr.mxu0 0.0
        %4640 = vmatpush1.msra.mxu0 0.0
        %4641 = vmatprep.subr.mxu0 0.0
        %4642 = vmatpush1.msra.mxu0 0.0
        %4643 = vmatprep.subr.mxu0 0.0
        %4644 = vmatpush1.msra.mxu0 0.0
        %4645 = vmatprep.subr.mxu0 0.0
        %4646 = vmatpush1.msra.mxu0 0.0
        %4647 = vmatprep.subr.mxu0 0.0
        %4648 = vmatpush1.msra.mxu0 0.0
        %4649 = vmatprep.subr.mxu0 0.0
        %4650 = vmatpush1.msra.mxu0 0.0
        %4651 = vmatprep.subr.mxu0 0.0
        %4652 = vmatpush1.msra.mxu0 0.0
        %4653 = vmatprep.subr.mxu0 0.0
        %4654 = vmatpush1.msra.mxu0 0.0
        %4655 = vmatprep.subr.mxu0 0.0
        %4656 = vmatpush1.msra.mxu0 0.0
        %4657 = vmatprep.subr.mxu0 0.0
        %4658 = vmatpush1.msra.mxu0 0.0
        %4659 = vmatprep.subr.mxu0 0.0
        %4660 = vmatpush1.msra.mxu0 0.0
        %4661 = vmatprep.subr.mxu0 0.0
        %4662 = vmatpush1.msra.mxu0 0.0
        %4663 = vmatprep.subr.mxu0 0.0
        %4664 = vmatpush1.msra.mxu0 0.0
        %4665 = vmatprep.subr.mxu0 0.0
        %4666 = vmatpush1.msra.mxu0 0.0
        %4667 = vmatprep.mubr.f32.mxu0 0.0
        %4668 = vmatmul.mubr.f32.gmra.mrb[0].mxu0 %v4601
        %v4669 = vpop.f32.mrb[0].mxu0
        %v4670 = vadd.f32 0.0, %v4669
        %v4671 = vpop.f32.mrb[0].mxu0
        %4672 = vdwg.mxu0
        %v4674 = vsel %vm1314, %v4670, 0
        %4676 = vmatprep.subr.mxu0 0.0
        %4677 = vmatpush1.msra.mxu0 %v4052
        %4678 = vmatprep.subr.mxu0 0.0
        %4679 = vmatpush1.msra.mxu0 0.0
        %4680 = vmatprep.subr.mxu0 0.0
        %4681 = vmatpush1.msra.mxu0 0.0
        %4682 = vmatprep.subr.mxu0 0.0
        %4683 = vmatpush1.msra.mxu0 0.0
        %4684 = vmatprep.subr.mxu0 0.0
        %4685 = vmatpush1.msra.mxu0 0.0
        %4686 = vmatprep.subr.mxu0 0.0
        %4687 = vmatpush1.msra.mxu0 0.0
        %4688 = vmatprep.subr.mxu0 0.0
        %4689 = vmatpush1.msra.mxu0 0.0
        %4690 = vmatprep.subr.mxu0 0.0
        %4691 = vmatpush1.msra.mxu0 0.0
        %4692 = vmatprep.subr.mxu0 0.0
        %4693 = vmatpush1.msra.mxu0 0.0
        %4694 = vmatprep.subr.mxu0 0.0
        %4695 = vmatpush1.msra.mxu0 0.0
        %4696 = vmatprep.subr.mxu0 0.0
        %4697 = vmatpush1.msra.mxu0 0.0
        %4698 = vmatprep.subr.mxu0 0.0
        %4699 = vmatpush1.msra.mxu0 0.0
        %4700 = vmatprep.subr.mxu0 0.0
        %4701 = vmatpush1.msra.mxu0 0.0
        %4702 = vmatprep.subr.mxu0 0.0
        %4703 = vmatpush1.msra.mxu0 0.0
        %4704 = vmatprep.subr.mxu0 0.0
        %4705 = vmatpush1.msra.mxu0 0.0
        %4706 = vmatprep.subr.mxu0 0.0
        %4707 = vmatpush1.msra.mxu0 0.0
        %4708 = vmatprep.subr.mxu0 0.0
        %4709 = vmatpush1.msra.mxu0 0.0
        %4710 = vmatprep.subr.mxu0 0.0
        %4711 = vmatpush1.msra.mxu0 0.0
        %4712 = vmatprep.subr.mxu0 0.0
        %4713 = vmatpush1.msra.mxu0 0.0
        %4714 = vmatprep.subr.mxu0 0.0
        %4715 = vmatpush1.msra.mxu0 0.0
        %4716 = vmatprep.subr.mxu0 0.0
        %4717 = vmatpush1.msra.mxu0 0.0
        %4718 = vmatprep.subr.mxu0 0.0
        %4719 = vmatpush1.msra.mxu0 0.0
        %4720 = vmatprep.subr.mxu0 0.0
        %4721 = vmatpush1.msra.mxu0 0.0
        %4722 = vmatprep.subr.mxu0 0.0
        %4723 = vmatpush1.msra.mxu0 0.0
        %4724 = vmatprep.subr.mxu0 0.0
        %4725 = vmatpush1.msra.mxu0 0.0
        %4726 = vmatprep.subr.mxu0 0.0
        %4727 = vmatpush1.msra.mxu0 0.0
        %4728 = vmatprep.subr.mxu0 0.0
        %4729 = vmatpush1.msra.mxu0 0.0
        %4730 = vmatprep.subr.mxu0 0.0
        %4731 = vmatpush1.msra.mxu0 0.0
        %4732 = vmatprep.subr.mxu0 0.0
        %4733 = vmatpush1.msra.mxu0 0.0
        %4734 = vmatprep.subr.mxu0 0.0
        %4735 = vmatpush1.msra.mxu0 0.0
        %4736 = vmatprep.subr.mxu0 0.0
        %4737 = vmatpush1.msra.mxu0 0.0
        %4738 = vmatprep.subr.mxu0 0.0
        %4739 = vmatpush1.msra.mxu0 0.0
        %4740 = vmatprep.mubr.f32.mxu0 0.0
        %4741 = vmatmul.mubr.f32.gmra.mrb[0].mxu0 %v4674
        %v4742 = vpop.f32.mrb[0].mxu0
        %v4743 = vadd.f32 0.0, %v4742
        %v4744 = vpop.f32.mrb[0].mxu0
        %4745 = vdwg.mxu0
        %v4747 = vsel %vm1314, %v4496, 0
        %4749 = vmatprep.subr.mxu0 0.0
        %4750 = vmatpush1.msra.mxu0 %v4051
        %4751 = vmatprep.subr.mxu0 0.0
        %4752 = vmatpush1.msra.mxu0 0.0
        %4753 = vmatprep.subr.mxu0 0.0
        %4754 = vmatpush1.msra.mxu0 0.0
        %4755 = vmatprep.subr.mxu0 0.0
        %4756 = vmatpush1.msra.mxu0 0.0
        %4757 = vmatprep.subr.mxu0 0.0
        %4758 = vmatpush1.msra.mxu0 0.0
        %4759 = vmatprep.subr.mxu0 0.0
        %4760 = vmatpush1.msra.mxu0 0.0
        %4761 = vmatprep.subr.mxu0 0.0
        %4762 = vmatpush1.msra.mxu0 0.0
        %4763 = vmatprep.subr.mxu0 0.0
        %4764 = vmatpush1.msra.mxu0 0.0
        %4765 = vmatprep.subr.mxu0 0.0
        %4766 = vmatpush1.msra.mxu0 0.0
        %4767 = vmatprep.subr.mxu0 0.0
        %4768 = vmatpush1.msra.mxu0 0.0
        %4769 = vmatprep.subr.mxu0 0.0
        %4770 = vmatpush1.msra.mxu0 0.0
        %4771 = vmatprep.subr.mxu0 0.0
        %4772 = vmatpush1.msra.mxu0 0.0
        %4773 = vmatprep.subr.mxu0 0.0
        %4774 = vmatpush1.msra.mxu0 0.0
        %4775 = vmatprep.subr.mxu0 0.0
        %4776 = vmatpush1.msra.mxu0 0.0
        %4777 = vmatprep.subr.mxu0 0.0
        %4778 = vmatpush1.msra.mxu0 0.0
        %4779 = vmatprep.subr.mxu0 0.0
        %4780 = vmatpush1.msra.mxu0 0.0
        %4781 = vmatprep.subr.mxu0 0.0
        %4782 = vmatpush1.msra.mxu0 0.0
        %4783 = vmatprep.subr.mxu0 0.0
        %4784 = vmatpush1.msra.mxu0 0.0
        %4785 = vmatprep.subr.mxu0 0.0
        %4786 = vmatpush1.msra.mxu0 0.0
        %4787 = vmatprep.subr.mxu0 0.0
        %4788 = vmatpush1.msra.mxu0 0.0
        %4789 = vmatprep.subr.mxu0 0.0
        %4790 = vmatpush1.msra.mxu0 0.0
        %4791 = vmatprep.subr.mxu0 0.0
        %4792 = vmatpush1.msra.mxu0 0.0
        %4793 = vmatprep.subr.mxu0 0.0
        %4794 = vmatpush1.msra.mxu0 0.0
        %4795 = vmatprep.subr.mxu0 0.0
        %4796 = vmatpush1.msra.mxu0 0.0
        %4797 = vmatprep.subr.mxu0 0.0
        %4798 = vmatpush1.msra.mxu0 0.0
        %4799 = vmatprep.subr.mxu0 0.0
        %4800 = vmatpush1.msra.mxu0 0.0
        %4801 = vmatprep.subr.mxu0 0.0
        %4802 = vmatpush1.msra.mxu0 0.0
        %4803 = vmatprep.subr.mxu0 0.0
        %4804 = vmatpush1.msra.mxu0 0.0
        %4805 = vmatprep.subr.mxu0 0.0
        %4806 = vmatpush1.msra.mxu0 0.0
        %4807 = vmatprep.subr.mxu0 0.0
        %4808 = vmatpush1.msra.mxu0 0.0
        %4809 = vmatprep.subr.mxu0 0.0
        %4810 = vmatpush1.msra.mxu0 0.0
        %4811 = vmatprep.subr.mxu0 0.0
        %4812 = vmatpush1.msra.mxu0 0.0
        %4813 = vmatprep.mubr.f32.mxu0 0.0
        %4814 = vmatmul.mubr.f32.gmra.mrb[0].mxu0 %v4747
        %v4815 = vpop.f32.mrb[0].mxu0
        %v4816 = vadd.f32 %v4743, %v4815
        %v4817 = vpop.f32.mrb[0].mxu0
        %4818 = vdwg.mxu0
        %4819 = vrot.lane.b32.xlu0 %v4335, 112
        %v4820 = vpop.permute.xlu0 %4819
        %4821 = vrot.lane.b32.xlu0 %v4227, 112
        %v4822 = vpop.permute.xlu0 %4821
        %4823 = vrot.lane.b32.xlu0 %v4232, 112
        %v4824 = vpop.permute.xlu0 %4823
        %v4825 = vsel %vm1314, %v4820, 0
        %v4827 = vsel %vm1314, %v4822, 0
        %v4829 = vsel %vm1314, %v4824, 0
        %4831 = vmatprep.subr.mxu0 0.0
        %4832 = vmatpush1.xpose.msra.mxu0 %v4827
        %4833 = vmatprep.subr.mxu0 0.0
        %4834 = vmatpush1.xpose.msra.mxu0 %v4829
        %4835 = vmatprep.subr.mxu0 0.0
        %4836 = vmatpush1.xpose.msra.mxu0 0.0
        %4837 = vmatprep.subr.mxu0 0.0
        %4838 = vmatpush1.xpose.msra.mxu0 0.0
        %4839 = vmatprep.subr.mxu0 0.0
        %4840 = vmatpush1.xpose.msra.mxu0 0.0
        %4841 = vmatprep.subr.mxu0 0.0
        %4842 = vmatpush1.xpose.msra.mxu0 0.0
        %4843 = vmatprep.subr.mxu0 0.0
        %4844 = vmatpush1.xpose.msra.mxu0 0.0
        %4845 = vmatprep.subr.mxu0 0.0
        %4846 = vmatpush1.xpose.msra.mxu0 0.0
        %4847 = vmatprep.subr.mxu0 0.0
        %4848 = vmatpush1.xpose.msra.mxu0 0.0
        %4849 = vmatprep.subr.mxu0 0.0
        %4850 = vmatpush1.xpose.msra.mxu0 0.0
        %4851 = vmatprep.subr.mxu0 0.0
        %4852 = vmatpush1.xpose.msra.mxu0 0.0
        %4853 = vmatprep.subr.mxu0 0.0
        %4854 = vmatpush1.xpose.msra.mxu0 0.0
        %4855 = vmatprep.subr.mxu0 0.0
        %4856 = vmatpush1.xpose.msra.mxu0 0.0
        %4857 = vmatprep.subr.mxu0 0.0
        %4858 = vmatpush1.xpose.msra.mxu0 0.0
        %4859 = vmatprep.subr.mxu0 0.0
        %4860 = vmatpush1.xpose.msra.mxu0 0.0
        %4861 = vmatprep.subr.mxu0 0.0
        %4862 = vmatpush1.xpose.msra.mxu0 0.0
        %4863 = vmatprep.subr.mxu0 0.0
        %4864 = vmatpush1.xpose.msra.mxu0 0.0
        %4865 = vmatprep.subr.mxu0 0.0
        %4866 = vmatpush1.xpose.msra.mxu0 0.0
        %4867 = vmatprep.subr.mxu0 0.0
        %4868 = vmatpush1.xpose.msra.mxu0 0.0
        %4869 = vmatprep.subr.mxu0 0.0
        %4870 = vmatpush1.xpose.msra.mxu0 0.0
        %4871 = vmatprep.subr.mxu0 0.0
        %4872 = vmatpush1.xpose.msra.mxu0 0.0
        %4873 = vmatprep.subr.mxu0 0.0
        %4874 = vmatpush1.xpose.msra.mxu0 0.0
        %4875 = vmatprep.subr.mxu0 0.0
        %4876 = vmatpush1.xpose.msra.mxu0 0.0
        %4877 = vmatprep.subr.mxu0 0.0
        %4878 = vmatpush1.xpose.msra.mxu0 0.0
        %4879 = vmatprep.subr.mxu0 0.0
        %4880 = vmatpush1.xpose.msra.mxu0 0.0
        %4881 = vmatprep.subr.mxu0 0.0
        %4882 = vmatpush1.xpose.msra.mxu0 0.0
        %4883 = vmatprep.subr.mxu0 0.0
        %4884 = vmatpush1.xpose.msra.mxu0 0.0
        %4885 = vmatprep.subr.mxu0 0.0
        %4886 = vmatpush1.xpose.msra.mxu0 0.0
        %4887 = vmatprep.subr.mxu0 0.0
        %4888 = vmatpush1.xpose.msra.mxu0 0.0
        %4889 = vmatprep.subr.mxu0 0.0
        %4890 = vmatpush1.xpose.msra.mxu0 0.0
        %4891 = vmatprep.subr.mxu0 0.0
        %4892 = vmatpush1.xpose.msra.mxu0 0.0
        %4893 = vmatprep.subr.mxu0 0.0
        %4894 = vmatpush1.xpose.msra.mxu0 0.0
        %4895 = vmatprep.mubr.f32.mxu0 0.0
        %4896 = vmatmul.mubr.f32.gmra.mrb[0].mxu0 %v4825
        %v4897 = vpop.f32.mrb[0].mxu0
        %v4898 = vadd.f32 0.0, %v4897
        %v4899 = vpop.f32.mrb[0].mxu0
        %4900 = vdwg.mxu0
        %v4901 = vsel %vm1400, %v4898, -inf
        %4902 = vmax.xlane.f32.xlu0 %v4901
        %v4903 = vpop.xlane.xlu0 %4902
        %v4904 = vsub.f32 %v4898, %v4903
        %v4905 = vmul.f32 %v4904, 1.442695
        %v4906 = vpow.pop %v4905
        %v4907 = vsel %vm1400, %v4906, 0.0
        %4908 = vadd.xlane.f32.xlu0 %v4907
        %v4909 = vpop.xlane.xlu0 %4908
        %v4910 = vrcp.pop %v4909
        %v4911 = vmul.f32 %v4906, %v4910
        %4912 = vrot.lane.b32.xlu0 %v4327, 112
        %v4913 = vpop.permute.xlu0 %4912
        %4914 = vrot.lane.b32.xlu0 %v4332, 112
        %v4915 = vpop.permute.xlu0 %4914
        %v4919 = vsel %vm1400, %v4911, 0
        %4921 = vmatprep.subr.mxu0 0.0
        %4922 = vmatpush1.msra.mxu0 %v4913
        %4923 = vmatprep.subr.mxu0 0.0
        %4924 = vmatpush1.msra.mxu0 %v4915
        %4925 = vmatprep.subr.mxu0 0.0
        %4926 = vmatpush1.msra.mxu0 0.0
        %4927 = vmatprep.subr.mxu0 0.0
        %4928 = vmatpush1.msra.mxu0 0.0
        %4929 = vmatprep.subr.mxu0 0.0
        %4930 = vmatpush1.msra.mxu0 0.0
        %4931 = vmatprep.subr.mxu0 0.0
        %4932 = vmatpush1.msra.mxu0 0.0
        %4933 = vmatprep.subr.mxu0 0.0
        %4934 = vmatpush1.msra.mxu0 0.0
        %4935 = vmatprep.subr.mxu0 0.0
        %4936 = vmatpush1.msra.mxu0 0.0
        %4937 = vmatprep.subr.mxu0 0.0
        %4938 = vmatpush1.msra.mxu0 0.0
        %4939 = vmatprep.subr.mxu0 0.0
        %4940 = vmatpush1.msra.mxu0 0.0
        %4941 = vmatprep.subr.mxu0 0.0
        %4942 = vmatpush1.msra.mxu0 0.0
        %4943 = vmatprep.subr.mxu0 0.0
        %4944 = vmatpush1.msra.mxu0 0.0
        %4945 = vmatprep.subr.mxu0 0.0
        %4946 = vmatpush1.msra.mxu0 0.0
        %4947 = vmatprep.subr.mxu0 0.0
        %4948 = vmatpush1.msra.mxu0 0.0
        %4949 = vmatprep.subr.mxu0 0.0
        %4950 = vmatpush1.msra.mxu0 0.0
        %4951 = vmatprep.subr.mxu0 0.0
        %4952 = vmatpush1.msra.mxu0 0.0
        %4953 = vmatprep.subr.mxu0 0.0
        %4954 = vmatpush1.msra.mxu0 0.0
        %4955 = vmatprep.subr.mxu0 0.0
        %4956 = vmatpush1.msra.mxu0 0.0
        %4957 = vmatprep.subr.mxu0 0.0
        %4958 = vmatpush1.msra.mxu0 0.0
        %4959 = vmatprep.subr.mxu0 0.0
        %4960 = vmatpush1.msra.mxu0 0.0
        %4961 = vmatprep.subr.mxu0 0.0
        %4962 = vmatpush1.msra.mxu0 0.0
        %4963 = vmatprep.subr.mxu0 0.0
        %4964 = vmatpush1.msra.mxu0 0.0
        %4965 = vmatprep.subr.mxu0 0.0
        %4966 = vmatpush1.msra.mxu0 0.0
        %4967 = vmatprep.subr.mxu0 0.0
        %4968 = vmatpush1.msra.mxu0 0.0
        %4969 = vmatprep.subr.mxu0 0.0
        %4970 = vmatpush1.msra.mxu0 0.0
        %4971 = vmatprep.subr.mxu0 0.0
        %4972 = vmatpush1.msra.mxu0 0.0
        %4973 = vmatprep.subr.mxu0 0.0
        %4974 = vmatpush1.msra.mxu0 0.0
        %4975 = vmatprep.subr.mxu0 0.0
        %4976 = vmatpush1.msra.mxu0 0.0
        %4977 = vmatprep.subr.mxu0 0.0
        %4978 = vmatpush1.msra.mxu0 0.0
        %4979 = vmatprep.subr.mxu0 0.0
        %4980 = vmatpush1.msra.mxu0 0.0
        %4981 = vmatprep.subr.mxu0 0.0
        %4982 = vmatpush1.msra.mxu0 0.0
        %4983 = vmatprep.subr.mxu0 0.0
        %4984 = vmatpush1.msra.mxu0 0.0
        %4985 = vmatprep.mubr.f32.mxu0 0.0
        %4986 = vmatmul.mubr.f32.gmra.mrb[0].mxu0 %v4919
        %v4987 = vpop.f32.mrb[0].mxu0
        %v4988 = vadd.f32 0.0, %v4987
        %v4989 = vpop.f32.mrb[0].mxu0
        %4990 = vdwg.mxu0
        %v4992 = vsel %vm1314, %v4988, 0
        %4994 = vmatprep.subr.mxu0 0.0
        %4995 = vmatpush1.msra.mxu0 %v4053
        %4996 = vmatprep.subr.mxu0 0.0
        %4997 = vmatpush1.msra.mxu0 0.0
        %4998 = vmatprep.subr.mxu0 0.0
        %4999 = vmatpush1.msra.mxu0 0.0
        %5000 = vmatprep.subr.mxu0 0.0
        %5001 = vmatpush1.msra.mxu0 0.0
        %5002 = vmatprep.subr.mxu0 0.0
        %5003 = vmatpush1.msra.mxu0 0.0
        %5004 = vmatprep.subr.mxu0 0.0
        %5005 = vmatpush1.msra.mxu0 0.0
        %5006 = vmatprep.subr.mxu0 0.0
        %5007 = vmatpush1.msra.mxu0 0.0
        %5008 = vmatprep.subr.mxu0 0.0
        %5009 = vmatpush1.msra.mxu0 0.0
        %5010 = vmatprep.subr.mxu0 0.0
        %5011 = vmatpush1.msra.mxu0 0.0
        %5012 = vmatprep.subr.mxu0 0.0
        %5013 = vmatpush1.msra.mxu0 0.0
        %5014 = vmatprep.subr.mxu0 0.0
        %5015 = vmatpush1.msra.mxu0 0.0
        %5016 = vmatprep.subr.mxu0 0.0
        %5017 = vmatpush1.msra.mxu0 0.0
        %5018 = vmatprep.subr.mxu0 0.0
        %5019 = vmatpush1.msra.mxu0 0.0
        %5020 = vmatprep.subr.mxu0 0.0
        %5021 = vmatpush1.msra.mxu0 0.0
        %5022 = vmatprep.subr.mxu0 0.0
        %5023 = vmatpush1.msra.mxu0 0.0
        %5024 = vmatprep.subr.mxu0 0.0
        %5025 = vmatpush1.msra.mxu0 0.0
        %5026 = vmatprep.subr.mxu0 0.0
        %5027 = vmatpush1.msra.mxu0 0.0
        %5028 = vmatprep.subr.mxu0 0.0
        %5029 = vmatpush1.msra.mxu0 0.0
        %5030 = vmatprep.subr.mxu0 0.0
        %5031 = vmatpush1.msra.mxu0 0.0
        %5032 = vmatprep.subr.mxu0 0.0
        %5033 = vmatpush1.msra.mxu0 0.0
        %5034 = vmatprep.subr.mxu0 0.0
        %5035 = vmatpush1.msra.mxu0 0.0
        %5036 = vmatprep.subr.mxu0 0.0
        %5037 = vmatpush1.msra.mxu0 0.0
        %5038 = vmatprep.subr.mxu0 0.0
        %5039 = vmatpush1.msra.mxu0 0.0
        %5040 = vmatprep.subr.mxu0 0.0
        %5041 = vmatpush1.msra.mxu0 0.0
        %5042 = vmatprep.subr.mxu0 0.0
        %5043 = vmatpush1.msra.mxu0 0.0
        %5044 = vmatprep.subr.mxu0 0.0
        %5045 = vmatpush1.msra.mxu0 0.0
        %5046 = vmatprep.subr.mxu0 0.0
        %5047 = vmatpush1.msra.mxu0 0.0
        %5048 = vmatprep.subr.mxu0 0.0
        %5049 = vmatpush1.msra.mxu0 0.0
        %5050 = vmatprep.subr.mxu0 0.0
        %5051 = vmatpush1.msra.mxu0 0.0
        %5052 = vmatprep.subr.mxu0 0.0
        %5053 = vmatpush1.msra.mxu0 0.0
        %5054 = vmatprep.subr.mxu0 0.0
        %5055 = vmatpush1.msra.mxu0 0.0
        %5056 = vmatprep.subr.mxu0 0.0
        %5057 = vmatpush1.msra.mxu0 0.0
        %5058 = vmatprep.mubr.f32.mxu0 0.0
        %5059 = vmatmul.mubr.f32.gmra.mrb[0].mxu0 %v4992
        %v5060 = vpop.f32.mrb[0].mxu0
        %v5061 = vadd.f32 0.0, %v5060
        %v5062 = vpop.f32.mrb[0].mxu0
        %5063 = vdwg.mxu0
        %v5064 = vadd.f32 %v4816, %v5061
        %5065 = vrot.lane.b32.xlu0 %v4335, 104
        %v5066 = vpop.permute.xlu0 %5065
        %5067 = vrot.lane.b32.xlu0 %v4227, 104
        %v5068 = vpop.permute.xlu0 %5067
        %5069 = vrot.lane.b32.xlu0 %v4232, 104
        %v5070 = vpop.permute.xlu0 %5069
        %v5071 = vsel %vm1314, %v5066, 0
        %v5073 = vsel %vm1314, %v5068, 0
        %v5075 = vsel %vm1314, %v5070, 0
        %5077 = vmatprep.subr.mxu0 0.0
        %5078 = vmatpush1.xpose.msra.mxu0 %v5073
        %5079 = vmatprep.subr.mxu0 0.0
        %5080 = vmatpush1.xpose.msra.mxu0 %v5075
        %5081 = vmatprep.subr.mxu0 0.0
        %5082 = vmatpush1.xpose.msra.mxu0 0.0
        %5083 = vmatprep.subr.mxu0 0.0
        %5084 = vmatpush1.xpose.msra.mxu0 0.0
        %5085 = vmatprep.subr.mxu0 0.0
        %5086 = vmatpush1.xpose.msra.mxu0 0.0
        %5087 = vmatprep.subr.mxu0 0.0
        %5088 = vmatpush1.xpose.msra.mxu0 0.0
        %5089 = vmatprep.subr.mxu0 0.0
        %5090 = vmatpush1.xpose.msra.mxu0 0.0
        %5091 = vmatprep.subr.mxu0 0.0
        %5092 = vmatpush1.xpose.msra.mxu0 0.0
        %5093 = vmatprep.subr.mxu0 0.0
        %5094 = vmatpush1.xpose.msra.mxu0 0.0
        %5095 = vmatprep.subr.mxu0 0.0
        %5096 = vmatpush1.xpose.msra.mxu0 0.0
        %5097 = vmatprep.subr.mxu0 0.0
        %5098 = vmatpush1.xpose.msra.mxu0 0.0
        %5099 = vmatprep.subr.mxu0 0.0
        %5100 = vmatpush1.xpose.msra.mxu0 0.0
        %5101 = vmatprep.subr.mxu0 0.0
        %5102 = vmatpush1.xpose.msra.mxu0 0.0
        %5103 = vmatprep.subr.mxu0 0.0
        %5104 = vmatpush1.xpose.msra.mxu0 0.0
        %5105 = vmatprep.subr.mxu0 0.0
        %5106 = vmatpush1.xpose.msra.mxu0 0.0
        %5107 = vmatprep.subr.mxu0 0.0
        %5108 = vmatpush1.xpose.msra.mxu0 0.0
        %5109 = vmatprep.subr.mxu0 0.0
        %5110 = vmatpush1.xpose.msra.mxu0 0.0
        %5111 = vmatprep.subr.mxu0 0.0
        %5112 = vmatpush1.xpose.msra.mxu0 0.0
        %5113 = vmatprep.subr.mxu0 0.0
        %5114 = vmatpush1.xpose.msra.mxu0 0.0
        %5115 = vmatprep.subr.mxu0 0.0
        %5116 = vmatpush1.xpose.msra.mxu0 0.0
        %5117 = vmatprep.subr.mxu0 0.0
        %5118 = vmatpush1.xpose.msra.mxu0 0.0
        %5119 = vmatprep.subr.mxu0 0.0
        %5120 = vmatpush1.xpose.msra.mxu0 0.0
        %5121 = vmatprep.subr.mxu0 0.0
        %5122 = vmatpush1.xpose.msra.mxu0 0.0
        %5123 = vmatprep.subr.mxu0 0.0
        %5124 = vmatpush1.xpose.msra.mxu0 0.0
        %5125 = vmatprep.subr.mxu0 0.0
        %5126 = vmatpush1.xpose.msra.mxu0 0.0
        %5127 = vmatprep.subr.mxu0 0.0
        %5128 = vmatpush1.xpose.msra.mxu0 0.0
        %5129 = vmatprep.subr.mxu0 0.0
        %5130 = vmatpush1.xpose.msra.mxu0 0.0
        %5131 = vmatprep.subr.mxu0 0.0
        %5132 = vmatpush1.xpose.msra.mxu0 0.0
        %5133 = vmatprep.subr.mxu0 0.0
        %5134 = vmatpush1.xpose.msra.mxu0 0.0
        %5135 = vmatprep.subr.mxu0 0.0
        %5136 = vmatpush1.xpose.msra.mxu0 0.0
        %5137 = vmatprep.subr.mxu0 0.0
        %5138 = vmatpush1.xpose.msra.mxu0 0.0
        %5139 = vmatprep.subr.mxu0 0.0
        %5140 = vmatpush1.xpose.msra.mxu0 0.0
        %5141 = vmatprep.mubr.f32.mxu0 0.0
        %5142 = vmatmul.mubr.f32.gmra.mrb[0].mxu0 %v5071
        %v5143 = vpop.f32.mrb[0].mxu0
        %v5144 = vadd.f32 0.0, %v5143
        %v5145 = vpop.f32.mrb[0].mxu0
        %5146 = vdwg.mxu0
        %v5147 = vsel %vm1400, %v5144, -inf
        %5148 = vmax.xlane.f32.xlu0 %v5147
        %v5149 = vpop.xlane.xlu0 %5148
        %v5150 = vsub.f32 %v5144, %v5149
        %v5151 = vmul.f32 %v5150, 1.442695
        %v5152 = vpow.pop %v5151
        %v5153 = vsel %vm1400, %v5152, 0.0
        %5154 = vadd.xlane.f32.xlu0 %v5153
        %v5155 = vpop.xlane.xlu0 %5154
        %v5156 = vrcp.pop %v5155
        %v5157 = vmul.f32 %v5152, %v5156
        %5158 = vrot.lane.b32.xlu0 %v4327, 104
        %v5159 = vpop.permute.xlu0 %5158
        %5160 = vrot.lane.b32.xlu0 %v4332, 104
        %v5161 = vpop.permute.xlu0 %5160
        %v5165 = vsel %vm1400, %v5157, 0
        %5167 = vmatprep.subr.mxu0 0.0
        %5168 = vmatpush1.msra.mxu0 %v5159
        %5169 = vmatprep.subr.mxu0 0.0
        %5170 = vmatpush1.msra.mxu0 %v5161
        %5171 = vmatprep.subr.mxu0 0.0
        %5172 = vmatpush1.msra.mxu0 0.0
        %5173 = vmatprep.subr.mxu0 0.0
        %5174 = vmatpush1.msra.mxu0 0.0
        %5175 = vmatprep.subr.mxu0 0.0
        %5176 = vmatpush1.msra.mxu0 0.0
        %5177 = vmatprep.subr.mxu0 0.0
        %5178 = vmatpush1.msra.mxu0 0.0
        %5179 = vmatprep.subr.mxu0 0.0
        %5180 = vmatpush1.msra.mxu0 0.0
        %5181 = vmatprep.subr.mxu0 0.0
        %5182 = vmatpush1.msra.mxu0 0.0
        %5183 = vmatprep.subr.mxu0 0.0
        %5184 = vmatpush1.msra.mxu0 0.0
        %5185 = vmatprep.subr.mxu0 0.0
        %5186 = vmatpush1.msra.mxu0 0.0
        %5187 = vmatprep.subr.mxu0 0.0
        %5188 = vmatpush1.msra.mxu0 0.0
        %5189 = vmatprep.subr.mxu0 0.0
        %5190 = vmatpush1.msra.mxu0 0.0
        %5191 = vmatprep.subr.mxu0 0.0
        %5192 = vmatpush1.msra.mxu0 0.0
        %5193 = vmatprep.subr.mxu0 0.0
        %5194 = vmatpush1.msra.mxu0 0.0
        %5195 = vmatprep.subr.mxu0 0.0
        %5196 = vmatpush1.msra.mxu0 0.0
        %5197 = vmatprep.subr.mxu0 0.0
        %5198 = vmatpush1.msra.mxu0 0.0
        %5199 = vmatprep.subr.mxu0 0.0
        %5200 = vmatpush1.msra.mxu0 0.0
        %5201 = vmatprep.subr.mxu0 0.0
        %5202 = vmatpush1.msra.mxu0 0.0
        %5203 = vmatprep.subr.mxu0 0.0
        %5204 = vmatpush1.msra.mxu0 0.0
        %5205 = vmatprep.subr.mxu0 0.0
        %5206 = vmatpush1.msra.mxu0 0.0
        %5207 = vmatprep.subr.mxu0 0.0
        %5208 = vmatpush1.msra.mxu0 0.0
        %5209 = vmatprep.subr.mxu0 0.0
        %5210 = vmatpush1.msra.mxu0 0.0
        %5211 = vmatprep.subr.mxu0 0.0
        %5212 = vmatpush1.msra.mxu0 0.0
        %5213 = vmatprep.subr.mxu0 0.0
        %5214 = vmatpush1.msra.mxu0 0.0
        %5215 = vmatprep.subr.mxu0 0.0
        %5216 = vmatpush1.msra.mxu0 0.0
        %5217 = vmatprep.subr.mxu0 0.0
        %5218 = vmatpush1.msra.mxu0 0.0
        %5219 = vmatprep.subr.mxu0 0.0
        %5220 = vmatpush1.msra.mxu0 0.0
        %5221 = vmatprep.subr.mxu0 0.0
        %5222 = vmatpush1.msra.mxu0 0.0
        %5223 = vmatprep.subr.mxu0 0.0
        %5224 = vmatpush1.msra.mxu0 0.0
        %5225 = vmatprep.subr.mxu0 0.0
        %5226 = vmatpush1.msra.mxu0 0.0
        %5227 = vmatprep.subr.mxu0 0.0
        %5228 = vmatpush1.msra.mxu0 0.0
        %5229 = vmatprep.subr.mxu0 0.0
        %5230 = vmatpush1.msra.mxu0 0.0
        %5231 = vmatprep.mubr.f32.mxu0 0.0
        %5232 = vmatmul.mubr.f32.gmra.mrb[0].mxu0 %v5165
        %v5233 = vpop.f32.mrb[0].mxu0
        %v5234 = vadd.f32 0.0, %v5233
        %v5235 = vpop.f32.mrb[0].mxu0
        %5236 = vdwg.mxu0
        %v5238 = vsel %vm1314, %v5234, 0
        %5240 = vmatprep.subr.mxu0 0.0
        %5241 = vmatpush1.msra.mxu0 %v4054
        %5242 = vmatprep.subr.mxu0 0.0
        %5243 = vmatpush1.msra.mxu0 0.0
        %5244 = vmatprep.subr.mxu0 0.0
        %5245 = vmatpush1.msra.mxu0 0.0
        %5246 = vmatprep.subr.mxu0 0.0
        %5247 = vmatpush1.msra.mxu0 0.0
        %5248 = vmatprep.subr.mxu0 0.0
        %5249 = vmatpush1.msra.mxu0 0.0
        %5250 = vmatprep.subr.mxu0 0.0
        %5251 = vmatpush1.msra.mxu0 0.0
        %5252 = vmatprep.subr.mxu0 0.0
        %5253 = vmatpush1.msra.mxu0 0.0
        %5254 = vmatprep.subr.mxu0 0.0
        %5255 = vmatpush1.msra.mxu0 0.0
        %5256 = vmatprep.subr.mxu0 0.0
        %5257 = vmatpush1.msra.mxu0 0.0
        %5258 = vmatprep.subr.mxu0 0.0
        %5259 = vmatpush1.msra.mxu0 0.0
        %5260 = vmatprep.subr.mxu0 0.0
        %5261 = vmatpush1.msra.mxu0 0.0
        %5262 = vmatprep.subr.mxu0 0.0
        %5263 = vmatpush1.msra.mxu0 0.0
        %5264 = vmatprep.subr.mxu0 0.0
        %5265 = vmatpush1.msra.mxu0 0.0
        %5266 = vmatprep.subr.mxu0 0.0
        %5267 = vmatpush1.msra.mxu0 0.0
        %5268 = vmatprep.subr.mxu0 0.0
        %5269 = vmatpush1.msra.mxu0 0.0
        %5270 = vmatprep.subr.mxu0 0.0
        %5271 = vmatpush1.msra.mxu0 0.0
        %5272 = vmatprep.subr.mxu0 0.0
        %5273 = vmatpush1.msra.mxu0 0.0
        %5274 = vmatprep.subr.mxu0 0.0
        %5275 = vmatpush1.msra.mxu0 0.0
        %5276 = vmatprep.subr.mxu0 0.0
        %5277 = vmatpush1.msra.mxu0 0.0
        %5278 = vmatprep.subr.mxu0 0.0
        %5279 = vmatpush1.msra.mxu0 0.0
        %5280 = vmatprep.subr.mxu0 0.0
        %5281 = vmatpush1.msra.mxu0 0.0
        %5282 = vmatprep.subr.mxu0 0.0
        %5283 = vmatpush1.msra.mxu0 0.0
        %5284 = vmatprep.subr.mxu0 0.0
        %5285 = vmatpush1.msra.mxu0 0.0
        %5286 = vmatprep.subr.mxu0 0.0
        %5287 = vmatpush1.msra.mxu0 0.0
        %5288 = vmatprep.subr.mxu0 0.0
        %5289 = vmatpush1.msra.mxu0 0.0
        %5290 = vmatprep.subr.mxu0 0.0
        %5291 = vmatpush1.msra.mxu0 0.0
        %5292 = vmatprep.subr.mxu0 0.0
        %5293 = vmatpush1.msra.mxu0 0.0
        %5294 = vmatprep.subr.mxu0 0.0
        %5295 = vmatpush1.msra.mxu0 0.0
        %5296 = vmatprep.subr.mxu0 0.0
        %5297 = vmatpush1.msra.mxu0 0.0
        %5298 = vmatprep.subr.mxu0 0.0
        %5299 = vmatpush1.msra.mxu0 0.0
        %5300 = vmatprep.subr.mxu0 0.0
        %5301 = vmatpush1.msra.mxu0 0.0
        %5302 = vmatprep.subr.mxu0 0.0
        %5303 = vmatpush1.msra.mxu0 0.0
        %5304 = vmatprep.mubr.f32.mxu0 0.0
        %5305 = vmatmul.mubr.f32.gmra.mrb[0].mxu0 %v5238
        %v5306 = vpop.f32.mrb[0].mxu0
        %v5307 = vadd.f32 0.0, %v5306
        %v5308 = vpop.f32.mrb[0].mxu0
        %5309 = vdwg.mxu0
        %v5310 = vadd.f32 %v5064, %v5307
        %v5312 = vlaneseq
        %v5313 = vshrl.u32 %v5312, 7
        %v5314 = vsub.s32 0, %v5313
        %v5315 = vrot.slane %v4055, %v5314
        %v5317 = vadd.f32 %v5310, %v5315
        %v5318 = vadd.f32 %v2483, %v3868
        %v5319 = vadd.f32 %v2484, %v3869
        %v5320 = vld [vmem:[%s57 + $0x1] sm:$0x1]
        %v5321 = vld [vmem:[%s59 + $0x1] sm:$0x1]
        %v5322 = vsel %vm1124, %v5318, 0.0
        %5323 = vadd.xlane.f32.xlu0 %v5322
        %v5324 = vpop.xlane.xlu0 %5323
        %v5325 = vsel %vm1124, %v5319, 0.0
        %5326 = vadd.xlane.f32.xlu0 %v5325
        %v5327 = vpop.xlane.xlu0 %5326
        %v5328 = vmul.f32 %v5324, %v2452
        %v5329 = vmul.f32 %v5327, %v2452
        %v5330 = vsub.f32 %v5318, %v5328
        %v5331 = vsub.f32 %v5319, %v5329
        %v5332 = vmul.f32 %v5330, %v5330
        %v5333 = vmul.f32 %v5331, %v5331
        %v5334 = vsel %vm1124, %v5332, 0.0
        %5335 = vadd.xlane.f32.xlu0 %v5334
        %v5336 = vpop.xlane.xlu0 %5335
        %v5337 = vsel %vm1124, %v5333, 0.0
        %5338 = vadd.xlane.f32.xlu0 %v5337
        %v5339 = vpop.xlane.xlu0 %5338
        %v5340 = vmul.f32 %v5336, %v2452
        %v5341 = vmul.f32 %v5339, %v2452
        %v5342 = vadd.f32 %v5340, 1e-05
        %v5343 = vadd.f32 %v5341, 1e-05
        %v5344 = vrsqrt.pop %v5342
        %v5345 = vrsqrt.pop %v5343
        %v5346 = vmul.f32 %v5330, %v5344
        %v5347 = vmul.f32 %v5331, %v5345
        %v5348 = vlaneseq
        %v5349 = vshrl.u32 %v5348, 7
        %v5350 = vsub.s32 0, %v5349
        %v5351 = vrot.slane %v5320, %v5350
        %v5352 = vmul.f32 %v5346, %v5351
        %v5353 = vmul.f32 %v5347, %v5351
        %v5354 = vlaneseq
        %v5355 = vshrl.u32 %v5354, 7
        %v5356 = vsub.s32 0, %v5355
        %v5357 = vrot.slane %v5321, %v5356
        %v5358 = vadd.f32 %v5352, %v5357
        %v5359 = vadd.f32 %v5353, %v5357
        %v5360 = vld [vmem:[%s41] sm:$0xff]
        %v5361 = vld [vmem:[%s41 + $0x8] sm:$0xff]
        %v5362 = vld [vmem:[%s41 + $0x10] sm:$0xff]
        %v5363 = vld [vmem:[%s41 + $0x18] sm:$0xff]
        %v5364 = vld [vmem:[#allocation6] sm:$0x1]
        %v5366 = vlaneseq
        %v5367 = vshrl.u32 %v5366, 7
        %v5368 = vsub.s32 0, %v5367
        %v5369 = vrot.slane %v5364, %v5368
        %v5372 = vsel %vm1124, %v5358, 0
        %v5375 = vsel %vm1124, %v5359, 0
        %5377 = vmatprep.subr.mxu0 0.0
        %5378 = vmatpush1.msra.mxu0 %v5360
        %5379 = vmatprep.subr.mxu0 0.0
        %5380 = vmatpush1.msra.mxu0 %v5361
        %5381 = vmatprep.subr.mxu0 0.0
        %5382 = vmatpush1.msra.mxu0 %v5362
        %5383 = vmatprep.subr.mxu0 0.0
        %5384 = vmatpush1.msra.mxu0 %v5363
        %5385 = vmatprep.subr.mxu0 0.0
        %5386 = vmatpush1.msra.mxu0 0.0
        %5387 = vmatprep.subr.mxu0 0.0
        %5388 = vmatpush1.msra.mxu0 0.0
        %5389 = vmatprep.subr.mxu0 0.0
        %5390 = vmatpush1.msra.mxu0 0.0
        %5391 = vmatprep.subr.mxu0 0.0
        %5392 = vmatpush1.msra.mxu0 0.0
        %5393 = vmatprep.subr.mxu0 0.0
        %5394 = vmatpush1.msra.mxu0 0.0
        %5395 = vmatprep.subr.mxu0 0.0
        %5396 = vmatpush1.msra.mxu0 0.0
        %5397 = vmatprep.subr.mxu0 0.0
        %5398 = vmatpush1.msra.mxu0 0.0
        %5399 = vmatprep.subr.mxu0 0.0
        %5400 = vmatpush1.msra.mxu0 0.0
        %5401 = vmatprep.subr.mxu0 0.0
        %5402 = vmatpush1.msra.mxu0 0.0
        %5403 = vmatprep.subr.mxu0 0.0
        %5404 = vmatpush1.msra.mxu0 0.0
        %5405 = vmatprep.subr.mxu0 0.0
        %5406 = vmatpush1.msra.mxu0 0.0
        %5407 = vmatprep.subr.mxu0 0.0
        %5408 = vmatpush1.msra.mxu0 0.0
        %5409 = vmatprep.subr.mxu0 0.0
        %5410 = vmatpush1.msra.mxu0 0.0
        %5411 = vmatprep.subr.mxu0 0.0
        %5412 = vmatpush1.msra.mxu0 0.0
        %5413 = vmatprep.subr.mxu0 0.0
        %5414 = vmatpush1.msra.mxu0 0.0
        %5415 = vmatprep.subr.mxu0 0.0
        %5416 = vmatpush1.msra.mxu0 0.0
        %5417 = vmatprep.subr.mxu0 0.0
        %5418 = vmatpush1.msra.mxu0 0.0
        %5419 = vmatprep.subr.mxu0 0.0
        %5420 = vmatpush1.msra.mxu0 0.0
        %5421 = vmatprep.subr.mxu0 0.0
        %5422 = vmatpush1.msra.mxu0 0.0
        %5423 = vmatprep.subr.mxu0 0.0
        %5424 = vmatpush1.msra.mxu0 0.0
        %5425 = vmatprep.subr.mxu0 0.0
        %5426 = vmatpush1.msra.mxu0 0.0
        %5427 = vmatprep.subr.mxu0 0.0
        %5428 = vmatpush1.msra.mxu0 0.0
        %5429 = vmatprep.subr.mxu0 0.0
        %5430 = vmatpush1.msra.mxu0 0.0
        %5431 = vmatprep.subr.mxu0 0.0
        %5432 = vmatpush1.msra.mxu0 0.0
        %5433 = vmatprep.subr.mxu0 0.0
        %5434 = vmatpush1.msra.mxu0 0.0
        %5435 = vmatprep.subr.mxu0 0.0
        %5436 = vmatpush1.msra.mxu0 0.0
        %5437 = vmatprep.subr.mxu0 0.0
        %5438 = vmatpush1.msra.mxu0 0.0
        %5439 = vmatprep.subr.mxu0 0.0
        %5440 = vmatpush1.msra.mxu0 0.0
        %5441 = vmatprep.mubr.f32.mxu0 0.0
        %5442 = vmatmul.mubr.f32.gmra.mrb[0].mxu0 %v5372
        %v5443 = vpop.f32.mrb[0].mxu0
        %v5444 = vadd.f32 %v5369, %v5443
        %v5445 = vpop.f32.mrb[0].mxu0
        %5446 = vmatprep.mubr.f32.mxu0 0.0
        %5447 = vmatmul.mubr.f32.gmra.mrb[0].mxu0 %v5375
        %v5448 = vpop.f32.mrb[0].mxu0
        %v5449 = vadd.f32 %v5369, %v5448
        %v5450 = vpop.f32.mrb[0].mxu0
        %5451 = vdwg.mxu0
        %v5452 = vmax.f32 %v5444, 0.0
        %v5453 = vmax.f32 %v5449, 0.0
        %v5454 = vld [vmem:[%s45] sm:$0xff]
        %v5455 = vld [vmem:[%s45 + $0x8] sm:$0xff]
        %v5456 = vld [vmem:[%s45 + $0x10] sm:$0xff]
        %v5457 = vld [vmem:[%s45 + $0x18] sm:$0xff]
        %v5458 = vld [vmem:[%s45 + $0x20] sm:$0xff]
        %v5459 = vld [vmem:[%s45 + $0x28] sm:$0xff]
        %v5460 = vld [vmem:[%s45 + $0x30] sm:$0xff]
        %v5461 = vld [vmem:[%s45 + $0x38] sm:$0xff]
        %v5462 = vld [vmem:[#allocation7] sm:$0x1]
        %v5464 = vlaneseq
        %v5465 = vshrl.u32 %v5464, 7
        %v5466 = vsub.s32 0, %v5465
        %v5467 = vrot.slane %v5462, %v5466
        %vm5469 = vcmask 523264
        %v5471 = vsel %vm5469, %v5452, 0
        %v5474 = vsel %vm5469, %v5453, 0
        %5476 = vmatprep.subr.mxu0 0.0
        %5477 = vmatpush1.msra.mxu0 %v5454
        %5478 = vmatprep.subr.mxu0 0.0
        %5479 = vmatpush1.msra.mxu0 %v5455
        %5480 = vmatprep.subr.mxu0 0.0
        %5481 = vmatpush1.msra.mxu0 %v5456
        %5482 = vmatprep.subr.mxu0 0.0
        %5483 = vmatpush1.msra.mxu0 %v5457
        %5484 = vmatprep.subr.mxu0 0.0
        %5485 = vmatpush1.msra.mxu0 %v5458
        %5486 = vmatprep.subr.mxu0 0.0
        %5487 = vmatpush1.msra.mxu0 %v5459
        %5488 = vmatprep.subr.mxu0 0.0
        %5489 = vmatpush1.msra.mxu0 %v5460
        %5490 = vmatprep.subr.mxu0 0.0
        %5491 = vmatpush1.msra.mxu0 %v5461
        %5492 = vmatprep.subr.mxu0 0.0
        %5493 = vmatpush1.msra.mxu0 0.0
        %5494 = vmatprep.subr.mxu0 0.0
        %5495 = vmatpush1.msra.mxu0 0.0
        %5496 = vmatprep.subr.mxu0 0.0
        %5497 = vmatpush1.msra.mxu0 0.0
        %5498 = vmatprep.subr.mxu0 0.0
        %5499 = vmatpush1.msra.mxu0 0.0
        %5500 = vmatprep.subr.mxu0 0.0
        %5501 = vmatpush1.msra.mxu0 0.0
        %5502 = vmatprep.subr.mxu0 0.0
        %5503 = vmatpush1.msra.mxu0 0.0
        %5504 = vmatprep.subr.mxu0 0.0
        %5505 = vmatpush1.msra.mxu0 0.0
        %5506 = vmatprep.subr.mxu0 0.0
        %5507 = vmatpush1.msra.mxu0 0.0
        %5508 = vmatprep.subr.mxu0 0.0
        %5509 = vmatpush1.msra.mxu0 0.0
        %5510 = vmatprep.subr.mxu0 0.0
        %5511 = vmatpush1.msra.mxu0 0.0
        %5512 = vmatprep.subr.mxu0 0.0
        %5513 = vmatpush1.msra.mxu0 0.0
        %5514 = vmatprep.subr.mxu0 0.0
        %5515 = vmatpush1.msra.mxu0 0.0
        %5516 = vmatprep.subr.mxu0 0.0
        %5517 = vmatpush1.msra.mxu0 0.0
        %5518 = vmatprep.subr.mxu0 0.0
        %5519 = vmatpush1.msra.mxu0 0.0
        %5520 = vmatprep.subr.mxu0 0.0
        %5521 = vmatpush1.msra.mxu0 0.0
        %5522 = vmatprep.subr.mxu0 0.0
        %5523 = vmatpush1.msra.mxu0 0.0
        %5524 = vmatprep.subr.mxu0 0.0
        %5525 = vmatpush1.msra.mxu0 0.0
        %5526 = vmatprep.subr.mxu0 0.0
        %5527 = vmatpush1.msra.mxu0 0.0
        %5528 = vmatprep.subr.mxu0 0.0
        %5529 = vmatpush1.msra.mxu0 0.0
        %5530 = vmatprep.subr.mxu0 0.0
        %5531 = vmatpush1.msra.mxu0 0.0
        %5532 = vmatprep.subr.mxu0 0.0
        %5533 = vmatpush1.msra.mxu0 0.0
        %5534 = vmatprep.subr.mxu0 0.0
        %5535 = vmatpush1.msra.mxu0 0.0
        %5536 = vmatprep.subr.mxu0 0.0
        %5537 = vmatpush1.msra.mxu0 0.0
        %5538 = vmatprep.subr.mxu0 0.0
        %5539 = vmatpush1.msra.mxu0 0.0
        %5540 = vmatprep.mubr.f32.mxu0 0.0
        %5541 = vmatmul.mubr.f32.gmra.mrb[0].mxu0 %v5471
        %v5542 = vpop.f32.mrb[0].mxu0
        %v5543 = vadd.f32 %v5467, %v5542
        %v5544 = vpop.f32.mrb[0].mxu0
        %5545 = vmatprep.mubr.f32.mxu0 0.0
        %5546 = vmatmul.mubr.f32.gmra.mrb[0].mxu0 %v5474
        %v5547 = vpop.f32.mrb[0].mxu0
        %v5548 = vadd.f32 %v5467, %v5547
        %v5549 = vpop.f32.mrb[0].mxu0
        %5550 = vdwg.mxu0
        %v5551 = vadd.f32 %v5358, %v5543
        %v5552 = vadd.f32 %v5359, %v5548
        %v5553 = vld [vmem:[%s57 + $0x2] sm:$0x1]
        %v5554 = vld [vmem:[%s59 + $0x2] sm:$0x1]
        %v5555 = vsel %vm1124, %v5551, 0.0
        %5556 = vadd.xlane.f32.xlu0 %v5555
        %v5557 = vpop.xlane.xlu0 %5556
        %v5558 = vsel %vm1124, %v5552, 0.0
        %5559 = vadd.xlane.f32.xlu0 %v5558
        %v5560 = vpop.xlane.xlu0 %5559
        %v5561 = vmul.f32 %v5557, %v2452
        %v5562 = vmul.f32 %v5560, %v2452
        %v5563 = vsub.f32 %v5551, %v5561
        %v5564 = vsub.f32 %v5552, %v5562
        %v5565 = vmul.f32 %v5563, %v5563
        %v5566 = vmul.f32 %v5564, %v5564
        %v5567 = vsel %vm1124, %v5565, 0.0
        %5568 = vadd.xlane.f32.xlu0 %v5567
        %v5569 = vpop.xlane.xlu0 %5568
        %v5570 = vsel %vm1124, %v5566, 0.0
        %5571 = vadd.xlane.f32.xlu0 %v5570
        %v5572 = vpop.xlane.xlu0 %5571
        %v5573 = vmul.f32 %v5569, %v2452
        %v5574 = vmul.f32 %v5572, %v2452
        %v5575 = vadd.f32 %v5573, 1e-05
        %v5576 = vadd.f32 %v5574, 1e-05
        %v5577 = vrsqrt.pop %v5575
        %v5578 = vrsqrt.pop %v5576
        %v5579 = vmul.f32 %v5563, %v5577
        %v5580 = vmul.f32 %v5564, %v5578
        %v5581 = vlaneseq
        %v5582 = vshrl.u32 %v5581, 7
        %v5583 = vsub.s32 0, %v5582
        %v5584 = vrot.slane %v5553, %v5583
        %v5585 = vmul.f32 %v5579, %v5584
        %v5586 = vmul.f32 %v5580, %v5584
        %v5587 = vlaneseq
        %v5588 = vshrl.u32 %v5587, 7
        %v5589 = vsub.s32 0, %v5588
        %v5590 = vrot.slane %v5554, %v5589
        %v5591 = vadd.f32 %v5585, %v5590
        %v5592 = vadd.f32 %v5586, %v5590
        %5593 = vst.msk [vmem:[%s1095] sm:$0xff] %vm1124, %v5591
        %5594 = vst.msk [vmem:[%s1095 + $0x8] sm:$0xff] %vm1124, %v5592
        %v5595 = vadd.f32 %v1102, %v5317
        %v5596 = vld [vmem:[%s57 + $0x3] sm:$0x1]
        %v5597 = vld [vmem:[%s59 + $0x3] sm:$0x1]
        %v5598 = vsel %vm1124, %v5595, 0.0
        %5599 = vadd.xlane.f32.xlu0 %v5598
        %v5600 = vpop.xlane.xlu0 %5599
        %v5601 = vmul.f32 %v5600, %v2452
        %v5602 = vsub.f32 %v5595, %v5601
        %v5603 = vmul.f32 %v5602, %v5602
        %v5604 = vsel %vm1124, %v5603, 0.0
        %5605 = vadd.xlane.f32.xlu0 %v5604
        %v5606 = vpop.xlane.xlu0 %5605
        %v5607 = vmul.f32 %v5606, %v2452
        %v5608 = vadd.f32 %v5607, 1e-05
        %v5609 = vrsqrt.pop %v5608
        %v5610 = vmul.f32 %v5602, %v5609
        %v5611 = vlaneseq
        %v5612 = vshrl.u32 %v5611, 7
        %v5613 = vsub.s32 0, %v5612
        %v5614 = vrot.slane %v5596, %v5613
        %v5615 = vmul.f32 %v5610, %v5614
        %v5616 = vlaneseq
        %v5617 = vshrl.u32 %v5616, 7
        %v5618 = vsub.s32 0, %v5617
        %v5619 = vrot.slane %v5597, %v5618
        %v5620 = vadd.f32 %v5615, %v5619
        %v5621 = vld [vmem:[%s49] sm:$0xff]
        %v5622 = vld [vmem:[%s49 + $0x8] sm:$0xff]
        %v5623 = vld [vmem:[%s49 + $0x10] sm:$0xff]
        %v5624 = vld [vmem:[%s49 + $0x18] sm:$0xff]
        %v5625 = vld [vmem:[#allocation9] sm:$0x1]
        %v5627 = vlaneseq
        %v5628 = vshrl.u32 %v5627, 7
        %v5629 = vsub.s32 0, %v5628
        %v5630 = vrot.slane %v5625, %v5629
        %v5633 = vsel %vm1124, %v5620, 0
        %5635 = vmatprep.subr.mxu0 0.0
        %5636 = vmatpush1.msra.mxu0 %v5621
        %5637 = vmatprep.subr.mxu0 0.0
        %5638 = vmatpush1.msra.mxu0 %v5622
        %5639 = vmatprep.subr.mxu0 0.0
        %5640 = vmatpush1.msra.mxu0 %v5623
        %5641 = vmatprep.subr.mxu0 0.0
        %5642 = vmatpush1.msra.mxu0 %v5624
        %5643 = vmatprep.subr.mxu0 0.0
        %5644 = vmatpush1.msra.mxu0 0.0
        %5645 = vmatprep.subr.mxu0 0.0
        %5646 = vmatpush1.msra.mxu0 0.0
        %5647 = vmatprep.subr.mxu0 0.0
        %5648 = vmatpush1.msra.mxu0 0.0
        %5649 = vmatprep.subr.mxu0 0.0
        %5650 = vmatpush1.msra.mxu0 0.0
        %5651 = vmatprep.subr.mxu0 0.0
        %5652 = vmatpush1.msra.mxu0 0.0
        %5653 = vmatprep.subr.mxu0 0.0
        %5654 = vmatpush1.msra.mxu0 0.0
        %5655 = vmatprep.subr.mxu0 0.0
        %5656 = vmatpush1.msra.mxu0 0.0
        %5657 = vmatprep.subr.mxu0 0.0
        %5658 = vmatpush1.msra.mxu0 0.0
        %5659 = vmatprep.subr.mxu0 0.0
        %5660 = vmatpush1.msra.mxu0 0.0
        %5661 = vmatprep.subr.mxu0 0.0
        %5662 = vmatpush1.msra.mxu0 0.0
        %5663 = vmatprep.subr.mxu0 0.0
        %5664 = vmatpush1.msra.mxu0 0.0
        %5665 = vmatprep.subr.mxu0 0.0
        %5666 = vmatpush1.msra.mxu0 0.0
        %5667 = vmatprep.subr.mxu0 0.0
        %5668 = vmatpush1.msra.mxu0 0.0
        %5669 = vmatprep.subr.mxu0 0.0
        %5670 = vmatpush1.msra.mxu0 0.0
        %5671 = vmatprep.subr.mxu0 0.0
        %5672 = vmatpush1.msra.mxu0 0.0
        %5673 = vmatprep.subr.mxu0 0.0
        %5674 = vmatpush1.msra.mxu0 0.0
        %5675 = vmatprep.subr.mxu0 0.0
        %5676 = vmatpush1.msra.mxu0 0.0
        %5677 = vmatprep.subr.mxu0 0.0
        %5678 = vmatpush1.msra.mxu0 0.0
        %5679 = vmatprep.subr.mxu0 0.0
        %5680 = vmatpush1.msra.mxu0 0.0
        %5681 = vmatprep.subr.mxu0 0.0
        %5682 = vmatpush1.msra.mxu0 0.0
        %5683 = vmatprep.subr.mxu0 0.0
        %5684 = vmatpush1.msra.mxu0 0.0
        %5685 = vmatprep.subr.mxu0 0.0
        %5686 = vmatpush1.msra.mxu0 0.0
        %5687 = vmatprep.subr.mxu0 0.0
        %5688 = vmatpush1.msra.mxu0 0.0
        %5689 = vmatprep.subr.mxu0 0.0
        %5690 = vmatpush1.msra.mxu0 0.0
        %5691 = vmatprep.subr.mxu0 0.0
        %5692 = vmatpush1.msra.mxu0 0.0
        %5693 = vmatprep.subr.mxu0 0.0
        %5694 = vmatpush1.msra.mxu0 0.0
        %5695 = vmatprep.subr.mxu0 0.0
        %5696 = vmatpush1.msra.mxu0 0.0
        %5697 = vmatprep.subr.mxu0 0.0
        %5698 = vmatpush1.msra.mxu0 0.0
        %5699 = vmatprep.mubr.f32.mxu0 0.0
        %5700 = vmatmul.mubr.f32.gmra.mrb[0].mxu0 %v5633
        %v5701 = vpop.f32.mrb[0].mxu0
        %v5702 = vadd.f32 %v5630, %v5701
        %v5703 = vpop.f32.mrb[0].mxu0
        %5704 = vdwg.mxu0
        %v5705 = vmax.f32 %v5702, 0.0
        %v5706 = vld [vmem:[%s53] sm:$0xff]
        %v5707 = vld [vmem:[%s53 + $0x8] sm:$0xff]
        %v5708 = vld [vmem:[%s53 + $0x10] sm:$0xff]
        %v5709 = vld [vmem:[%s53 + $0x18] sm:$0xff]
        %v5710 = vld [vmem:[%s53 + $0x20] sm:$0xff]
        %v5711 = vld [vmem:[%s53 + $0x28] sm:$0xff]
        %v5712 = vld [vmem:[%s53 + $0x30] sm:$0xff]
        %v5713 = vld [vmem:[%s53 + $0x38] sm:$0xff]
        %v5714 = vld [vmem:[#allocation10] sm:$0x1]
        %v5716 = vlaneseq
        %v5717 = vshrl.u32 %v5716, 7
        %v5718 = vsub.s32 0, %v5717
        %v5719 = vrot.slane %v5714, %v5718
        %v5722 = vsel %vm5469, %v5705, 0
        %5724 = vmatprep.subr.mxu0 0.0
        %5725 = vmatpush1.msra.mxu0 %v5706
        %5726 = vmatprep.subr.mxu0 0.0
        %5727 = vmatpush1.msra.mxu0 %v5707
        %5728 = vmatprep.subr.mxu0 0.0
        %5729 = vmatpush1.msra.mxu0 %v5708
        %5730 = vmatprep.subr.mxu0 0.0
        %5731 = vmatpush1.msra.mxu0 %v5709
        %5732 = vmatprep.subr.mxu0 0.0
        %5733 = vmatpush1.msra.mxu0 %v5710
        %5734 = vmatprep.subr.mxu0 0.0
        %5735 = vmatpush1.msra.mxu0 %v5711
        %5736 = vmatprep.subr.mxu0 0.0
        %5737 = vmatpush1.msra.mxu0 %v5712
        %5738 = vmatprep.subr.mxu0 0.0
        %5739 = vmatpush1.msra.mxu0 %v5713
        %5740 = vmatprep.subr.mxu0 0.0
        %5741 = vmatpush1.msra.mxu0 0.0
        %5742 = vmatprep.subr.mxu0 0.0
        %5743 = vmatpush1.msra.mxu0 0.0
        %5744 = vmatprep.subr.mxu0 0.0
        %5745 = vmatpush1.msra.mxu0 0.0
        %5746 = vmatprep.subr.mxu0 0.0
        %5747 = vmatpush1.msra.mxu0 0.0
        %5748 = vmatprep.subr.mxu0 0.0
        %5749 = vmatpush1.msra.mxu0 0.0
        %5750 = vmatprep.subr.mxu0 0.0
        %5751 = vmatpush1.msra.mxu0 0.0
        %5752 = vmatprep.subr.mxu0 0.0
        %5753 = vmatpush1.msra.mxu0 0.0
        %5754 = vmatprep.subr.mxu0 0.0
        %5755 = vmatpush1.msra.mxu0 0.0
        %5756 = vmatprep.subr.mxu0 0.0
        %5757 = vmatpush1.msra.mxu0 0.0
        %5758 = vmatprep.subr.mxu0 0.0
        %5759 = vmatpush1.msra.mxu0 0.0
        %5760 = vmatprep.subr.mxu0 0.0
        %5761 = vmatpush1.msra.mxu0 0.0
        %5762 = vmatprep.subr.mxu0 0.0
        %5763 = vmatpush1.msra.mxu0 0.0
        %5764 = vmatprep.subr.mxu0 0.0
        %5765 = vmatpush1.msra.mxu0 0.0
        %5766 = vmatprep.subr.mxu0 0.0
        %5767 = vmatpush1.msra.mxu0 0.0
        %5768 = vmatprep.subr.mxu0 0.0
        %5769 = vmatpush1.msra.mxu0 0.0
        %5770 = vmatprep.subr.mxu0 0.0
        %5771 = vmatpush1.msra.mxu0 0.0
        %5772 = vmatprep.subr.mxu0 0.0
        %5773 = vmatpush1.msra.mxu0 0.0
        %5774 = vmatprep.subr.mxu0 0.0
        %5775 = vmatpush1.msra.mxu0 0.0
        %5776 = vmatprep.subr.mxu0 0.0
        %5777 = vmatpush1.msra.mxu0 0.0
        %5778 = vmatprep.subr.mxu0 0.0
        %5779 = vmatpush1.msra.mxu0 0.0
        %5780 = vmatprep.subr.mxu0 0.0
        %5781 = vmatpush1.msra.mxu0 0.0
        %5782 = vmatprep.subr.mxu0 0.0
        %5783 = vmatpush1.msra.mxu0 0.0
        %5784 = vmatprep.subr.mxu0 0.0
        %5785 = vmatpush1.msra.mxu0 0.0
        %5786 = vmatprep.subr.mxu0 0.0
        %5787 = vmatpush1.msra.mxu0 0.0
        %5788 = vmatprep.mubr.f32.mxu0 0.0
        %5789 = vmatmul.mubr.f32.gmra.mrb[0].mxu0 %v5722
        %v5790 = vpop.f32.mrb[0].mxu0
        %v5791 = vadd.f32 %v5719, %v5790
        %v5792 = vpop.f32.mrb[0].mxu0
        %5793 = vdwg.mxu0
        %v5794 = vadd.f32 %v5620, %v5791
        %v5795 = vld [vmem:[%s57 + $0x4] sm:$0x1]
        %v5796 = vld [vmem:[%s59 + $0x4] sm:$0x1]
        %v5797 = vsel %vm1124, %v5794, 0.0
        %5798 = vadd.xlane.f32.xlu0 %v5797
        %v5799 = vpop.xlane.xlu0 %5798
        %v5800 = vmul.f32 %v5799, %v2452
        %v5801 = vsub.f32 %v5794, %v5800
        %v5802 = vmul.f32 %v5801, %v5801
        %v5803 = vsel %vm1124, %v5802, 0.0
        %5804 = vadd.xlane.f32.xlu0 %v5803
        %v5805 = vpop.xlane.xlu0 %5804
        %v5806 = vmul.f32 %v5805, %v2452
        %v5807 = vadd.f32 %v5806, 1e-05
        %v5808 = vrsqrt.pop %v5807
        %v5809 = vmul.f32 %v5801, %v5808
        %v5810 = vlaneseq
        %v5811 = vshrl.u32 %v5810, 7
        %v5812 = vsub.s32 0, %v5811
        %v5813 = vrot.slane %v5795, %v5812
        %v5814 = vmul.f32 %v5809, %v5813
        %v5815 = vlaneseq
        %v5816 = vshrl.u32 %v5815, 7
        %v5817 = vsub.s32 0, %v5816
        %v5818 = vrot.slane %v5796, %v5817
        %v5819 = vadd.f32 %v5814, %v5818
        %5820 = vst.msk [vmem:[%s1099] sm:$0xff] %vm1124, %v5819
        %p5821 = scmp.lt.s32.totalorder %s79, 1
        %s5822 = scalar_select %p5821, %s79, 1
        %s5823 = smul.addr %s5822, 2
        %s5824 = smul.addr %s5823, 8
        %s5825 = scalar_lea.vmem %s61, %s5824
        %p5826 = scmp.lt.s32.totalorder %s79, 1
        %s5827 = scalar_select %p5826, %s79, 1
        %s5828 = smul.addr %s5827, 8
        %s5829 = scalar_lea.vmem %s63, %s5828
        // Predicated region
        $region165: #{dual_block_forward.1} parent=139 // pred_check
          %p5830 = pneg %p747
        $region166: #{dual_block_forward.1} parent=139 // pred_check_branch
          %5832 = sbr.rel (%p5830) target = $region168
        $region167: #{dual_block_forward.1} parent=139 // pred_region
          _
        $region168: #{dual_block_forward.1} parent=139 // pred_fallthru
          _
        // Predicated region
        $region169: #{dual_block_forward.1} parent=139 // pred_check
          %p5833 = pneg %p773
        $region170: #{dual_block_forward.1} parent=139 // pred_check_branch
          %5835 = sbr.rel (%p5833) target = $region172
        $region171: #{dual_block_forward.1} parent=139 // pred_region
          _
        $region172: #{dual_block_forward.1} parent=139 // pred_fallthru
          _
      $region140: #{dual_block_forward.1} parent=5 // pred_fallthru
        _
      %p5836 = scmp.le.s32.totalorder 2, %s74
      // Predicated region
      $region173: #{dual_block_forward.1} parent=5 // pred_check
        %p5837 = pneg %p5836
      $region174: #{dual_block_forward.1} parent=5 // pred_check_branch
        %5839 = sbr.rel (%p5837) target = $region176
      $region175: #{dual_block_forward.1} parent=5 // pred_region
        %s5840 = ssub.s32 %s74, 2
        // Predicated region
        $region177: #{dual_block_forward.1} parent=175 // pred_check
          %p5841 = pneg %p753
        $region178: #{dual_block_forward.1} parent=175 // pred_check_branch
          %5843 = sbr.rel (%p5841) target = $region180
        $region179: #{dual_block_forward.1} parent=175 // pred_region
          %p5844 = scmp.lt.s32.totalorder %s80, 1
          %s5845 = scalar_select %p5844, %s80, 1
          %s5846 = smul.addr %s5845, 2
          %s5847 = smul.addr %s5846, 8
          %s5848 = scalar_lea.vmem %s61, %s5847
        $region180: #{dual_block_forward.1} parent=175 // pred_fallthru
          _
        // Predicated region
        $region181: #{dual_block_forward.1} parent=175 // pred_check
          %p5849 = pneg %p779
        $region182: #{dual_block_forward.1} parent=175 // pred_check_branch
          %5851 = sbr.rel (%p5849) target = $region184
        $region183: #{dual_block_forward.1} parent=175 // pred_region
          %p5852 = scmp.lt.s32.totalorder %s80, 1
          %s5853 = scalar_select %p5852, %s80, 1
          %s5854 = smul.addr %s5853, 8
          %s5855 = scalar_lea.vmem %s63, %s5854
        $region184: #{dual_block_forward.1} parent=175 // pred_fallthru
          _
      $region176: #{dual_block_forward.1} parent=5 // pred_fallthru
        _
    $region6: #{dual_block_forward.1} parent=1 // loop_footer
      %s78 = sadd.s32 1, %s74
    $region7: #{dual_block_forward.1} parent=1 // loop_footer_branch
      %73 = sbr.rel target = $region3
    $region8: #{dual_block_forward.1} parent=1 // loop_exit
      _
    %5856 = vsyncpa [#allocation3], 1
    %s5857 = scalar_lea.sflag [#allocation3], 1
    %5858 = vsyncpa %s5857, 1
    %5859 = vsyncpa [#allocation5], 1
    %5860 = vsyncpa [#allocation8], 1
    %5861 = vsyncpa [#allocation11], 1

</llo_original>
